<compile_context>
chip_gen: v7x
topology: tpu7x:2x2x1
jax: 0.10.0
libtpu: 0.0.40
codegen_flags: <defaults>
</compile_context>

<pallas_src>
import jax
import jax.numpy as jnp
from jax.experimental import pallas as pl
from jax.experimental.pallas import tpu as pltpu

# --- config (small, consistent with the module) ---
VOCAB = 64
BLOCK_SIZE = 16   # max context
N_EMBD = 32
N_HEAD = 4
N_LAYER = 2
EPS = 1e-5        # nn.LayerNorm default
VPAD = ((VOCAB + 127) // 128) * 128   # lane-dense logits width (128)


def _layernorm(x, g, b):
    # x: (N, C), g/b: (1, C); biased variance, like nn.LayerNorm
    mu = jnp.mean(x, axis=-1, keepdims=True)
    var = jnp.mean((x - mu) ** 2, axis=-1, keepdims=True)
    return (x - mu) * jax.lax.rsqrt(var + EPS) * g + b


# ---------------- fused full-forward Pallas kernel ----------------

def gpt_kernel(idx_ref, tok_ref, pos_ref,
               ln1g_ref, ln1b_ref, wq_ref, wk_ref, wv_ref, wo_ref, bo_ref,
               ln2g_ref, ln2b_ref, w1_ref, b1_ref, w2_ref, b2_ref,
               lnfg_ref, lnfb_ref, wlm_ref, blm_ref,
               out_ref):
    Bc, T, Vp = out_ref.shape
    C = tok_ref.shape[1]
    H = N_HEAD
    hs = C // H
    N = Bc * T
    f32 = jnp.float32

    # --- embedding lookup folded into the kernel: one-hot @ tok_emb on the MXU ---
    if idx_ref.shape[0] == N:                       # single grid step: static read
        idx_c = idx_ref[...]
    else:                                           # per-chunk rows of flattened idx
        idx_c = idx_ref[pl.ds(pl.program_id(0) * N, N), :]
    onehot = (idx_c == jax.lax.broadcasted_iota(jnp.int32, (N, VOCAB), 1)).astype(f32)
    x = jnp.dot(onehot, tok_ref[...], preferred_element_type=f32)        # (N, C)
    x = (x.reshape(Bc, T, C) + pos_ref[0:T, :][None]).reshape(N, C)

    # --- causal mask bias, hoisted out of the layer loop (finite, NaN-safe) ---
    row = jax.lax.broadcasted_iota(jnp.int32, (T, T), 0)
    col = jax.lax.broadcasted_iota(jnp.int32, (T, T), 1)
    mask_bias = jnp.where(col <= row, f32(0.0), f32(-1e30))[None]        # (1, T, T)
    scale = f32(C ** -0.5)        # reference scales by n_embd (not head_size)

    for l in range(N_LAYER):      # static unroll; all weights resident in VMEM
        # --- multi-head causal self-attention (pre-norm) ---
        xn = _layernorm(x, ln1g_ref[l], ln1b_ref[l])
        att = jnp.zeros((N, C), f32)
        for h in range(H):        # per-head weights: no lane slicing / stack / concat
            qh = jnp.dot(xn, wq_ref[l, h], preferred_element_type=f32).reshape(Bc, T, hs)
            kh = jnp.dot(xn, wk_ref[l, h], preferred_element_type=f32).reshape(Bc, T, hs)
            vh = jnp.dot(xn, wv_ref[l, h], preferred_element_type=f32).reshape(Bc, T, hs)
            s = jnp.einsum('btd,bsd->bts', qh, kh, preferred_element_type=f32)
            s = s * scale + mask_bias
            s = s - jnp.max(s, axis=-1, keepdims=True)
            p = jnp.exp(s)
            p = p / jnp.sum(p, axis=-1, keepdims=True)      # exact softmax divide
            oh = jnp.einsum('bts,bsd->btd', p, vh, preferred_element_type=f32)
            # head-merge + output projection fused: concat(o_h) @ Wproj == sum_h o_h @ Wproj_h
            att = att + jnp.dot(oh.reshape(N, hs), wo_ref[l, h],
                                preferred_element_type=f32)
        x = x + att + bo_ref[l]

        # --- feed-forward (pre-norm), dropout = identity (eval) ---
        xn2 = _layernorm(x, ln2g_ref[l], ln2b_ref[l])
        hdn = jnp.maximum(
            jnp.dot(xn2, w1_ref[l], preferred_element_type=f32) + b1_ref[l], 0.0)
        x = x + jnp.dot(hdn, w2_ref[l], preferred_element_type=f32) + b2_ref[l]

    # --- final LayerNorm + lm_head (weights pre-padded to lane-dense 128) ---
    xn = _layernorm(x, lnfg_ref[...], lnfb_ref[...])
    logits = jnp.dot(xn, wlm_ref[...], preferred_element_type=f32) + blm_ref[...]
    out_ref[...] = logits.reshape(Bc, T, Vp)


# ---------------- wrapper ----------------

def _pick_num_chunks(B, T):
    """Split the batch across grid steps only on multi-TensorCore chips (v7x)
    and only when each chunk still has enough matmul rows; v5e/v6e have a
    single TensorCore so one step is strictly faster."""
    try:
        kind = jax.devices()[0].device_kind.lower()
    except Exception:
        kind = ""
    multi_tc = ("v7" in kind) or ("7x" in kind)
    if multi_tc and B % 2 == 0 and (B * T) // 2 >= 128:
        return 2
    return 1


_WEIGHT_NAMES = ('ln1_g', 'ln1_b', 'wq', 'wk', 'wv', 'wproj', 'bproj',
                 'ln2_g', 'ln2_b', 'w1', 'b1', 'w2', 'b2',
                 'lnf_g', 'lnf_b', 'w_lm', 'b_lm')


def model_forward(idx, params):
    B, T = idx.shape
    n_chunks = _pick_num_chunks(B, T)
    Bc = B // n_chunks

    idx_flat = idx.reshape(B * T, 1).astype(jnp.int32)
    weights = [params[k] for k in _WEIGHT_NAMES]

    def _full(arr):
        n = arr.ndim
        return pl.BlockSpec(arr.shape, lambda i, _n=n: (0,) * _n)

    # TODO(synk): cast matmul operands to bf16 (keep f32 accumulation) once exact
    # f32 parity with the PyTorch module is no longer required.
    out = pl.pallas_call(
        gpt_kernel,
        out_shape=jax.ShapeDtypeStruct((B, T, VPAD), jnp.float32),
        grid=(n_chunks,),
        in_specs=[_full(idx_flat), _full(params['tok_emb']), _full(params['pos_emb'])]
                 + [_full(w) for w in weights],
        out_specs=pl.BlockSpec((Bc, T, VPAD), lambda i: (i, 0, 0)),
        compiler_params=pltpu.CompilerParams(
            dimension_semantics=("parallel",)),
    )(idx_flat, params['tok_emb'], params['pos_emb'], *weights)

    return out[:, :, :VOCAB]


# ---------------- deterministic parameter init ----------------

def init_params(key):
    C, V, L, H = N_EMBD, VOCAB, N_LAYER, N_HEAD
    hs = C // H
    ks = iter(jax.random.split(key, 24))

    def nrm(shape, scale=0.02):
        return scale * jax.random.normal(next(ks), shape, jnp.float32)

    # lm_head pre-padded ONCE to the lane-dense width used by the kernel
    w_lm = jnp.pad(nrm((C, V)), ((0, 0), (0, VPAD - V)))
    b_lm = jnp.pad(nrm((1, V)), ((0, 0), (0, VPAD - V)))

    return {
        'tok_emb': nrm((V, C)),
        'pos_emb': nrm((BLOCK_SIZE, C)),
        'ln1_g': jnp.ones((L, 1, C), jnp.float32),
        'ln1_b': jnp.zeros((L, 1, C), jnp.float32),
        # per-head Q/K/V and output-projection weights (native PyTorch Head layout)
        'wq': nrm((L, H, C, hs)),
        'wk': nrm((L, H, C, hs)),
        'wv': nrm((L, H, C, hs)),
        'wproj': nrm((L, H, hs, C)),
        'bproj': nrm((L, 1, C)),
        'ln2_g': jnp.ones((L, 1, C), jnp.float32),
        'ln2_b': jnp.zeros((L, 1, C), jnp.float32),
        'w1': nrm((L, C, 4 * C)),
        'b1': nrm((L, 1, 4 * C)),
        'w2': nrm((L, 4 * C, C)),
        'b2': nrm((L, 1, C)),
        'lnf_g': jnp.ones((1, C), jnp.float32),
        'lnf_b': jnp.zeros((1, C), jnp.float32),
        'w_lm': w_lm,
        'b_lm': b_lm,
    }


# ---------------- pure-JAX reference (for verification) ----------------

def _ln_ref(x, g, b):
    mu = jnp.mean(x, axis=-1, keepdims=True)
    var = jnp.mean((x - mu) ** 2, axis=-1, keepdims=True)
    return (x - mu) * jax.lax.rsqrt(var + EPS) * g + b


def ref_forward(idx, params):
    B, T = idx.shape
    C, H = N_EMBD, N_HEAD
    x = params['tok_emb'][idx] + params['pos_emb'][:T][None]
    mask = jnp.tril(jnp.ones((T, T), bool))
    for l in range(N_LAYER):
        xn = _ln_ref(x, params['ln1_g'][l], params['ln1_b'][l])
        att = jnp.zeros_like(x)
        for h in range(H):
            q = xn @ params['wq'][l, h]
            k = xn @ params['wk'][l, h]
            v = xn @ params['wv'][l, h]
            s = jnp.einsum('btd,bsd->bts', q, k) * (C ** -0.5)
            s = jnp.where(mask[None], s, -jnp.inf)
            w = jax.nn.softmax(s, axis=-1)
            att = att + jnp.einsum('bts,bsd->btd', w, v) @ params['wproj'][l, h]
        x = x + att + params['bproj'][l]
        xn2 = _ln_ref(x, params['ln2_g'][l], params['ln2_b'][l])
        x = x + jnp.maximum(xn2 @ params['w1'][l] + params['b1'][l],
                            0.0) @ params['w2'][l] + params['b2'][l]
    xn = _ln_ref(x, params['lnf_g'], params['lnf_b'])
    logits = xn @ params['w_lm'] + params['b_lm']
    return logits[..., :VOCAB]


if __name__ == "__main__":
    key = jax.random.PRNGKey(0)
    k_param, k_idx = jax.random.split(key)
    params = init_params(k_param)

    B, T = 2, 8
    idx = jax.random.randint(k_idx, (B, T), 0, VOCAB, dtype=jnp.int32)

    fwd = jax.jit(model_forward)
    logits = jax.block_until_ready(fwd(idx, params))

    ref = ref_forward(idx, params)
    assert logits.shape == (B, T, VOCAB), logits.shape
    err = float(jnp.max(jnp.abs(logits - ref)))
    assert jnp.allclose(logits, ref, atol=1e-3, rtol=1e-3), \
        f"mismatch vs reference (max abs err {err})"

    print("KERNEL_OK")
</pallas_src>

<mosaic_0001>
module attributes {stable_mosaic.version = 11 : i64} {
  func.func @gpt_kernel(%arg0: i32, %arg1: memref<16x1xi32, #tpu.memory_space<vmem>>, %arg2: memref<64x32xf32, #tpu.memory_space<vmem>>, %arg3: memref<16x32xf32, #tpu.memory_space<vmem>>, %arg4: memref<2x1x32xf32, #tpu.memory_space<vmem>>, %arg5: memref<2x1x32xf32, #tpu.memory_space<vmem>>, %arg6: memref<2x4x32x8xf32, #tpu.memory_space<vmem>>, %arg7: memref<2x4x32x8xf32, #tpu.memory_space<vmem>>, %arg8: memref<2x4x32x8xf32, #tpu.memory_space<vmem>>, %arg9: memref<2x4x8x32xf32, #tpu.memory_space<vmem>>, %arg10: memref<2x1x32xf32, #tpu.memory_space<vmem>>, %arg11: memref<2x1x32xf32, #tpu.memory_space<vmem>>, %arg12: memref<2x1x32xf32, #tpu.memory_space<vmem>>, %arg13: memref<2x32x128xf32, #tpu.memory_space<vmem>>, %arg14: memref<2x1x128xf32, #tpu.memory_space<vmem>>, %arg15: memref<2x128x32xf32, #tpu.memory_space<vmem>>, %arg16: memref<2x1x32xf32, #tpu.memory_space<vmem>>, %arg17: memref<1x32xf32, #tpu.memory_space<vmem>>, %arg18: memref<1x32xf32, #tpu.memory_space<vmem>>, %arg19: memref<32x128xf32, #tpu.memory_space<vmem>>, %arg20: memref<1x128xf32, #tpu.memory_space<vmem>>, %arg21: memref<2x8x128xf32, #tpu.memory_space<vmem>>) attributes {dimension_semantics = [#tpu.dimension_semantics<parallel>], iteration_bounds = array<i64: 1>, scalar_prefetch = 0 : i64, scratch_operands = 0 : i64, tpu.core_type = #tpu.core_type<tc>, window_params = [{pipeline_mode = #tpu.pipeline_mode<synchronous>, transform_indices = @transform_0, window_bounds = array<i64: 16, 1>}, {pipeline_mode = #tpu.pipeline_mode<synchronous>, transform_indices = @transform_1, window_bounds = array<i64: 64, 32>}, {pipeline_mode = #tpu.pipeline_mode<synchronous>, transform_indices = @transform_2, window_bounds = array<i64: 16, 32>}, {pipeline_mode = #tpu.pipeline_mode<synchronous>, transform_indices = @transform_3, window_bounds = array<i64: 2, 1, 32>}, {pipeline_mode = #tpu.pipeline_mode<synchronous>, transform_indices = @transform_4, window_bounds = array<i64: 2, 1, 32>}, {pipeline_mode = #tpu.pipeline_mode<synchronous>, transform_indices = @transform_5, window_bounds = array<i64: 2, 4, 32, 8>}, {pipeline_mode = #tpu.pipeline_mode<synchronous>, transform_indices = @transform_6, window_bounds = array<i64: 2, 4, 32, 8>}, {pipeline_mode = #tpu.pipeline_mode<synchronous>, transform_indices = @transform_7, window_bounds = array<i64: 2, 4, 32, 8>}, {pipeline_mode = #tpu.pipeline_mode<synchronous>, transform_indices = @transform_8, window_bounds = array<i64: 2, 4, 8, 32>}, {pipeline_mode = #tpu.pipeline_mode<synchronous>, transform_indices = @transform_9, window_bounds = array<i64: 2, 1, 32>}, {pipeline_mode = #tpu.pipeline_mode<synchronous>, transform_indices = @transform_10, window_bounds = array<i64: 2, 1, 32>}, {pipeline_mode = #tpu.pipeline_mode<synchronous>, transform_indices = @transform_11, window_bounds = array<i64: 2, 1, 32>}, {pipeline_mode = #tpu.pipeline_mode<synchronous>, transform_indices = @transform_12, window_bounds = array<i64: 2, 32, 128>}, {pipeline_mode = #tpu.pipeline_mode<synchronous>, transform_indices = @transform_13, window_bounds = array<i64: 2, 1, 128>}, {pipeline_mode = #tpu.pipeline_mode<synchronous>, transform_indices = @transform_14, window_bounds = array<i64: 2, 128, 32>}, {pipeline_mode = #tpu.pipeline_mode<synchronous>, transform_indices = @transform_15, window_bounds = array<i64: 2, 1, 32>}, {pipeline_mode = #tpu.pipeline_mode<synchronous>, transform_indices = @transform_16, window_bounds = array<i64: 1, 32>}, {pipeline_mode = #tpu.pipeline_mode<synchronous>, transform_indices = @transform_17, window_bounds = array<i64: 1, 32>}, {pipeline_mode = #tpu.pipeline_mode<synchronous>, transform_indices = @transform_18, window_bounds = array<i64: 32, 128>}, {pipeline_mode = #tpu.pipeline_mode<synchronous>, transform_indices = @transform_19, window_bounds = array<i64: 1, 128>}, {transform_indices = @transform_20, window_bounds = array<i64: 2, 8, 128>}]} {
    %c0 = arith.constant 0 : index
    %c0_0 = arith.constant 0 : index
    %0 = vector.load %arg1[%c0, %c0_0] : memref<16x1xi32, #tpu.memory_space<vmem>>, vector<16x1xi32>
    %1 = tpu.iota {dimensions = array<i32: 1>} : vector<16x64xi32>
    %2 = vector.broadcast %0 : vector<16x1xi32> to vector<16x64xi32>
    %3 = arith.cmpi eq, %2, %1 : vector<16x64xi32>
    %4 = arith.extui %3 : vector<16x64xi1> to vector<16x64xi32>
    %5 = arith.sitofp %4 : vector<16x64xi32> to vector<16x64xf32>
    %c0_1 = arith.constant 0 : index
    %c0_2 = arith.constant 0 : index
    %6 = vector.load %arg2[%c0_1, %c0_2] : memref<64x32xf32, #tpu.memory_space<vmem>>, vector<64x32xf32>
    %cst = arith.constant dense<0.000000e+00> : vector<16x32xf32>
    %7 = tpu.matmul %5, %6, %cst {dimension_numbers = #tpu.dot_dimension_numbers<[1], [0], [0], [1], [0, 0, 1, 1], [], []>} : vector<16x64xf32>, vector<64x32xf32>, vector<16x32xf32> -> vector<16x32xf32>
    %8 = vector.shape_cast %7 : vector<16x32xf32> to vector<2x8x32xf32>
    %c0_3 = arith.constant 0 : index
    %c0_4 = arith.constant 0 : index
    %9 = vector.load %arg3[%c0_3, %c0_4] : memref<16x32xf32, #tpu.memory_space<vmem>>, vector<8x32xf32>
    %10 = vector.shape_cast %9 : vector<8x32xf32> to vector<1x8x32xf32>
    %11 = vector.broadcast %10 : vector<1x8x32xf32> to vector<2x8x32xf32>
    %12 = arith.addf %8, %11 : vector<2x8x32xf32>
    %13 = vector.shape_cast %12 : vector<2x8x32xf32> to vector<16x32xf32>
    %14 = tpu.iota {dimensions = array<i32: 0>} : vector<8x8xi32>
    %15 = tpu.iota {dimensions = array<i32: 1>} : vector<8x8xi32>
    %16 = arith.cmpi sle, %15, %14 : vector<8x8xi32>
    %cst_5 = arith.constant 0.000000e+00 : f32
    %cst_6 = arith.constant -1.000000e+30 : f32
    %17 = vector.broadcast %cst_5 : f32 to vector<8x8xf32>
    %18 = vector.broadcast %cst_6 : f32 to vector<8x8xf32>
    %19 = arith.select %16, %17, %18 : vector<8x8xi1>, vector<8x8xf32>
    %20 = vector.shape_cast %19 : vector<8x8xf32> to vector<1x8x8xf32>
    %c0_7 = arith.constant 0 : index
    %c0_8 = arith.constant 0 : index
    %c0_9 = arith.constant 0 : index
    %21 = vector.load %arg4[%c0_7, %c0_8, %c0_9] : memref<2x1x32xf32, #tpu.memory_space<vmem>>, vector<1x1x32xf32>
    %22 = vector.shape_cast %21 : vector<1x1x32xf32> to vector<1x32xf32>
    %c0_10 = arith.constant 0 : index
    %c0_11 = arith.constant 0 : index
    %c0_12 = arith.constant 0 : index
    %23 = vector.load %arg5[%c0_10, %c0_11, %c0_12] : memref<2x1x32xf32, #tpu.memory_space<vmem>>, vector<1x1x32xf32>
    %24 = vector.shape_cast %23 : vector<1x1x32xf32> to vector<1x32xf32>
    %cst_13 = arith.constant dense<0.000000e+00> : vector<16xf32>
    %25 = vector.multi_reduction <add>, %13, %cst_13 [1] : vector<16x32xf32> to vector<16xf32>
    %26 = vector.shape_cast %25 : vector<16xf32> to vector<16x1xf32>
    %cst_14 = arith.constant 3.200000e+01 : f32
    %27 = vector.broadcast %cst_14 : f32 to vector<16x1xf32>
    %28 = arith.divf %26, %27 : vector<16x1xf32>
    %29 = vector.broadcast %28 : vector<16x1xf32> to vector<16x32xf32>
    %30 = arith.subf %13, %29 : vector<16x32xf32>
    %31 = arith.mulf %30, %30 : vector<16x32xf32>
    %cst_15 = arith.constant dense<0.000000e+00> : vector<16xf32>
    %32 = vector.multi_reduction <add>, %31, %cst_15 [1] : vector<16x32xf32> to vector<16xf32>
    %33 = vector.shape_cast %32 : vector<16xf32> to vector<16x1xf32>
    %cst_16 = arith.constant 3.200000e+01 : f32
    %34 = vector.broadcast %cst_16 : f32 to vector<16x1xf32>
    %35 = arith.divf %33, %34 : vector<16x1xf32>
    %36 = vector.broadcast %28 : vector<16x1xf32> to vector<16x32xf32>
    %37 = arith.subf %13, %36 : vector<16x32xf32>
    %cst_17 = arith.constant 9.99999974E-6 : f32
    %38 = vector.broadcast %cst_17 : f32 to vector<16x1xf32>
    %39 = arith.addf %35, %38 : vector<16x1xf32>
    %40 = math.rsqrt %39 : vector<16x1xf32>
    %41 = vector.broadcast %40 : vector<16x1xf32> to vector<16x32xf32>
    %42 = arith.mulf %37, %41 : vector<16x32xf32>
    %43 = vector.broadcast %22 : vector<1x32xf32> to vector<16x32xf32>
    %44 = arith.mulf %42, %43 : vector<16x32xf32>
    %45 = vector.broadcast %24 : vector<1x32xf32> to vector<16x32xf32>
    %46 = arith.addf %44, %45 : vector<16x32xf32>
    %cst_18 = arith.constant 0.000000e+00 : f32
    %47 = vector.broadcast %cst_18 : f32 to vector<16x32xf32>
    %c0_19 = arith.constant 0 : index
    %c0_20 = arith.constant 0 : index
    %c0_21 = arith.constant 0 : index
    %c0_22 = arith.constant 0 : index
    %48 = vector.load %arg6[%c0_19, %c0_20, %c0_21, %c0_22] : memref<2x4x32x8xf32, #tpu.memory_space<vmem>>, vector<1x1x32x8xf32>
    %49 = vector.shape_cast %48 : vector<1x1x32x8xf32> to vector<32x8xf32>
    %cst_23 = arith.constant dense<0.000000e+00> : vector<16x8xf32>
    %50 = tpu.matmul %46, %49, %cst_23 {dimension_numbers = #tpu.dot_dimension_numbers<[1], [0], [0], [1], [0, 0, 1, 1], [], []>} : vector<16x32xf32>, vector<32x8xf32>, vector<16x8xf32> -> vector<16x8xf32>
    %51 = vector.shape_cast %50 : vector<16x8xf32> to vector<2x8x8xf32>
    %c0_24 = arith.constant 0 : index
    %c0_25 = arith.constant 0 : index
    %c0_26 = arith.constant 0 : index
    %c0_27 = arith.constant 0 : index
    %52 = vector.load %arg7[%c0_24, %c0_25, %c0_26, %c0_27] : memref<2x4x32x8xf32, #tpu.memory_space<vmem>>, vector<1x1x32x8xf32>
    %53 = vector.shape_cast %52 : vector<1x1x32x8xf32> to vector<32x8xf32>
    %cst_28 = arith.constant dense<0.000000e+00> : vector<16x8xf32>
    %54 = tpu.matmul %46, %53, %cst_28 {dimension_numbers = #tpu.dot_dimension_numbers<[1], [0], [0], [1], [0, 0, 1, 1], [], []>} : vector<16x32xf32>, vector<32x8xf32>, vector<16x8xf32> -> vector<16x8xf32>
    %55 = vector.shape_cast %54 : vector<16x8xf32> to vector<2x8x8xf32>
    %c0_29 = arith.constant 0 : index
    %c0_30 = arith.constant 0 : index
    %c0_31 = arith.constant 0 : index
    %c0_32 = arith.constant 0 : index
    %56 = vector.load %arg8[%c0_29, %c0_30, %c0_31, %c0_32] : memref<2x4x32x8xf32, #tpu.memory_space<vmem>>, vector<1x1x32x8xf32>
    %57 = vector.shape_cast %56 : vector<1x1x32x8xf32> to vector<32x8xf32>
    %cst_33 = arith.constant dense<0.000000e+00> : vector<16x8xf32>
    %58 = tpu.matmul %46, %57, %cst_33 {dimension_numbers = #tpu.dot_dimension_numbers<[1], [0], [0], [1], [0, 0, 1, 1], [], []>} : vector<16x32xf32>, vector<32x8xf32>, vector<16x8xf32> -> vector<16x8xf32>
    %59 = vector.shape_cast %58 : vector<16x8xf32> to vector<2x8x8xf32>
    "tpu.trace_start"() <{level = 10 : i32, message = "btd,bsd->bts"}> : () -> ()
    %cst_34 = arith.constant dense<0.000000e+00> : vector<2x8x8xf32>
    %60 = tpu.matmul %51, %55, %cst_34 {dimension_numbers = #tpu.dot_dimension_numbers<[2], [2], [1], [1], [0, 0, 0, 1, 1, 1], [0], [0]>} : vector<2x8x8xf32>, vector<2x8x8xf32>, vector<2x8x8xf32> -> vector<2x8x8xf32>
    "tpu.trace_stop"() : () -> ()
    %cst_35 = arith.constant 0.176776692 : f32
    %61 = vector.broadcast %cst_35 : f32 to vector<2x8x8xf32>
    %62 = arith.mulf %60, %61 : vector<2x8x8xf32>
    %63 = vector.broadcast %20 : vector<1x8x8xf32> to vector<2x8x8xf32>
    %64 = arith.addf %62, %63 : vector<2x8x8xf32>
    %cst_36 = arith.constant dense<0xFF800000> : vector<2x8xf32>
    %65 = vector.multi_reduction <maximumf>, %64, %cst_36 [2] : vector<2x8x8xf32> to vector<2x8xf32>
    %66 = vector.shape_cast %65 : vector<2x8xf32> to vector<2x8x1xf32>
    %67 = vector.broadcast %66 : vector<2x8x1xf32> to vector<2x8x8xf32>
    %68 = arith.subf %64, %67 : vector<2x8x8xf32>
    %69 = math.exp %68 : vector<2x8x8xf32>
    %cst_37 = arith.constant dense<0.000000e+00> : vector<2x8xf32>
    %70 = vector.multi_reduction <add>, %69, %cst_37 [2] : vector<2x8x8xf32> to vector<2x8xf32>
    %71 = vector.shape_cast %70 : vector<2x8xf32> to vector<2x8x1xf32>
    %72 = vector.broadcast %71 : vector<2x8x1xf32> to vector<2x8x8xf32>
    %73 = arith.divf %69, %72 : vector<2x8x8xf32>
    "tpu.trace_start"() <{level = 10 : i32, message = "bts,bsd->btd"}> : () -> ()
    %cst_38 = arith.constant dense<0.000000e+00> : vector<2x8x8xf32>
    %74 = tpu.matmul %73, %59, %cst_38 {dimension_numbers = #tpu.dot_dimension_numbers<[2], [1], [1], [2], [0, 0, 0, 1, 1, 2], [0], [0]>} : vector<2x8x8xf32>, vector<2x8x8xf32>, vector<2x8x8xf32> -> vector<2x8x8xf32>
    "tpu.trace_stop"() : () -> ()
    %75 = vector.shape_cast %74 : vector<2x8x8xf32> to vector<16x8xf32>
    %c0_39 = arith.constant 0 : index
    %c0_40 = arith.constant 0 : index
    %c0_41 = arith.constant 0 : index
    %c0_42 = arith.constant 0 : index
    %76 = vector.load %arg9[%c0_39, %c0_40, %c0_41, %c0_42] : memref<2x4x8x32xf32, #tpu.memory_space<vmem>>, vector<1x1x8x32xf32>
    %77 = vector.shape_cast %76 : vector<1x1x8x32xf32> to vector<8x32xf32>
    %cst_43 = arith.constant dense<0.000000e+00> : vector<16x32xf32>
    %78 = tpu.matmul %75, %77, %cst_43 {dimension_numbers = #tpu.dot_dimension_numbers<[1], [0], [0], [1], [0, 0, 1, 1], [], []>} : vector<16x8xf32>, vector<8x32xf32>, vector<16x32xf32> -> vector<16x32xf32>
    %79 = arith.addf %47, %78 : vector<16x32xf32>
    %c0_44 = arith.constant 0 : index
    %c1 = arith.constant 1 : index
    %c0_45 = arith.constant 0 : index
    %c0_46 = arith.constant 0 : index
    %80 = vector.load %arg6[%c0_44, %c1, %c0_45, %c0_46] : memref<2x4x32x8xf32, #tpu.memory_space<vmem>>, vector<1x1x32x8xf32>
    %81 = vector.shape_cast %80 : vector<1x1x32x8xf32> to vector<32x8xf32>
    %cst_47 = arith.constant dense<0.000000e+00> : vector<16x8xf32>
    %82 = tpu.matmul %46, %81, %cst_47 {dimension_numbers = #tpu.dot_dimension_numbers<[1], [0], [0], [1], [0, 0, 1, 1], [], []>} : vector<16x32xf32>, vector<32x8xf32>, vector<16x8xf32> -> vector<16x8xf32>
    %83 = vector.shape_cast %82 : vector<16x8xf32> to vector<2x8x8xf32>
    %c0_48 = arith.constant 0 : index
    %c1_49 = arith.constant 1 : index
    %c0_50 = arith.constant 0 : index
    %c0_51 = arith.constant 0 : index
    %84 = vector.load %arg7[%c0_48, %c1_49, %c0_50, %c0_51] : memref<2x4x32x8xf32, #tpu.memory_space<vmem>>, vector<1x1x32x8xf32>
    %85 = vector.shape_cast %84 : vector<1x1x32x8xf32> to vector<32x8xf32>
    %cst_52 = arith.constant dense<0.000000e+00> : vector<16x8xf32>
    %86 = tpu.matmul %46, %85, %cst_52 {dimension_numbers = #tpu.dot_dimension_numbers<[1], [0], [0], [1], [0, 0, 1, 1], [], []>} : vector<16x32xf32>, vector<32x8xf32>, vector<16x8xf32> -> vector<16x8xf32>
    %87 = vector.shape_cast %86 : vector<16x8xf32> to vector<2x8x8xf32>
    %c0_53 = arith.constant 0 : index
    %c1_54 = arith.constant 1 : index
    %c0_55 = arith.constant 0 : index
    %c0_56 = arith.constant 0 : index
    %88 = vector.load %arg8[%c0_53, %c1_54, %c0_55, %c0_56] : memref<2x4x32x8xf32, #tpu.memory_space<vmem>>, vector<1x1x32x8xf32>
    %89 = vector.shape_cast %88 : vector<1x1x32x8xf32> to vector<32x8xf32>
    %cst_57 = arith.constant dense<0.000000e+00> : vector<16x8xf32>
    %90 = tpu.matmul %46, %89, %cst_57 {dimension_numbers = #tpu.dot_dimension_numbers<[1], [0], [0], [1], [0, 0, 1, 1], [], []>} : vector<16x32xf32>, vector<32x8xf32>, vector<16x8xf32> -> vector<16x8xf32>
    %91 = vector.shape_cast %90 : vector<16x8xf32> to vector<2x8x8xf32>
    "tpu.trace_start"() <{level = 10 : i32, message = "btd,bsd->bts"}> : () -> ()
    %cst_58 = arith.constant dense<0.000000e+00> : vector<2x8x8xf32>
    %92 = tpu.matmul %83, %87, %cst_58 {dimension_numbers = #tpu.dot_dimension_numbers<[2], [2], [1], [1], [0, 0, 0, 1, 1, 1], [0], [0]>} : vector<2x8x8xf32>, vector<2x8x8xf32>, vector<2x8x8xf32> -> vector<2x8x8xf32>
    "tpu.trace_stop"() : () -> ()
    %cst_59 = arith.constant 0.176776692 : f32
    %93 = vector.broadcast %cst_59 : f32 to vector<2x8x8xf32>
    %94 = arith.mulf %92, %93 : vector<2x8x8xf32>
    %95 = vector.broadcast %20 : vector<1x8x8xf32> to vector<2x8x8xf32>
    %96 = arith.addf %94, %95 : vector<2x8x8xf32>
    %cst_60 = arith.constant dense<0xFF800000> : vector<2x8xf32>
    %97 = vector.multi_reduction <maximumf>, %96, %cst_60 [2] : vector<2x8x8xf32> to vector<2x8xf32>
    %98 = vector.shape_cast %97 : vector<2x8xf32> to vector<2x8x1xf32>
    %99 = vector.broadcast %98 : vector<2x8x1xf32> to vector<2x8x8xf32>
    %100 = arith.subf %96, %99 : vector<2x8x8xf32>
    %101 = math.exp %100 : vector<2x8x8xf32>
    %cst_61 = arith.constant dense<0.000000e+00> : vector<2x8xf32>
    %102 = vector.multi_reduction <add>, %101, %cst_61 [2] : vector<2x8x8xf32> to vector<2x8xf32>
    %103 = vector.shape_cast %102 : vector<2x8xf32> to vector<2x8x1xf32>
    %104 = vector.broadcast %103 : vector<2x8x1xf32> to vector<2x8x8xf32>
    %105 = arith.divf %101, %104 : vector<2x8x8xf32>
    "tpu.trace_start"() <{level = 10 : i32, message = "bts,bsd->btd"}> : () -> ()
    %cst_62 = arith.constant dense<0.000000e+00> : vector<2x8x8xf32>
    %106 = tpu.matmul %105, %91, %cst_62 {dimension_numbers = #tpu.dot_dimension_numbers<[2], [1], [1], [2], [0, 0, 0, 1, 1, 2], [0], [0]>} : vector<2x8x8xf32>, vector<2x8x8xf32>, vector<2x8x8xf32> -> vector<2x8x8xf32>
    "tpu.trace_stop"() : () -> ()
    %107 = vector.shape_cast %106 : vector<2x8x8xf32> to vector<16x8xf32>
    %c0_63 = arith.constant 0 : index
    %c1_64 = arith.constant 1 : index
    %c0_65 = arith.constant 0 : index
    %c0_66 = arith.constant 0 : index
    %108 = vector.load %arg9[%c0_63, %c1_64, %c0_65, %c0_66] : memref<2x4x8x32xf32, #tpu.memory_space<vmem>>, vector<1x1x8x32xf32>
    %109 = vector.shape_cast %108 : vector<1x1x8x32xf32> to vector<8x32xf32>
    %cst_67 = arith.constant dense<0.000000e+00> : vector<16x32xf32>
    %110 = tpu.matmul %107, %109, %cst_67 {dimension_numbers = #tpu.dot_dimension_numbers<[1], [0], [0], [1], [0, 0, 1, 1], [], []>} : vector<16x8xf32>, vector<8x32xf32>, vector<16x32xf32> -> vector<16x32xf32>
    %111 = arith.addf %79, %110 : vector<16x32xf32>
    %c0_68 = arith.constant 0 : index
    %c2 = arith.constant 2 : index
    %c0_69 = arith.constant 0 : index
    %c0_70 = arith.constant 0 : index
    %112 = vector.load %arg6[%c0_68, %c2, %c0_69, %c0_70] : memref<2x4x32x8xf32, #tpu.memory_space<vmem>>, vector<1x1x32x8xf32>
    %113 = vector.shape_cast %112 : vector<1x1x32x8xf32> to vector<32x8xf32>
    %cst_71 = arith.constant dense<0.000000e+00> : vector<16x8xf32>
    %114 = tpu.matmul %46, %113, %cst_71 {dimension_numbers = #tpu.dot_dimension_numbers<[1], [0], [0], [1], [0, 0, 1, 1], [], []>} : vector<16x32xf32>, vector<32x8xf32>, vector<16x8xf32> -> vector<16x8xf32>
    %115 = vector.shape_cast %114 : vector<16x8xf32> to vector<2x8x8xf32>
    %c0_72 = arith.constant 0 : index
    %c2_73 = arith.constant 2 : index
    %c0_74 = arith.constant 0 : index
    %c0_75 = arith.constant 0 : index
    %116 = vector.load %arg7[%c0_72, %c2_73, %c0_74, %c0_75] : memref<2x4x32x8xf32, #tpu.memory_space<vmem>>, vector<1x1x32x8xf32>
    %117 = vector.shape_cast %116 : vector<1x1x32x8xf32> to vector<32x8xf32>
    %cst_76 = arith.constant dense<0.000000e+00> : vector<16x8xf32>
    %118 = tpu.matmul %46, %117, %cst_76 {dimension_numbers = #tpu.dot_dimension_numbers<[1], [0], [0], [1], [0, 0, 1, 1], [], []>} : vector<16x32xf32>, vector<32x8xf32>, vector<16x8xf32> -> vector<16x8xf32>
    %119 = vector.shape_cast %118 : vector<16x8xf32> to vector<2x8x8xf32>
    %c0_77 = arith.constant 0 : index
    %c2_78 = arith.constant 2 : index
    %c0_79 = arith.constant 0 : index
    %c0_80 = arith.constant 0 : index
    %120 = vector.load %arg8[%c0_77, %c2_78, %c0_79, %c0_80] : memref<2x4x32x8xf32, #tpu.memory_space<vmem>>, vector<1x1x32x8xf32>
    %121 = vector.shape_cast %120 : vector<1x1x32x8xf32> to vector<32x8xf32>
    %cst_81 = arith.constant dense<0.000000e+00> : vector<16x8xf32>
    %122 = tpu.matmul %46, %121, %cst_81 {dimension_numbers = #tpu.dot_dimension_numbers<[1], [0], [0], [1], [0, 0, 1, 1], [], []>} : vector<16x32xf32>, vector<32x8xf32>, vector<16x8xf32> -> vector<16x8xf32>
    %123 = vector.shape_cast %122 : vector<16x8xf32> to vector<2x8x8xf32>
    "tpu.trace_start"() <{level = 10 : i32, message = "btd,bsd->bts"}> : () -> ()
    %cst_82 = arith.constant dense<0.000000e+00> : vector<2x8x8xf32>
    %124 = tpu.matmul %115, %119, %cst_82 {dimension_numbers = #tpu.dot_dimension_numbers<[2], [2], [1], [1], [0, 0, 0, 1, 1, 1], [0], [0]>} : vector<2x8x8xf32>, vector<2x8x8xf32>, vector<2x8x8xf32> -> vector<2x8x8xf32>
    "tpu.trace_stop"() : () -> ()
    %cst_83 = arith.constant 0.176776692 : f32
    %125 = vector.broadcast %cst_83 : f32 to vector<2x8x8xf32>
    %126 = arith.mulf %124, %125 : vector<2x8x8xf32>
    %127 = vector.broadcast %20 : vector<1x8x8xf32> to vector<2x8x8xf32>
    %128 = arith.addf %126, %127 : vector<2x8x8xf32>
    %cst_84 = arith.constant dense<0xFF800000> : vector<2x8xf32>
    %129 = vector.multi_reduction <maximumf>, %128, %cst_84 [2] : vector<2x8x8xf32> to vector<2x8xf32>
    %130 = vector.shape_cast %129 : vector<2x8xf32> to vector<2x8x1xf32>
    %131 = vector.broadcast %130 : vector<2x8x1xf32> to vector<2x8x8xf32>
    %132 = arith.subf %128, %131 : vector<2x8x8xf32>
    %133 = math.exp %132 : vector<2x8x8xf32>
    %cst_85 = arith.constant dense<0.000000e+00> : vector<2x8xf32>
    %134 = vector.multi_reduction <add>, %133, %cst_85 [2] : vector<2x8x8xf32> to vector<2x8xf32>
    %135 = vector.shape_cast %134 : vector<2x8xf32> to vector<2x8x1xf32>
    %136 = vector.broadcast %135 : vector<2x8x1xf32> to vector<2x8x8xf32>
    %137 = arith.divf %133, %136 : vector<2x8x8xf32>
    "tpu.trace_start"() <{level = 10 : i32, message = "bts,bsd->btd"}> : () -> ()
    %cst_86 = arith.constant dense<0.000000e+00> : vector<2x8x8xf32>
    %138 = tpu.matmul %137, %123, %cst_86 {dimension_numbers = #tpu.dot_dimension_numbers<[2], [1], [1], [2], [0, 0, 0, 1, 1, 2], [0], [0]>} : vector<2x8x8xf32>, vector<2x8x8xf32>, vector<2x8x8xf32> -> vector<2x8x8xf32>
    "tpu.trace_stop"() : () -> ()
    %139 = vector.shape_cast %138 : vector<2x8x8xf32> to vector<16x8xf32>
    %c0_87 = arith.constant 0 : index
    %c2_88 = arith.constant 2 : index
    %c0_89 = arith.constant 0 : index
    %c0_90 = arith.constant 0 : index
    %140 = vector.load %arg9[%c0_87, %c2_88, %c0_89, %c0_90] : memref<2x4x8x32xf32, #tpu.memory_space<vmem>>, vector<1x1x8x32xf32>
    %141 = vector.shape_cast %140 : vector<1x1x8x32xf32> to vector<8x32xf32>
    %cst_91 = arith.constant dense<0.000000e+00> : vector<16x32xf32>
    %142 = tpu.matmul %139, %141, %cst_91 {dimension_numbers = #tpu.dot_dimension_numbers<[1], [0], [0], [1], [0, 0, 1, 1], [], []>} : vector<16x8xf32>, vector<8x32xf32>, vector<16x32xf32> -> vector<16x32xf32>
    %143 = arith.addf %111, %142 : vector<16x32xf32>
    %c0_92 = arith.constant 0 : index
    %c3 = arith.constant 3 : index
    %c0_93 = arith.constant 0 : index
    %c0_94 = arith.constant 0 : index
    %144 = vector.load %arg6[%c0_92, %c3, %c0_93, %c0_94] : memref<2x4x32x8xf32, #tpu.memory_space<vmem>>, vector<1x1x32x8xf32>
    %145 = vector.shape_cast %144 : vector<1x1x32x8xf32> to vector<32x8xf32>
    %cst_95 = arith.constant dense<0.000000e+00> : vector<16x8xf32>
    %146 = tpu.matmul %46, %145, %cst_95 {dimension_numbers = #tpu.dot_dimension_numbers<[1], [0], [0], [1], [0, 0, 1, 1], [], []>} : vector<16x32xf32>, vector<32x8xf32>, vector<16x8xf32> -> vector<16x8xf32>
    %147 = vector.shape_cast %146 : vector<16x8xf32> to vector<2x8x8xf32>
    %c0_96 = arith.constant 0 : index
    %c3_97 = arith.constant 3 : index
    %c0_98 = arith.constant 0 : index
    %c0_99 = arith.constant 0 : index
    %148 = vector.load %arg7[%c0_96, %c3_97, %c0_98, %c0_99] : memref<2x4x32x8xf32, #tpu.memory_space<vmem>>, vector<1x1x32x8xf32>
    %149 = vector.shape_cast %148 : vector<1x1x32x8xf32> to vector<32x8xf32>
    %cst_100 = arith.constant dense<0.000000e+00> : vector<16x8xf32>
    %150 = tpu.matmul %46, %149, %cst_100 {dimension_numbers = #tpu.dot_dimension_numbers<[1], [0], [0], [1], [0, 0, 1, 1], [], []>} : vector<16x32xf32>, vector<32x8xf32>, vector<16x8xf32> -> vector<16x8xf32>
    %151 = vector.shape_cast %150 : vector<16x8xf32> to vector<2x8x8xf32>
    %c0_101 = arith.constant 0 : index
    %c3_102 = arith.constant 3 : index
    %c0_103 = arith.constant 0 : index
    %c0_104 = arith.constant 0 : index
    %152 = vector.load %arg8[%c0_101, %c3_102, %c0_103, %c0_104] : memref<2x4x32x8xf32, #tpu.memory_space<vmem>>, vector<1x1x32x8xf32>
    %153 = vector.shape_cast %152 : vector<1x1x32x8xf32> to vector<32x8xf32>
    %cst_105 = arith.constant dense<0.000000e+00> : vector<16x8xf32>
    %154 = tpu.matmul %46, %153, %cst_105 {dimension_numbers = #tpu.dot_dimension_numbers<[1], [0], [0], [1], [0, 0, 1, 1], [], []>} : vector<16x32xf32>, vector<32x8xf32>, vector<16x8xf32> -> vector<16x8xf32>
    %155 = vector.shape_cast %154 : vector<16x8xf32> to vector<2x8x8xf32>
    "tpu.trace_start"() <{level = 10 : i32, message = "btd,bsd->bts"}> : () -> ()
    %cst_106 = arith.constant dense<0.000000e+00> : vector<2x8x8xf32>
    %156 = tpu.matmul %147, %151, %cst_106 {dimension_numbers = #tpu.dot_dimension_numbers<[2], [2], [1], [1], [0, 0, 0, 1, 1, 1], [0], [0]>} : vector<2x8x8xf32>, vector<2x8x8xf32>, vector<2x8x8xf32> -> vector<2x8x8xf32>
    "tpu.trace_stop"() : () -> ()
    %cst_107 = arith.constant 0.176776692 : f32
    %157 = vector.broadcast %cst_107 : f32 to vector<2x8x8xf32>
    %158 = arith.mulf %156, %157 : vector<2x8x8xf32>
    %159 = vector.broadcast %20 : vector<1x8x8xf32> to vector<2x8x8xf32>
    %160 = arith.addf %158, %159 : vector<2x8x8xf32>
    %cst_108 = arith.constant dense<0xFF800000> : vector<2x8xf32>
    %161 = vector.multi_reduction <maximumf>, %160, %cst_108 [2] : vector<2x8x8xf32> to vector<2x8xf32>
    %162 = vector.shape_cast %161 : vector<2x8xf32> to vector<2x8x1xf32>
    %163 = vector.broadcast %162 : vector<2x8x1xf32> to vector<2x8x8xf32>
    %164 = arith.subf %160, %163 : vector<2x8x8xf32>
    %165 = math.exp %164 : vector<2x8x8xf32>
    %cst_109 = arith.constant dense<0.000000e+00> : vector<2x8xf32>
    %166 = vector.multi_reduction <add>, %165, %cst_109 [2] : vector<2x8x8xf32> to vector<2x8xf32>
    %167 = vector.shape_cast %166 : vector<2x8xf32> to vector<2x8x1xf32>
    %168 = vector.broadcast %167 : vector<2x8x1xf32> to vector<2x8x8xf32>
    %169 = arith.divf %165, %168 : vector<2x8x8xf32>
    "tpu.trace_start"() <{level = 10 : i32, message = "bts,bsd->btd"}> : () -> ()
    %cst_110 = arith.constant dense<0.000000e+00> : vector<2x8x8xf32>
    %170 = tpu.matmul %169, %155, %cst_110 {dimension_numbers = #tpu.dot_dimension_numbers<[2], [1], [1], [2], [0, 0, 0, 1, 1, 2], [0], [0]>} : vector<2x8x8xf32>, vector<2x8x8xf32>, vector<2x8x8xf32> -> vector<2x8x8xf32>
    "tpu.trace_stop"() : () -> ()
    %171 = vector.shape_cast %170 : vector<2x8x8xf32> to vector<16x8xf32>
    %c0_111 = arith.constant 0 : index
    %c3_112 = arith.constant 3 : index
    %c0_113 = arith.constant 0 : index
    %c0_114 = arith.constant 0 : index
    %172 = vector.load %arg9[%c0_111, %c3_112, %c0_113, %c0_114] : memref<2x4x8x32xf32, #tpu.memory_space<vmem>>, vector<1x1x8x32xf32>
    %173 = vector.shape_cast %172 : vector<1x1x8x32xf32> to vector<8x32xf32>
    %cst_115 = arith.constant dense<0.000000e+00> : vector<16x32xf32>
    %174 = tpu.matmul %171, %173, %cst_115 {dimension_numbers = #tpu.dot_dimension_numbers<[1], [0], [0], [1], [0, 0, 1, 1], [], []>} : vector<16x8xf32>, vector<8x32xf32>, vector<16x32xf32> -> vector<16x32xf32>
    %175 = arith.addf %143, %174 : vector<16x32xf32>
    %176 = arith.addf %13, %175 : vector<16x32xf32>
    %c0_116 = arith.constant 0 : index
    %c0_117 = arith.constant 0 : index
    %c0_118 = arith.constant 0 : index
    %177 = vector.load %arg10[%c0_116, %c0_117, %c0_118] : memref<2x1x32xf32, #tpu.memory_space<vmem>>, vector<1x1x32xf32>
    %178 = vector.shape_cast %177 : vector<1x1x32xf32> to vector<1x32xf32>
    %179 = vector.broadcast %178 : vector<1x32xf32> to vector<16x32xf32>
    %180 = arith.addf %176, %179 : vector<16x32xf32>
    %c0_119 = arith.constant 0 : index
    %c0_120 = arith.constant 0 : index
    %c0_121 = arith.constant 0 : index
    %181 = vector.load %arg11[%c0_119, %c0_120, %c0_121] : memref<2x1x32xf32, #tpu.memory_space<vmem>>, vector<1x1x32xf32>
    %182 = vector.shape_cast %181 : vector<1x1x32xf32> to vector<1x32xf32>
    %c0_122 = arith.constant 0 : index
    %c0_123 = arith.constant 0 : index
    %c0_124 = arith.constant 0 : index
    %183 = vector.load %arg12[%c0_122, %c0_123, %c0_124] : memref<2x1x32xf32, #tpu.memory_space<vmem>>, vector<1x1x32xf32>
    %184 = vector.shape_cast %183 : vector<1x1x32xf32> to vector<1x32xf32>
    %cst_125 = arith.constant dense<0.000000e+00> : vector<16xf32>
    %185 = vector.multi_reduction <add>, %180, %cst_125 [1] : vector<16x32xf32> to vector<16xf32>
    %186 = vector.shape_cast %185 : vector<16xf32> to vector<16x1xf32>
    %cst_126 = arith.constant 3.200000e+01 : f32
    %187 = vector.broadcast %cst_126 : f32 to vector<16x1xf32>
    %188 = arith.divf %186, %187 : vector<16x1xf32>
    %189 = vector.broadcast %188 : vector<16x1xf32> to vector<16x32xf32>
    %190 = arith.subf %180, %189 : vector<16x32xf32>
    %191 = arith.mulf %190, %190 : vector<16x32xf32>
    %cst_127 = arith.constant dense<0.000000e+00> : vector<16xf32>
    %192 = vector.multi_reduction <add>, %191, %cst_127 [1] : vector<16x32xf32> to vector<16xf32>
    %193 = vector.shape_cast %192 : vector<16xf32> to vector<16x1xf32>
    %cst_128 = arith.constant 3.200000e+01 : f32
    %194 = vector.broadcast %cst_128 : f32 to vector<16x1xf32>
    %195 = arith.divf %193, %194 : vector<16x1xf32>
    %196 = vector.broadcast %188 : vector<16x1xf32> to vector<16x32xf32>
    %197 = arith.subf %180, %196 : vector<16x32xf32>
    %cst_129 = arith.constant 9.99999974E-6 : f32
    %198 = vector.broadcast %cst_129 : f32 to vector<16x1xf32>
    %199 = arith.addf %195, %198 : vector<16x1xf32>
    %200 = math.rsqrt %199 : vector<16x1xf32>
    %201 = vector.broadcast %200 : vector<16x1xf32> to vector<16x32xf32>
    %202 = arith.mulf %197, %201 : vector<16x32xf32>
    %203 = vector.broadcast %182 : vector<1x32xf32> to vector<16x32xf32>
    %204 = arith.mulf %202, %203 : vector<16x32xf32>
    %205 = vector.broadcast %184 : vector<1x32xf32> to vector<16x32xf32>
    %206 = arith.addf %204, %205 : vector<16x32xf32>
    %c0_130 = arith.constant 0 : index
    %c0_131 = arith.constant 0 : index
    %c0_132 = arith.constant 0 : index
    %207 = vector.load %arg13[%c0_130, %c0_131, %c0_132] : memref<2x32x128xf32, #tpu.memory_space<vmem>>, vector<1x32x128xf32>
    %208 = vector.shape_cast %207 : vector<1x32x128xf32> to vector<32x128xf32>
    %cst_133 = arith.constant dense<0.000000e+00> : vector<16x128xf32>
    %209 = tpu.matmul %206, %208, %cst_133 {dimension_numbers = #tpu.dot_dimension_numbers<[1], [0], [0], [1], [0, 0, 1, 1], [], []>} : vector<16x32xf32>, vector<32x128xf32>, vector<16x128xf32> -> vector<16x128xf32>
    %c0_134 = arith.constant 0 : index
    %c0_135 = arith.constant 0 : index
    %c0_136 = arith.constant 0 : index
    %210 = vector.load %arg14[%c0_134, %c0_135, %c0_136] : memref<2x1x128xf32, #tpu.memory_space<vmem>>, vector<1x1x128xf32>
    %211 = vector.shape_cast %210 : vector<1x1x128xf32> to vector<1x128xf32>
    %212 = vector.broadcast %211 : vector<1x128xf32> to vector<16x128xf32>
    %213 = arith.addf %209, %212 : vector<16x128xf32>
    %cst_137 = arith.constant 0.000000e+00 : f32
    %214 = vector.broadcast %cst_137 : f32 to vector<16x128xf32>
    %215 = arith.maximumf %213, %214 : vector<16x128xf32>
    %c0_138 = arith.constant 0 : index
    %c0_139 = arith.constant 0 : index
    %c0_140 = arith.constant 0 : index
    %216 = vector.load %arg15[%c0_138, %c0_139, %c0_140] : memref<2x128x32xf32, #tpu.memory_space<vmem>>, vector<1x128x32xf32>
    %217 = vector.shape_cast %216 : vector<1x128x32xf32> to vector<128x32xf32>
    %cst_141 = arith.constant dense<0.000000e+00> : vector<16x32xf32>
    %218 = tpu.matmul %215, %217, %cst_141 {dimension_numbers = #tpu.dot_dimension_numbers<[1], [0], [0], [1], [0, 0, 1, 1], [], []>} : vector<16x128xf32>, vector<128x32xf32>, vector<16x32xf32> -> vector<16x32xf32>
    %219 = arith.addf %180, %218 : vector<16x32xf32>
    %c0_142 = arith.constant 0 : index
    %c0_143 = arith.constant 0 : index
    %c0_144 = arith.constant 0 : index
    %220 = vector.load %arg16[%c0_142, %c0_143, %c0_144] : memref<2x1x32xf32, #tpu.memory_space<vmem>>, vector<1x1x32xf32>
    %221 = vector.shape_cast %220 : vector<1x1x32xf32> to vector<1x32xf32>
    %222 = vector.broadcast %221 : vector<1x32xf32> to vector<16x32xf32>
    %223 = arith.addf %219, %222 : vector<16x32xf32>
    %c1_145 = arith.constant 1 : index
    %c0_146 = arith.constant 0 : index
    %c0_147 = arith.constant 0 : index
    %224 = vector.load %arg4[%c1_145, %c0_146, %c0_147] : memref<2x1x32xf32, #tpu.memory_space<vmem>>, vector<1x1x32xf32>
    %225 = vector.shape_cast %224 : vector<1x1x32xf32> to vector<1x32xf32>
    %c1_148 = arith.constant 1 : index
    %c0_149 = arith.constant 0 : index
    %c0_150 = arith.constant 0 : index
    %226 = vector.load %arg5[%c1_148, %c0_149, %c0_150] : memref<2x1x32xf32, #tpu.memory_space<vmem>>, vector<1x1x32xf32>
    %227 = vector.shape_cast %226 : vector<1x1x32xf32> to vector<1x32xf32>
    %cst_151 = arith.constant dense<0.000000e+00> : vector<16xf32>
    %228 = vector.multi_reduction <add>, %223, %cst_151 [1] : vector<16x32xf32> to vector<16xf32>
    %229 = vector.shape_cast %228 : vector<16xf32> to vector<16x1xf32>
    %cst_152 = arith.constant 3.200000e+01 : f32
    %230 = vector.broadcast %cst_152 : f32 to vector<16x1xf32>
    %231 = arith.divf %229, %230 : vector<16x1xf32>
    %232 = vector.broadcast %231 : vector<16x1xf32> to vector<16x32xf32>
    %233 = arith.subf %223, %232 : vector<16x32xf32>
    %234 = arith.mulf %233, %233 : vector<16x32xf32>
    %cst_153 = arith.constant dense<0.000000e+00> : vector<16xf32>
    %235 = vector.multi_reduction <add>, %234, %cst_153 [1] : vector<16x32xf32> to vector<16xf32>
    %236 = vector.shape_cast %235 : vector<16xf32> to vector<16x1xf32>
    %cst_154 = arith.constant 3.200000e+01 : f32
    %237 = vector.broadcast %cst_154 : f32 to vector<16x1xf32>
    %238 = arith.divf %236, %237 : vector<16x1xf32>
    %239 = vector.broadcast %231 : vector<16x1xf32> to vector<16x32xf32>
    %240 = arith.subf %223, %239 : vector<16x32xf32>
    %cst_155 = arith.constant 9.99999974E-6 : f32
    %241 = vector.broadcast %cst_155 : f32 to vector<16x1xf32>
    %242 = arith.addf %238, %241 : vector<16x1xf32>
    %243 = math.rsqrt %242 : vector<16x1xf32>
    %244 = vector.broadcast %243 : vector<16x1xf32> to vector<16x32xf32>
    %245 = arith.mulf %240, %244 : vector<16x32xf32>
    %246 = vector.broadcast %225 : vector<1x32xf32> to vector<16x32xf32>
    %247 = arith.mulf %245, %246 : vector<16x32xf32>
    %248 = vector.broadcast %227 : vector<1x32xf32> to vector<16x32xf32>
    %249 = arith.addf %247, %248 : vector<16x32xf32>
    %cst_156 = arith.constant 0.000000e+00 : f32
    %250 = vector.broadcast %cst_156 : f32 to vector<16x32xf32>
    %c1_157 = arith.constant 1 : index
    %c0_158 = arith.constant 0 : index
    %c0_159 = arith.constant 0 : index
    %c0_160 = arith.constant 0 : index
    %251 = vector.load %arg6[%c1_157, %c0_158, %c0_159, %c0_160] : memref<2x4x32x8xf32, #tpu.memory_space<vmem>>, vector<1x1x32x8xf32>
    %252 = vector.shape_cast %251 : vector<1x1x32x8xf32> to vector<32x8xf32>
    %cst_161 = arith.constant dense<0.000000e+00> : vector<16x8xf32>
    %253 = tpu.matmul %249, %252, %cst_161 {dimension_numbers = #tpu.dot_dimension_numbers<[1], [0], [0], [1], [0, 0, 1, 1], [], []>} : vector<16x32xf32>, vector<32x8xf32>, vector<16x8xf32> -> vector<16x8xf32>
    %254 = vector.shape_cast %253 : vector<16x8xf32> to vector<2x8x8xf32>
    %c1_162 = arith.constant 1 : index
    %c0_163 = arith.constant 0 : index
    %c0_164 = arith.constant 0 : index
    %c0_165 = arith.constant 0 : index
    %255 = vector.load %arg7[%c1_162, %c0_163, %c0_164, %c0_165] : memref<2x4x32x8xf32, #tpu.memory_space<vmem>>, vector<1x1x32x8xf32>
    %256 = vector.shape_cast %255 : vector<1x1x32x8xf32> to vector<32x8xf32>
    %cst_166 = arith.constant dense<0.000000e+00> : vector<16x8xf32>
    %257 = tpu.matmul %249, %256, %cst_166 {dimension_numbers = #tpu.dot_dimension_numbers<[1], [0], [0], [1], [0, 0, 1, 1], [], []>} : vector<16x32xf32>, vector<32x8xf32>, vector<16x8xf32> -> vector<16x8xf32>
    %258 = vector.shape_cast %257 : vector<16x8xf32> to vector<2x8x8xf32>
    %c1_167 = arith.constant 1 : index
    %c0_168 = arith.constant 0 : index
    %c0_169 = arith.constant 0 : index
    %c0_170 = arith.constant 0 : index
    %259 = vector.load %arg8[%c1_167, %c0_168, %c0_169, %c0_170] : memref<2x4x32x8xf32, #tpu.memory_space<vmem>>, vector<1x1x32x8xf32>
    %260 = vector.shape_cast %259 : vector<1x1x32x8xf32> to vector<32x8xf32>
    %cst_171 = arith.constant dense<0.000000e+00> : vector<16x8xf32>
    %261 = tpu.matmul %249, %260, %cst_171 {dimension_numbers = #tpu.dot_dimension_numbers<[1], [0], [0], [1], [0, 0, 1, 1], [], []>} : vector<16x32xf32>, vector<32x8xf32>, vector<16x8xf32> -> vector<16x8xf32>
    %262 = vector.shape_cast %261 : vector<16x8xf32> to vector<2x8x8xf32>
    "tpu.trace_start"() <{level = 10 : i32, message = "btd,bsd->bts"}> : () -> ()
    %cst_172 = arith.constant dense<0.000000e+00> : vector<2x8x8xf32>
    %263 = tpu.matmul %254, %258, %cst_172 {dimension_numbers = #tpu.dot_dimension_numbers<[2], [2], [1], [1], [0, 0, 0, 1, 1, 1], [0], [0]>} : vector<2x8x8xf32>, vector<2x8x8xf32>, vector<2x8x8xf32> -> vector<2x8x8xf32>
    "tpu.trace_stop"() : () -> ()
    %cst_173 = arith.constant 0.176776692 : f32
    %264 = vector.broadcast %cst_173 : f32 to vector<2x8x8xf32>
    %265 = arith.mulf %263, %264 : vector<2x8x8xf32>
    %266 = vector.broadcast %20 : vector<1x8x8xf32> to vector<2x8x8xf32>
    %267 = arith.addf %265, %266 : vector<2x8x8xf32>
    %cst_174 = arith.constant dense<0xFF800000> : vector<2x8xf32>
    %268 = vector.multi_reduction <maximumf>, %267, %cst_174 [2] : vector<2x8x8xf32> to vector<2x8xf32>
    %269 = vector.shape_cast %268 : vector<2x8xf32> to vector<2x8x1xf32>
    %270 = vector.broadcast %269 : vector<2x8x1xf32> to vector<2x8x8xf32>
    %271 = arith.subf %267, %270 : vector<2x8x8xf32>
    %272 = math.exp %271 : vector<2x8x8xf32>
    %cst_175 = arith.constant dense<0.000000e+00> : vector<2x8xf32>
    %273 = vector.multi_reduction <add>, %272, %cst_175 [2] : vector<2x8x8xf32> to vector<2x8xf32>
    %274 = vector.shape_cast %273 : vector<2x8xf32> to vector<2x8x1xf32>
    %275 = vector.broadcast %274 : vector<2x8x1xf32> to vector<2x8x8xf32>
    %276 = arith.divf %272, %275 : vector<2x8x8xf32>
    "tpu.trace_start"() <{level = 10 : i32, message = "bts,bsd->btd"}> : () -> ()
    %cst_176 = arith.constant dense<0.000000e+00> : vector<2x8x8xf32>
    %277 = tpu.matmul %276, %262, %cst_176 {dimension_numbers = #tpu.dot_dimension_numbers<[2], [1], [1], [2], [0, 0, 0, 1, 1, 2], [0], [0]>} : vector<2x8x8xf32>, vector<2x8x8xf32>, vector<2x8x8xf32> -> vector<2x8x8xf32>
    "tpu.trace_stop"() : () -> ()
    %278 = vector.shape_cast %277 : vector<2x8x8xf32> to vector<16x8xf32>
    %c1_177 = arith.constant 1 : index
    %c0_178 = arith.constant 0 : index
    %c0_179 = arith.constant 0 : index
    %c0_180 = arith.constant 0 : index
    %279 = vector.load %arg9[%c1_177, %c0_178, %c0_179, %c0_180] : memref<2x4x8x32xf32, #tpu.memory_space<vmem>>, vector<1x1x8x32xf32>
    %280 = vector.shape_cast %279 : vector<1x1x8x32xf32> to vector<8x32xf32>
    %cst_181 = arith.constant dense<0.000000e+00> : vector<16x32xf32>
    %281 = tpu.matmul %278, %280, %cst_181 {dimension_numbers = #tpu.dot_dimension_numbers<[1], [0], [0], [1], [0, 0, 1, 1], [], []>} : vector<16x8xf32>, vector<8x32xf32>, vector<16x32xf32> -> vector<16x32xf32>
    %282 = arith.addf %250, %281 : vector<16x32xf32>
    %c1_182 = arith.constant 1 : index
    %c1_183 = arith.constant 1 : index
    %c0_184 = arith.constant 0 : index
    %c0_185 = arith.constant 0 : index
    %283 = vector.load %arg6[%c1_182, %c1_183, %c0_184, %c0_185] : memref<2x4x32x8xf32, #tpu.memory_space<vmem>>, vector<1x1x32x8xf32>
    %284 = vector.shape_cast %283 : vector<1x1x32x8xf32> to vector<32x8xf32>
    %cst_186 = arith.constant dense<0.000000e+00> : vector<16x8xf32>
    %285 = tpu.matmul %249, %284, %cst_186 {dimension_numbers = #tpu.dot_dimension_numbers<[1], [0], [0], [1], [0, 0, 1, 1], [], []>} : vector<16x32xf32>, vector<32x8xf32>, vector<16x8xf32> -> vector<16x8xf32>
    %286 = vector.shape_cast %285 : vector<16x8xf32> to vector<2x8x8xf32>
    %c1_187 = arith.constant 1 : index
    %c1_188 = arith.constant 1 : index
    %c0_189 = arith.constant 0 : index
    %c0_190 = arith.constant 0 : index
    %287 = vector.load %arg7[%c1_187, %c1_188, %c0_189, %c0_190] : memref<2x4x32x8xf32, #tpu.memory_space<vmem>>, vector<1x1x32x8xf32>
    %288 = vector.shape_cast %287 : vector<1x1x32x8xf32> to vector<32x8xf32>
    %cst_191 = arith.constant dense<0.000000e+00> : vector<16x8xf32>
    %289 = tpu.matmul %249, %288, %cst_191 {dimension_numbers = #tpu.dot_dimension_numbers<[1], [0], [0], [1], [0, 0, 1, 1], [], []>} : vector<16x32xf32>, vector<32x8xf32>, vector<16x8xf32> -> vector<16x8xf32>
    %290 = vector.shape_cast %289 : vector<16x8xf32> to vector<2x8x8xf32>
    %c1_192 = arith.constant 1 : index
    %c1_193 = arith.constant 1 : index
    %c0_194 = arith.constant 0 : index
    %c0_195 = arith.constant 0 : index
    %291 = vector.load %arg8[%c1_192, %c1_193, %c0_194, %c0_195] : memref<2x4x32x8xf32, #tpu.memory_space<vmem>>, vector<1x1x32x8xf32>
    %292 = vector.shape_cast %291 : vector<1x1x32x8xf32> to vector<32x8xf32>
    %cst_196 = arith.constant dense<0.000000e+00> : vector<16x8xf32>
    %293 = tpu.matmul %249, %292, %cst_196 {dimension_numbers = #tpu.dot_dimension_numbers<[1], [0], [0], [1], [0, 0, 1, 1], [], []>} : vector<16x32xf32>, vector<32x8xf32>, vector<16x8xf32> -> vector<16x8xf32>
    %294 = vector.shape_cast %293 : vector<16x8xf32> to vector<2x8x8xf32>
    "tpu.trace_start"() <{level = 10 : i32, message = "btd,bsd->bts"}> : () -> ()
    %cst_197 = arith.constant dense<0.000000e+00> : vector<2x8x8xf32>
    %295 = tpu.matmul %286, %290, %cst_197 {dimension_numbers = #tpu.dot_dimension_numbers<[2], [2], [1], [1], [0, 0, 0, 1, 1, 1], [0], [0]>} : vector<2x8x8xf32>, vector<2x8x8xf32>, vector<2x8x8xf32> -> vector<2x8x8xf32>
    "tpu.trace_stop"() : () -> ()
    %cst_198 = arith.constant 0.176776692 : f32
    %296 = vector.broadcast %cst_198 : f32 to vector<2x8x8xf32>
    %297 = arith.mulf %295, %296 : vector<2x8x8xf32>
    %298 = vector.broadcast %20 : vector<1x8x8xf32> to vector<2x8x8xf32>
    %299 = arith.addf %297, %298 : vector<2x8x8xf32>
    %cst_199 = arith.constant dense<0xFF800000> : vector<2x8xf32>
    %300 = vector.multi_reduction <maximumf>, %299, %cst_199 [2] : vector<2x8x8xf32> to vector<2x8xf32>
    %301 = vector.shape_cast %300 : vector<2x8xf32> to vector<2x8x1xf32>
    %302 = vector.broadcast %301 : vector<2x8x1xf32> to vector<2x8x8xf32>
    %303 = arith.subf %299, %302 : vector<2x8x8xf32>
    %304 = math.exp %303 : vector<2x8x8xf32>
    %cst_200 = arith.constant dense<0.000000e+00> : vector<2x8xf32>
    %305 = vector.multi_reduction <add>, %304, %cst_200 [2] : vector<2x8x8xf32> to vector<2x8xf32>
    %306 = vector.shape_cast %305 : vector<2x8xf32> to vector<2x8x1xf32>
    %307 = vector.broadcast %306 : vector<2x8x1xf32> to vector<2x8x8xf32>
    %308 = arith.divf %304, %307 : vector<2x8x8xf32>
    "tpu.trace_start"() <{level = 10 : i32, message = "bts,bsd->btd"}> : () -> ()
    %cst_201 = arith.constant dense<0.000000e+00> : vector<2x8x8xf32>
    %309 = tpu.matmul %308, %294, %cst_201 {dimension_numbers = #tpu.dot_dimension_numbers<[2], [1], [1], [2], [0, 0, 0, 1, 1, 2], [0], [0]>} : vector<2x8x8xf32>, vector<2x8x8xf32>, vector<2x8x8xf32> -> vector<2x8x8xf32>
    "tpu.trace_stop"() : () -> ()
    %310 = vector.shape_cast %309 : vector<2x8x8xf32> to vector<16x8xf32>
    %c1_202 = arith.constant 1 : index
    %c1_203 = arith.constant 1 : index
    %c0_204 = arith.constant 0 : index
    %c0_205 = arith.constant 0 : index
    %311 = vector.load %arg9[%c1_202, %c1_203, %c0_204, %c0_205] : memref<2x4x8x32xf32, #tpu.memory_space<vmem>>, vector<1x1x8x32xf32>
    %312 = vector.shape_cast %311 : vector<1x1x8x32xf32> to vector<8x32xf32>
    %cst_206 = arith.constant dense<0.000000e+00> : vector<16x32xf32>
    %313 = tpu.matmul %310, %312, %cst_206 {dimension_numbers = #tpu.dot_dimension_numbers<[1], [0], [0], [1], [0, 0, 1, 1], [], []>} : vector<16x8xf32>, vector<8x32xf32>, vector<16x32xf32> -> vector<16x32xf32>
    %314 = arith.addf %282, %313 : vector<16x32xf32>
    %c1_207 = arith.constant 1 : index
    %c2_208 = arith.constant 2 : index
    %c0_209 = arith.constant 0 : index
    %c0_210 = arith.constant 0 : index
    %315 = vector.load %arg6[%c1_207, %c2_208, %c0_209, %c0_210] : memref<2x4x32x8xf32, #tpu.memory_space<vmem>>, vector<1x1x32x8xf32>
    %316 = vector.shape_cast %315 : vector<1x1x32x8xf32> to vector<32x8xf32>
    %cst_211 = arith.constant dense<0.000000e+00> : vector<16x8xf32>
    %317 = tpu.matmul %249, %316, %cst_211 {dimension_numbers = #tpu.dot_dimension_numbers<[1], [0], [0], [1], [0, 0, 1, 1], [], []>} : vector<16x32xf32>, vector<32x8xf32>, vector<16x8xf32> -> vector<16x8xf32>
    %318 = vector.shape_cast %317 : vector<16x8xf32> to vector<2x8x8xf32>
    %c1_212 = arith.constant 1 : index
    %c2_213 = arith.constant 2 : index
    %c0_214 = arith.constant 0 : index
    %c0_215 = arith.constant 0 : index
    %319 = vector.load %arg7[%c1_212, %c2_213, %c0_214, %c0_215] : memref<2x4x32x8xf32, #tpu.memory_space<vmem>>, vector<1x1x32x8xf32>
    %320 = vector.shape_cast %319 : vector<1x1x32x8xf32> to vector<32x8xf32>
    %cst_216 = arith.constant dense<0.000000e+00> : vector<16x8xf32>
    %321 = tpu.matmul %249, %320, %cst_216 {dimension_numbers = #tpu.dot_dimension_numbers<[1], [0], [0], [1], [0, 0, 1, 1], [], []>} : vector<16x32xf32>, vector<32x8xf32>, vector<16x8xf32> -> vector<16x8xf32>
    %322 = vector.shape_cast %321 : vector<16x8xf32> to vector<2x8x8xf32>
    %c1_217 = arith.constant 1 : index
    %c2_218 = arith.constant 2 : index
    %c0_219 = arith.constant 0 : index
    %c0_220 = arith.constant 0 : index
    %323 = vector.load %arg8[%c1_217, %c2_218, %c0_219, %c0_220] : memref<2x4x32x8xf32, #tpu.memory_space<vmem>>, vector<1x1x32x8xf32>
    %324 = vector.shape_cast %323 : vector<1x1x32x8xf32> to vector<32x8xf32>
    %cst_221 = arith.constant dense<0.000000e+00> : vector<16x8xf32>
    %325 = tpu.matmul %249, %324, %cst_221 {dimension_numbers = #tpu.dot_dimension_numbers<[1], [0], [0], [1], [0, 0, 1, 1], [], []>} : vector<16x32xf32>, vector<32x8xf32>, vector<16x8xf32> -> vector<16x8xf32>
    %326 = vector.shape_cast %325 : vector<16x8xf32> to vector<2x8x8xf32>
    "tpu.trace_start"() <{level = 10 : i32, message = "btd,bsd->bts"}> : () -> ()
    %cst_222 = arith.constant dense<0.000000e+00> : vector<2x8x8xf32>
    %327 = tpu.matmul %318, %322, %cst_222 {dimension_numbers = #tpu.dot_dimension_numbers<[2], [2], [1], [1], [0, 0, 0, 1, 1, 1], [0], [0]>} : vector<2x8x8xf32>, vector<2x8x8xf32>, vector<2x8x8xf32> -> vector<2x8x8xf32>
    "tpu.trace_stop"() : () -> ()
    %cst_223 = arith.constant 0.176776692 : f32
    %328 = vector.broadcast %cst_223 : f32 to vector<2x8x8xf32>
    %329 = arith.mulf %327, %328 : vector<2x8x8xf32>
    %330 = vector.broadcast %20 : vector<1x8x8xf32> to vector<2x8x8xf32>
    %331 = arith.addf %329, %330 : vector<2x8x8xf32>
    %cst_224 = arith.constant dense<0xFF800000> : vector<2x8xf32>
    %332 = vector.multi_reduction <maximumf>, %331, %cst_224 [2] : vector<2x8x8xf32> to vector<2x8xf32>
    %333 = vector.shape_cast %332 : vector<2x8xf32> to vector<2x8x1xf32>
    %334 = vector.broadcast %333 : vector<2x8x1xf32> to vector<2x8x8xf32>
    %335 = arith.subf %331, %334 : vector<2x8x8xf32>
    %336 = math.exp %335 : vector<2x8x8xf32>
    %cst_225 = arith.constant dense<0.000000e+00> : vector<2x8xf32>
    %337 = vector.multi_reduction <add>, %336, %cst_225 [2] : vector<2x8x8xf32> to vector<2x8xf32>
    %338 = vector.shape_cast %337 : vector<2x8xf32> to vector<2x8x1xf32>
    %339 = vector.broadcast %338 : vector<2x8x1xf32> to vector<2x8x8xf32>
    %340 = arith.divf %336, %339 : vector<2x8x8xf32>
    "tpu.trace_start"() <{level = 10 : i32, message = "bts,bsd->btd"}> : () -> ()
    %cst_226 = arith.constant dense<0.000000e+00> : vector<2x8x8xf32>
    %341 = tpu.matmul %340, %326, %cst_226 {dimension_numbers = #tpu.dot_dimension_numbers<[2], [1], [1], [2], [0, 0, 0, 1, 1, 2], [0], [0]>} : vector<2x8x8xf32>, vector<2x8x8xf32>, vector<2x8x8xf32> -> vector<2x8x8xf32>
    "tpu.trace_stop"() : () -> ()
    %342 = vector.shape_cast %341 : vector<2x8x8xf32> to vector<16x8xf32>
    %c1_227 = arith.constant 1 : index
    %c2_228 = arith.constant 2 : index
    %c0_229 = arith.constant 0 : index
    %c0_230 = arith.constant 0 : index
    %343 = vector.load %arg9[%c1_227, %c2_228, %c0_229, %c0_230] : memref<2x4x8x32xf32, #tpu.memory_space<vmem>>, vector<1x1x8x32xf32>
    %344 = vector.shape_cast %343 : vector<1x1x8x32xf32> to vector<8x32xf32>
    %cst_231 = arith.constant dense<0.000000e+00> : vector<16x32xf32>
    %345 = tpu.matmul %342, %344, %cst_231 {dimension_numbers = #tpu.dot_dimension_numbers<[1], [0], [0], [1], [0, 0, 1, 1], [], []>} : vector<16x8xf32>, vector<8x32xf32>, vector<16x32xf32> -> vector<16x32xf32>
    %346 = arith.addf %314, %345 : vector<16x32xf32>
    %c1_232 = arith.constant 1 : index
    %c3_233 = arith.constant 3 : index
    %c0_234 = arith.constant 0 : index
    %c0_235 = arith.constant 0 : index
    %347 = vector.load %arg6[%c1_232, %c3_233, %c0_234, %c0_235] : memref<2x4x32x8xf32, #tpu.memory_space<vmem>>, vector<1x1x32x8xf32>
    %348 = vector.shape_cast %347 : vector<1x1x32x8xf32> to vector<32x8xf32>
    %cst_236 = arith.constant dense<0.000000e+00> : vector<16x8xf32>
    %349 = tpu.matmul %249, %348, %cst_236 {dimension_numbers = #tpu.dot_dimension_numbers<[1], [0], [0], [1], [0, 0, 1, 1], [], []>} : vector<16x32xf32>, vector<32x8xf32>, vector<16x8xf32> -> vector<16x8xf32>
    %350 = vector.shape_cast %349 : vector<16x8xf32> to vector<2x8x8xf32>
    %c1_237 = arith.constant 1 : index
    %c3_238 = arith.constant 3 : index
    %c0_239 = arith.constant 0 : index
    %c0_240 = arith.constant 0 : index
    %351 = vector.load %arg7[%c1_237, %c3_238, %c0_239, %c0_240] : memref<2x4x32x8xf32, #tpu.memory_space<vmem>>, vector<1x1x32x8xf32>
    %352 = vector.shape_cast %351 : vector<1x1x32x8xf32> to vector<32x8xf32>
    %cst_241 = arith.constant dense<0.000000e+00> : vector<16x8xf32>
    %353 = tpu.matmul %249, %352, %cst_241 {dimension_numbers = #tpu.dot_dimension_numbers<[1], [0], [0], [1], [0, 0, 1, 1], [], []>} : vector<16x32xf32>, vector<32x8xf32>, vector<16x8xf32> -> vector<16x8xf32>
    %354 = vector.shape_cast %353 : vector<16x8xf32> to vector<2x8x8xf32>
    %c1_242 = arith.constant 1 : index
    %c3_243 = arith.constant 3 : index
    %c0_244 = arith.constant 0 : index
    %c0_245 = arith.constant 0 : index
    %355 = vector.load %arg8[%c1_242, %c3_243, %c0_244, %c0_245] : memref<2x4x32x8xf32, #tpu.memory_space<vmem>>, vector<1x1x32x8xf32>
    %356 = vector.shape_cast %355 : vector<1x1x32x8xf32> to vector<32x8xf32>
    %cst_246 = arith.constant dense<0.000000e+00> : vector<16x8xf32>
    %357 = tpu.matmul %249, %356, %cst_246 {dimension_numbers = #tpu.dot_dimension_numbers<[1], [0], [0], [1], [0, 0, 1, 1], [], []>} : vector<16x32xf32>, vector<32x8xf32>, vector<16x8xf32> -> vector<16x8xf32>
    %358 = vector.shape_cast %357 : vector<16x8xf32> to vector<2x8x8xf32>
    "tpu.trace_start"() <{level = 10 : i32, message = "btd,bsd->bts"}> : () -> ()
    %cst_247 = arith.constant dense<0.000000e+00> : vector<2x8x8xf32>
    %359 = tpu.matmul %350, %354, %cst_247 {dimension_numbers = #tpu.dot_dimension_numbers<[2], [2], [1], [1], [0, 0, 0, 1, 1, 1], [0], [0]>} : vector<2x8x8xf32>, vector<2x8x8xf32>, vector<2x8x8xf32> -> vector<2x8x8xf32>
    "tpu.trace_stop"() : () -> ()
    %cst_248 = arith.constant 0.176776692 : f32
    %360 = vector.broadcast %cst_248 : f32 to vector<2x8x8xf32>
    %361 = arith.mulf %359, %360 : vector<2x8x8xf32>
    %362 = vector.broadcast %20 : vector<1x8x8xf32> to vector<2x8x8xf32>
    %363 = arith.addf %361, %362 : vector<2x8x8xf32>
    %cst_249 = arith.constant dense<0xFF800000> : vector<2x8xf32>
    %364 = vector.multi_reduction <maximumf>, %363, %cst_249 [2] : vector<2x8x8xf32> to vector<2x8xf32>
    %365 = vector.shape_cast %364 : vector<2x8xf32> to vector<2x8x1xf32>
    %366 = vector.broadcast %365 : vector<2x8x1xf32> to vector<2x8x8xf32>
    %367 = arith.subf %363, %366 : vector<2x8x8xf32>
    %368 = math.exp %367 : vector<2x8x8xf32>
    %cst_250 = arith.constant dense<0.000000e+00> : vector<2x8xf32>
    %369 = vector.multi_reduction <add>, %368, %cst_250 [2] : vector<2x8x8xf32> to vector<2x8xf32>
    %370 = vector.shape_cast %369 : vector<2x8xf32> to vector<2x8x1xf32>
    %371 = vector.broadcast %370 : vector<2x8x1xf32> to vector<2x8x8xf32>
    %372 = arith.divf %368, %371 : vector<2x8x8xf32>
    "tpu.trace_start"() <{level = 10 : i32, message = "bts,bsd->btd"}> : () -> ()
    %cst_251 = arith.constant dense<0.000000e+00> : vector<2x8x8xf32>
    %373 = tpu.matmul %372, %358, %cst_251 {dimension_numbers = #tpu.dot_dimension_numbers<[2], [1], [1], [2], [0, 0, 0, 1, 1, 2], [0], [0]>} : vector<2x8x8xf32>, vector<2x8x8xf32>, vector<2x8x8xf32> -> vector<2x8x8xf32>
    "tpu.trace_stop"() : () -> ()
    %374 = vector.shape_cast %373 : vector<2x8x8xf32> to vector<16x8xf32>
    %c1_252 = arith.constant 1 : index
    %c3_253 = arith.constant 3 : index
    %c0_254 = arith.constant 0 : index
    %c0_255 = arith.constant 0 : index
    %375 = vector.load %arg9[%c1_252, %c3_253, %c0_254, %c0_255] : memref<2x4x8x32xf32, #tpu.memory_space<vmem>>, vector<1x1x8x32xf32>
    %376 = vector.shape_cast %375 : vector<1x1x8x32xf32> to vector<8x32xf32>
    %cst_256 = arith.constant dense<0.000000e+00> : vector<16x32xf32>
    %377 = tpu.matmul %374, %376, %cst_256 {dimension_numbers = #tpu.dot_dimension_numbers<[1], [0], [0], [1], [0, 0, 1, 1], [], []>} : vector<16x8xf32>, vector<8x32xf32>, vector<16x32xf32> -> vector<16x32xf32>
    %378 = arith.addf %346, %377 : vector<16x32xf32>
    %379 = arith.addf %223, %378 : vector<16x32xf32>
    %c1_257 = arith.constant 1 : index
    %c0_258 = arith.constant 0 : index
    %c0_259 = arith.constant 0 : index
    %380 = vector.load %arg10[%c1_257, %c0_258, %c0_259] : memref<2x1x32xf32, #tpu.memory_space<vmem>>, vector<1x1x32xf32>
    %381 = vector.shape_cast %380 : vector<1x1x32xf32> to vector<1x32xf32>
    %382 = vector.broadcast %381 : vector<1x32xf32> to vector<16x32xf32>
    %383 = arith.addf %379, %382 : vector<16x32xf32>
    %c1_260 = arith.constant 1 : index
    %c0_261 = arith.constant 0 : index
    %c0_262 = arith.constant 0 : index
    %384 = vector.load %arg11[%c1_260, %c0_261, %c0_262] : memref<2x1x32xf32, #tpu.memory_space<vmem>>, vector<1x1x32xf32>
    %385 = vector.shape_cast %384 : vector<1x1x32xf32> to vector<1x32xf32>
    %c1_263 = arith.constant 1 : index
    %c0_264 = arith.constant 0 : index
    %c0_265 = arith.constant 0 : index
    %386 = vector.load %arg12[%c1_263, %c0_264, %c0_265] : memref<2x1x32xf32, #tpu.memory_space<vmem>>, vector<1x1x32xf32>
    %387 = vector.shape_cast %386 : vector<1x1x32xf32> to vector<1x32xf32>
    %cst_266 = arith.constant dense<0.000000e+00> : vector<16xf32>
    %388 = vector.multi_reduction <add>, %383, %cst_266 [1] : vector<16x32xf32> to vector<16xf32>
    %389 = vector.shape_cast %388 : vector<16xf32> to vector<16x1xf32>
    %cst_267 = arith.constant 3.200000e+01 : f32
    %390 = vector.broadcast %cst_267 : f32 to vector<16x1xf32>
    %391 = arith.divf %389, %390 : vector<16x1xf32>
    %392 = vector.broadcast %391 : vector<16x1xf32> to vector<16x32xf32>
    %393 = arith.subf %383, %392 : vector<16x32xf32>
    %394 = arith.mulf %393, %393 : vector<16x32xf32>
    %cst_268 = arith.constant dense<0.000000e+00> : vector<16xf32>
    %395 = vector.multi_reduction <add>, %394, %cst_268 [1] : vector<16x32xf32> to vector<16xf32>
    %396 = vector.shape_cast %395 : vector<16xf32> to vector<16x1xf32>
    %cst_269 = arith.constant 3.200000e+01 : f32
    %397 = vector.broadcast %cst_269 : f32 to vector<16x1xf32>
    %398 = arith.divf %396, %397 : vector<16x1xf32>
    %399 = vector.broadcast %391 : vector<16x1xf32> to vector<16x32xf32>
    %400 = arith.subf %383, %399 : vector<16x32xf32>
    %cst_270 = arith.constant 9.99999974E-6 : f32
    %401 = vector.broadcast %cst_270 : f32 to vector<16x1xf32>
    %402 = arith.addf %398, %401 : vector<16x1xf32>
    %403 = math.rsqrt %402 : vector<16x1xf32>
    %404 = vector.broadcast %403 : vector<16x1xf32> to vector<16x32xf32>
    %405 = arith.mulf %400, %404 : vector<16x32xf32>
    %406 = vector.broadcast %385 : vector<1x32xf32> to vector<16x32xf32>
    %407 = arith.mulf %405, %406 : vector<16x32xf32>
    %408 = vector.broadcast %387 : vector<1x32xf32> to vector<16x32xf32>
    %409 = arith.addf %407, %408 : vector<16x32xf32>
    %c1_271 = arith.constant 1 : index
    %c0_272 = arith.constant 0 : index
    %c0_273 = arith.constant 0 : index
    %410 = vector.load %arg13[%c1_271, %c0_272, %c0_273] : memref<2x32x128xf32, #tpu.memory_space<vmem>>, vector<1x32x128xf32>
    %411 = vector.shape_cast %410 : vector<1x32x128xf32> to vector<32x128xf32>
    %cst_274 = arith.constant dense<0.000000e+00> : vector<16x128xf32>
    %412 = tpu.matmul %409, %411, %cst_274 {dimension_numbers = #tpu.dot_dimension_numbers<[1], [0], [0], [1], [0, 0, 1, 1], [], []>} : vector<16x32xf32>, vector<32x128xf32>, vector<16x128xf32> -> vector<16x128xf32>
    %c1_275 = arith.constant 1 : index
    %c0_276 = arith.constant 0 : index
    %c0_277 = arith.constant 0 : index
    %413 = vector.load %arg14[%c1_275, %c0_276, %c0_277] : memref<2x1x128xf32, #tpu.memory_space<vmem>>, vector<1x1x128xf32>
    %414 = vector.shape_cast %413 : vector<1x1x128xf32> to vector<1x128xf32>
    %415 = vector.broadcast %414 : vector<1x128xf32> to vector<16x128xf32>
    %416 = arith.addf %412, %415 : vector<16x128xf32>
    %cst_278 = arith.constant 0.000000e+00 : f32
    %417 = vector.broadcast %cst_278 : f32 to vector<16x128xf32>
    %418 = arith.maximumf %416, %417 : vector<16x128xf32>
    %c1_279 = arith.constant 1 : index
    %c0_280 = arith.constant 0 : index
    %c0_281 = arith.constant 0 : index
    %419 = vector.load %arg15[%c1_279, %c0_280, %c0_281] : memref<2x128x32xf32, #tpu.memory_space<vmem>>, vector<1x128x32xf32>
    %420 = vector.shape_cast %419 : vector<1x128x32xf32> to vector<128x32xf32>
    %cst_282 = arith.constant dense<0.000000e+00> : vector<16x32xf32>
    %421 = tpu.matmul %418, %420, %cst_282 {dimension_numbers = #tpu.dot_dimension_numbers<[1], [0], [0], [1], [0, 0, 1, 1], [], []>} : vector<16x128xf32>, vector<128x32xf32>, vector<16x32xf32> -> vector<16x32xf32>
    %422 = arith.addf %383, %421 : vector<16x32xf32>
    %c1_283 = arith.constant 1 : index
    %c0_284 = arith.constant 0 : index
    %c0_285 = arith.constant 0 : index
    %423 = vector.load %arg16[%c1_283, %c0_284, %c0_285] : memref<2x1x32xf32, #tpu.memory_space<vmem>>, vector<1x1x32xf32>
    %424 = vector.shape_cast %423 : vector<1x1x32xf32> to vector<1x32xf32>
    %425 = vector.broadcast %424 : vector<1x32xf32> to vector<16x32xf32>
    %426 = arith.addf %422, %425 : vector<16x32xf32>
    %c0_286 = arith.constant 0 : index
    %c0_287 = arith.constant 0 : index
    %427 = vector.load %arg17[%c0_286, %c0_287] : memref<1x32xf32, #tpu.memory_space<vmem>>, vector<1x32xf32>
    %c0_288 = arith.constant 0 : index
    %c0_289 = arith.constant 0 : index
    %428 = vector.load %arg18[%c0_288, %c0_289] : memref<1x32xf32, #tpu.memory_space<vmem>>, vector<1x32xf32>
    %cst_290 = arith.constant dense<0.000000e+00> : vector<16xf32>
    %429 = vector.multi_reduction <add>, %426, %cst_290 [1] : vector<16x32xf32> to vector<16xf32>
    %430 = vector.shape_cast %429 : vector<16xf32> to vector<16x1xf32>
    %cst_291 = arith.constant 3.200000e+01 : f32
    %431 = vector.broadcast %cst_291 : f32 to vector<16x1xf32>
    %432 = arith.divf %430, %431 : vector<16x1xf32>
    %433 = vector.broadcast %432 : vector<16x1xf32> to vector<16x32xf32>
    %434 = arith.subf %426, %433 : vector<16x32xf32>
    %435 = arith.mulf %434, %434 : vector<16x32xf32>
    %cst_292 = arith.constant dense<0.000000e+00> : vector<16xf32>
    %436 = vector.multi_reduction <add>, %435, %cst_292 [1] : vector<16x32xf32> to vector<16xf32>
    %437 = vector.shape_cast %436 : vector<16xf32> to vector<16x1xf32>
    %cst_293 = arith.constant 3.200000e+01 : f32
    %438 = vector.broadcast %cst_293 : f32 to vector<16x1xf32>
    %439 = arith.divf %437, %438 : vector<16x1xf32>
    %440 = vector.broadcast %432 : vector<16x1xf32> to vector<16x32xf32>
    %441 = arith.subf %426, %440 : vector<16x32xf32>
    %cst_294 = arith.constant 9.99999974E-6 : f32
    %442 = vector.broadcast %cst_294 : f32 to vector<16x1xf32>
    %443 = arith.addf %439, %442 : vector<16x1xf32>
    %444 = math.rsqrt %443 : vector<16x1xf32>
    %445 = vector.broadcast %444 : vector<16x1xf32> to vector<16x32xf32>
    %446 = arith.mulf %441, %445 : vector<16x32xf32>
    %447 = vector.broadcast %427 : vector<1x32xf32> to vector<16x32xf32>
    %448 = arith.mulf %446, %447 : vector<16x32xf32>
    %449 = vector.broadcast %428 : vector<1x32xf32> to vector<16x32xf32>
    %450 = arith.addf %448, %449 : vector<16x32xf32>
    %c0_295 = arith.constant 0 : index
    %c0_296 = arith.constant 0 : index
    %451 = vector.load %arg19[%c0_295, %c0_296] : memref<32x128xf32, #tpu.memory_space<vmem>>, vector<32x128xf32>
    %cst_297 = arith.constant dense<0.000000e+00> : vector<16x128xf32>
    %452 = tpu.matmul %450, %451, %cst_297 {dimension_numbers = #tpu.dot_dimension_numbers<[1], [0], [0], [1], [0, 0, 1, 1], [], []>} : vector<16x32xf32>, vector<32x128xf32>, vector<16x128xf32> -> vector<16x128xf32>
    %c0_298 = arith.constant 0 : index
    %c0_299 = arith.constant 0 : index
    %453 = vector.load %arg20[%c0_298, %c0_299] : memref<1x128xf32, #tpu.memory_space<vmem>>, vector<1x128xf32>
    %454 = vector.broadcast %453 : vector<1x128xf32> to vector<16x128xf32>
    %455 = arith.addf %452, %454 : vector<16x128xf32>
    %456 = vector.shape_cast %455 : vector<16x128xf32> to vector<2x8x128xf32>
    %c0_300 = arith.constant 0 : index
    %c0_301 = arith.constant 0 : index
    %c0_302 = arith.constant 0 : index
    %457 = vector.load %arg21[%c0_300, %c0_301, %c0_302] : memref<2x8x128xf32, #tpu.memory_space<vmem>>, vector<2x8x128xf32>
    tpu.vector_store %arg21[%c0_300, %c0_301, %c0_302], %456 {strides = array<i32>} : memref<2x8x128xf32, #tpu.memory_space<vmem>>, vector<2x8x128xf32>,
    return
  }
  func.func @transform_0(%arg0: i32) -> (i32, i32) {
    %c0_i32 = arith.constant 0 : i32
    %c0_i32_0 = arith.constant 0 : i32
    %c0_i32_1 = arith.constant 0 : i32
    return %c0_i32, %c0_i32_0 : i32, i32
  }
  func.func @transform_1(%arg0: i32) -> (i32, i32) {
    %c0_i32 = arith.constant 0 : i32
    %c0_i32_0 = arith.constant 0 : i32
    %c0_i32_1 = arith.constant 0 : i32
    return %c0_i32, %c0_i32_0 : i32, i32
  }
  func.func @transform_2(%arg0: i32) -> (i32, i32) {
    %c0_i32 = arith.constant 0 : i32
    %c0_i32_0 = arith.constant 0 : i32
    %c0_i32_1 = arith.constant 0 : i32
    return %c0_i32, %c0_i32_0 : i32, i32
  }
  func.func @transform_3(%arg0: i32) -> (i32, i32, i32) {
    %c0_i32 = arith.constant 0 : i32
    %c0_i32_0 = arith.constant 0 : i32
    %c0_i32_1 = arith.constant 0 : i32
    %c0_i32_2 = arith.constant 0 : i32
    return %c0_i32, %c0_i32_0, %c0_i32_1 : i32, i32, i32
  }
  func.func @transform_4(%arg0: i32) -> (i32, i32, i32) {
    %c0_i32 = arith.constant 0 : i32
    %c0_i32_0 = arith.constant 0 : i32
    %c0_i32_1 = arith.constant 0 : i32
    %c0_i32_2 = arith.constant 0 : i32
    return %c0_i32, %c0_i32_0, %c0_i32_1 : i32, i32, i32
  }
  func.func @transform_5(%arg0: i32) -> (i32, i32, i32, i32) {
    %c0_i32 = arith.constant 0 : i32
    %c0_i32_0 = arith.constant 0 : i32
    %c0_i32_1 = arith.constant 0 : i32
    %c0_i32_2 = arith.constant 0 : i32
    %c0_i32_3 = arith.constant 0 : i32
    return %c0_i32, %c0_i32_0, %c0_i32_1, %c0_i32_2 : i32, i32, i32, i32
  }
  func.func @transform_6(%arg0: i32) -> (i32, i32, i32, i32) {
    %c0_i32 = arith.constant 0 : i32
    %c0_i32_0 = arith.constant 0 : i32
    %c0_i32_1 = arith.constant 0 : i32
    %c0_i32_2 = arith.constant 0 : i32
    %c0_i32_3 = arith.constant 0 : i32
    return %c0_i32, %c0_i32_0, %c0_i32_1, %c0_i32_2 : i32, i32, i32, i32
  }
  func.func @transform_7(%arg0: i32) -> (i32, i32, i32, i32) {
    %c0_i32 = arith.constant 0 : i32
    %c0_i32_0 = arith.constant 0 : i32
    %c0_i32_1 = arith.constant 0 : i32
    %c0_i32_2 = arith.constant 0 : i32
    %c0_i32_3 = arith.constant 0 : i32
    return %c0_i32, %c0_i32_0, %c0_i32_1, %c0_i32_2 : i32, i32, i32, i32
  }
  func.func @transform_8(%arg0: i32) -> (i32, i32, i32, i32) {
    %c0_i32 = arith.constant 0 : i32
    %c0_i32_0 = arith.constant 0 : i32
    %c0_i32_1 = arith.constant 0 : i32
    %c0_i32_2 = arith.constant 0 : i32
    %c0_i32_3 = arith.constant 0 : i32
    return %c0_i32, %c0_i32_0, %c0_i32_1, %c0_i32_2 : i32, i32, i32, i32
  }
  func.func @transform_9(%arg0: i32) -> (i32, i32, i32) {
    %c0_i32 = arith.constant 0 : i32
    %c0_i32_0 = arith.constant 0 : i32
    %c0_i32_1 = arith.constant 0 : i32
    %c0_i32_2 = arith.constant 0 : i32
    return %c0_i32, %c0_i32_0, %c0_i32_1 : i32, i32, i32
  }
  func.func @transform_10(%arg0: i32) -> (i32, i32, i32) {
    %c0_i32 = arith.constant 0 : i32
    %c0_i32_0 = arith.constant 0 : i32
    %c0_i32_1 = arith.constant 0 : i32
    %c0_i32_2 = arith.constant 0 : i32
    return %c0_i32, %c0_i32_0, %c0_i32_1 : i32, i32, i32
  }
  func.func @transform_11(%arg0: i32) -> (i32, i32, i32) {
    %c0_i32 = arith.constant 0 : i32
    %c0_i32_0 = arith.constant 0 : i32
    %c0_i32_1 = arith.constant 0 : i32
    %c0_i32_2 = arith.constant 0 : i32
    return %c0_i32, %c0_i32_0, %c0_i32_1 : i32, i32, i32
  }
  func.func @transform_12(%arg0: i32) -> (i32, i32, i32) {
    %c0_i32 = arith.constant 0 : i32
    %c0_i32_0 = arith.constant 0 : i32
    %c0_i32_1 = arith.constant 0 : i32
    %c0_i32_2 = arith.constant 0 : i32
    return %c0_i32, %c0_i32_0, %c0_i32_1 : i32, i32, i32
  }
  func.func @transform_13(%arg0: i32) -> (i32, i32, i32) {
    %c0_i32 = arith.constant 0 : i32
    %c0_i32_0 = arith.constant 0 : i32
    %c0_i32_1 = arith.constant 0 : i32
    %c0_i32_2 = arith.constant 0 : i32
    return %c0_i32, %c0_i32_0, %c0_i32_1 : i32, i32, i32
  }
  func.func @transform_14(%arg0: i32) -> (i32, i32, i32) {
    %c0_i32 = arith.constant 0 : i32
    %c0_i32_0 = arith.constant 0 : i32
    %c0_i32_1 = arith.constant 0 : i32
    %c0_i32_2 = arith.constant 0 : i32
    return %c0_i32, %c0_i32_0, %c0_i32_1 : i32, i32, i32
  }
  func.func @transform_15(%arg0: i32) -> (i32, i32, i32) {
    %c0_i32 = arith.constant 0 : i32
    %c0_i32_0 = arith.constant 0 : i32
    %c0_i32_1 = arith.constant 0 : i32
    %c0_i32_2 = arith.constant 0 : i32
    return %c0_i32, %c0_i32_0, %c0_i32_1 : i32, i32, i32
  }
  func.func @transform_16(%arg0: i32) -> (i32, i32) {
    %c0_i32 = arith.constant 0 : i32
    %c0_i32_0 = arith.constant 0 : i32
    %c0_i32_1 = arith.constant 0 : i32
    return %c0_i32, %c0_i32_0 : i32, i32
  }
  func.func @transform_17(%arg0: i32) -> (i32, i32) {
    %c0_i32 = arith.constant 0 : i32
    %c0_i32_0 = arith.constant 0 : i32
    %c0_i32_1 = arith.constant 0 : i32
    return %c0_i32, %c0_i32_0 : i32, i32
  }
  func.func @transform_18(%arg0: i32) -> (i32, i32) {
    %c0_i32 = arith.constant 0 : i32
    %c0_i32_0 = arith.constant 0 : i32
    %c0_i32_1 = arith.constant 0 : i32
    return %c0_i32, %c0_i32_0 : i32, i32
  }
  func.func @transform_19(%arg0: i32) -> (i32, i32) {
    %c0_i32 = arith.constant 0 : i32
    %c0_i32_0 = arith.constant 0 : i32
    %c0_i32_1 = arith.constant 0 : i32
    return %c0_i32, %c0_i32_0 : i32, i32
  }
  func.func @transform_20(%arg0: i32) -> (i32, i32, i32) {
    %c0_i32 = arith.constant 0 : i32
    %c0_i32_0 = arith.constant 0 : i32
    %c0_i32_1 = arith.constant 0 : i32
    return %arg0, %c0_i32, %c0_i32_0 : i32, i32, i32
  }
}

</mosaic_0001>

<llo_original>
// kernel: model_forward.1
$region0: #{model_forward.1}
  #allocation0 [shape = 'u32[]', space=smem, size = 0x4, offset = 0x4, fixed_abs, tag = 'smem constant byte address 0x4 - core index']
  #allocation1 [shape = 'u32[144,128]{1,0:T(1,128)}', space=vmem, size = 0x12000, scoped, tag = 'internal scratch']
  %s0 = inlined_call_operand.vmem [shape: s32[16,1], index: 0, kind: input, shape index: {}]
  %s1 = inlined_call_operand.vmem [shape: f32[64,32], index: 1, kind: input, shape index: {}]
  %s2 = inlined_call_operand.vmem [shape: f32[16,32], index: 2, kind: input, shape index: {}]
  %s3 = inlined_call_operand.vmem [shape: f32[2,1,32], index: 3, kind: input, shape index: {}]
  %s4 = inlined_call_operand.vmem [shape: f32[2,1,32], index: 4, kind: input, shape index: {}]
  %s5 = inlined_call_operand.vmem [shape: f32[2,4,32,8], index: 5, kind: input, shape index: {}]
  %s6 = inlined_call_operand.vmem [shape: f32[2,4,32,8], index: 6, kind: input, shape index: {}]
  %s7 = inlined_call_operand.vmem [shape: f32[2,4,32,8], index: 7, kind: input, shape index: {}]
  %s8 = inlined_call_operand.vmem [shape: f32[2,4,8,32], index: 8, kind: input, shape index: {}]
  %s9 = inlined_call_operand.vmem [shape: f32[2,1,32], index: 9, kind: input, shape index: {}]
  %s10 = inlined_call_operand.vmem [shape: f32[2,1,32], index: 10, kind: input, shape index: {}]
  %s11 = inlined_call_operand.vmem [shape: f32[2,1,32], index: 11, kind: input, shape index: {}]
  %s12 = inlined_call_operand.vmem [shape: f32[2,32,128], index: 12, kind: input, shape index: {}]
  %s13 = inlined_call_operand.vmem [shape: f32[2,1,128], index: 13, kind: input, shape index: {}]
  %s14 = inlined_call_operand.vmem [shape: f32[2,128,32], index: 14, kind: input, shape index: {}]
  %s15 = inlined_call_operand.vmem [shape: f32[2,1,32], index: 15, kind: input, shape index: {}]
  %s16 = inlined_call_operand.vmem [shape: f32[1,32], index: 16, kind: input, shape index: {}]
  %s17 = inlined_call_operand.vmem [shape: f32[1,32], index: 17, kind: input, shape index: {}]
  %s18 = inlined_call_operand.vmem [shape: f32[32,128], index: 18, kind: input, shape index: {}]
  %s19 = inlined_call_operand.vmem [shape: f32[1,128], index: 19, kind: input, shape index: {}]
  %s20 = inlined_call_operand.hbm [shape: f32[2,8,128], index: 20, kind: output, shape index: {}]
  %s21 = sld [smem:[#allocation0]]
  $region90: #{model_forward.1} parent=0
    _
  %s23 = ssub.s32 1, %s21
  %s24 = scalar_select 0, %s23, %s21
  $region1: #{model_forward.1} parent=0
    #allocation2 [shape = 'u8[8192]{0}', space=vmem, size = 0x2000, scoped, tag = 'output window, operand 0, single buffered']
    #allocation3 [shape = 's32[1]{0}', space=sflag, size = 0x4, scoped, tag = 'scoped memory for model_forward.1']
    %25 = vsyncpa [#allocation3], 0
    // Predicated region
    $region2: #{model_forward.1} parent=1 // pred_check
      _
    $region3: #{model_forward.1} parent=1 // pred_check_branch
      %27 = sbr.rel (0) target = $region5
    $region4: #{model_forward.1} parent=1 // pred_region
      _
    $region5: #{model_forward.1} parent=1 // pred_fallthru
      _
    // Predicated region
    $region6: #{model_forward.1} parent=1 // pred_check
      _
    $region7: #{model_forward.1} parent=1 // pred_check_branch
      %29 = sbr.rel (0) target = $region9
    $region8: #{model_forward.1} parent=1 // pred_region
      _
    $region9: #{model_forward.1} parent=1 // pred_fallthru
      _
    // Predicated region
    $region10: #{model_forward.1} parent=1 // pred_check
      _
    $region11: #{model_forward.1} parent=1 // pred_check_branch
      %31 = sbr.rel (0) target = $region13
    $region12: #{model_forward.1} parent=1 // pred_region
      _
    $region13: #{model_forward.1} parent=1 // pred_fallthru
      _
    // Predicated region
    $region14: #{model_forward.1} parent=1 // pred_check
      _
    $region15: #{model_forward.1} parent=1 // pred_check_branch
      %33 = sbr.rel (0) target = $region17
    $region16: #{model_forward.1} parent=1 // pred_region
      _
    $region17: #{model_forward.1} parent=1 // pred_fallthru
      _
    // Predicated region
    $region18: #{model_forward.1} parent=1 // pred_check
      _
    $region19: #{model_forward.1} parent=1 // pred_check_branch
      %35 = sbr.rel (0) target = $region21
    $region20: #{model_forward.1} parent=1 // pred_region
      _
    $region21: #{model_forward.1} parent=1 // pred_fallthru
      _
    // Predicated region
    $region22: #{model_forward.1} parent=1 // pred_check
      _
    $region23: #{model_forward.1} parent=1 // pred_check_branch
      %37 = sbr.rel (0) target = $region25
    $region24: #{model_forward.1} parent=1 // pred_region
      _
    $region25: #{model_forward.1} parent=1 // pred_fallthru
      _
    // Predicated region
    $region26: #{model_forward.1} parent=1 // pred_check
      _
    $region27: #{model_forward.1} parent=1 // pred_check_branch
      %39 = sbr.rel (0) target = $region29
    $region28: #{model_forward.1} parent=1 // pred_region
      _
    $region29: #{model_forward.1} parent=1 // pred_fallthru
      _
    // Predicated region
    $region30: #{model_forward.1} parent=1 // pred_check
      _
    $region31: #{model_forward.1} parent=1 // pred_check_branch
      %41 = sbr.rel (0) target = $region33
    $region32: #{model_forward.1} parent=1 // pred_region
      _
    $region33: #{model_forward.1} parent=1 // pred_fallthru
      _
    // Predicated region
    $region34: #{model_forward.1} parent=1 // pred_check
      _
    $region35: #{model_forward.1} parent=1 // pred_check_branch
      %43 = sbr.rel (0) target = $region37
    $region36: #{model_forward.1} parent=1 // pred_region
      _
    $region37: #{model_forward.1} parent=1 // pred_fallthru
      _
    // Predicated region
    $region38: #{model_forward.1} parent=1 // pred_check
      _
    $region39: #{model_forward.1} parent=1 // pred_check_branch
      %45 = sbr.rel (0) target = $region41
    $region40: #{model_forward.1} parent=1 // pred_region
      _
    $region41: #{model_forward.1} parent=1 // pred_fallthru
      _
    // Predicated region
    $region42: #{model_forward.1} parent=1 // pred_check
      _
    $region43: #{model_forward.1} parent=1 // pred_check_branch
      %47 = sbr.rel (0) target = $region45
    $region44: #{model_forward.1} parent=1 // pred_region
      _
    $region45: #{model_forward.1} parent=1 // pred_fallthru
      _
    // Predicated region
    $region46: #{model_forward.1} parent=1 // pred_check
      _
    $region47: #{model_forward.1} parent=1 // pred_check_branch
      %49 = sbr.rel (0) target = $region49
    $region48: #{model_forward.1} parent=1 // pred_region
      _
    $region49: #{model_forward.1} parent=1 // pred_fallthru
      _
    // Predicated region
    $region50: #{model_forward.1} parent=1 // pred_check
      _
    $region51: #{model_forward.1} parent=1 // pred_check_branch
      %51 = sbr.rel (0) target = $region53
    $region52: #{model_forward.1} parent=1 // pred_region
      _
    $region53: #{model_forward.1} parent=1 // pred_fallthru
      _
    // Predicated region
    $region54: #{model_forward.1} parent=1 // pred_check
      _
    $region55: #{model_forward.1} parent=1 // pred_check_branch
      %53 = sbr.rel (0) target = $region57
    $region56: #{model_forward.1} parent=1 // pred_region
      _
    $region57: #{model_forward.1} parent=1 // pred_fallthru
      _
    // Predicated region
    $region58: #{model_forward.1} parent=1 // pred_check
      _
    $region59: #{model_forward.1} parent=1 // pred_check_branch
      %55 = sbr.rel (0) target = $region61
    $region60: #{model_forward.1} parent=1 // pred_region
      _
    $region61: #{model_forward.1} parent=1 // pred_fallthru
      _
    // Predicated region
    $region62: #{model_forward.1} parent=1 // pred_check
      _
    $region63: #{model_forward.1} parent=1 // pred_check_branch
      %57 = sbr.rel (0) target = $region65
    $region64: #{model_forward.1} parent=1 // pred_region
      _
    $region65: #{model_forward.1} parent=1 // pred_fallthru
      _
    // Predicated region
    $region66: #{model_forward.1} parent=1 // pred_check
      _
    $region67: #{model_forward.1} parent=1 // pred_check_branch
      %59 = sbr.rel (0) target = $region69
    $region68: #{model_forward.1} parent=1 // pred_region
      _
    $region69: #{model_forward.1} parent=1 // pred_fallthru
      _
    // Predicated region
    $region70: #{model_forward.1} parent=1 // pred_check
      _
    $region71: #{model_forward.1} parent=1 // pred_check_branch
      %61 = sbr.rel (0) target = $region73
    $region72: #{model_forward.1} parent=1 // pred_region
      _
    $region73: #{model_forward.1} parent=1 // pred_fallthru
      _
    // Predicated region
    $region74: #{model_forward.1} parent=1 // pred_check
      _
    $region75: #{model_forward.1} parent=1 // pred_check_branch
      %63 = sbr.rel (0) target = $region77
    $region76: #{model_forward.1} parent=1 // pred_region
      _
    $region77: #{model_forward.1} parent=1 // pred_fallthru
      _
    // Predicated region
    $region78: #{model_forward.1} parent=1 // pred_check
      _
    $region79: #{model_forward.1} parent=1 // pred_check_branch
      %65 = sbr.rel (0) target = $region81
    $region80: #{model_forward.1} parent=1 // pred_region
      _
    $region81: #{model_forward.1} parent=1 // pred_fallthru
      _
    %v66 = vld [vmem:[%s0] sm:$0xff]
    %v67 = vld [vmem:[%s0 + $0x8] sm:$0xff]
    %v68 = vlaneseq
    %v69 = vand.u32 %v68, 127
    %70 = vset.pattern.permute.xlu0 0
    %71 = vperm.xlu0 %70, %v66
    %v72 = vpop.permute.xlu0 %71
    %73 = vset.pattern.permute.xlu0 0
    %74 = vperm.xlu0 %73, %v67
    %v75 = vpop.permute.xlu0 %74
    %vm76 = vcmp.eq.s32.totalorder %v72, %v69
    %vm77 = vcmp.eq.s32.totalorder %v75, %v69
    %v78 = vsel %vm76, 1, 0
    %v79 = vsel %vm77, 1, 0
    %v80 = vcvt.s32.f32 %v78
    %v81 = vcvt.s32.f32 %v79
    %v82 = vld [vmem:[%s1] sm:$0xff]
    %v83 = vld [vmem:[%s1 + $0x8] sm:$0xff]
    %v84 = vld [vmem:[%s1 + $0x10] sm:$0xff]
    %v85 = vld [vmem:[%s1 + $0x18] sm:$0xff]
    %v86 = vld [vmem:[%s1 + $0x20] sm:$0xff]
    %v87 = vld [vmem:[%s1 + $0x28] sm:$0xff]
    %v88 = vld [vmem:[%s1 + $0x30] sm:$0xff]
    %v89 = vld [vmem:[%s1 + $0x38] sm:$0xff]
    %vm90 = vcmask 523264
    %v92 = vsel %vm90, %v80, 0
    %v95 = vsel %vm90, %v81, 0
    %97 = vmatprep.subr.mxu0 0.0
    %98 = vmatpush1.msra.mxu0 %v82
    %99 = vmatprep.subr.mxu0 0.0
    %100 = vmatpush1.msra.mxu0 %v83
    %101 = vmatprep.subr.mxu0 0.0
    %102 = vmatpush1.msra.mxu0 %v84
    %103 = vmatprep.subr.mxu0 0.0
    %104 = vmatpush1.msra.mxu0 %v85
    %105 = vmatprep.subr.mxu0 0.0
    %106 = vmatpush1.msra.mxu0 %v86
    %107 = vmatprep.subr.mxu0 0.0
    %108 = vmatpush1.msra.mxu0 %v87
    %109 = vmatprep.subr.mxu0 0.0
    %110 = vmatpush1.msra.mxu0 %v88
    %111 = vmatprep.subr.mxu0 0.0
    %112 = vmatpush1.msra.mxu0 %v89
    %113 = vmatprep.subr.mxu0 0.0
    %114 = vmatpush1.msra.mxu0 0.0
    %115 = vmatprep.subr.mxu0 0.0
    %116 = vmatpush1.msra.mxu0 0.0
    %117 = vmatprep.subr.mxu0 0.0
    %118 = vmatpush1.msra.mxu0 0.0
    %119 = vmatprep.subr.mxu0 0.0
    %120 = vmatpush1.msra.mxu0 0.0
    %121 = vmatprep.subr.mxu0 0.0
    %122 = vmatpush1.msra.mxu0 0.0
    %123 = vmatprep.subr.mxu0 0.0
    %124 = vmatpush1.msra.mxu0 0.0
    %125 = vmatprep.subr.mxu0 0.0
    %126 = vmatpush1.msra.mxu0 0.0
    %127 = vmatprep.subr.mxu0 0.0
    %128 = vmatpush1.msra.mxu0 0.0
    %129 = vmatprep.subr.mxu0 0.0
    %130 = vmatpush1.msra.mxu0 0.0
    %131 = vmatprep.subr.mxu0 0.0
    %132 = vmatpush1.msra.mxu0 0.0
    %133 = vmatprep.subr.mxu0 0.0
    %134 = vmatpush1.msra.mxu0 0.0
    %135 = vmatprep.subr.mxu0 0.0
    %136 = vmatpush1.msra.mxu0 0.0
    %137 = vmatprep.subr.mxu0 0.0
    %138 = vmatpush1.msra.mxu0 0.0
    %139 = vmatprep.subr.mxu0 0.0
    %140 = vmatpush1.msra.mxu0 0.0
    %141 = vmatprep.subr.mxu0 0.0
    %142 = vmatpush1.msra.mxu0 0.0
    %143 = vmatprep.subr.mxu0 0.0
    %144 = vmatpush1.msra.mxu0 0.0
    %145 = vmatprep.subr.mxu0 0.0
    %146 = vmatpush1.msra.mxu0 0.0
    %147 = vmatprep.subr.mxu0 0.0
    %148 = vmatpush1.msra.mxu0 0.0
    %149 = vmatprep.subr.mxu0 0.0
    %150 = vmatpush1.msra.mxu0 0.0
    %151 = vmatprep.subr.mxu0 0.0
    %152 = vmatpush1.msra.mxu0 0.0
    %153 = vmatprep.subr.mxu0 0.0
    %154 = vmatpush1.msra.mxu0 0.0
    %155 = vmatprep.subr.mxu0 0.0
    %156 = vmatpush1.msra.mxu0 0.0
    %157 = vmatprep.subr.mxu0 0.0
    %158 = vmatpush1.msra.mxu0 0.0
    %159 = vmatprep.subr.mxu0 0.0
    %160 = vmatpush1.msra.mxu0 0.0
    %161 = vmatprep.mubr.f32.mxu0 0.0
    %162 = vmatmul.mubr.f32.gmra.mrb[0].mxu0 %v92
    %v163 = vpop.f32.mrb[0].mxu0
    %v164 = vadd.f32 0.0, %v163
    %v165 = vpop.f32.mrb[0].mxu0
    %166 = vmatprep.mubr.f32.mxu0 0.0
    %167 = vmatmul.mubr.f32.gmra.mrb[0].mxu0 %v95
    %v168 = vpop.f32.mrb[0].mxu0
    %v169 = vadd.f32 0.0, %v168
    %v170 = vpop.f32.mrb[0].mxu0
    %171 = vdwg.mxu0
    %v172 = vld [vmem:[%s2] sm:$0xff]
    %v173 = vadd.f32 %v164, %v172
    %v174 = vadd.f32 %v169, %v172
    %v175 = vlaneseq
    %v176 = vshrl.u32 %v175, 7
    %vm177 = vcmp.le.s32.totalorder %v69, %v176
    %v178 = vsel %vm177, 0.0, -1e+30
    %v179 = vld [vmem:[%s3] sm:$0x1]
    %v180 = vld [vmem:[%s4] sm:$0x1]
    %vm181 = vcmask 261120
    %v182 = vsel %vm181, %v173, 0.0
    %183 = vadd.xlane.f32.xlu0 %v182
    %v184 = vpop.xlane.xlu0 %183
    %v185 = vsel %vm181, %v174, 0.0
    %186 = vadd.xlane.f32.xlu0 %v185
    %v187 = vpop.xlane.xlu0 %186
    %v188 = vrcp.pop 32.0
    %v189 = vmul.f32 %v184, %v188
    %v190 = vmul.f32 %v187, %v188
    %v191 = vsub.f32 %v173, %v189
    %v192 = vsub.f32 %v174, %v190
    %v193 = vmul.f32 %v191, %v191
    %v194 = vmul.f32 %v192, %v192
    %v195 = vsel %vm181, %v193, 0.0
    %196 = vadd.xlane.f32.xlu0 %v195
    %v197 = vpop.xlane.xlu0 %196
    %v198 = vsel %vm181, %v194, 0.0
    %199 = vadd.xlane.f32.xlu0 %v198
    %v200 = vpop.xlane.xlu0 %199
    %v201 = vmul.f32 %v197, %v188
    %v202 = vmul.f32 %v200, %v188
    %v203 = vadd.f32 %v201, 1e-05
    %v204 = vadd.f32 %v202, 1e-05
    %v205 = vrsqrt.pop %v203
    %v206 = vrsqrt.pop %v204
    %v207 = vmul.f32 %v191, %v205
    %v208 = vmul.f32 %v192, %v206
    %v210 = vlaneseq
    %v211 = vshrl.u32 %v210, 7
    %v212 = vsub.s32 0, %v211
    %v213 = vrot.slane %v179, %v212
    %v215 = vmul.f32 %v207, %v213
    %v216 = vmul.f32 %v208, %v213
    %v218 = vlaneseq
    %v219 = vshrl.u32 %v218, 7
    %v220 = vsub.s32 0, %v219
    %v221 = vrot.slane %v180, %v220
    %v223 = vadd.f32 %v215, %v221
    %v224 = vadd.f32 %v216, %v221
    %v225 = vld [vmem:[%s5] sm:$0xff]
    %v226 = vld [vmem:[%s5 + $0x8] sm:$0xff]
    %v227 = vld [vmem:[%s5 + $0x10] sm:$0xff]
    %v228 = vld [vmem:[%s5 + $0x18] sm:$0xff]
    %v230 = vsel %vm181, %v223, 0
    %v233 = vsel %vm181, %v224, 0
    %235 = vmatprep.subr.mxu0 0.0
    %236 = vmatpush1.msra.mxu0 %v225
    %237 = vmatprep.subr.mxu0 0.0
    %238 = vmatpush1.msra.mxu0 %v226
    %239 = vmatprep.subr.mxu0 0.0
    %240 = vmatpush1.msra.mxu0 %v227
    %241 = vmatprep.subr.mxu0 0.0
    %242 = vmatpush1.msra.mxu0 %v228
    %243 = vmatprep.subr.mxu0 0.0
    %244 = vmatpush1.msra.mxu0 0.0
    %245 = vmatprep.subr.mxu0 0.0
    %246 = vmatpush1.msra.mxu0 0.0
    %247 = vmatprep.subr.mxu0 0.0
    %248 = vmatpush1.msra.mxu0 0.0
    %249 = vmatprep.subr.mxu0 0.0
    %250 = vmatpush1.msra.mxu0 0.0
    %251 = vmatprep.subr.mxu0 0.0
    %252 = vmatpush1.msra.mxu0 0.0
    %253 = vmatprep.subr.mxu0 0.0
    %254 = vmatpush1.msra.mxu0 0.0
    %255 = vmatprep.subr.mxu0 0.0
    %256 = vmatpush1.msra.mxu0 0.0
    %257 = vmatprep.subr.mxu0 0.0
    %258 = vmatpush1.msra.mxu0 0.0
    %259 = vmatprep.subr.mxu0 0.0
    %260 = vmatpush1.msra.mxu0 0.0
    %261 = vmatprep.subr.mxu0 0.0
    %262 = vmatpush1.msra.mxu0 0.0
    %263 = vmatprep.subr.mxu0 0.0
    %264 = vmatpush1.msra.mxu0 0.0
    %265 = vmatprep.subr.mxu0 0.0
    %266 = vmatpush1.msra.mxu0 0.0
    %267 = vmatprep.subr.mxu0 0.0
    %268 = vmatpush1.msra.mxu0 0.0
    %269 = vmatprep.subr.mxu0 0.0
    %270 = vmatpush1.msra.mxu0 0.0
    %271 = vmatprep.subr.mxu0 0.0
    %272 = vmatpush1.msra.mxu0 0.0
    %273 = vmatprep.subr.mxu0 0.0
    %274 = vmatpush1.msra.mxu0 0.0
    %275 = vmatprep.subr.mxu0 0.0
    %276 = vmatpush1.msra.mxu0 0.0
    %277 = vmatprep.subr.mxu0 0.0
    %278 = vmatpush1.msra.mxu0 0.0
    %279 = vmatprep.subr.mxu0 0.0
    %280 = vmatpush1.msra.mxu0 0.0
    %281 = vmatprep.subr.mxu0 0.0
    %282 = vmatpush1.msra.mxu0 0.0
    %283 = vmatprep.subr.mxu0 0.0
    %284 = vmatpush1.msra.mxu0 0.0
    %285 = vmatprep.subr.mxu0 0.0
    %286 = vmatpush1.msra.mxu0 0.0
    %287 = vmatprep.subr.mxu0 0.0
    %288 = vmatpush1.msra.mxu0 0.0
    %289 = vmatprep.subr.mxu0 0.0
    %290 = vmatpush1.msra.mxu0 0.0
    %291 = vmatprep.subr.mxu0 0.0
    %292 = vmatpush1.msra.mxu0 0.0
    %293 = vmatprep.subr.mxu0 0.0
    %294 = vmatpush1.msra.mxu0 0.0
    %295 = vmatprep.subr.mxu0 0.0
    %296 = vmatpush1.msra.mxu0 0.0
    %297 = vmatprep.subr.mxu0 0.0
    %298 = vmatpush1.msra.mxu0 0.0
    %299 = vmatprep.mubr.f32.mxu0 0.0
    %300 = vmatmul.mubr.f32.gmra.mrb[0].mxu0 %v230
    %v301 = vpop.f32.mrb[0].mxu0
    %v302 = vadd.f32 0.0, %v301
    %v303 = vpop.f32.mrb[0].mxu0
    %304 = vmatprep.mubr.f32.mxu0 0.0
    %305 = vmatmul.mubr.f32.gmra.mrb[0].mxu0 %v233
    %v306 = vpop.f32.mrb[0].mxu0
    %v307 = vadd.f32 0.0, %v306
    %v308 = vpop.f32.mrb[0].mxu0
    %309 = vdwg.mxu0
    %v310 = vld [vmem:[%s6] sm:$0xff]
    %v311 = vld [vmem:[%s6 + $0x8] sm:$0xff]
    %v312 = vld [vmem:[%s6 + $0x10] sm:$0xff]
    %v313 = vld [vmem:[%s6 + $0x18] sm:$0xff]
    %314 = vmatprep.subr.mxu0 0.0
    %315 = vmatpush1.msra.mxu0 %v310
    %316 = vmatprep.subr.mxu0 0.0
    %317 = vmatpush1.msra.mxu0 %v311
    %318 = vmatprep.subr.mxu0 0.0
    %319 = vmatpush1.msra.mxu0 %v312
    %320 = vmatprep.subr.mxu0 0.0
    %321 = vmatpush1.msra.mxu0 %v313
    %322 = vmatprep.subr.mxu0 0.0
    %323 = vmatpush1.msra.mxu0 0.0
    %324 = vmatprep.subr.mxu0 0.0
    %325 = vmatpush1.msra.mxu0 0.0
    %326 = vmatprep.subr.mxu0 0.0
    %327 = vmatpush1.msra.mxu0 0.0
    %328 = vmatprep.subr.mxu0 0.0
    %329 = vmatpush1.msra.mxu0 0.0
    %330 = vmatprep.subr.mxu0 0.0
    %331 = vmatpush1.msra.mxu0 0.0
    %332 = vmatprep.subr.mxu0 0.0
    %333 = vmatpush1.msra.mxu0 0.0
    %334 = vmatprep.subr.mxu0 0.0
    %335 = vmatpush1.msra.mxu0 0.0
    %336 = vmatprep.subr.mxu0 0.0
    %337 = vmatpush1.msra.mxu0 0.0
    %338 = vmatprep.subr.mxu0 0.0
    %339 = vmatpush1.msra.mxu0 0.0
    %340 = vmatprep.subr.mxu0 0.0
    %341 = vmatpush1.msra.mxu0 0.0
    %342 = vmatprep.subr.mxu0 0.0
    %343 = vmatpush1.msra.mxu0 0.0
    %344 = vmatprep.subr.mxu0 0.0
    %345 = vmatpush1.msra.mxu0 0.0
    %346 = vmatprep.subr.mxu0 0.0
    %347 = vmatpush1.msra.mxu0 0.0
    %348 = vmatprep.subr.mxu0 0.0
    %349 = vmatpush1.msra.mxu0 0.0
    %350 = vmatprep.subr.mxu0 0.0
    %351 = vmatpush1.msra.mxu0 0.0
    %352 = vmatprep.subr.mxu0 0.0
    %353 = vmatpush1.msra.mxu0 0.0
    %354 = vmatprep.subr.mxu0 0.0
    %355 = vmatpush1.msra.mxu0 0.0
    %356 = vmatprep.subr.mxu0 0.0
    %357 = vmatpush1.msra.mxu0 0.0
    %358 = vmatprep.subr.mxu0 0.0
    %359 = vmatpush1.msra.mxu0 0.0
    %360 = vmatprep.subr.mxu0 0.0
    %361 = vmatpush1.msra.mxu0 0.0
    %362 = vmatprep.subr.mxu0 0.0
    %363 = vmatpush1.msra.mxu0 0.0
    %364 = vmatprep.subr.mxu0 0.0
    %365 = vmatpush1.msra.mxu0 0.0
    %366 = vmatprep.subr.mxu0 0.0
    %367 = vmatpush1.msra.mxu0 0.0
    %368 = vmatprep.subr.mxu0 0.0
    %369 = vmatpush1.msra.mxu0 0.0
    %370 = vmatprep.subr.mxu0 0.0
    %371 = vmatpush1.msra.mxu0 0.0
    %372 = vmatprep.subr.mxu0 0.0
    %373 = vmatpush1.msra.mxu0 0.0
    %374 = vmatprep.subr.mxu0 0.0
    %375 = vmatpush1.msra.mxu0 0.0
    %376 = vmatprep.subr.mxu0 0.0
    %377 = vmatpush1.msra.mxu0 0.0
    %378 = vmatprep.mubr.f32.mxu0 0.0
    %379 = vmatmul.mubr.f32.gmra.mrb[0].mxu0 %v230
    %v380 = vpop.f32.mrb[0].mxu0
    %v381 = vadd.f32 0.0, %v380
    %v382 = vpop.f32.mrb[0].mxu0
    %383 = vmatprep.mubr.f32.mxu0 0.0
    %384 = vmatmul.mubr.f32.gmra.mrb[0].mxu0 %v233
    %v385 = vpop.f32.mrb[0].mxu0
    %v386 = vadd.f32 0.0, %v385
    %v387 = vpop.f32.mrb[0].mxu0
    %388 = vdwg.mxu0
    %v389 = vld [vmem:[%s7] sm:$0xff]
    %v390 = vld [vmem:[%s7 + $0x8] sm:$0xff]
    %v391 = vld [vmem:[%s7 + $0x10] sm:$0xff]
    %v392 = vld [vmem:[%s7 + $0x18] sm:$0xff]
    %393 = vmatprep.subr.mxu0 0.0
    %394 = vmatpush1.msra.mxu0 %v389
    %395 = vmatprep.subr.mxu0 0.0
    %396 = vmatpush1.msra.mxu0 %v390
    %397 = vmatprep.subr.mxu0 0.0
    %398 = vmatpush1.msra.mxu0 %v391
    %399 = vmatprep.subr.mxu0 0.0
    %400 = vmatpush1.msra.mxu0 %v392
    %401 = vmatprep.subr.mxu0 0.0
    %402 = vmatpush1.msra.mxu0 0.0
    %403 = vmatprep.subr.mxu0 0.0
    %404 = vmatpush1.msra.mxu0 0.0
    %405 = vmatprep.subr.mxu0 0.0
    %406 = vmatpush1.msra.mxu0 0.0
    %407 = vmatprep.subr.mxu0 0.0
    %408 = vmatpush1.msra.mxu0 0.0
    %409 = vmatprep.subr.mxu0 0.0
    %410 = vmatpush1.msra.mxu0 0.0
    %411 = vmatprep.subr.mxu0 0.0
    %412 = vmatpush1.msra.mxu0 0.0
    %413 = vmatprep.subr.mxu0 0.0
    %414 = vmatpush1.msra.mxu0 0.0
    %415 = vmatprep.subr.mxu0 0.0
    %416 = vmatpush1.msra.mxu0 0.0
    %417 = vmatprep.subr.mxu0 0.0
    %418 = vmatpush1.msra.mxu0 0.0
    %419 = vmatprep.subr.mxu0 0.0
    %420 = vmatpush1.msra.mxu0 0.0
    %421 = vmatprep.subr.mxu0 0.0
    %422 = vmatpush1.msra.mxu0 0.0
    %423 = vmatprep.subr.mxu0 0.0
    %424 = vmatpush1.msra.mxu0 0.0
    %425 = vmatprep.subr.mxu0 0.0
    %426 = vmatpush1.msra.mxu0 0.0
    %427 = vmatprep.subr.mxu0 0.0
    %428 = vmatpush1.msra.mxu0 0.0
    %429 = vmatprep.subr.mxu0 0.0
    %430 = vmatpush1.msra.mxu0 0.0
    %431 = vmatprep.subr.mxu0 0.0
    %432 = vmatpush1.msra.mxu0 0.0
    %433 = vmatprep.subr.mxu0 0.0
    %434 = vmatpush1.msra.mxu0 0.0
    %435 = vmatprep.subr.mxu0 0.0
    %436 = vmatpush1.msra.mxu0 0.0
    %437 = vmatprep.subr.mxu0 0.0
    %438 = vmatpush1.msra.mxu0 0.0
    %439 = vmatprep.subr.mxu0 0.0
    %440 = vmatpush1.msra.mxu0 0.0
    %441 = vmatprep.subr.mxu0 0.0
    %442 = vmatpush1.msra.mxu0 0.0
    %443 = vmatprep.subr.mxu0 0.0
    %444 = vmatpush1.msra.mxu0 0.0
    %445 = vmatprep.subr.mxu0 0.0
    %446 = vmatpush1.msra.mxu0 0.0
    %447 = vmatprep.subr.mxu0 0.0
    %448 = vmatpush1.msra.mxu0 0.0
    %449 = vmatprep.subr.mxu0 0.0
    %450 = vmatpush1.msra.mxu0 0.0
    %451 = vmatprep.subr.mxu0 0.0
    %452 = vmatpush1.msra.mxu0 0.0
    %453 = vmatprep.subr.mxu0 0.0
    %454 = vmatpush1.msra.mxu0 0.0
    %455 = vmatprep.subr.mxu0 0.0
    %456 = vmatpush1.msra.mxu0 0.0
    %457 = vmatprep.mubr.f32.mxu0 0.0
    %458 = vmatmul.mubr.f32.gmra.mrb[0].mxu0 %v230
    %v459 = vpop.f32.mrb[0].mxu0
    %v460 = vadd.f32 0.0, %v459
    %v461 = vpop.f32.mrb[0].mxu0
    %462 = vmatprep.mubr.f32.mxu0 0.0
    %463 = vmatmul.mubr.f32.gmra.mrb[0].mxu0 %v233
    %v464 = vpop.f32.mrb[0].mxu0
    %v465 = vadd.f32 0.0, %v464
    %v466 = vpop.f32.mrb[0].mxu0
    %467 = vdwg.mxu0
    %vm468 = vcmask 64512
    %v470 = vsel %vm468, %v302, 0
    %v473 = vsel %vm468, %v381, 0
    %475 = vmatprep.subr.mxu0 0.0
    %476 = vmatpush1.xpose.msra.mxu0 %v473
    %477 = vmatprep.subr.mxu0 0.0
    %478 = vmatpush1.xpose.msra.mxu0 0.0
    %479 = vmatprep.subr.mxu0 0.0
    %480 = vmatpush1.xpose.msra.mxu0 0.0
    %481 = vmatprep.subr.mxu0 0.0
    %482 = vmatpush1.xpose.msra.mxu0 0.0
    %483 = vmatprep.subr.mxu0 0.0
    %484 = vmatpush1.xpose.msra.mxu0 0.0
    %485 = vmatprep.subr.mxu0 0.0
    %486 = vmatpush1.xpose.msra.mxu0 0.0
    %487 = vmatprep.subr.mxu0 0.0
    %488 = vmatpush1.xpose.msra.mxu0 0.0
    %489 = vmatprep.subr.mxu0 0.0
    %490 = vmatpush1.xpose.msra.mxu0 0.0
    %491 = vmatprep.subr.mxu0 0.0
    %492 = vmatpush1.xpose.msra.mxu0 0.0
    %493 = vmatprep.subr.mxu0 0.0
    %494 = vmatpush1.xpose.msra.mxu0 0.0
    %495 = vmatprep.subr.mxu0 0.0
    %496 = vmatpush1.xpose.msra.mxu0 0.0
    %497 = vmatprep.subr.mxu0 0.0
    %498 = vmatpush1.xpose.msra.mxu0 0.0
    %499 = vmatprep.subr.mxu0 0.0
    %500 = vmatpush1.xpose.msra.mxu0 0.0
    %501 = vmatprep.subr.mxu0 0.0
    %502 = vmatpush1.xpose.msra.mxu0 0.0
    %503 = vmatprep.subr.mxu0 0.0
    %504 = vmatpush1.xpose.msra.mxu0 0.0
    %505 = vmatprep.subr.mxu0 0.0
    %506 = vmatpush1.xpose.msra.mxu0 0.0
    %507 = vmatprep.subr.mxu0 0.0
    %508 = vmatpush1.xpose.msra.mxu0 0.0
    %509 = vmatprep.subr.mxu0 0.0
    %510 = vmatpush1.xpose.msra.mxu0 0.0
    %511 = vmatprep.subr.mxu0 0.0
    %512 = vmatpush1.xpose.msra.mxu0 0.0
    %513 = vmatprep.subr.mxu0 0.0
    %514 = vmatpush1.xpose.msra.mxu0 0.0
    %515 = vmatprep.subr.mxu0 0.0
    %516 = vmatpush1.xpose.msra.mxu0 0.0
    %517 = vmatprep.subr.mxu0 0.0
    %518 = vmatpush1.xpose.msra.mxu0 0.0
    %519 = vmatprep.subr.mxu0 0.0
    %520 = vmatpush1.xpose.msra.mxu0 0.0
    %521 = vmatprep.subr.mxu0 0.0
    %522 = vmatpush1.xpose.msra.mxu0 0.0
    %523 = vmatprep.subr.mxu0 0.0
    %524 = vmatpush1.xpose.msra.mxu0 0.0
    %525 = vmatprep.subr.mxu0 0.0
    %526 = vmatpush1.xpose.msra.mxu0 0.0
    %527 = vmatprep.subr.mxu0 0.0
    %528 = vmatpush1.xpose.msra.mxu0 0.0
    %529 = vmatprep.subr.mxu0 0.0
    %530 = vmatpush1.xpose.msra.mxu0 0.0
    %531 = vmatprep.subr.mxu0 0.0
    %532 = vmatpush1.xpose.msra.mxu0 0.0
    %533 = vmatprep.subr.mxu0 0.0
    %534 = vmatpush1.xpose.msra.mxu0 0.0
    %535 = vmatprep.subr.mxu0 0.0
    %536 = vmatpush1.xpose.msra.mxu0 0.0
    %537 = vmatprep.subr.mxu0 0.0
    %538 = vmatpush1.xpose.msra.mxu0 0.0
    %539 = vmatprep.mubr.f32.mxu0 0.0
    %540 = vmatmul.mubr.f32.gmra.mrb[0].mxu0 %v470
    %v541 = vpop.f32.mrb[0].mxu0
    %v542 = vadd.f32 0.0, %v541
    %v543 = vpop.f32.mrb[0].mxu0
    %544 = vdwg.mxu0
    %v546 = vsel %vm468, %v307, 0
    %v549 = vsel %vm468, %v386, 0
    %551 = vmatprep.subr.mxu0 0.0
    %552 = vmatpush1.xpose.msra.mxu0 %v549
    %553 = vmatprep.subr.mxu0 0.0
    %554 = vmatpush1.xpose.msra.mxu0 0.0
    %555 = vmatprep.subr.mxu0 0.0
    %556 = vmatpush1.xpose.msra.mxu0 0.0
    %557 = vmatprep.subr.mxu0 0.0
    %558 = vmatpush1.xpose.msra.mxu0 0.0
    %559 = vmatprep.subr.mxu0 0.0
    %560 = vmatpush1.xpose.msra.mxu0 0.0
    %561 = vmatprep.subr.mxu0 0.0
    %562 = vmatpush1.xpose.msra.mxu0 0.0
    %563 = vmatprep.subr.mxu0 0.0
    %564 = vmatpush1.xpose.msra.mxu0 0.0
    %565 = vmatprep.subr.mxu0 0.0
    %566 = vmatpush1.xpose.msra.mxu0 0.0
    %567 = vmatprep.subr.mxu0 0.0
    %568 = vmatpush1.xpose.msra.mxu0 0.0
    %569 = vmatprep.subr.mxu0 0.0
    %570 = vmatpush1.xpose.msra.mxu0 0.0
    %571 = vmatprep.subr.mxu0 0.0
    %572 = vmatpush1.xpose.msra.mxu0 0.0
    %573 = vmatprep.subr.mxu0 0.0
    %574 = vmatpush1.xpose.msra.mxu0 0.0
    %575 = vmatprep.subr.mxu0 0.0
    %576 = vmatpush1.xpose.msra.mxu0 0.0
    %577 = vmatprep.subr.mxu0 0.0
    %578 = vmatpush1.xpose.msra.mxu0 0.0
    %579 = vmatprep.subr.mxu0 0.0
    %580 = vmatpush1.xpose.msra.mxu0 0.0
    %581 = vmatprep.subr.mxu0 0.0
    %582 = vmatpush1.xpose.msra.mxu0 0.0
    %583 = vmatprep.subr.mxu0 0.0
    %584 = vmatpush1.xpose.msra.mxu0 0.0
    %585 = vmatprep.subr.mxu0 0.0
    %586 = vmatpush1.xpose.msra.mxu0 0.0
    %587 = vmatprep.subr.mxu0 0.0
    %588 = vmatpush1.xpose.msra.mxu0 0.0
    %589 = vmatprep.subr.mxu0 0.0
    %590 = vmatpush1.xpose.msra.mxu0 0.0
    %591 = vmatprep.subr.mxu0 0.0
    %592 = vmatpush1.xpose.msra.mxu0 0.0
    %593 = vmatprep.subr.mxu0 0.0
    %594 = vmatpush1.xpose.msra.mxu0 0.0
    %595 = vmatprep.subr.mxu0 0.0
    %596 = vmatpush1.xpose.msra.mxu0 0.0
    %597 = vmatprep.subr.mxu0 0.0
    %598 = vmatpush1.xpose.msra.mxu0 0.0
    %599 = vmatprep.subr.mxu0 0.0
    %600 = vmatpush1.xpose.msra.mxu0 0.0
    %601 = vmatprep.subr.mxu0 0.0
    %602 = vmatpush1.xpose.msra.mxu0 0.0
    %603 = vmatprep.subr.mxu0 0.0
    %604 = vmatpush1.xpose.msra.mxu0 0.0
    %605 = vmatprep.subr.mxu0 0.0
    %606 = vmatpush1.xpose.msra.mxu0 0.0
    %607 = vmatprep.subr.mxu0 0.0
    %608 = vmatpush1.xpose.msra.mxu0 0.0
    %609 = vmatprep.subr.mxu0 0.0
    %610 = vmatpush1.xpose.msra.mxu0 0.0
    %611 = vmatprep.subr.mxu0 0.0
    %612 = vmatpush1.xpose.msra.mxu0 0.0
    %613 = vmatprep.subr.mxu0 0.0
    %614 = vmatpush1.xpose.msra.mxu0 0.0
    %615 = vmatprep.mubr.f32.mxu0 0.0
    %616 = vmatmul.mubr.f32.gmra.mrb[0].mxu0 %v546
    %v617 = vpop.f32.mrb[0].mxu0
    %v618 = vadd.f32 0.0, %v617
    %v619 = vpop.f32.mrb[0].mxu0
    %620 = vdwg.mxu0
    %v621 = vmul.f32 %v542, 0.17677669
    %v622 = vmul.f32 %v618, 0.17677669
    %v623 = vadd.f32 %v621, %v178
    %v624 = vadd.f32 %v622, %v178
    %v625 = vsel %vm468, %v623, -inf
    %626 = vmax.xlane.f32.xlu0 %v625
    %v627 = vpop.xlane.xlu0 %626
    %v628 = vsel %vm468, %v624, -inf
    %629 = vmax.xlane.f32.xlu0 %v628
    %v630 = vpop.xlane.xlu0 %629
    %v631 = vsub.f32 %v623, %v627
    %v632 = vsub.f32 %v624, %v630
    %v633 = vmul.f32 %v631, 1.442695
    %v634 = vpow.pop %v633
    %v635 = vmul.f32 %v632, 1.442695
    %v636 = vpow.pop %v635
    %v637 = vsel %vm468, %v634, 0.0
    %638 = vadd.xlane.f32.xlu0 %v637
    %v639 = vpop.xlane.xlu0 %638
    %v640 = vsel %vm468, %v636, 0.0
    %641 = vadd.xlane.f32.xlu0 %v640
    %v642 = vpop.xlane.xlu0 %641
    %v643 = vrcp.pop %v639
    %v644 = vmul.f32 %v634, %v643
    %v645 = vrcp.pop %v642
    %v646 = vmul.f32 %v636, %v645
    %v648 = vsel %vm468, %v644, 0
    %650 = vmatprep.subr.mxu0 0.0
    %651 = vmatpush1.msra.mxu0 %v460
    %652 = vmatprep.subr.mxu0 0.0
    %653 = vmatpush1.msra.mxu0 0.0
    %654 = vmatprep.subr.mxu0 0.0
    %655 = vmatpush1.msra.mxu0 0.0
    %656 = vmatprep.subr.mxu0 0.0
    %657 = vmatpush1.msra.mxu0 0.0
    %658 = vmatprep.subr.mxu0 0.0
    %659 = vmatpush1.msra.mxu0 0.0
    %660 = vmatprep.subr.mxu0 0.0
    %661 = vmatpush1.msra.mxu0 0.0
    %662 = vmatprep.subr.mxu0 0.0
    %663 = vmatpush1.msra.mxu0 0.0
    %664 = vmatprep.subr.mxu0 0.0
    %665 = vmatpush1.msra.mxu0 0.0
    %666 = vmatprep.subr.mxu0 0.0
    %667 = vmatpush1.msra.mxu0 0.0
    %668 = vmatprep.subr.mxu0 0.0
    %669 = vmatpush1.msra.mxu0 0.0
    %670 = vmatprep.subr.mxu0 0.0
    %671 = vmatpush1.msra.mxu0 0.0
    %672 = vmatprep.subr.mxu0 0.0
    %673 = vmatpush1.msra.mxu0 0.0
    %674 = vmatprep.subr.mxu0 0.0
    %675 = vmatpush1.msra.mxu0 0.0
    %676 = vmatprep.subr.mxu0 0.0
    %677 = vmatpush1.msra.mxu0 0.0
    %678 = vmatprep.subr.mxu0 0.0
    %679 = vmatpush1.msra.mxu0 0.0
    %680 = vmatprep.subr.mxu0 0.0
    %681 = vmatpush1.msra.mxu0 0.0
    %682 = vmatprep.subr.mxu0 0.0
    %683 = vmatpush1.msra.mxu0 0.0
    %684 = vmatprep.subr.mxu0 0.0
    %685 = vmatpush1.msra.mxu0 0.0
    %686 = vmatprep.subr.mxu0 0.0
    %687 = vmatpush1.msra.mxu0 0.0
    %688 = vmatprep.subr.mxu0 0.0
    %689 = vmatpush1.msra.mxu0 0.0
    %690 = vmatprep.subr.mxu0 0.0
    %691 = vmatpush1.msra.mxu0 0.0
    %692 = vmatprep.subr.mxu0 0.0
    %693 = vmatpush1.msra.mxu0 0.0
    %694 = vmatprep.subr.mxu0 0.0
    %695 = vmatpush1.msra.mxu0 0.0
    %696 = vmatprep.subr.mxu0 0.0
    %697 = vmatpush1.msra.mxu0 0.0
    %698 = vmatprep.subr.mxu0 0.0
    %699 = vmatpush1.msra.mxu0 0.0
    %700 = vmatprep.subr.mxu0 0.0
    %701 = vmatpush1.msra.mxu0 0.0
    %702 = vmatprep.subr.mxu0 0.0
    %703 = vmatpush1.msra.mxu0 0.0
    %704 = vmatprep.subr.mxu0 0.0
    %705 = vmatpush1.msra.mxu0 0.0
    %706 = vmatprep.subr.mxu0 0.0
    %707 = vmatpush1.msra.mxu0 0.0
    %708 = vmatprep.subr.mxu0 0.0
    %709 = vmatpush1.msra.mxu0 0.0
    %710 = vmatprep.subr.mxu0 0.0
    %711 = vmatpush1.msra.mxu0 0.0
    %712 = vmatprep.subr.mxu0 0.0
    %713 = vmatpush1.msra.mxu0 0.0
    %714 = vmatprep.mubr.f32.mxu0 0.0
    %715 = vmatmul.mubr.f32.gmra.mrb[0].mxu0 %v648
    %v716 = vpop.f32.mrb[0].mxu0
    %v717 = vadd.f32 0.0, %v716
    %v718 = vpop.f32.mrb[0].mxu0
    %719 = vdwg.mxu0
    %v721 = vsel %vm468, %v646, 0
    %723 = vmatprep.subr.mxu0 0.0
    %724 = vmatpush1.msra.mxu0 %v465
    %725 = vmatprep.subr.mxu0 0.0
    %726 = vmatpush1.msra.mxu0 0.0
    %727 = vmatprep.subr.mxu0 0.0
    %728 = vmatpush1.msra.mxu0 0.0
    %729 = vmatprep.subr.mxu0 0.0
    %730 = vmatpush1.msra.mxu0 0.0
    %731 = vmatprep.subr.mxu0 0.0
    %732 = vmatpush1.msra.mxu0 0.0
    %733 = vmatprep.subr.mxu0 0.0
    %734 = vmatpush1.msra.mxu0 0.0
    %735 = vmatprep.subr.mxu0 0.0
    %736 = vmatpush1.msra.mxu0 0.0
    %737 = vmatprep.subr.mxu0 0.0
    %738 = vmatpush1.msra.mxu0 0.0
    %739 = vmatprep.subr.mxu0 0.0
    %740 = vmatpush1.msra.mxu0 0.0
    %741 = vmatprep.subr.mxu0 0.0
    %742 = vmatpush1.msra.mxu0 0.0
    %743 = vmatprep.subr.mxu0 0.0
    %744 = vmatpush1.msra.mxu0 0.0
    %745 = vmatprep.subr.mxu0 0.0
    %746 = vmatpush1.msra.mxu0 0.0
    %747 = vmatprep.subr.mxu0 0.0
    %748 = vmatpush1.msra.mxu0 0.0
    %749 = vmatprep.subr.mxu0 0.0
    %750 = vmatpush1.msra.mxu0 0.0
    %751 = vmatprep.subr.mxu0 0.0
    %752 = vmatpush1.msra.mxu0 0.0
    %753 = vmatprep.subr.mxu0 0.0
    %754 = vmatpush1.msra.mxu0 0.0
    %755 = vmatprep.subr.mxu0 0.0
    %756 = vmatpush1.msra.mxu0 0.0
    %757 = vmatprep.subr.mxu0 0.0
    %758 = vmatpush1.msra.mxu0 0.0
    %759 = vmatprep.subr.mxu0 0.0
    %760 = vmatpush1.msra.mxu0 0.0
    %761 = vmatprep.subr.mxu0 0.0
    %762 = vmatpush1.msra.mxu0 0.0
    %763 = vmatprep.subr.mxu0 0.0
    %764 = vmatpush1.msra.mxu0 0.0
    %765 = vmatprep.subr.mxu0 0.0
    %766 = vmatpush1.msra.mxu0 0.0
    %767 = vmatprep.subr.mxu0 0.0
    %768 = vmatpush1.msra.mxu0 0.0
    %769 = vmatprep.subr.mxu0 0.0
    %770 = vmatpush1.msra.mxu0 0.0
    %771 = vmatprep.subr.mxu0 0.0
    %772 = vmatpush1.msra.mxu0 0.0
    %773 = vmatprep.subr.mxu0 0.0
    %774 = vmatpush1.msra.mxu0 0.0
    %775 = vmatprep.subr.mxu0 0.0
    %776 = vmatpush1.msra.mxu0 0.0
    %777 = vmatprep.subr.mxu0 0.0
    %778 = vmatpush1.msra.mxu0 0.0
    %779 = vmatprep.subr.mxu0 0.0
    %780 = vmatpush1.msra.mxu0 0.0
    %781 = vmatprep.subr.mxu0 0.0
    %782 = vmatpush1.msra.mxu0 0.0
    %783 = vmatprep.subr.mxu0 0.0
    %784 = vmatpush1.msra.mxu0 0.0
    %785 = vmatprep.subr.mxu0 0.0
    %786 = vmatpush1.msra.mxu0 0.0
    %787 = vmatprep.mubr.f32.mxu0 0.0
    %788 = vmatmul.mubr.f32.gmra.mrb[0].mxu0 %v721
    %v789 = vpop.f32.mrb[0].mxu0
    %v790 = vadd.f32 0.0, %v789
    %v791 = vpop.f32.mrb[0].mxu0
    %792 = vdwg.mxu0
    %v793 = vld [vmem:[%s8] sm:$0xff]
    %s794 = scalar_lea.vmem %s5, 32
    %v795 = vld [vmem:[%s794] sm:$0xff]
    %v796 = vld [vmem:[%s794 + $0x8] sm:$0xff]
    %v797 = vld [vmem:[%s794 + $0x10] sm:$0xff]
    %v798 = vld [vmem:[%s794 + $0x18] sm:$0xff]
    %799 = vmatprep.subr.mxu0 0.0
    %800 = vmatpush1.msra.mxu0 %v795
    %801 = vmatprep.subr.mxu0 0.0
    %802 = vmatpush1.msra.mxu0 %v796
    %803 = vmatprep.subr.mxu0 0.0
    %804 = vmatpush1.msra.mxu0 %v797
    %805 = vmatprep.subr.mxu0 0.0
    %806 = vmatpush1.msra.mxu0 %v798
    %807 = vmatprep.subr.mxu0 0.0
    %808 = vmatpush1.msra.mxu0 0.0
    %809 = vmatprep.subr.mxu0 0.0
    %810 = vmatpush1.msra.mxu0 0.0
    %811 = vmatprep.subr.mxu0 0.0
    %812 = vmatpush1.msra.mxu0 0.0
    %813 = vmatprep.subr.mxu0 0.0
    %814 = vmatpush1.msra.mxu0 0.0
    %815 = vmatprep.subr.mxu0 0.0
    %816 = vmatpush1.msra.mxu0 0.0
    %817 = vmatprep.subr.mxu0 0.0
    %818 = vmatpush1.msra.mxu0 0.0
    %819 = vmatprep.subr.mxu0 0.0
    %820 = vmatpush1.msra.mxu0 0.0
    %821 = vmatprep.subr.mxu0 0.0
    %822 = vmatpush1.msra.mxu0 0.0
    %823 = vmatprep.subr.mxu0 0.0
    %824 = vmatpush1.msra.mxu0 0.0
    %825 = vmatprep.subr.mxu0 0.0
    %826 = vmatpush1.msra.mxu0 0.0
    %827 = vmatprep.subr.mxu0 0.0
    %828 = vmatpush1.msra.mxu0 0.0
    %829 = vmatprep.subr.mxu0 0.0
    %830 = vmatpush1.msra.mxu0 0.0
    %831 = vmatprep.subr.mxu0 0.0
    %832 = vmatpush1.msra.mxu0 0.0
    %833 = vmatprep.subr.mxu0 0.0
    %834 = vmatpush1.msra.mxu0 0.0
    %835 = vmatprep.subr.mxu0 0.0
    %836 = vmatpush1.msra.mxu0 0.0
    %837 = vmatprep.subr.mxu0 0.0
    %838 = vmatpush1.msra.mxu0 0.0
    %839 = vmatprep.subr.mxu0 0.0
    %840 = vmatpush1.msra.mxu0 0.0
    %841 = vmatprep.subr.mxu0 0.0
    %842 = vmatpush1.msra.mxu0 0.0
    %843 = vmatprep.subr.mxu0 0.0
    %844 = vmatpush1.msra.mxu0 0.0
    %845 = vmatprep.subr.mxu0 0.0
    %846 = vmatpush1.msra.mxu0 0.0
    %847 = vmatprep.subr.mxu0 0.0
    %848 = vmatpush1.msra.mxu0 0.0
    %849 = vmatprep.subr.mxu0 0.0
    %850 = vmatpush1.msra.mxu0 0.0
    %851 = vmatprep.subr.mxu0 0.0
    %852 = vmatpush1.msra.mxu0 0.0
    %853 = vmatprep.subr.mxu0 0.0
    %854 = vmatpush1.msra.mxu0 0.0
    %855 = vmatprep.subr.mxu0 0.0
    %856 = vmatpush1.msra.mxu0 0.0
    %857 = vmatprep.subr.mxu0 0.0
    %858 = vmatpush1.msra.mxu0 0.0
    %859 = vmatprep.subr.mxu0 0.0
    %860 = vmatpush1.msra.mxu0 0.0
    %861 = vmatprep.subr.mxu0 0.0
    %862 = vmatpush1.msra.mxu0 0.0
    %863 = vmatprep.mubr.f32.mxu0 0.0
    %864 = vmatmul.mubr.f32.gmra.mrb[0].mxu0 %v230
    %v865 = vpop.f32.mrb[0].mxu0
    %v866 = vadd.f32 0.0, %v865
    %v867 = vpop.f32.mrb[0].mxu0
    %868 = vmatprep.mubr.f32.mxu0 0.0
    %869 = vmatmul.mubr.f32.gmra.mrb[0].mxu0 %v233
    %v870 = vpop.f32.mrb[0].mxu0
    %v871 = vadd.f32 0.0, %v870
    %v872 = vpop.f32.mrb[0].mxu0
    %873 = vdwg.mxu0
    %s874 = scalar_lea.vmem %s6, 32
    %v875 = vld [vmem:[%s874] sm:$0xff]
    %v876 = vld [vmem:[%s874 + $0x8] sm:$0xff]
    %v877 = vld [vmem:[%s874 + $0x10] sm:$0xff]
    %v878 = vld [vmem:[%s874 + $0x18] sm:$0xff]
    %879 = vmatprep.subr.mxu0 0.0
    %880 = vmatpush1.msra.mxu0 %v875
    %881 = vmatprep.subr.mxu0 0.0
    %882 = vmatpush1.msra.mxu0 %v876
    %883 = vmatprep.subr.mxu0 0.0
    %884 = vmatpush1.msra.mxu0 %v877
    %885 = vmatprep.subr.mxu0 0.0
    %886 = vmatpush1.msra.mxu0 %v878
    %887 = vmatprep.subr.mxu0 0.0
    %888 = vmatpush1.msra.mxu0 0.0
    %889 = vmatprep.subr.mxu0 0.0
    %890 = vmatpush1.msra.mxu0 0.0
    %891 = vmatprep.subr.mxu0 0.0
    %892 = vmatpush1.msra.mxu0 0.0
    %893 = vmatprep.subr.mxu0 0.0
    %894 = vmatpush1.msra.mxu0 0.0
    %895 = vmatprep.subr.mxu0 0.0
    %896 = vmatpush1.msra.mxu0 0.0
    %897 = vmatprep.subr.mxu0 0.0
    %898 = vmatpush1.msra.mxu0 0.0
    %899 = vmatprep.subr.mxu0 0.0
    %900 = vmatpush1.msra.mxu0 0.0
    %901 = vmatprep.subr.mxu0 0.0
    %902 = vmatpush1.msra.mxu0 0.0
    %903 = vmatprep.subr.mxu0 0.0
    %904 = vmatpush1.msra.mxu0 0.0
    %905 = vmatprep.subr.mxu0 0.0
    %906 = vmatpush1.msra.mxu0 0.0
    %907 = vmatprep.subr.mxu0 0.0
    %908 = vmatpush1.msra.mxu0 0.0
    %909 = vmatprep.subr.mxu0 0.0
    %910 = vmatpush1.msra.mxu0 0.0
    %911 = vmatprep.subr.mxu0 0.0
    %912 = vmatpush1.msra.mxu0 0.0
    %913 = vmatprep.subr.mxu0 0.0
    %914 = vmatpush1.msra.mxu0 0.0
    %915 = vmatprep.subr.mxu0 0.0
    %916 = vmatpush1.msra.mxu0 0.0
    %917 = vmatprep.subr.mxu0 0.0
    %918 = vmatpush1.msra.mxu0 0.0
    %919 = vmatprep.subr.mxu0 0.0
    %920 = vmatpush1.msra.mxu0 0.0
    %921 = vmatprep.subr.mxu0 0.0
    %922 = vmatpush1.msra.mxu0 0.0
    %923 = vmatprep.subr.mxu0 0.0
    %924 = vmatpush1.msra.mxu0 0.0
    %925 = vmatprep.subr.mxu0 0.0
    %926 = vmatpush1.msra.mxu0 0.0
    %927 = vmatprep.subr.mxu0 0.0
    %928 = vmatpush1.msra.mxu0 0.0
    %929 = vmatprep.subr.mxu0 0.0
    %930 = vmatpush1.msra.mxu0 0.0
    %931 = vmatprep.subr.mxu0 0.0
    %932 = vmatpush1.msra.mxu0 0.0
    %933 = vmatprep.subr.mxu0 0.0
    %934 = vmatpush1.msra.mxu0 0.0
    %935 = vmatprep.subr.mxu0 0.0
    %936 = vmatpush1.msra.mxu0 0.0
    %937 = vmatprep.subr.mxu0 0.0
    %938 = vmatpush1.msra.mxu0 0.0
    %939 = vmatprep.subr.mxu0 0.0
    %940 = vmatpush1.msra.mxu0 0.0
    %941 = vmatprep.subr.mxu0 0.0
    %942 = vmatpush1.msra.mxu0 0.0
    %943 = vmatprep.mubr.f32.mxu0 0.0
    %944 = vmatmul.mubr.f32.gmra.mrb[0].mxu0 %v230
    %v945 = vpop.f32.mrb[0].mxu0
    %v946 = vadd.f32 0.0, %v945
    %v947 = vpop.f32.mrb[0].mxu0
    %948 = vmatprep.mubr.f32.mxu0 0.0
    %949 = vmatmul.mubr.f32.gmra.mrb[0].mxu0 %v233
    %v950 = vpop.f32.mrb[0].mxu0
    %v951 = vadd.f32 0.0, %v950
    %v952 = vpop.f32.mrb[0].mxu0
    %953 = vdwg.mxu0
    %s954 = scalar_lea.vmem %s7, 32
    %v955 = vld [vmem:[%s954] sm:$0xff]
    %v956 = vld [vmem:[%s954 + $0x8] sm:$0xff]
    %v957 = vld [vmem:[%s954 + $0x10] sm:$0xff]
    %v958 = vld [vmem:[%s954 + $0x18] sm:$0xff]
    %959 = vmatprep.subr.mxu0 0.0
    %960 = vmatpush1.msra.mxu0 %v955
    %961 = vmatprep.subr.mxu0 0.0
    %962 = vmatpush1.msra.mxu0 %v956
    %963 = vmatprep.subr.mxu0 0.0
    %964 = vmatpush1.msra.mxu0 %v957
    %965 = vmatprep.subr.mxu0 0.0
    %966 = vmatpush1.msra.mxu0 %v958
    %967 = vmatprep.subr.mxu0 0.0
    %968 = vmatpush1.msra.mxu0 0.0
    %969 = vmatprep.subr.mxu0 0.0
    %970 = vmatpush1.msra.mxu0 0.0
    %971 = vmatprep.subr.mxu0 0.0
    %972 = vmatpush1.msra.mxu0 0.0
    %973 = vmatprep.subr.mxu0 0.0
    %974 = vmatpush1.msra.mxu0 0.0
    %975 = vmatprep.subr.mxu0 0.0
    %976 = vmatpush1.msra.mxu0 0.0
    %977 = vmatprep.subr.mxu0 0.0
    %978 = vmatpush1.msra.mxu0 0.0
    %979 = vmatprep.subr.mxu0 0.0
    %980 = vmatpush1.msra.mxu0 0.0
    %981 = vmatprep.subr.mxu0 0.0
    %982 = vmatpush1.msra.mxu0 0.0
    %983 = vmatprep.subr.mxu0 0.0
    %984 = vmatpush1.msra.mxu0 0.0
    %985 = vmatprep.subr.mxu0 0.0
    %986 = vmatpush1.msra.mxu0 0.0
    %987 = vmatprep.subr.mxu0 0.0
    %988 = vmatpush1.msra.mxu0 0.0
    %989 = vmatprep.subr.mxu0 0.0
    %990 = vmatpush1.msra.mxu0 0.0
    %991 = vmatprep.subr.mxu0 0.0
    %992 = vmatpush1.msra.mxu0 0.0
    %993 = vmatprep.subr.mxu0 0.0
    %994 = vmatpush1.msra.mxu0 0.0
    %995 = vmatprep.subr.mxu0 0.0
    %996 = vmatpush1.msra.mxu0 0.0
    %997 = vmatprep.subr.mxu0 0.0
    %998 = vmatpush1.msra.mxu0 0.0
    %999 = vmatprep.subr.mxu0 0.0
    %1000 = vmatpush1.msra.mxu0 0.0
    %1001 = vmatprep.subr.mxu0 0.0
    %1002 = vmatpush1.msra.mxu0 0.0
    %1003 = vmatprep.subr.mxu0 0.0
    %1004 = vmatpush1.msra.mxu0 0.0
    %1005 = vmatprep.subr.mxu0 0.0
    %1006 = vmatpush1.msra.mxu0 0.0
    %1007 = vmatprep.subr.mxu0 0.0
    %1008 = vmatpush1.msra.mxu0 0.0
    %1009 = vmatprep.subr.mxu0 0.0
    %1010 = vmatpush1.msra.mxu0 0.0
    %1011 = vmatprep.subr.mxu0 0.0
    %1012 = vmatpush1.msra.mxu0 0.0
    %1013 = vmatprep.subr.mxu0 0.0
    %1014 = vmatpush1.msra.mxu0 0.0
    %1015 = vmatprep.subr.mxu0 0.0
    %1016 = vmatpush1.msra.mxu0 0.0
    %1017 = vmatprep.subr.mxu0 0.0
    %1018 = vmatpush1.msra.mxu0 0.0
    %1019 = vmatprep.subr.mxu0 0.0
    %1020 = vmatpush1.msra.mxu0 0.0
    %1021 = vmatprep.subr.mxu0 0.0
    %1022 = vmatpush1.msra.mxu0 0.0
    %1023 = vmatprep.mubr.f32.mxu0 0.0
    %1024 = vmatmul.mubr.f32.gmra.mrb[0].mxu0 %v230
    %v1025 = vpop.f32.mrb[0].mxu0
    %v1026 = vadd.f32 0.0, %v1025
    %v1027 = vpop.f32.mrb[0].mxu0
    %1028 = vmatprep.mubr.f32.mxu0 0.0
    %1029 = vmatmul.mubr.f32.gmra.mrb[0].mxu0 %v233
    %v1030 = vpop.f32.mrb[0].mxu0
    %v1031 = vadd.f32 0.0, %v1030
    %v1032 = vpop.f32.mrb[0].mxu0
    %1033 = vdwg.mxu0
    %v1035 = vsel %vm468, %v866, 0
    %v1038 = vsel %vm468, %v946, 0
    %1040 = vmatprep.subr.mxu0 0.0
    %1041 = vmatpush1.xpose.msra.mxu0 %v1038
    %1042 = vmatprep.subr.mxu0 0.0
    %1043 = vmatpush1.xpose.msra.mxu0 0.0
    %1044 = vmatprep.subr.mxu0 0.0
    %1045 = vmatpush1.xpose.msra.mxu0 0.0
    %1046 = vmatprep.subr.mxu0 0.0
    %1047 = vmatpush1.xpose.msra.mxu0 0.0
    %1048 = vmatprep.subr.mxu0 0.0
    %1049 = vmatpush1.xpose.msra.mxu0 0.0
    %1050 = vmatprep.subr.mxu0 0.0
    %1051 = vmatpush1.xpose.msra.mxu0 0.0
    %1052 = vmatprep.subr.mxu0 0.0
    %1053 = vmatpush1.xpose.msra.mxu0 0.0
    %1054 = vmatprep.subr.mxu0 0.0
    %1055 = vmatpush1.xpose.msra.mxu0 0.0
    %1056 = vmatprep.subr.mxu0 0.0
    %1057 = vmatpush1.xpose.msra.mxu0 0.0
    %1058 = vmatprep.subr.mxu0 0.0
    %1059 = vmatpush1.xpose.msra.mxu0 0.0
    %1060 = vmatprep.subr.mxu0 0.0
    %1061 = vmatpush1.xpose.msra.mxu0 0.0
    %1062 = vmatprep.subr.mxu0 0.0
    %1063 = vmatpush1.xpose.msra.mxu0 0.0
    %1064 = vmatprep.subr.mxu0 0.0
    %1065 = vmatpush1.xpose.msra.mxu0 0.0
    %1066 = vmatprep.subr.mxu0 0.0
    %1067 = vmatpush1.xpose.msra.mxu0 0.0
    %1068 = vmatprep.subr.mxu0 0.0
    %1069 = vmatpush1.xpose.msra.mxu0 0.0
    %1070 = vmatprep.subr.mxu0 0.0
    %1071 = vmatpush1.xpose.msra.mxu0 0.0
    %1072 = vmatprep.subr.mxu0 0.0
    %1073 = vmatpush1.xpose.msra.mxu0 0.0
    %1074 = vmatprep.subr.mxu0 0.0
    %1075 = vmatpush1.xpose.msra.mxu0 0.0
    %1076 = vmatprep.subr.mxu0 0.0
    %1077 = vmatpush1.xpose.msra.mxu0 0.0
    %1078 = vmatprep.subr.mxu0 0.0
    %1079 = vmatpush1.xpose.msra.mxu0 0.0
    %1080 = vmatprep.subr.mxu0 0.0
    %1081 = vmatpush1.xpose.msra.mxu0 0.0
    %1082 = vmatprep.subr.mxu0 0.0
    %1083 = vmatpush1.xpose.msra.mxu0 0.0
    %1084 = vmatprep.subr.mxu0 0.0
    %1085 = vmatpush1.xpose.msra.mxu0 0.0
    %1086 = vmatprep.subr.mxu0 0.0
    %1087 = vmatpush1.xpose.msra.mxu0 0.0
    %1088 = vmatprep.subr.mxu0 0.0
    %1089 = vmatpush1.xpose.msra.mxu0 0.0
    %1090 = vmatprep.subr.mxu0 0.0
    %1091 = vmatpush1.xpose.msra.mxu0 0.0
    %1092 = vmatprep.subr.mxu0 0.0
    %1093 = vmatpush1.xpose.msra.mxu0 0.0
    %1094 = vmatprep.subr.mxu0 0.0
    %1095 = vmatpush1.xpose.msra.mxu0 0.0
    %1096 = vmatprep.subr.mxu0 0.0
    %1097 = vmatpush1.xpose.msra.mxu0 0.0
    %1098 = vmatprep.subr.mxu0 0.0
    %1099 = vmatpush1.xpose.msra.mxu0 0.0
    %1100 = vmatprep.subr.mxu0 0.0
    %1101 = vmatpush1.xpose.msra.mxu0 0.0
    %1102 = vmatprep.subr.mxu0 0.0
    %1103 = vmatpush1.xpose.msra.mxu0 0.0
    %1104 = vmatprep.mubr.f32.mxu0 0.0
    %1105 = vmatmul.mubr.f32.gmra.mrb[0].mxu0 %v1035
    %v1106 = vpop.f32.mrb[0].mxu0
    %v1107 = vadd.f32 0.0, %v1106
    %v1108 = vpop.f32.mrb[0].mxu0
    %1109 = vdwg.mxu0
    %v1111 = vsel %vm468, %v871, 0
    %v1114 = vsel %vm468, %v951, 0
    %1116 = vmatprep.subr.mxu0 0.0
    %1117 = vmatpush1.xpose.msra.mxu0 %v1114
    %1118 = vmatprep.subr.mxu0 0.0
    %1119 = vmatpush1.xpose.msra.mxu0 0.0
    %1120 = vmatprep.subr.mxu0 0.0
    %1121 = vmatpush1.xpose.msra.mxu0 0.0
    %1122 = vmatprep.subr.mxu0 0.0
    %1123 = vmatpush1.xpose.msra.mxu0 0.0
    %1124 = vmatprep.subr.mxu0 0.0
    %1125 = vmatpush1.xpose.msra.mxu0 0.0
    %1126 = vmatprep.subr.mxu0 0.0
    %1127 = vmatpush1.xpose.msra.mxu0 0.0
    %1128 = vmatprep.subr.mxu0 0.0
    %1129 = vmatpush1.xpose.msra.mxu0 0.0
    %1130 = vmatprep.subr.mxu0 0.0
    %1131 = vmatpush1.xpose.msra.mxu0 0.0
    %1132 = vmatprep.subr.mxu0 0.0
    %1133 = vmatpush1.xpose.msra.mxu0 0.0
    %1134 = vmatprep.subr.mxu0 0.0
    %1135 = vmatpush1.xpose.msra.mxu0 0.0
    %1136 = vmatprep.subr.mxu0 0.0
    %1137 = vmatpush1.xpose.msra.mxu0 0.0
    %1138 = vmatprep.subr.mxu0 0.0
    %1139 = vmatpush1.xpose.msra.mxu0 0.0
    %1140 = vmatprep.subr.mxu0 0.0
    %1141 = vmatpush1.xpose.msra.mxu0 0.0
    %1142 = vmatprep.subr.mxu0 0.0
    %1143 = vmatpush1.xpose.msra.mxu0 0.0
    %1144 = vmatprep.subr.mxu0 0.0
    %1145 = vmatpush1.xpose.msra.mxu0 0.0
    %1146 = vmatprep.subr.mxu0 0.0
    %1147 = vmatpush1.xpose.msra.mxu0 0.0
    %1148 = vmatprep.subr.mxu0 0.0
    %1149 = vmatpush1.xpose.msra.mxu0 0.0
    %1150 = vmatprep.subr.mxu0 0.0
    %1151 = vmatpush1.xpose.msra.mxu0 0.0
    %1152 = vmatprep.subr.mxu0 0.0
    %1153 = vmatpush1.xpose.msra.mxu0 0.0
    %1154 = vmatprep.subr.mxu0 0.0
    %1155 = vmatpush1.xpose.msra.mxu0 0.0
    %1156 = vmatprep.subr.mxu0 0.0
    %1157 = vmatpush1.xpose.msra.mxu0 0.0
    %1158 = vmatprep.subr.mxu0 0.0
    %1159 = vmatpush1.xpose.msra.mxu0 0.0
    %1160 = vmatprep.subr.mxu0 0.0
    %1161 = vmatpush1.xpose.msra.mxu0 0.0
    %1162 = vmatprep.subr.mxu0 0.0
    %1163 = vmatpush1.xpose.msra.mxu0 0.0
    %1164 = vmatprep.subr.mxu0 0.0
    %1165 = vmatpush1.xpose.msra.mxu0 0.0
    %1166 = vmatprep.subr.mxu0 0.0
    %1167 = vmatpush1.xpose.msra.mxu0 0.0
    %1168 = vmatprep.subr.mxu0 0.0
    %1169 = vmatpush1.xpose.msra.mxu0 0.0
    %1170 = vmatprep.subr.mxu0 0.0
    %1171 = vmatpush1.xpose.msra.mxu0 0.0
    %1172 = vmatprep.subr.mxu0 0.0
    %1173 = vmatpush1.xpose.msra.mxu0 0.0
    %1174 = vmatprep.subr.mxu0 0.0
    %1175 = vmatpush1.xpose.msra.mxu0 0.0
    %1176 = vmatprep.subr.mxu0 0.0
    %1177 = vmatpush1.xpose.msra.mxu0 0.0
    %1178 = vmatprep.subr.mxu0 0.0
    %1179 = vmatpush1.xpose.msra.mxu0 0.0
    %1180 = vmatprep.mubr.f32.mxu0 0.0
    %1181 = vmatmul.mubr.f32.gmra.mrb[0].mxu0 %v1111
    %v1182 = vpop.f32.mrb[0].mxu0
    %v1183 = vadd.f32 0.0, %v1182
    %v1184 = vpop.f32.mrb[0].mxu0
    %1185 = vdwg.mxu0
    %v1186 = vmul.f32 %v1107, 0.17677669
    %v1187 = vmul.f32 %v1183, 0.17677669
    %v1188 = vadd.f32 %v1186, %v178
    %v1189 = vadd.f32 %v1187, %v178
    %v1190 = vsel %vm468, %v1188, -inf
    %1191 = vmax.xlane.f32.xlu0 %v1190
    %v1192 = vpop.xlane.xlu0 %1191
    %v1193 = vsel %vm468, %v1189, -inf
    %1194 = vmax.xlane.f32.xlu0 %v1193
    %v1195 = vpop.xlane.xlu0 %1194
    %v1196 = vsub.f32 %v1188, %v1192
    %v1197 = vsub.f32 %v1189, %v1195
    %v1198 = vmul.f32 %v1196, 1.442695
    %v1199 = vpow.pop %v1198
    %v1200 = vmul.f32 %v1197, 1.442695
    %v1201 = vpow.pop %v1200
    %v1202 = vsel %vm468, %v1199, 0.0
    %1203 = vadd.xlane.f32.xlu0 %v1202
    %v1204 = vpop.xlane.xlu0 %1203
    %v1205 = vsel %vm468, %v1201, 0.0
    %1206 = vadd.xlane.f32.xlu0 %v1205
    %v1207 = vpop.xlane.xlu0 %1206
    %v1208 = vrcp.pop %v1204
    %v1209 = vmul.f32 %v1199, %v1208
    %v1210 = vrcp.pop %v1207
    %v1211 = vmul.f32 %v1201, %v1210
    %v1213 = vsel %vm468, %v1209, 0
    %1215 = vmatprep.subr.mxu0 0.0
    %1216 = vmatpush1.msra.mxu0 %v1026
    %1217 = vmatprep.subr.mxu0 0.0
    %1218 = vmatpush1.msra.mxu0 0.0
    %1219 = vmatprep.subr.mxu0 0.0
    %1220 = vmatpush1.msra.mxu0 0.0
    %1221 = vmatprep.subr.mxu0 0.0
    %1222 = vmatpush1.msra.mxu0 0.0
    %1223 = vmatprep.subr.mxu0 0.0
    %1224 = vmatpush1.msra.mxu0 0.0
    %1225 = vmatprep.subr.mxu0 0.0
    %1226 = vmatpush1.msra.mxu0 0.0
    %1227 = vmatprep.subr.mxu0 0.0
    %1228 = vmatpush1.msra.mxu0 0.0
    %1229 = vmatprep.subr.mxu0 0.0
    %1230 = vmatpush1.msra.mxu0 0.0
    %1231 = vmatprep.subr.mxu0 0.0
    %1232 = vmatpush1.msra.mxu0 0.0
    %1233 = vmatprep.subr.mxu0 0.0
    %1234 = vmatpush1.msra.mxu0 0.0
    %1235 = vmatprep.subr.mxu0 0.0
    %1236 = vmatpush1.msra.mxu0 0.0
    %1237 = vmatprep.subr.mxu0 0.0
    %1238 = vmatpush1.msra.mxu0 0.0
    %1239 = vmatprep.subr.mxu0 0.0
    %1240 = vmatpush1.msra.mxu0 0.0
    %1241 = vmatprep.subr.mxu0 0.0
    %1242 = vmatpush1.msra.mxu0 0.0
    %1243 = vmatprep.subr.mxu0 0.0
    %1244 = vmatpush1.msra.mxu0 0.0
    %1245 = vmatprep.subr.mxu0 0.0
    %1246 = vmatpush1.msra.mxu0 0.0
    %1247 = vmatprep.subr.mxu0 0.0
    %1248 = vmatpush1.msra.mxu0 0.0
    %1249 = vmatprep.subr.mxu0 0.0
    %1250 = vmatpush1.msra.mxu0 0.0
    %1251 = vmatprep.subr.mxu0 0.0
    %1252 = vmatpush1.msra.mxu0 0.0
    %1253 = vmatprep.subr.mxu0 0.0
    %1254 = vmatpush1.msra.mxu0 0.0
    %1255 = vmatprep.subr.mxu0 0.0
    %1256 = vmatpush1.msra.mxu0 0.0
    %1257 = vmatprep.subr.mxu0 0.0
    %1258 = vmatpush1.msra.mxu0 0.0
    %1259 = vmatprep.subr.mxu0 0.0
    %1260 = vmatpush1.msra.mxu0 0.0
    %1261 = vmatprep.subr.mxu0 0.0
    %1262 = vmatpush1.msra.mxu0 0.0
    %1263 = vmatprep.subr.mxu0 0.0
    %1264 = vmatpush1.msra.mxu0 0.0
    %1265 = vmatprep.subr.mxu0 0.0
    %1266 = vmatpush1.msra.mxu0 0.0
    %1267 = vmatprep.subr.mxu0 0.0
    %1268 = vmatpush1.msra.mxu0 0.0
    %1269 = vmatprep.subr.mxu0 0.0
    %1270 = vmatpush1.msra.mxu0 0.0
    %1271 = vmatprep.subr.mxu0 0.0
    %1272 = vmatpush1.msra.mxu0 0.0
    %1273 = vmatprep.subr.mxu0 0.0
    %1274 = vmatpush1.msra.mxu0 0.0
    %1275 = vmatprep.subr.mxu0 0.0
    %1276 = vmatpush1.msra.mxu0 0.0
    %1277 = vmatprep.subr.mxu0 0.0
    %1278 = vmatpush1.msra.mxu0 0.0
    %1279 = vmatprep.mubr.f32.mxu0 0.0
    %1280 = vmatmul.mubr.f32.gmra.mrb[0].mxu0 %v1213
    %v1281 = vpop.f32.mrb[0].mxu0
    %v1282 = vadd.f32 0.0, %v1281
    %v1283 = vpop.f32.mrb[0].mxu0
    %1284 = vdwg.mxu0
    %v1286 = vsel %vm468, %v1211, 0
    %1288 = vmatprep.subr.mxu0 0.0
    %1289 = vmatpush1.msra.mxu0 %v1031
    %1290 = vmatprep.subr.mxu0 0.0
    %1291 = vmatpush1.msra.mxu0 0.0
    %1292 = vmatprep.subr.mxu0 0.0
    %1293 = vmatpush1.msra.mxu0 0.0
    %1294 = vmatprep.subr.mxu0 0.0
    %1295 = vmatpush1.msra.mxu0 0.0
    %1296 = vmatprep.subr.mxu0 0.0
    %1297 = vmatpush1.msra.mxu0 0.0
    %1298 = vmatprep.subr.mxu0 0.0
    %1299 = vmatpush1.msra.mxu0 0.0
    %1300 = vmatprep.subr.mxu0 0.0
    %1301 = vmatpush1.msra.mxu0 0.0
    %1302 = vmatprep.subr.mxu0 0.0
    %1303 = vmatpush1.msra.mxu0 0.0
    %1304 = vmatprep.subr.mxu0 0.0
    %1305 = vmatpush1.msra.mxu0 0.0
    %1306 = vmatprep.subr.mxu0 0.0
    %1307 = vmatpush1.msra.mxu0 0.0
    %1308 = vmatprep.subr.mxu0 0.0
    %1309 = vmatpush1.msra.mxu0 0.0
    %1310 = vmatprep.subr.mxu0 0.0
    %1311 = vmatpush1.msra.mxu0 0.0
    %1312 = vmatprep.subr.mxu0 0.0
    %1313 = vmatpush1.msra.mxu0 0.0
    %1314 = vmatprep.subr.mxu0 0.0
    %1315 = vmatpush1.msra.mxu0 0.0
    %1316 = vmatprep.subr.mxu0 0.0
    %1317 = vmatpush1.msra.mxu0 0.0
    %1318 = vmatprep.subr.mxu0 0.0
    %1319 = vmatpush1.msra.mxu0 0.0
    %1320 = vmatprep.subr.mxu0 0.0
    %1321 = vmatpush1.msra.mxu0 0.0
    %1322 = vmatprep.subr.mxu0 0.0
    %1323 = vmatpush1.msra.mxu0 0.0
    %1324 = vmatprep.subr.mxu0 0.0
    %1325 = vmatpush1.msra.mxu0 0.0
    %1326 = vmatprep.subr.mxu0 0.0
    %1327 = vmatpush1.msra.mxu0 0.0
    %1328 = vmatprep.subr.mxu0 0.0
    %1329 = vmatpush1.msra.mxu0 0.0
    %1330 = vmatprep.subr.mxu0 0.0
    %1331 = vmatpush1.msra.mxu0 0.0
    %1332 = vmatprep.subr.mxu0 0.0
    %1333 = vmatpush1.msra.mxu0 0.0
    %1334 = vmatprep.subr.mxu0 0.0
    %1335 = vmatpush1.msra.mxu0 0.0
    %1336 = vmatprep.subr.mxu0 0.0
    %1337 = vmatpush1.msra.mxu0 0.0
    %1338 = vmatprep.subr.mxu0 0.0
    %1339 = vmatpush1.msra.mxu0 0.0
    %1340 = vmatprep.subr.mxu0 0.0
    %1341 = vmatpush1.msra.mxu0 0.0
    %1342 = vmatprep.subr.mxu0 0.0
    %1343 = vmatpush1.msra.mxu0 0.0
    %1344 = vmatprep.subr.mxu0 0.0
    %1345 = vmatpush1.msra.mxu0 0.0
    %1346 = vmatprep.subr.mxu0 0.0
    %1347 = vmatpush1.msra.mxu0 0.0
    %1348 = vmatprep.subr.mxu0 0.0
    %1349 = vmatpush1.msra.mxu0 0.0
    %1350 = vmatprep.subr.mxu0 0.0
    %1351 = vmatpush1.msra.mxu0 0.0
    %1352 = vmatprep.mubr.f32.mxu0 0.0
    %1353 = vmatmul.mubr.f32.gmra.mrb[0].mxu0 %v1286
    %v1354 = vpop.f32.mrb[0].mxu0
    %v1355 = vadd.f32 0.0, %v1354
    %v1356 = vpop.f32.mrb[0].mxu0
    %1357 = vdwg.mxu0
    %s1358 = scalar_lea.vmem %s8, 8
    %v1359 = vld [vmem:[%s1358] sm:$0xff]
    %v1361 = vsel %vm468, %v1282, 0
    %v1364 = vsel %vm468, %v1355, 0
    %1366 = vmatprep.subr.mxu0 0.0
    %1367 = vmatpush1.msra.mxu0 %v1359
    %1368 = vmatprep.subr.mxu0 0.0
    %1369 = vmatpush1.msra.mxu0 0.0
    %1370 = vmatprep.subr.mxu0 0.0
    %1371 = vmatpush1.msra.mxu0 0.0
    %1372 = vmatprep.subr.mxu0 0.0
    %1373 = vmatpush1.msra.mxu0 0.0
    %1374 = vmatprep.subr.mxu0 0.0
    %1375 = vmatpush1.msra.mxu0 0.0
    %1376 = vmatprep.subr.mxu0 0.0
    %1377 = vmatpush1.msra.mxu0 0.0
    %1378 = vmatprep.subr.mxu0 0.0
    %1379 = vmatpush1.msra.mxu0 0.0
    %1380 = vmatprep.subr.mxu0 0.0
    %1381 = vmatpush1.msra.mxu0 0.0
    %1382 = vmatprep.subr.mxu0 0.0
    %1383 = vmatpush1.msra.mxu0 0.0
    %1384 = vmatprep.subr.mxu0 0.0
    %1385 = vmatpush1.msra.mxu0 0.0
    %1386 = vmatprep.subr.mxu0 0.0
    %1387 = vmatpush1.msra.mxu0 0.0
    %1388 = vmatprep.subr.mxu0 0.0
    %1389 = vmatpush1.msra.mxu0 0.0
    %1390 = vmatprep.subr.mxu0 0.0
    %1391 = vmatpush1.msra.mxu0 0.0
    %1392 = vmatprep.subr.mxu0 0.0
    %1393 = vmatpush1.msra.mxu0 0.0
    %1394 = vmatprep.subr.mxu0 0.0
    %1395 = vmatpush1.msra.mxu0 0.0
    %1396 = vmatprep.subr.mxu0 0.0
    %1397 = vmatpush1.msra.mxu0 0.0
    %1398 = vmatprep.subr.mxu0 0.0
    %1399 = vmatpush1.msra.mxu0 0.0
    %1400 = vmatprep.subr.mxu0 0.0
    %1401 = vmatpush1.msra.mxu0 0.0
    %1402 = vmatprep.subr.mxu0 0.0
    %1403 = vmatpush1.msra.mxu0 0.0
    %1404 = vmatprep.subr.mxu0 0.0
    %1405 = vmatpush1.msra.mxu0 0.0
    %1406 = vmatprep.subr.mxu0 0.0
    %1407 = vmatpush1.msra.mxu0 0.0
    %1408 = vmatprep.subr.mxu0 0.0
    %1409 = vmatpush1.msra.mxu0 0.0
    %1410 = vmatprep.subr.mxu0 0.0
    %1411 = vmatpush1.msra.mxu0 0.0
    %1412 = vmatprep.subr.mxu0 0.0
    %1413 = vmatpush1.msra.mxu0 0.0
    %1414 = vmatprep.subr.mxu0 0.0
    %1415 = vmatpush1.msra.mxu0 0.0
    %1416 = vmatprep.subr.mxu0 0.0
    %1417 = vmatpush1.msra.mxu0 0.0
    %1418 = vmatprep.subr.mxu0 0.0
    %1419 = vmatpush1.msra.mxu0 0.0
    %1420 = vmatprep.subr.mxu0 0.0
    %1421 = vmatpush1.msra.mxu0 0.0
    %1422 = vmatprep.subr.mxu0 0.0
    %1423 = vmatpush1.msra.mxu0 0.0
    %1424 = vmatprep.subr.mxu0 0.0
    %1425 = vmatpush1.msra.mxu0 0.0
    %1426 = vmatprep.subr.mxu0 0.0
    %1427 = vmatpush1.msra.mxu0 0.0
    %1428 = vmatprep.subr.mxu0 0.0
    %1429 = vmatpush1.msra.mxu0 0.0
    %1430 = vmatprep.mubr.f32.mxu0 0.0
    %1431 = vmatmul.mubr.f32.gmra.mrb[0].mxu0 %v1361
    %v1432 = vpop.f32.mrb[0].mxu0
    %v1433 = vadd.f32 0.0, %v1432
    %v1434 = vpop.f32.mrb[0].mxu0
    %1435 = vmatprep.mubr.f32.mxu0 0.0
    %1436 = vmatmul.mubr.f32.gmra.mrb[0].mxu0 %v1364
    %v1437 = vpop.f32.mrb[0].mxu0
    %v1438 = vadd.f32 0.0, %v1437
    %v1439 = vpop.f32.mrb[0].mxu0
    %1440 = vdwg.mxu0
    %v1442 = vsel %vm468, %v717, 0
    %v1445 = vsel %vm468, %v790, 0
    %1447 = vmatprep.subr.mxu0 0.0
    %1448 = vmatpush1.msra.mxu0 %v793
    %1449 = vmatprep.subr.mxu0 0.0
    %1450 = vmatpush1.msra.mxu0 0.0
    %1451 = vmatprep.subr.mxu0 0.0
    %1452 = vmatpush1.msra.mxu0 0.0
    %1453 = vmatprep.subr.mxu0 0.0
    %1454 = vmatpush1.msra.mxu0 0.0
    %1455 = vmatprep.subr.mxu0 0.0
    %1456 = vmatpush1.msra.mxu0 0.0
    %1457 = vmatprep.subr.mxu0 0.0
    %1458 = vmatpush1.msra.mxu0 0.0
    %1459 = vmatprep.subr.mxu0 0.0
    %1460 = vmatpush1.msra.mxu0 0.0
    %1461 = vmatprep.subr.mxu0 0.0
    %1462 = vmatpush1.msra.mxu0 0.0
    %1463 = vmatprep.subr.mxu0 0.0
    %1464 = vmatpush1.msra.mxu0 0.0
    %1465 = vmatprep.subr.mxu0 0.0
    %1466 = vmatpush1.msra.mxu0 0.0
    %1467 = vmatprep.subr.mxu0 0.0
    %1468 = vmatpush1.msra.mxu0 0.0
    %1469 = vmatprep.subr.mxu0 0.0
    %1470 = vmatpush1.msra.mxu0 0.0
    %1471 = vmatprep.subr.mxu0 0.0
    %1472 = vmatpush1.msra.mxu0 0.0
    %1473 = vmatprep.subr.mxu0 0.0
    %1474 = vmatpush1.msra.mxu0 0.0
    %1475 = vmatprep.subr.mxu0 0.0
    %1476 = vmatpush1.msra.mxu0 0.0
    %1477 = vmatprep.subr.mxu0 0.0
    %1478 = vmatpush1.msra.mxu0 0.0
    %1479 = vmatprep.subr.mxu0 0.0
    %1480 = vmatpush1.msra.mxu0 0.0
    %1481 = vmatprep.subr.mxu0 0.0
    %1482 = vmatpush1.msra.mxu0 0.0
    %1483 = vmatprep.subr.mxu0 0.0
    %1484 = vmatpush1.msra.mxu0 0.0
    %1485 = vmatprep.subr.mxu0 0.0
    %1486 = vmatpush1.msra.mxu0 0.0
    %1487 = vmatprep.subr.mxu0 0.0
    %1488 = vmatpush1.msra.mxu0 0.0
    %1489 = vmatprep.subr.mxu0 0.0
    %1490 = vmatpush1.msra.mxu0 0.0
    %1491 = vmatprep.subr.mxu0 0.0
    %1492 = vmatpush1.msra.mxu0 0.0
    %1493 = vmatprep.subr.mxu0 0.0
    %1494 = vmatpush1.msra.mxu0 0.0
    %1495 = vmatprep.subr.mxu0 0.0
    %1496 = vmatpush1.msra.mxu0 0.0
    %1497 = vmatprep.subr.mxu0 0.0
    %1498 = vmatpush1.msra.mxu0 0.0
    %1499 = vmatprep.subr.mxu0 0.0
    %1500 = vmatpush1.msra.mxu0 0.0
    %1501 = vmatprep.subr.mxu0 0.0
    %1502 = vmatpush1.msra.mxu0 0.0
    %1503 = vmatprep.subr.mxu0 0.0
    %1504 = vmatpush1.msra.mxu0 0.0
    %1505 = vmatprep.subr.mxu0 0.0
    %1506 = vmatpush1.msra.mxu0 0.0
    %1507 = vmatprep.subr.mxu0 0.0
    %1508 = vmatpush1.msra.mxu0 0.0
    %1509 = vmatprep.subr.mxu0 0.0
    %1510 = vmatpush1.msra.mxu0 0.0
    %1511 = vmatprep.mubr.f32.mxu0 0.0
    %1512 = vmatmul.mubr.f32.gmra.mrb[0].mxu0 %v1442
    %v1513 = vpop.f32.mrb[0].mxu0
    %v1514 = vadd.f32 %v1433, %v1513
    %v1515 = vpop.f32.mrb[0].mxu0
    %1516 = vmatprep.mubr.f32.mxu0 0.0
    %1517 = vmatmul.mubr.f32.gmra.mrb[0].mxu0 %v1445
    %v1518 = vpop.f32.mrb[0].mxu0
    %v1519 = vadd.f32 %v1438, %v1518
    %v1520 = vpop.f32.mrb[0].mxu0
    %1521 = vdwg.mxu0
    %s1522 = scalar_lea.vmem %s5, 64
    %v1523 = vld [vmem:[%s1522] sm:$0xff]
    %v1524 = vld [vmem:[%s1522 + $0x8] sm:$0xff]
    %v1525 = vld [vmem:[%s1522 + $0x10] sm:$0xff]
    %v1526 = vld [vmem:[%s1522 + $0x18] sm:$0xff]
    %1527 = vmatprep.subr.mxu0 0.0
    %1528 = vmatpush1.msra.mxu0 %v1523
    %1529 = vmatprep.subr.mxu0 0.0
    %1530 = vmatpush1.msra.mxu0 %v1524
    %1531 = vmatprep.subr.mxu0 0.0
    %1532 = vmatpush1.msra.mxu0 %v1525
    %1533 = vmatprep.subr.mxu0 0.0
    %1534 = vmatpush1.msra.mxu0 %v1526
    %1535 = vmatprep.subr.mxu0 0.0
    %1536 = vmatpush1.msra.mxu0 0.0
    %1537 = vmatprep.subr.mxu0 0.0
    %1538 = vmatpush1.msra.mxu0 0.0
    %1539 = vmatprep.subr.mxu0 0.0
    %1540 = vmatpush1.msra.mxu0 0.0
    %1541 = vmatprep.subr.mxu0 0.0
    %1542 = vmatpush1.msra.mxu0 0.0
    %1543 = vmatprep.subr.mxu0 0.0
    %1544 = vmatpush1.msra.mxu0 0.0
    %1545 = vmatprep.subr.mxu0 0.0
    %1546 = vmatpush1.msra.mxu0 0.0
    %1547 = vmatprep.subr.mxu0 0.0
    %1548 = vmatpush1.msra.mxu0 0.0
    %1549 = vmatprep.subr.mxu0 0.0
    %1550 = vmatpush1.msra.mxu0 0.0
    %1551 = vmatprep.subr.mxu0 0.0
    %1552 = vmatpush1.msra.mxu0 0.0
    %1553 = vmatprep.subr.mxu0 0.0
    %1554 = vmatpush1.msra.mxu0 0.0
    %1555 = vmatprep.subr.mxu0 0.0
    %1556 = vmatpush1.msra.mxu0 0.0
    %1557 = vmatprep.subr.mxu0 0.0
    %1558 = vmatpush1.msra.mxu0 0.0
    %1559 = vmatprep.subr.mxu0 0.0
    %1560 = vmatpush1.msra.mxu0 0.0
    %1561 = vmatprep.subr.mxu0 0.0
    %1562 = vmatpush1.msra.mxu0 0.0
    %1563 = vmatprep.subr.mxu0 0.0
    %1564 = vmatpush1.msra.mxu0 0.0
    %1565 = vmatprep.subr.mxu0 0.0
    %1566 = vmatpush1.msra.mxu0 0.0
    %1567 = vmatprep.subr.mxu0 0.0
    %1568 = vmatpush1.msra.mxu0 0.0
    %1569 = vmatprep.subr.mxu0 0.0
    %1570 = vmatpush1.msra.mxu0 0.0
    %1571 = vmatprep.subr.mxu0 0.0
    %1572 = vmatpush1.msra.mxu0 0.0
    %1573 = vmatprep.subr.mxu0 0.0
    %1574 = vmatpush1.msra.mxu0 0.0
    %1575 = vmatprep.subr.mxu0 0.0
    %1576 = vmatpush1.msra.mxu0 0.0
    %1577 = vmatprep.subr.mxu0 0.0
    %1578 = vmatpush1.msra.mxu0 0.0
    %1579 = vmatprep.subr.mxu0 0.0
    %1580 = vmatpush1.msra.mxu0 0.0
    %1581 = vmatprep.subr.mxu0 0.0
    %1582 = vmatpush1.msra.mxu0 0.0
    %1583 = vmatprep.subr.mxu0 0.0
    %1584 = vmatpush1.msra.mxu0 0.0
    %1585 = vmatprep.subr.mxu0 0.0
    %1586 = vmatpush1.msra.mxu0 0.0
    %1587 = vmatprep.subr.mxu0 0.0
    %1588 = vmatpush1.msra.mxu0 0.0
    %1589 = vmatprep.subr.mxu0 0.0
    %1590 = vmatpush1.msra.mxu0 0.0
    %1591 = vmatprep.mubr.f32.mxu0 0.0
    %1592 = vmatmul.mubr.f32.gmra.mrb[0].mxu0 %v230
    %v1593 = vpop.f32.mrb[0].mxu0
    %v1594 = vadd.f32 0.0, %v1593
    %v1595 = vpop.f32.mrb[0].mxu0
    %1596 = vmatprep.mubr.f32.mxu0 0.0
    %1597 = vmatmul.mubr.f32.gmra.mrb[0].mxu0 %v233
    %v1598 = vpop.f32.mrb[0].mxu0
    %v1599 = vadd.f32 0.0, %v1598
    %v1600 = vpop.f32.mrb[0].mxu0
    %1601 = vdwg.mxu0
    %s1602 = scalar_lea.vmem %s6, 64
    %v1603 = vld [vmem:[%s1602] sm:$0xff]
    %v1604 = vld [vmem:[%s1602 + $0x8] sm:$0xff]
    %v1605 = vld [vmem:[%s1602 + $0x10] sm:$0xff]
    %v1606 = vld [vmem:[%s1602 + $0x18] sm:$0xff]
    %1607 = vmatprep.subr.mxu0 0.0
    %1608 = vmatpush1.msra.mxu0 %v1603
    %1609 = vmatprep.subr.mxu0 0.0
    %1610 = vmatpush1.msra.mxu0 %v1604
    %1611 = vmatprep.subr.mxu0 0.0
    %1612 = vmatpush1.msra.mxu0 %v1605
    %1613 = vmatprep.subr.mxu0 0.0
    %1614 = vmatpush1.msra.mxu0 %v1606
    %1615 = vmatprep.subr.mxu0 0.0
    %1616 = vmatpush1.msra.mxu0 0.0
    %1617 = vmatprep.subr.mxu0 0.0
    %1618 = vmatpush1.msra.mxu0 0.0
    %1619 = vmatprep.subr.mxu0 0.0
    %1620 = vmatpush1.msra.mxu0 0.0
    %1621 = vmatprep.subr.mxu0 0.0
    %1622 = vmatpush1.msra.mxu0 0.0
    %1623 = vmatprep.subr.mxu0 0.0
    %1624 = vmatpush1.msra.mxu0 0.0
    %1625 = vmatprep.subr.mxu0 0.0
    %1626 = vmatpush1.msra.mxu0 0.0
    %1627 = vmatprep.subr.mxu0 0.0
    %1628 = vmatpush1.msra.mxu0 0.0
    %1629 = vmatprep.subr.mxu0 0.0
    %1630 = vmatpush1.msra.mxu0 0.0
    %1631 = vmatprep.subr.mxu0 0.0
    %1632 = vmatpush1.msra.mxu0 0.0
    %1633 = vmatprep.subr.mxu0 0.0
    %1634 = vmatpush1.msra.mxu0 0.0
    %1635 = vmatprep.subr.mxu0 0.0
    %1636 = vmatpush1.msra.mxu0 0.0
    %1637 = vmatprep.subr.mxu0 0.0
    %1638 = vmatpush1.msra.mxu0 0.0
    %1639 = vmatprep.subr.mxu0 0.0
    %1640 = vmatpush1.msra.mxu0 0.0
    %1641 = vmatprep.subr.mxu0 0.0
    %1642 = vmatpush1.msra.mxu0 0.0
    %1643 = vmatprep.subr.mxu0 0.0
    %1644 = vmatpush1.msra.mxu0 0.0
    %1645 = vmatprep.subr.mxu0 0.0
    %1646 = vmatpush1.msra.mxu0 0.0
    %1647 = vmatprep.subr.mxu0 0.0
    %1648 = vmatpush1.msra.mxu0 0.0
    %1649 = vmatprep.subr.mxu0 0.0
    %1650 = vmatpush1.msra.mxu0 0.0
    %1651 = vmatprep.subr.mxu0 0.0
    %1652 = vmatpush1.msra.mxu0 0.0
    %1653 = vmatprep.subr.mxu0 0.0
    %1654 = vmatpush1.msra.mxu0 0.0
    %1655 = vmatprep.subr.mxu0 0.0
    %1656 = vmatpush1.msra.mxu0 0.0
    %1657 = vmatprep.subr.mxu0 0.0
    %1658 = vmatpush1.msra.mxu0 0.0
    %1659 = vmatprep.subr.mxu0 0.0
    %1660 = vmatpush1.msra.mxu0 0.0
    %1661 = vmatprep.subr.mxu0 0.0
    %1662 = vmatpush1.msra.mxu0 0.0
    %1663 = vmatprep.subr.mxu0 0.0
    %1664 = vmatpush1.msra.mxu0 0.0
    %1665 = vmatprep.subr.mxu0 0.0
    %1666 = vmatpush1.msra.mxu0 0.0
    %1667 = vmatprep.subr.mxu0 0.0
    %1668 = vmatpush1.msra.mxu0 0.0
    %1669 = vmatprep.subr.mxu0 0.0
    %1670 = vmatpush1.msra.mxu0 0.0
    %1671 = vmatprep.mubr.f32.mxu0 0.0
    %1672 = vmatmul.mubr.f32.gmra.mrb[0].mxu0 %v230
    %v1673 = vpop.f32.mrb[0].mxu0
    %v1674 = vadd.f32 0.0, %v1673
    %v1675 = vpop.f32.mrb[0].mxu0
    %1676 = vmatprep.mubr.f32.mxu0 0.0
    %1677 = vmatmul.mubr.f32.gmra.mrb[0].mxu0 %v233
    %v1678 = vpop.f32.mrb[0].mxu0
    %v1679 = vadd.f32 0.0, %v1678
    %v1680 = vpop.f32.mrb[0].mxu0
    %1681 = vdwg.mxu0
    %s1682 = scalar_lea.vmem %s7, 64
    %v1683 = vld [vmem:[%s1682] sm:$0xff]
    %v1684 = vld [vmem:[%s1682 + $0x8] sm:$0xff]
    %v1685 = vld [vmem:[%s1682 + $0x10] sm:$0xff]
    %v1686 = vld [vmem:[%s1682 + $0x18] sm:$0xff]
    %1687 = vmatprep.subr.mxu0 0.0
    %1688 = vmatpush1.msra.mxu0 %v1683
    %1689 = vmatprep.subr.mxu0 0.0
    %1690 = vmatpush1.msra.mxu0 %v1684
    %1691 = vmatprep.subr.mxu0 0.0
    %1692 = vmatpush1.msra.mxu0 %v1685
    %1693 = vmatprep.subr.mxu0 0.0
    %1694 = vmatpush1.msra.mxu0 %v1686
    %1695 = vmatprep.subr.mxu0 0.0
    %1696 = vmatpush1.msra.mxu0 0.0
    %1697 = vmatprep.subr.mxu0 0.0
    %1698 = vmatpush1.msra.mxu0 0.0
    %1699 = vmatprep.subr.mxu0 0.0
    %1700 = vmatpush1.msra.mxu0 0.0
    %1701 = vmatprep.subr.mxu0 0.0
    %1702 = vmatpush1.msra.mxu0 0.0
    %1703 = vmatprep.subr.mxu0 0.0
    %1704 = vmatpush1.msra.mxu0 0.0
    %1705 = vmatprep.subr.mxu0 0.0
    %1706 = vmatpush1.msra.mxu0 0.0
    %1707 = vmatprep.subr.mxu0 0.0
    %1708 = vmatpush1.msra.mxu0 0.0
    %1709 = vmatprep.subr.mxu0 0.0
    %1710 = vmatpush1.msra.mxu0 0.0
    %1711 = vmatprep.subr.mxu0 0.0
    %1712 = vmatpush1.msra.mxu0 0.0
    %1713 = vmatprep.subr.mxu0 0.0
    %1714 = vmatpush1.msra.mxu0 0.0
    %1715 = vmatprep.subr.mxu0 0.0
    %1716 = vmatpush1.msra.mxu0 0.0
    %1717 = vmatprep.subr.mxu0 0.0
    %1718 = vmatpush1.msra.mxu0 0.0
    %1719 = vmatprep.subr.mxu0 0.0
    %1720 = vmatpush1.msra.mxu0 0.0
    %1721 = vmatprep.subr.mxu0 0.0
    %1722 = vmatpush1.msra.mxu0 0.0
    %1723 = vmatprep.subr.mxu0 0.0
    %1724 = vmatpush1.msra.mxu0 0.0
    %1725 = vmatprep.subr.mxu0 0.0
    %1726 = vmatpush1.msra.mxu0 0.0
    %1727 = vmatprep.subr.mxu0 0.0
    %1728 = vmatpush1.msra.mxu0 0.0
    %1729 = vmatprep.subr.mxu0 0.0
    %1730 = vmatpush1.msra.mxu0 0.0
    %1731 = vmatprep.subr.mxu0 0.0
    %1732 = vmatpush1.msra.mxu0 0.0
    %1733 = vmatprep.subr.mxu0 0.0
    %1734 = vmatpush1.msra.mxu0 0.0
    %1735 = vmatprep.subr.mxu0 0.0
    %1736 = vmatpush1.msra.mxu0 0.0
    %1737 = vmatprep.subr.mxu0 0.0
    %1738 = vmatpush1.msra.mxu0 0.0
    %1739 = vmatprep.subr.mxu0 0.0
    %1740 = vmatpush1.msra.mxu0 0.0
    %1741 = vmatprep.subr.mxu0 0.0
    %1742 = vmatpush1.msra.mxu0 0.0
    %1743 = vmatprep.subr.mxu0 0.0
    %1744 = vmatpush1.msra.mxu0 0.0
    %1745 = vmatprep.subr.mxu0 0.0
    %1746 = vmatpush1.msra.mxu0 0.0
    %1747 = vmatprep.subr.mxu0 0.0
    %1748 = vmatpush1.msra.mxu0 0.0
    %1749 = vmatprep.subr.mxu0 0.0
    %1750 = vmatpush1.msra.mxu0 0.0
    %1751 = vmatprep.mubr.f32.mxu0 0.0
    %1752 = vmatmul.mubr.f32.gmra.mrb[0].mxu0 %v230
    %v1753 = vpop.f32.mrb[0].mxu0
    %v1754 = vadd.f32 0.0, %v1753
    %v1755 = vpop.f32.mrb[0].mxu0
    %1756 = vmatprep.mubr.f32.mxu0 0.0
    %1757 = vmatmul.mubr.f32.gmra.mrb[0].mxu0 %v233
    %v1758 = vpop.f32.mrb[0].mxu0
    %v1759 = vadd.f32 0.0, %v1758
    %v1760 = vpop.f32.mrb[0].mxu0
    %1761 = vdwg.mxu0
    %v1763 = vsel %vm468, %v1594, 0
    %v1766 = vsel %vm468, %v1674, 0
    %1768 = vmatprep.subr.mxu0 0.0
    %1769 = vmatpush1.xpose.msra.mxu0 %v1766
    %1770 = vmatprep.subr.mxu0 0.0
    %1771 = vmatpush1.xpose.msra.mxu0 0.0
    %1772 = vmatprep.subr.mxu0 0.0
    %1773 = vmatpush1.xpose.msra.mxu0 0.0
    %1774 = vmatprep.subr.mxu0 0.0
    %1775 = vmatpush1.xpose.msra.mxu0 0.0
    %1776 = vmatprep.subr.mxu0 0.0
    %1777 = vmatpush1.xpose.msra.mxu0 0.0
    %1778 = vmatprep.subr.mxu0 0.0
    %1779 = vmatpush1.xpose.msra.mxu0 0.0
    %1780 = vmatprep.subr.mxu0 0.0
    %1781 = vmatpush1.xpose.msra.mxu0 0.0
    %1782 = vmatprep.subr.mxu0 0.0
    %1783 = vmatpush1.xpose.msra.mxu0 0.0
    %1784 = vmatprep.subr.mxu0 0.0
    %1785 = vmatpush1.xpose.msra.mxu0 0.0
    %1786 = vmatprep.subr.mxu0 0.0
    %1787 = vmatpush1.xpose.msra.mxu0 0.0
    %1788 = vmatprep.subr.mxu0 0.0
    %1789 = vmatpush1.xpose.msra.mxu0 0.0
    %1790 = vmatprep.subr.mxu0 0.0
    %1791 = vmatpush1.xpose.msra.mxu0 0.0
    %1792 = vmatprep.subr.mxu0 0.0
    %1793 = vmatpush1.xpose.msra.mxu0 0.0
    %1794 = vmatprep.subr.mxu0 0.0
    %1795 = vmatpush1.xpose.msra.mxu0 0.0
    %1796 = vmatprep.subr.mxu0 0.0
    %1797 = vmatpush1.xpose.msra.mxu0 0.0
    %1798 = vmatprep.subr.mxu0 0.0
    %1799 = vmatpush1.xpose.msra.mxu0 0.0
    %1800 = vmatprep.subr.mxu0 0.0
    %1801 = vmatpush1.xpose.msra.mxu0 0.0
    %1802 = vmatprep.subr.mxu0 0.0
    %1803 = vmatpush1.xpose.msra.mxu0 0.0
    %1804 = vmatprep.subr.mxu0 0.0
    %1805 = vmatpush1.xpose.msra.mxu0 0.0
    %1806 = vmatprep.subr.mxu0 0.0
    %1807 = vmatpush1.xpose.msra.mxu0 0.0
    %1808 = vmatprep.subr.mxu0 0.0
    %1809 = vmatpush1.xpose.msra.mxu0 0.0
    %1810 = vmatprep.subr.mxu0 0.0
    %1811 = vmatpush1.xpose.msra.mxu0 0.0
    %1812 = vmatprep.subr.mxu0 0.0
    %1813 = vmatpush1.xpose.msra.mxu0 0.0
    %1814 = vmatprep.subr.mxu0 0.0
    %1815 = vmatpush1.xpose.msra.mxu0 0.0
    %1816 = vmatprep.subr.mxu0 0.0
    %1817 = vmatpush1.xpose.msra.mxu0 0.0
    %1818 = vmatprep.subr.mxu0 0.0
    %1819 = vmatpush1.xpose.msra.mxu0 0.0
    %1820 = vmatprep.subr.mxu0 0.0
    %1821 = vmatpush1.xpose.msra.mxu0 0.0
    %1822 = vmatprep.subr.mxu0 0.0
    %1823 = vmatpush1.xpose.msra.mxu0 0.0
    %1824 = vmatprep.subr.mxu0 0.0
    %1825 = vmatpush1.xpose.msra.mxu0 0.0
    %1826 = vmatprep.subr.mxu0 0.0
    %1827 = vmatpush1.xpose.msra.mxu0 0.0
    %1828 = vmatprep.subr.mxu0 0.0
    %1829 = vmatpush1.xpose.msra.mxu0 0.0
    %1830 = vmatprep.subr.mxu0 0.0
    %1831 = vmatpush1.xpose.msra.mxu0 0.0
    %1832 = vmatprep.mubr.f32.mxu0 0.0
    %1833 = vmatmul.mubr.f32.gmra.mrb[0].mxu0 %v1763
    %v1834 = vpop.f32.mrb[0].mxu0
    %v1835 = vadd.f32 0.0, %v1834
    %v1836 = vpop.f32.mrb[0].mxu0
    %1837 = vdwg.mxu0
    %v1839 = vsel %vm468, %v1599, 0
    %v1842 = vsel %vm468, %v1679, 0
    %1844 = vmatprep.subr.mxu0 0.0
    %1845 = vmatpush1.xpose.msra.mxu0 %v1842
    %1846 = vmatprep.subr.mxu0 0.0
    %1847 = vmatpush1.xpose.msra.mxu0 0.0
    %1848 = vmatprep.subr.mxu0 0.0
    %1849 = vmatpush1.xpose.msra.mxu0 0.0
    %1850 = vmatprep.subr.mxu0 0.0
    %1851 = vmatpush1.xpose.msra.mxu0 0.0
    %1852 = vmatprep.subr.mxu0 0.0
    %1853 = vmatpush1.xpose.msra.mxu0 0.0
    %1854 = vmatprep.subr.mxu0 0.0
    %1855 = vmatpush1.xpose.msra.mxu0 0.0
    %1856 = vmatprep.subr.mxu0 0.0
    %1857 = vmatpush1.xpose.msra.mxu0 0.0
    %1858 = vmatprep.subr.mxu0 0.0
    %1859 = vmatpush1.xpose.msra.mxu0 0.0
    %1860 = vmatprep.subr.mxu0 0.0
    %1861 = vmatpush1.xpose.msra.mxu0 0.0
    %1862 = vmatprep.subr.mxu0 0.0
    %1863 = vmatpush1.xpose.msra.mxu0 0.0
    %1864 = vmatprep.subr.mxu0 0.0
    %1865 = vmatpush1.xpose.msra.mxu0 0.0
    %1866 = vmatprep.subr.mxu0 0.0
    %1867 = vmatpush1.xpose.msra.mxu0 0.0
    %1868 = vmatprep.subr.mxu0 0.0
    %1869 = vmatpush1.xpose.msra.mxu0 0.0
    %1870 = vmatprep.subr.mxu0 0.0
    %1871 = vmatpush1.xpose.msra.mxu0 0.0
    %1872 = vmatprep.subr.mxu0 0.0
    %1873 = vmatpush1.xpose.msra.mxu0 0.0
    %1874 = vmatprep.subr.mxu0 0.0
    %1875 = vmatpush1.xpose.msra.mxu0 0.0
    %1876 = vmatprep.subr.mxu0 0.0
    %1877 = vmatpush1.xpose.msra.mxu0 0.0
    %1878 = vmatprep.subr.mxu0 0.0
    %1879 = vmatpush1.xpose.msra.mxu0 0.0
    %1880 = vmatprep.subr.mxu0 0.0
    %1881 = vmatpush1.xpose.msra.mxu0 0.0
    %1882 = vmatprep.subr.mxu0 0.0
    %1883 = vmatpush1.xpose.msra.mxu0 0.0
    %1884 = vmatprep.subr.mxu0 0.0
    %1885 = vmatpush1.xpose.msra.mxu0 0.0
    %1886 = vmatprep.subr.mxu0 0.0
    %1887 = vmatpush1.xpose.msra.mxu0 0.0
    %1888 = vmatprep.subr.mxu0 0.0
    %1889 = vmatpush1.xpose.msra.mxu0 0.0
    %1890 = vmatprep.subr.mxu0 0.0
    %1891 = vmatpush1.xpose.msra.mxu0 0.0
    %1892 = vmatprep.subr.mxu0 0.0
    %1893 = vmatpush1.xpose.msra.mxu0 0.0
    %1894 = vmatprep.subr.mxu0 0.0
    %1895 = vmatpush1.xpose.msra.mxu0 0.0
    %1896 = vmatprep.subr.mxu0 0.0
    %1897 = vmatpush1.xpose.msra.mxu0 0.0
    %1898 = vmatprep.subr.mxu0 0.0
    %1899 = vmatpush1.xpose.msra.mxu0 0.0
    %1900 = vmatprep.subr.mxu0 0.0
    %1901 = vmatpush1.xpose.msra.mxu0 0.0
    %1902 = vmatprep.subr.mxu0 0.0
    %1903 = vmatpush1.xpose.msra.mxu0 0.0
    %1904 = vmatprep.subr.mxu0 0.0
    %1905 = vmatpush1.xpose.msra.mxu0 0.0
    %1906 = vmatprep.subr.mxu0 0.0
    %1907 = vmatpush1.xpose.msra.mxu0 0.0
    %1908 = vmatprep.mubr.f32.mxu0 0.0
    %1909 = vmatmul.mubr.f32.gmra.mrb[0].mxu0 %v1839
    %v1910 = vpop.f32.mrb[0].mxu0
    %v1911 = vadd.f32 0.0, %v1910
    %v1912 = vpop.f32.mrb[0].mxu0
    %1913 = vdwg.mxu0
    %v1914 = vmul.f32 %v1835, 0.17677669
    %v1915 = vmul.f32 %v1911, 0.17677669
    %v1916 = vadd.f32 %v1914, %v178
    %v1917 = vadd.f32 %v1915, %v178
    %v1918 = vsel %vm468, %v1916, -inf
    %1919 = vmax.xlane.f32.xlu0 %v1918
    %v1920 = vpop.xlane.xlu0 %1919
    %v1921 = vsel %vm468, %v1917, -inf
    %1922 = vmax.xlane.f32.xlu0 %v1921
    %v1923 = vpop.xlane.xlu0 %1922
    %v1924 = vsub.f32 %v1916, %v1920
    %v1925 = vsub.f32 %v1917, %v1923
    %v1926 = vmul.f32 %v1924, 1.442695
    %v1927 = vpow.pop %v1926
    %v1928 = vmul.f32 %v1925, 1.442695
    %v1929 = vpow.pop %v1928
    %v1930 = vsel %vm468, %v1927, 0.0
    %1931 = vadd.xlane.f32.xlu0 %v1930
    %v1932 = vpop.xlane.xlu0 %1931
    %v1933 = vsel %vm468, %v1929, 0.0
    %1934 = vadd.xlane.f32.xlu0 %v1933
    %v1935 = vpop.xlane.xlu0 %1934
    %v1936 = vrcp.pop %v1932
    %v1937 = vmul.f32 %v1927, %v1936
    %v1938 = vrcp.pop %v1935
    %v1939 = vmul.f32 %v1929, %v1938
    %v1941 = vsel %vm468, %v1937, 0
    %1943 = vmatprep.subr.mxu0 0.0
    %1944 = vmatpush1.msra.mxu0 %v1754
    %1945 = vmatprep.subr.mxu0 0.0
    %1946 = vmatpush1.msra.mxu0 0.0
    %1947 = vmatprep.subr.mxu0 0.0
    %1948 = vmatpush1.msra.mxu0 0.0
    %1949 = vmatprep.subr.mxu0 0.0
    %1950 = vmatpush1.msra.mxu0 0.0
    %1951 = vmatprep.subr.mxu0 0.0
    %1952 = vmatpush1.msra.mxu0 0.0
    %1953 = vmatprep.subr.mxu0 0.0
    %1954 = vmatpush1.msra.mxu0 0.0
    %1955 = vmatprep.subr.mxu0 0.0
    %1956 = vmatpush1.msra.mxu0 0.0
    %1957 = vmatprep.subr.mxu0 0.0
    %1958 = vmatpush1.msra.mxu0 0.0
    %1959 = vmatprep.subr.mxu0 0.0
    %1960 = vmatpush1.msra.mxu0 0.0
    %1961 = vmatprep.subr.mxu0 0.0
    %1962 = vmatpush1.msra.mxu0 0.0
    %1963 = vmatprep.subr.mxu0 0.0
    %1964 = vmatpush1.msra.mxu0 0.0
    %1965 = vmatprep.subr.mxu0 0.0
    %1966 = vmatpush1.msra.mxu0 0.0
    %1967 = vmatprep.subr.mxu0 0.0
    %1968 = vmatpush1.msra.mxu0 0.0
    %1969 = vmatprep.subr.mxu0 0.0
    %1970 = vmatpush1.msra.mxu0 0.0
    %1971 = vmatprep.subr.mxu0 0.0
    %1972 = vmatpush1.msra.mxu0 0.0
    %1973 = vmatprep.subr.mxu0 0.0
    %1974 = vmatpush1.msra.mxu0 0.0
    %1975 = vmatprep.subr.mxu0 0.0
    %1976 = vmatpush1.msra.mxu0 0.0
    %1977 = vmatprep.subr.mxu0 0.0
    %1978 = vmatpush1.msra.mxu0 0.0
    %1979 = vmatprep.subr.mxu0 0.0
    %1980 = vmatpush1.msra.mxu0 0.0
    %1981 = vmatprep.subr.mxu0 0.0
    %1982 = vmatpush1.msra.mxu0 0.0
    %1983 = vmatprep.subr.mxu0 0.0
    %1984 = vmatpush1.msra.mxu0 0.0
    %1985 = vmatprep.subr.mxu0 0.0
    %1986 = vmatpush1.msra.mxu0 0.0
    %1987 = vmatprep.subr.mxu0 0.0
    %1988 = vmatpush1.msra.mxu0 0.0
    %1989 = vmatprep.subr.mxu0 0.0
    %1990 = vmatpush1.msra.mxu0 0.0
    %1991 = vmatprep.subr.mxu0 0.0
    %1992 = vmatpush1.msra.mxu0 0.0
    %1993 = vmatprep.subr.mxu0 0.0
    %1994 = vmatpush1.msra.mxu0 0.0
    %1995 = vmatprep.subr.mxu0 0.0
    %1996 = vmatpush1.msra.mxu0 0.0
    %1997 = vmatprep.subr.mxu0 0.0
    %1998 = vmatpush1.msra.mxu0 0.0
    %1999 = vmatprep.subr.mxu0 0.0
    %2000 = vmatpush1.msra.mxu0 0.0
    %2001 = vmatprep.subr.mxu0 0.0
    %2002 = vmatpush1.msra.mxu0 0.0
    %2003 = vmatprep.subr.mxu0 0.0
    %2004 = vmatpush1.msra.mxu0 0.0
    %2005 = vmatprep.subr.mxu0 0.0
    %2006 = vmatpush1.msra.mxu0 0.0
    %2007 = vmatprep.mubr.f32.mxu0 0.0
    %2008 = vmatmul.mubr.f32.gmra.mrb[0].mxu0 %v1941
    %v2009 = vpop.f32.mrb[0].mxu0
    %v2010 = vadd.f32 0.0, %v2009
    %v2011 = vpop.f32.mrb[0].mxu0
    %2012 = vdwg.mxu0
    %v2014 = vsel %vm468, %v1939, 0
    %2016 = vmatprep.subr.mxu0 0.0
    %2017 = vmatpush1.msra.mxu0 %v1759
    %2018 = vmatprep.subr.mxu0 0.0
    %2019 = vmatpush1.msra.mxu0 0.0
    %2020 = vmatprep.subr.mxu0 0.0
    %2021 = vmatpush1.msra.mxu0 0.0
    %2022 = vmatprep.subr.mxu0 0.0
    %2023 = vmatpush1.msra.mxu0 0.0
    %2024 = vmatprep.subr.mxu0 0.0
    %2025 = vmatpush1.msra.mxu0 0.0
    %2026 = vmatprep.subr.mxu0 0.0
    %2027 = vmatpush1.msra.mxu0 0.0
    %2028 = vmatprep.subr.mxu0 0.0
    %2029 = vmatpush1.msra.mxu0 0.0
    %2030 = vmatprep.subr.mxu0 0.0
    %2031 = vmatpush1.msra.mxu0 0.0
    %2032 = vmatprep.subr.mxu0 0.0
    %2033 = vmatpush1.msra.mxu0 0.0
    %2034 = vmatprep.subr.mxu0 0.0
    %2035 = vmatpush1.msra.mxu0 0.0
    %2036 = vmatprep.subr.mxu0 0.0
    %2037 = vmatpush1.msra.mxu0 0.0
    %2038 = vmatprep.subr.mxu0 0.0
    %2039 = vmatpush1.msra.mxu0 0.0
    %2040 = vmatprep.subr.mxu0 0.0
    %2041 = vmatpush1.msra.mxu0 0.0
    %2042 = vmatprep.subr.mxu0 0.0
    %2043 = vmatpush1.msra.mxu0 0.0
    %2044 = vmatprep.subr.mxu0 0.0
    %2045 = vmatpush1.msra.mxu0 0.0
    %2046 = vmatprep.subr.mxu0 0.0
    %2047 = vmatpush1.msra.mxu0 0.0
    %2048 = vmatprep.subr.mxu0 0.0
    %2049 = vmatpush1.msra.mxu0 0.0
    %2050 = vmatprep.subr.mxu0 0.0
    %2051 = vmatpush1.msra.mxu0 0.0
    %2052 = vmatprep.subr.mxu0 0.0
    %2053 = vmatpush1.msra.mxu0 0.0
    %2054 = vmatprep.subr.mxu0 0.0
    %2055 = vmatpush1.msra.mxu0 0.0
    %2056 = vmatprep.subr.mxu0 0.0
    %2057 = vmatpush1.msra.mxu0 0.0
    %2058 = vmatprep.subr.mxu0 0.0
    %2059 = vmatpush1.msra.mxu0 0.0
    %2060 = vmatprep.subr.mxu0 0.0
    %2061 = vmatpush1.msra.mxu0 0.0
    %2062 = vmatprep.subr.mxu0 0.0
    %2063 = vmatpush1.msra.mxu0 0.0
    %2064 = vmatprep.subr.mxu0 0.0
    %2065 = vmatpush1.msra.mxu0 0.0
    %2066 = vmatprep.subr.mxu0 0.0
    %2067 = vmatpush1.msra.mxu0 0.0
    %2068 = vmatprep.subr.mxu0 0.0
    %2069 = vmatpush1.msra.mxu0 0.0
    %2070 = vmatprep.subr.mxu0 0.0
    %2071 = vmatpush1.msra.mxu0 0.0
    %2072 = vmatprep.subr.mxu0 0.0
    %2073 = vmatpush1.msra.mxu0 0.0
    %2074 = vmatprep.subr.mxu0 0.0
    %2075 = vmatpush1.msra.mxu0 0.0
    %2076 = vmatprep.subr.mxu0 0.0
    %2077 = vmatpush1.msra.mxu0 0.0
    %2078 = vmatprep.subr.mxu0 0.0
    %2079 = vmatpush1.msra.mxu0 0.0
    %2080 = vmatprep.mubr.f32.mxu0 0.0
    %2081 = vmatmul.mubr.f32.gmra.mrb[0].mxu0 %v2014
    %v2082 = vpop.f32.mrb[0].mxu0
    %v2083 = vadd.f32 0.0, %v2082
    %v2084 = vpop.f32.mrb[0].mxu0
    %2085 = vdwg.mxu0
    %s2086 = scalar_lea.vmem %s8, 16
    %v2087 = vld [vmem:[%s2086] sm:$0xff]
    %v2089 = vsel %vm468, %v2010, 0
    %v2092 = vsel %vm468, %v2083, 0
    %2094 = vmatprep.subr.mxu0 0.0
    %2095 = vmatpush1.msra.mxu0 %v2087
    %2096 = vmatprep.subr.mxu0 0.0
    %2097 = vmatpush1.msra.mxu0 0.0
    %2098 = vmatprep.subr.mxu0 0.0
    %2099 = vmatpush1.msra.mxu0 0.0
    %2100 = vmatprep.subr.mxu0 0.0
    %2101 = vmatpush1.msra.mxu0 0.0
    %2102 = vmatprep.subr.mxu0 0.0
    %2103 = vmatpush1.msra.mxu0 0.0
    %2104 = vmatprep.subr.mxu0 0.0
    %2105 = vmatpush1.msra.mxu0 0.0
    %2106 = vmatprep.subr.mxu0 0.0
    %2107 = vmatpush1.msra.mxu0 0.0
    %2108 = vmatprep.subr.mxu0 0.0
    %2109 = vmatpush1.msra.mxu0 0.0
    %2110 = vmatprep.subr.mxu0 0.0
    %2111 = vmatpush1.msra.mxu0 0.0
    %2112 = vmatprep.subr.mxu0 0.0
    %2113 = vmatpush1.msra.mxu0 0.0
    %2114 = vmatprep.subr.mxu0 0.0
    %2115 = vmatpush1.msra.mxu0 0.0
    %2116 = vmatprep.subr.mxu0 0.0
    %2117 = vmatpush1.msra.mxu0 0.0
    %2118 = vmatprep.subr.mxu0 0.0
    %2119 = vmatpush1.msra.mxu0 0.0
    %2120 = vmatprep.subr.mxu0 0.0
    %2121 = vmatpush1.msra.mxu0 0.0
    %2122 = vmatprep.subr.mxu0 0.0
    %2123 = vmatpush1.msra.mxu0 0.0
    %2124 = vmatprep.subr.mxu0 0.0
    %2125 = vmatpush1.msra.mxu0 0.0
    %2126 = vmatprep.subr.mxu0 0.0
    %2127 = vmatpush1.msra.mxu0 0.0
    %2128 = vmatprep.subr.mxu0 0.0
    %2129 = vmatpush1.msra.mxu0 0.0
    %2130 = vmatprep.subr.mxu0 0.0
    %2131 = vmatpush1.msra.mxu0 0.0
    %2132 = vmatprep.subr.mxu0 0.0
    %2133 = vmatpush1.msra.mxu0 0.0
    %2134 = vmatprep.subr.mxu0 0.0
    %2135 = vmatpush1.msra.mxu0 0.0
    %2136 = vmatprep.subr.mxu0 0.0
    %2137 = vmatpush1.msra.mxu0 0.0
    %2138 = vmatprep.subr.mxu0 0.0
    %2139 = vmatpush1.msra.mxu0 0.0
    %2140 = vmatprep.subr.mxu0 0.0
    %2141 = vmatpush1.msra.mxu0 0.0
    %2142 = vmatprep.subr.mxu0 0.0
    %2143 = vmatpush1.msra.mxu0 0.0
    %2144 = vmatprep.subr.mxu0 0.0
    %2145 = vmatpush1.msra.mxu0 0.0
    %2146 = vmatprep.subr.mxu0 0.0
    %2147 = vmatpush1.msra.mxu0 0.0
    %2148 = vmatprep.subr.mxu0 0.0
    %2149 = vmatpush1.msra.mxu0 0.0
    %2150 = vmatprep.subr.mxu0 0.0
    %2151 = vmatpush1.msra.mxu0 0.0
    %2152 = vmatprep.subr.mxu0 0.0
    %2153 = vmatpush1.msra.mxu0 0.0
    %2154 = vmatprep.subr.mxu0 0.0
    %2155 = vmatpush1.msra.mxu0 0.0
    %2156 = vmatprep.subr.mxu0 0.0
    %2157 = vmatpush1.msra.mxu0 0.0
    %2158 = vmatprep.mubr.f32.mxu0 0.0
    %2159 = vmatmul.mubr.f32.gmra.mrb[0].mxu0 %v2089
    %v2160 = vpop.f32.mrb[0].mxu0
    %v2161 = vadd.f32 0.0, %v2160
    %v2162 = vpop.f32.mrb[0].mxu0
    %2163 = vmatprep.mubr.f32.mxu0 0.0
    %2164 = vmatmul.mubr.f32.gmra.mrb[0].mxu0 %v2092
    %v2165 = vpop.f32.mrb[0].mxu0
    %v2166 = vadd.f32 0.0, %v2165
    %v2167 = vpop.f32.mrb[0].mxu0
    %2168 = vdwg.mxu0
    %v2169 = vadd.f32 %v1514, %v2161
    %v2170 = vadd.f32 %v1519, %v2166
    %s2171 = scalar_lea.vmem %s5, 96
    %v2172 = vld [vmem:[%s2171] sm:$0xff]
    %v2173 = vld [vmem:[%s2171 + $0x8] sm:$0xff]
    %v2174 = vld [vmem:[%s2171 + $0x10] sm:$0xff]
    %v2175 = vld [vmem:[%s2171 + $0x18] sm:$0xff]
    %2176 = vmatprep.subr.mxu0 0.0
    %2177 = vmatpush1.msra.mxu0 %v2172
    %2178 = vmatprep.subr.mxu0 0.0
    %2179 = vmatpush1.msra.mxu0 %v2173
    %2180 = vmatprep.subr.mxu0 0.0
    %2181 = vmatpush1.msra.mxu0 %v2174
    %2182 = vmatprep.subr.mxu0 0.0
    %2183 = vmatpush1.msra.mxu0 %v2175
    %2184 = vmatprep.subr.mxu0 0.0
    %2185 = vmatpush1.msra.mxu0 0.0
    %2186 = vmatprep.subr.mxu0 0.0
    %2187 = vmatpush1.msra.mxu0 0.0
    %2188 = vmatprep.subr.mxu0 0.0
    %2189 = vmatpush1.msra.mxu0 0.0
    %2190 = vmatprep.subr.mxu0 0.0
    %2191 = vmatpush1.msra.mxu0 0.0
    %2192 = vmatprep.subr.mxu0 0.0
    %2193 = vmatpush1.msra.mxu0 0.0
    %2194 = vmatprep.subr.mxu0 0.0
    %2195 = vmatpush1.msra.mxu0 0.0
    %2196 = vmatprep.subr.mxu0 0.0
    %2197 = vmatpush1.msra.mxu0 0.0
    %2198 = vmatprep.subr.mxu0 0.0
    %2199 = vmatpush1.msra.mxu0 0.0
    %2200 = vmatprep.subr.mxu0 0.0
    %2201 = vmatpush1.msra.mxu0 0.0
    %2202 = vmatprep.subr.mxu0 0.0
    %2203 = vmatpush1.msra.mxu0 0.0
    %2204 = vmatprep.subr.mxu0 0.0
    %2205 = vmatpush1.msra.mxu0 0.0
    %2206 = vmatprep.subr.mxu0 0.0
    %2207 = vmatpush1.msra.mxu0 0.0
    %2208 = vmatprep.subr.mxu0 0.0
    %2209 = vmatpush1.msra.mxu0 0.0
    %2210 = vmatprep.subr.mxu0 0.0
    %2211 = vmatpush1.msra.mxu0 0.0
    %2212 = vmatprep.subr.mxu0 0.0
    %2213 = vmatpush1.msra.mxu0 0.0
    %2214 = vmatprep.subr.mxu0 0.0
    %2215 = vmatpush1.msra.mxu0 0.0
    %2216 = vmatprep.subr.mxu0 0.0
    %2217 = vmatpush1.msra.mxu0 0.0
    %2218 = vmatprep.subr.mxu0 0.0
    %2219 = vmatpush1.msra.mxu0 0.0
    %2220 = vmatprep.subr.mxu0 0.0
    %2221 = vmatpush1.msra.mxu0 0.0
    %2222 = vmatprep.subr.mxu0 0.0
    %2223 = vmatpush1.msra.mxu0 0.0
    %2224 = vmatprep.subr.mxu0 0.0
    %2225 = vmatpush1.msra.mxu0 0.0
    %2226 = vmatprep.subr.mxu0 0.0
    %2227 = vmatpush1.msra.mxu0 0.0
    %2228 = vmatprep.subr.mxu0 0.0
    %2229 = vmatpush1.msra.mxu0 0.0
    %2230 = vmatprep.subr.mxu0 0.0
    %2231 = vmatpush1.msra.mxu0 0.0
    %2232 = vmatprep.subr.mxu0 0.0
    %2233 = vmatpush1.msra.mxu0 0.0
    %2234 = vmatprep.subr.mxu0 0.0
    %2235 = vmatpush1.msra.mxu0 0.0
    %2236 = vmatprep.subr.mxu0 0.0
    %2237 = vmatpush1.msra.mxu0 0.0
    %2238 = vmatprep.subr.mxu0 0.0
    %2239 = vmatpush1.msra.mxu0 0.0
    %2240 = vmatprep.mubr.f32.mxu0 0.0
    %2241 = vmatmul.mubr.f32.gmra.mrb[0].mxu0 %v230
    %v2242 = vpop.f32.mrb[0].mxu0
    %v2243 = vadd.f32 0.0, %v2242
    %v2244 = vpop.f32.mrb[0].mxu0
    %2245 = vmatprep.mubr.f32.mxu0 0.0
    %2246 = vmatmul.mubr.f32.gmra.mrb[0].mxu0 %v233
    %v2247 = vpop.f32.mrb[0].mxu0
    %v2248 = vadd.f32 0.0, %v2247
    %v2249 = vpop.f32.mrb[0].mxu0
    %2250 = vdwg.mxu0
    %s2251 = scalar_lea.vmem %s6, 96
    %v2252 = vld [vmem:[%s2251] sm:$0xff]
    %v2253 = vld [vmem:[%s2251 + $0x8] sm:$0xff]
    %v2254 = vld [vmem:[%s2251 + $0x10] sm:$0xff]
    %v2255 = vld [vmem:[%s2251 + $0x18] sm:$0xff]
    %2256 = vmatprep.subr.mxu0 0.0
    %2257 = vmatpush1.msra.mxu0 %v2252
    %2258 = vmatprep.subr.mxu0 0.0
    %2259 = vmatpush1.msra.mxu0 %v2253
    %2260 = vmatprep.subr.mxu0 0.0
    %2261 = vmatpush1.msra.mxu0 %v2254
    %2262 = vmatprep.subr.mxu0 0.0
    %2263 = vmatpush1.msra.mxu0 %v2255
    %2264 = vmatprep.subr.mxu0 0.0
    %2265 = vmatpush1.msra.mxu0 0.0
    %2266 = vmatprep.subr.mxu0 0.0
    %2267 = vmatpush1.msra.mxu0 0.0
    %2268 = vmatprep.subr.mxu0 0.0
    %2269 = vmatpush1.msra.mxu0 0.0
    %2270 = vmatprep.subr.mxu0 0.0
    %2271 = vmatpush1.msra.mxu0 0.0
    %2272 = vmatprep.subr.mxu0 0.0
    %2273 = vmatpush1.msra.mxu0 0.0
    %2274 = vmatprep.subr.mxu0 0.0
    %2275 = vmatpush1.msra.mxu0 0.0
    %2276 = vmatprep.subr.mxu0 0.0
    %2277 = vmatpush1.msra.mxu0 0.0
    %2278 = vmatprep.subr.mxu0 0.0
    %2279 = vmatpush1.msra.mxu0 0.0
    %2280 = vmatprep.subr.mxu0 0.0
    %2281 = vmatpush1.msra.mxu0 0.0
    %2282 = vmatprep.subr.mxu0 0.0
    %2283 = vmatpush1.msra.mxu0 0.0
    %2284 = vmatprep.subr.mxu0 0.0
    %2285 = vmatpush1.msra.mxu0 0.0
    %2286 = vmatprep.subr.mxu0 0.0
    %2287 = vmatpush1.msra.mxu0 0.0
    %2288 = vmatprep.subr.mxu0 0.0
    %2289 = vmatpush1.msra.mxu0 0.0
    %2290 = vmatprep.subr.mxu0 0.0
    %2291 = vmatpush1.msra.mxu0 0.0
    %2292 = vmatprep.subr.mxu0 0.0
    %2293 = vmatpush1.msra.mxu0 0.0
    %2294 = vmatprep.subr.mxu0 0.0
    %2295 = vmatpush1.msra.mxu0 0.0
    %2296 = vmatprep.subr.mxu0 0.0
    %2297 = vmatpush1.msra.mxu0 0.0
    %2298 = vmatprep.subr.mxu0 0.0
    %2299 = vmatpush1.msra.mxu0 0.0
    %2300 = vmatprep.subr.mxu0 0.0
    %2301 = vmatpush1.msra.mxu0 0.0
    %2302 = vmatprep.subr.mxu0 0.0
    %2303 = vmatpush1.msra.mxu0 0.0
    %2304 = vmatprep.subr.mxu0 0.0
    %2305 = vmatpush1.msra.mxu0 0.0
    %2306 = vmatprep.subr.mxu0 0.0
    %2307 = vmatpush1.msra.mxu0 0.0
    %2308 = vmatprep.subr.mxu0 0.0
    %2309 = vmatpush1.msra.mxu0 0.0
    %2310 = vmatprep.subr.mxu0 0.0
    %2311 = vmatpush1.msra.mxu0 0.0
    %2312 = vmatprep.subr.mxu0 0.0
    %2313 = vmatpush1.msra.mxu0 0.0
    %2314 = vmatprep.subr.mxu0 0.0
    %2315 = vmatpush1.msra.mxu0 0.0
    %2316 = vmatprep.subr.mxu0 0.0
    %2317 = vmatpush1.msra.mxu0 0.0
    %2318 = vmatprep.subr.mxu0 0.0
    %2319 = vmatpush1.msra.mxu0 0.0
    %2320 = vmatprep.mubr.f32.mxu0 0.0
    %2321 = vmatmul.mubr.f32.gmra.mrb[0].mxu0 %v230
    %v2322 = vpop.f32.mrb[0].mxu0
    %v2323 = vadd.f32 0.0, %v2322
    %v2324 = vpop.f32.mrb[0].mxu0
    %2325 = vmatprep.mubr.f32.mxu0 0.0
    %2326 = vmatmul.mubr.f32.gmra.mrb[0].mxu0 %v233
    %v2327 = vpop.f32.mrb[0].mxu0
    %v2328 = vadd.f32 0.0, %v2327
    %v2329 = vpop.f32.mrb[0].mxu0
    %2330 = vdwg.mxu0
    %s2331 = scalar_lea.vmem %s7, 96
    %v2332 = vld [vmem:[%s2331] sm:$0xff]
    %v2333 = vld [vmem:[%s2331 + $0x8] sm:$0xff]
    %v2334 = vld [vmem:[%s2331 + $0x10] sm:$0xff]
    %v2335 = vld [vmem:[%s2331 + $0x18] sm:$0xff]
    %2336 = vmatprep.subr.mxu0 0.0
    %2337 = vmatpush1.msra.mxu0 %v2332
    %2338 = vmatprep.subr.mxu0 0.0
    %2339 = vmatpush1.msra.mxu0 %v2333
    %2340 = vmatprep.subr.mxu0 0.0
    %2341 = vmatpush1.msra.mxu0 %v2334
    %2342 = vmatprep.subr.mxu0 0.0
    %2343 = vmatpush1.msra.mxu0 %v2335
    %2344 = vmatprep.subr.mxu0 0.0
    %2345 = vmatpush1.msra.mxu0 0.0
    %2346 = vmatprep.subr.mxu0 0.0
    %2347 = vmatpush1.msra.mxu0 0.0
    %2348 = vmatprep.subr.mxu0 0.0
    %2349 = vmatpush1.msra.mxu0 0.0
    %2350 = vmatprep.subr.mxu0 0.0
    %2351 = vmatpush1.msra.mxu0 0.0
    %2352 = vmatprep.subr.mxu0 0.0
    %2353 = vmatpush1.msra.mxu0 0.0
    %2354 = vmatprep.subr.mxu0 0.0
    %2355 = vmatpush1.msra.mxu0 0.0
    %2356 = vmatprep.subr.mxu0 0.0
    %2357 = vmatpush1.msra.mxu0 0.0
    %2358 = vmatprep.subr.mxu0 0.0
    %2359 = vmatpush1.msra.mxu0 0.0
    %2360 = vmatprep.subr.mxu0 0.0
    %2361 = vmatpush1.msra.mxu0 0.0
    %2362 = vmatprep.subr.mxu0 0.0
    %2363 = vmatpush1.msra.mxu0 0.0
    %2364 = vmatprep.subr.mxu0 0.0
    %2365 = vmatpush1.msra.mxu0 0.0
    %2366 = vmatprep.subr.mxu0 0.0
    %2367 = vmatpush1.msra.mxu0 0.0
    %2368 = vmatprep.subr.mxu0 0.0
    %2369 = vmatpush1.msra.mxu0 0.0
    %2370 = vmatprep.subr.mxu0 0.0
    %2371 = vmatpush1.msra.mxu0 0.0
    %2372 = vmatprep.subr.mxu0 0.0
    %2373 = vmatpush1.msra.mxu0 0.0
    %2374 = vmatprep.subr.mxu0 0.0
    %2375 = vmatpush1.msra.mxu0 0.0
    %2376 = vmatprep.subr.mxu0 0.0
    %2377 = vmatpush1.msra.mxu0 0.0
    %2378 = vmatprep.subr.mxu0 0.0
    %2379 = vmatpush1.msra.mxu0 0.0
    %2380 = vmatprep.subr.mxu0 0.0
    %2381 = vmatpush1.msra.mxu0 0.0
    %2382 = vmatprep.subr.mxu0 0.0
    %2383 = vmatpush1.msra.mxu0 0.0
    %2384 = vmatprep.subr.mxu0 0.0
    %2385 = vmatpush1.msra.mxu0 0.0
    %2386 = vmatprep.subr.mxu0 0.0
    %2387 = vmatpush1.msra.mxu0 0.0
    %2388 = vmatprep.subr.mxu0 0.0
    %2389 = vmatpush1.msra.mxu0 0.0
    %2390 = vmatprep.subr.mxu0 0.0
    %2391 = vmatpush1.msra.mxu0 0.0
    %2392 = vmatprep.subr.mxu0 0.0
    %2393 = vmatpush1.msra.mxu0 0.0
    %2394 = vmatprep.subr.mxu0 0.0
    %2395 = vmatpush1.msra.mxu0 0.0
    %2396 = vmatprep.subr.mxu0 0.0
    %2397 = vmatpush1.msra.mxu0 0.0
    %2398 = vmatprep.subr.mxu0 0.0
    %2399 = vmatpush1.msra.mxu0 0.0
    %2400 = vmatprep.mubr.f32.mxu0 0.0
    %2401 = vmatmul.mubr.f32.gmra.mrb[0].mxu0 %v230
    %v2402 = vpop.f32.mrb[0].mxu0
    %v2403 = vadd.f32 0.0, %v2402
    %v2404 = vpop.f32.mrb[0].mxu0
    %2405 = vmatprep.mubr.f32.mxu0 0.0
    %2406 = vmatmul.mubr.f32.gmra.mrb[0].mxu0 %v233
    %v2407 = vpop.f32.mrb[0].mxu0
    %v2408 = vadd.f32 0.0, %v2407
    %v2409 = vpop.f32.mrb[0].mxu0
    %2410 = vdwg.mxu0
    %v2412 = vsel %vm468, %v2243, 0
    %v2415 = vsel %vm468, %v2323, 0
    %2417 = vmatprep.subr.mxu0 0.0
    %2418 = vmatpush1.xpose.msra.mxu0 %v2415
    %2419 = vmatprep.subr.mxu0 0.0
    %2420 = vmatpush1.xpose.msra.mxu0 0.0
    %2421 = vmatprep.subr.mxu0 0.0
    %2422 = vmatpush1.xpose.msra.mxu0 0.0
    %2423 = vmatprep.subr.mxu0 0.0
    %2424 = vmatpush1.xpose.msra.mxu0 0.0
    %2425 = vmatprep.subr.mxu0 0.0
    %2426 = vmatpush1.xpose.msra.mxu0 0.0
    %2427 = vmatprep.subr.mxu0 0.0
    %2428 = vmatpush1.xpose.msra.mxu0 0.0
    %2429 = vmatprep.subr.mxu0 0.0
    %2430 = vmatpush1.xpose.msra.mxu0 0.0
    %2431 = vmatprep.subr.mxu0 0.0
    %2432 = vmatpush1.xpose.msra.mxu0 0.0
    %2433 = vmatprep.subr.mxu0 0.0
    %2434 = vmatpush1.xpose.msra.mxu0 0.0
    %2435 = vmatprep.subr.mxu0 0.0
    %2436 = vmatpush1.xpose.msra.mxu0 0.0
    %2437 = vmatprep.subr.mxu0 0.0
    %2438 = vmatpush1.xpose.msra.mxu0 0.0
    %2439 = vmatprep.subr.mxu0 0.0
    %2440 = vmatpush1.xpose.msra.mxu0 0.0
    %2441 = vmatprep.subr.mxu0 0.0
    %2442 = vmatpush1.xpose.msra.mxu0 0.0
    %2443 = vmatprep.subr.mxu0 0.0
    %2444 = vmatpush1.xpose.msra.mxu0 0.0
    %2445 = vmatprep.subr.mxu0 0.0
    %2446 = vmatpush1.xpose.msra.mxu0 0.0
    %2447 = vmatprep.subr.mxu0 0.0
    %2448 = vmatpush1.xpose.msra.mxu0 0.0
    %2449 = vmatprep.subr.mxu0 0.0
    %2450 = vmatpush1.xpose.msra.mxu0 0.0
    %2451 = vmatprep.subr.mxu0 0.0
    %2452 = vmatpush1.xpose.msra.mxu0 0.0
    %2453 = vmatprep.subr.mxu0 0.0
    %2454 = vmatpush1.xpose.msra.mxu0 0.0
    %2455 = vmatprep.subr.mxu0 0.0
    %2456 = vmatpush1.xpose.msra.mxu0 0.0
    %2457 = vmatprep.subr.mxu0 0.0
    %2458 = vmatpush1.xpose.msra.mxu0 0.0
    %2459 = vmatprep.subr.mxu0 0.0
    %2460 = vmatpush1.xpose.msra.mxu0 0.0
    %2461 = vmatprep.subr.mxu0 0.0
    %2462 = vmatpush1.xpose.msra.mxu0 0.0
    %2463 = vmatprep.subr.mxu0 0.0
    %2464 = vmatpush1.xpose.msra.mxu0 0.0
    %2465 = vmatprep.subr.mxu0 0.0
    %2466 = vmatpush1.xpose.msra.mxu0 0.0
    %2467 = vmatprep.subr.mxu0 0.0
    %2468 = vmatpush1.xpose.msra.mxu0 0.0
    %2469 = vmatprep.subr.mxu0 0.0
    %2470 = vmatpush1.xpose.msra.mxu0 0.0
    %2471 = vmatprep.subr.mxu0 0.0
    %2472 = vmatpush1.xpose.msra.mxu0 0.0
    %2473 = vmatprep.subr.mxu0 0.0
    %2474 = vmatpush1.xpose.msra.mxu0 0.0
    %2475 = vmatprep.subr.mxu0 0.0
    %2476 = vmatpush1.xpose.msra.mxu0 0.0
    %2477 = vmatprep.subr.mxu0 0.0
    %2478 = vmatpush1.xpose.msra.mxu0 0.0
    %2479 = vmatprep.subr.mxu0 0.0
    %2480 = vmatpush1.xpose.msra.mxu0 0.0
    %2481 = vmatprep.mubr.f32.mxu0 0.0
    %2482 = vmatmul.mubr.f32.gmra.mrb[0].mxu0 %v2412
    %v2483 = vpop.f32.mrb[0].mxu0
    %v2484 = vadd.f32 0.0, %v2483
    %v2485 = vpop.f32.mrb[0].mxu0
    %2486 = vdwg.mxu0
    %v2488 = vsel %vm468, %v2248, 0
    %v2491 = vsel %vm468, %v2328, 0
    %2493 = vmatprep.subr.mxu0 0.0
    %2494 = vmatpush1.xpose.msra.mxu0 %v2491
    %2495 = vmatprep.subr.mxu0 0.0
    %2496 = vmatpush1.xpose.msra.mxu0 0.0
    %2497 = vmatprep.subr.mxu0 0.0
    %2498 = vmatpush1.xpose.msra.mxu0 0.0
    %2499 = vmatprep.subr.mxu0 0.0
    %2500 = vmatpush1.xpose.msra.mxu0 0.0
    %2501 = vmatprep.subr.mxu0 0.0
    %2502 = vmatpush1.xpose.msra.mxu0 0.0
    %2503 = vmatprep.subr.mxu0 0.0
    %2504 = vmatpush1.xpose.msra.mxu0 0.0
    %2505 = vmatprep.subr.mxu0 0.0
    %2506 = vmatpush1.xpose.msra.mxu0 0.0
    %2507 = vmatprep.subr.mxu0 0.0
    %2508 = vmatpush1.xpose.msra.mxu0 0.0
    %2509 = vmatprep.subr.mxu0 0.0
    %2510 = vmatpush1.xpose.msra.mxu0 0.0
    %2511 = vmatprep.subr.mxu0 0.0
    %2512 = vmatpush1.xpose.msra.mxu0 0.0
    %2513 = vmatprep.subr.mxu0 0.0
    %2514 = vmatpush1.xpose.msra.mxu0 0.0
    %2515 = vmatprep.subr.mxu0 0.0
    %2516 = vmatpush1.xpose.msra.mxu0 0.0
    %2517 = vmatprep.subr.mxu0 0.0
    %2518 = vmatpush1.xpose.msra.mxu0 0.0
    %2519 = vmatprep.subr.mxu0 0.0
    %2520 = vmatpush1.xpose.msra.mxu0 0.0
    %2521 = vmatprep.subr.mxu0 0.0
    %2522 = vmatpush1.xpose.msra.mxu0 0.0
    %2523 = vmatprep.subr.mxu0 0.0
    %2524 = vmatpush1.xpose.msra.mxu0 0.0
    %2525 = vmatprep.subr.mxu0 0.0
    %2526 = vmatpush1.xpose.msra.mxu0 0.0
    %2527 = vmatprep.subr.mxu0 0.0
    %2528 = vmatpush1.xpose.msra.mxu0 0.0
    %2529 = vmatprep.subr.mxu0 0.0
    %2530 = vmatpush1.xpose.msra.mxu0 0.0
    %2531 = vmatprep.subr.mxu0 0.0
    %2532 = vmatpush1.xpose.msra.mxu0 0.0
    %2533 = vmatprep.subr.mxu0 0.0
    %2534 = vmatpush1.xpose.msra.mxu0 0.0
    %2535 = vmatprep.subr.mxu0 0.0
    %2536 = vmatpush1.xpose.msra.mxu0 0.0
    %2537 = vmatprep.subr.mxu0 0.0
    %2538 = vmatpush1.xpose.msra.mxu0 0.0
    %2539 = vmatprep.subr.mxu0 0.0
    %2540 = vmatpush1.xpose.msra.mxu0 0.0
    %2541 = vmatprep.subr.mxu0 0.0
    %2542 = vmatpush1.xpose.msra.mxu0 0.0
    %2543 = vmatprep.subr.mxu0 0.0
    %2544 = vmatpush1.xpose.msra.mxu0 0.0
    %2545 = vmatprep.subr.mxu0 0.0
    %2546 = vmatpush1.xpose.msra.mxu0 0.0
    %2547 = vmatprep.subr.mxu0 0.0
    %2548 = vmatpush1.xpose.msra.mxu0 0.0
    %2549 = vmatprep.subr.mxu0 0.0
    %2550 = vmatpush1.xpose.msra.mxu0 0.0
    %2551 = vmatprep.subr.mxu0 0.0
    %2552 = vmatpush1.xpose.msra.mxu0 0.0
    %2553 = vmatprep.subr.mxu0 0.0
    %2554 = vmatpush1.xpose.msra.mxu0 0.0
    %2555 = vmatprep.subr.mxu0 0.0
    %2556 = vmatpush1.xpose.msra.mxu0 0.0
    %2557 = vmatprep.mubr.f32.mxu0 0.0
    %2558 = vmatmul.mubr.f32.gmra.mrb[0].mxu0 %v2488
    %v2559 = vpop.f32.mrb[0].mxu0
    %v2560 = vadd.f32 0.0, %v2559
    %v2561 = vpop.f32.mrb[0].mxu0
    %2562 = vdwg.mxu0
    %v2563 = vmul.f32 %v2484, 0.17677669
    %v2564 = vmul.f32 %v2560, 0.17677669
    %v2565 = vadd.f32 %v2563, %v178
    %v2566 = vadd.f32 %v2564, %v178
    %v2567 = vsel %vm468, %v2565, -inf
    %2568 = vmax.xlane.f32.xlu0 %v2567
    %v2569 = vpop.xlane.xlu0 %2568
    %v2570 = vsel %vm468, %v2566, -inf
    %2571 = vmax.xlane.f32.xlu0 %v2570
    %v2572 = vpop.xlane.xlu0 %2571
    %v2573 = vsub.f32 %v2565, %v2569
    %v2574 = vsub.f32 %v2566, %v2572
    %v2575 = vmul.f32 %v2573, 1.442695
    %v2576 = vpow.pop %v2575
    %v2577 = vmul.f32 %v2574, 1.442695
    %v2578 = vpow.pop %v2577
    %v2579 = vsel %vm468, %v2576, 0.0
    %2580 = vadd.xlane.f32.xlu0 %v2579
    %v2581 = vpop.xlane.xlu0 %2580
    %v2582 = vsel %vm468, %v2578, 0.0
    %2583 = vadd.xlane.f32.xlu0 %v2582
    %v2584 = vpop.xlane.xlu0 %2583
    %v2585 = vrcp.pop %v2581
    %v2586 = vmul.f32 %v2576, %v2585
    %v2587 = vrcp.pop %v2584
    %v2588 = vmul.f32 %v2578, %v2587
    %v2590 = vsel %vm468, %v2586, 0
    %2592 = vmatprep.subr.mxu0 0.0
    %2593 = vmatpush1.msra.mxu0 %v2403
    %2594 = vmatprep.subr.mxu0 0.0
    %2595 = vmatpush1.msra.mxu0 0.0
    %2596 = vmatprep.subr.mxu0 0.0
    %2597 = vmatpush1.msra.mxu0 0.0
    %2598 = vmatprep.subr.mxu0 0.0
    %2599 = vmatpush1.msra.mxu0 0.0
    %2600 = vmatprep.subr.mxu0 0.0
    %2601 = vmatpush1.msra.mxu0 0.0
    %2602 = vmatprep.subr.mxu0 0.0
    %2603 = vmatpush1.msra.mxu0 0.0
    %2604 = vmatprep.subr.mxu0 0.0
    %2605 = vmatpush1.msra.mxu0 0.0
    %2606 = vmatprep.subr.mxu0 0.0
    %2607 = vmatpush1.msra.mxu0 0.0
    %2608 = vmatprep.subr.mxu0 0.0
    %2609 = vmatpush1.msra.mxu0 0.0
    %2610 = vmatprep.subr.mxu0 0.0
    %2611 = vmatpush1.msra.mxu0 0.0
    %2612 = vmatprep.subr.mxu0 0.0
    %2613 = vmatpush1.msra.mxu0 0.0
    %2614 = vmatprep.subr.mxu0 0.0
    %2615 = vmatpush1.msra.mxu0 0.0
    %2616 = vmatprep.subr.mxu0 0.0
    %2617 = vmatpush1.msra.mxu0 0.0
    %2618 = vmatprep.subr.mxu0 0.0
    %2619 = vmatpush1.msra.mxu0 0.0
    %2620 = vmatprep.subr.mxu0 0.0
    %2621 = vmatpush1.msra.mxu0 0.0
    %2622 = vmatprep.subr.mxu0 0.0
    %2623 = vmatpush1.msra.mxu0 0.0
    %2624 = vmatprep.subr.mxu0 0.0
    %2625 = vmatpush1.msra.mxu0 0.0
    %2626 = vmatprep.subr.mxu0 0.0
    %2627 = vmatpush1.msra.mxu0 0.0
    %2628 = vmatprep.subr.mxu0 0.0
    %2629 = vmatpush1.msra.mxu0 0.0
    %2630 = vmatprep.subr.mxu0 0.0
    %2631 = vmatpush1.msra.mxu0 0.0
    %2632 = vmatprep.subr.mxu0 0.0
    %2633 = vmatpush1.msra.mxu0 0.0
    %2634 = vmatprep.subr.mxu0 0.0
    %2635 = vmatpush1.msra.mxu0 0.0
    %2636 = vmatprep.subr.mxu0 0.0
    %2637 = vmatpush1.msra.mxu0 0.0
    %2638 = vmatprep.subr.mxu0 0.0
    %2639 = vmatpush1.msra.mxu0 0.0
    %2640 = vmatprep.subr.mxu0 0.0
    %2641 = vmatpush1.msra.mxu0 0.0
    %2642 = vmatprep.subr.mxu0 0.0
    %2643 = vmatpush1.msra.mxu0 0.0
    %2644 = vmatprep.subr.mxu0 0.0
    %2645 = vmatpush1.msra.mxu0 0.0
    %2646 = vmatprep.subr.mxu0 0.0
    %2647 = vmatpush1.msra.mxu0 0.0
    %2648 = vmatprep.subr.mxu0 0.0
    %2649 = vmatpush1.msra.mxu0 0.0
    %2650 = vmatprep.subr.mxu0 0.0
    %2651 = vmatpush1.msra.mxu0 0.0
    %2652 = vmatprep.subr.mxu0 0.0
    %2653 = vmatpush1.msra.mxu0 0.0
    %2654 = vmatprep.subr.mxu0 0.0
    %2655 = vmatpush1.msra.mxu0 0.0
    %2656 = vmatprep.mubr.f32.mxu0 0.0
    %2657 = vmatmul.mubr.f32.gmra.mrb[0].mxu0 %v2590
    %v2658 = vpop.f32.mrb[0].mxu0
    %v2659 = vadd.f32 0.0, %v2658
    %v2660 = vpop.f32.mrb[0].mxu0
    %2661 = vdwg.mxu0
    %v2663 = vsel %vm468, %v2588, 0
    %2665 = vmatprep.subr.mxu0 0.0
    %2666 = vmatpush1.msra.mxu0 %v2408
    %2667 = vmatprep.subr.mxu0 0.0
    %2668 = vmatpush1.msra.mxu0 0.0
    %2669 = vmatprep.subr.mxu0 0.0
    %2670 = vmatpush1.msra.mxu0 0.0
    %2671 = vmatprep.subr.mxu0 0.0
    %2672 = vmatpush1.msra.mxu0 0.0
    %2673 = vmatprep.subr.mxu0 0.0
    %2674 = vmatpush1.msra.mxu0 0.0
    %2675 = vmatprep.subr.mxu0 0.0
    %2676 = vmatpush1.msra.mxu0 0.0
    %2677 = vmatprep.subr.mxu0 0.0
    %2678 = vmatpush1.msra.mxu0 0.0
    %2679 = vmatprep.subr.mxu0 0.0
    %2680 = vmatpush1.msra.mxu0 0.0
    %2681 = vmatprep.subr.mxu0 0.0
    %2682 = vmatpush1.msra.mxu0 0.0
    %2683 = vmatprep.subr.mxu0 0.0
    %2684 = vmatpush1.msra.mxu0 0.0
    %2685 = vmatprep.subr.mxu0 0.0
    %2686 = vmatpush1.msra.mxu0 0.0
    %2687 = vmatprep.subr.mxu0 0.0
    %2688 = vmatpush1.msra.mxu0 0.0
    %2689 = vmatprep.subr.mxu0 0.0
    %2690 = vmatpush1.msra.mxu0 0.0
    %2691 = vmatprep.subr.mxu0 0.0
    %2692 = vmatpush1.msra.mxu0 0.0
    %2693 = vmatprep.subr.mxu0 0.0
    %2694 = vmatpush1.msra.mxu0 0.0
    %2695 = vmatprep.subr.mxu0 0.0
    %2696 = vmatpush1.msra.mxu0 0.0
    %2697 = vmatprep.subr.mxu0 0.0
    %2698 = vmatpush1.msra.mxu0 0.0
    %2699 = vmatprep.subr.mxu0 0.0
    %2700 = vmatpush1.msra.mxu0 0.0
    %2701 = vmatprep.subr.mxu0 0.0
    %2702 = vmatpush1.msra.mxu0 0.0
    %2703 = vmatprep.subr.mxu0 0.0
    %2704 = vmatpush1.msra.mxu0 0.0
    %2705 = vmatprep.subr.mxu0 0.0
    %2706 = vmatpush1.msra.mxu0 0.0
    %2707 = vmatprep.subr.mxu0 0.0
    %2708 = vmatpush1.msra.mxu0 0.0
    %2709 = vmatprep.subr.mxu0 0.0
    %2710 = vmatpush1.msra.mxu0 0.0
    %2711 = vmatprep.subr.mxu0 0.0
    %2712 = vmatpush1.msra.mxu0 0.0
    %2713 = vmatprep.subr.mxu0 0.0
    %2714 = vmatpush1.msra.mxu0 0.0
    %2715 = vmatprep.subr.mxu0 0.0
    %2716 = vmatpush1.msra.mxu0 0.0
    %2717 = vmatprep.subr.mxu0 0.0
    %2718 = vmatpush1.msra.mxu0 0.0
    %2719 = vmatprep.subr.mxu0 0.0
    %2720 = vmatpush1.msra.mxu0 0.0
    %2721 = vmatprep.subr.mxu0 0.0
    %2722 = vmatpush1.msra.mxu0 0.0
    %2723 = vmatprep.subr.mxu0 0.0
    %2724 = vmatpush1.msra.mxu0 0.0
    %2725 = vmatprep.subr.mxu0 0.0
    %2726 = vmatpush1.msra.mxu0 0.0
    %2727 = vmatprep.subr.mxu0 0.0
    %2728 = vmatpush1.msra.mxu0 0.0
    %2729 = vmatprep.mubr.f32.mxu0 0.0
    %2730 = vmatmul.mubr.f32.gmra.mrb[0].mxu0 %v2663
    %v2731 = vpop.f32.mrb[0].mxu0
    %v2732 = vadd.f32 0.0, %v2731
    %v2733 = vpop.f32.mrb[0].mxu0
    %2734 = vdwg.mxu0
    %s2735 = scalar_lea.vmem %s8, 24
    %v2736 = vld [vmem:[%s2735] sm:$0xff]
    %v2738 = vsel %vm468, %v2659, 0
    %v2741 = vsel %vm468, %v2732, 0
    %2743 = vmatprep.subr.mxu0 0.0
    %2744 = vmatpush1.msra.mxu0 %v2736
    %2745 = vmatprep.subr.mxu0 0.0
    %2746 = vmatpush1.msra.mxu0 0.0
    %2747 = vmatprep.subr.mxu0 0.0
    %2748 = vmatpush1.msra.mxu0 0.0
    %2749 = vmatprep.subr.mxu0 0.0
    %2750 = vmatpush1.msra.mxu0 0.0
    %2751 = vmatprep.subr.mxu0 0.0
    %2752 = vmatpush1.msra.mxu0 0.0
    %2753 = vmatprep.subr.mxu0 0.0
    %2754 = vmatpush1.msra.mxu0 0.0
    %2755 = vmatprep.subr.mxu0 0.0
    %2756 = vmatpush1.msra.mxu0 0.0
    %2757 = vmatprep.subr.mxu0 0.0
    %2758 = vmatpush1.msra.mxu0 0.0
    %2759 = vmatprep.subr.mxu0 0.0
    %2760 = vmatpush1.msra.mxu0 0.0
    %2761 = vmatprep.subr.mxu0 0.0
    %2762 = vmatpush1.msra.mxu0 0.0
    %2763 = vmatprep.subr.mxu0 0.0
    %2764 = vmatpush1.msra.mxu0 0.0
    %2765 = vmatprep.subr.mxu0 0.0
    %2766 = vmatpush1.msra.mxu0 0.0
    %2767 = vmatprep.subr.mxu0 0.0
    %2768 = vmatpush1.msra.mxu0 0.0
    %2769 = vmatprep.subr.mxu0 0.0
    %2770 = vmatpush1.msra.mxu0 0.0
    %2771 = vmatprep.subr.mxu0 0.0
    %2772 = vmatpush1.msra.mxu0 0.0
    %2773 = vmatprep.subr.mxu0 0.0
    %2774 = vmatpush1.msra.mxu0 0.0
    %2775 = vmatprep.subr.mxu0 0.0
    %2776 = vmatpush1.msra.mxu0 0.0
    %2777 = vmatprep.subr.mxu0 0.0
    %2778 = vmatpush1.msra.mxu0 0.0
    %2779 = vmatprep.subr.mxu0 0.0
    %2780 = vmatpush1.msra.mxu0 0.0
    %2781 = vmatprep.subr.mxu0 0.0
    %2782 = vmatpush1.msra.mxu0 0.0
    %2783 = vmatprep.subr.mxu0 0.0
    %2784 = vmatpush1.msra.mxu0 0.0
    %2785 = vmatprep.subr.mxu0 0.0
    %2786 = vmatpush1.msra.mxu0 0.0
    %2787 = vmatprep.subr.mxu0 0.0
    %2788 = vmatpush1.msra.mxu0 0.0
    %2789 = vmatprep.subr.mxu0 0.0
    %2790 = vmatpush1.msra.mxu0 0.0
    %2791 = vmatprep.subr.mxu0 0.0
    %2792 = vmatpush1.msra.mxu0 0.0
    %2793 = vmatprep.subr.mxu0 0.0
    %2794 = vmatpush1.msra.mxu0 0.0
    %2795 = vmatprep.subr.mxu0 0.0
    %2796 = vmatpush1.msra.mxu0 0.0
    %2797 = vmatprep.subr.mxu0 0.0
    %2798 = vmatpush1.msra.mxu0 0.0
    %2799 = vmatprep.subr.mxu0 0.0
    %2800 = vmatpush1.msra.mxu0 0.0
    %2801 = vmatprep.subr.mxu0 0.0
    %2802 = vmatpush1.msra.mxu0 0.0
    %2803 = vmatprep.subr.mxu0 0.0
    %2804 = vmatpush1.msra.mxu0 0.0
    %2805 = vmatprep.subr.mxu0 0.0
    %2806 = vmatpush1.msra.mxu0 0.0
    %2807 = vmatprep.mubr.f32.mxu0 0.0
    %2808 = vmatmul.mubr.f32.gmra.mrb[0].mxu0 %v2738
    %v2809 = vpop.f32.mrb[0].mxu0
    %v2810 = vadd.f32 0.0, %v2809
    %v2811 = vpop.f32.mrb[0].mxu0
    %2812 = vmatprep.mubr.f32.mxu0 0.0
    %2813 = vmatmul.mubr.f32.gmra.mrb[0].mxu0 %v2741
    %v2814 = vpop.f32.mrb[0].mxu0
    %v2815 = vadd.f32 0.0, %v2814
    %v2816 = vpop.f32.mrb[0].mxu0
    %2817 = vdwg.mxu0
    %v2818 = vadd.f32 %v2169, %v2810
    %v2819 = vadd.f32 %v2170, %v2815
    %v2820 = vadd.f32 %v173, %v2818
    %v2821 = vadd.f32 %v174, %v2819
    %v2822 = vld [vmem:[%s9] sm:$0x1]
    %v2824 = vlaneseq
    %v2825 = vshrl.u32 %v2824, 7
    %v2826 = vsub.s32 0, %v2825
    %v2827 = vrot.slane %v2822, %v2826
    %v2829 = vadd.f32 %v2820, %v2827
    %v2830 = vadd.f32 %v2821, %v2827
    %v2831 = vld [vmem:[%s10] sm:$0x1]
    %v2832 = vld [vmem:[%s11] sm:$0x1]
    %v2833 = vsel %vm181, %v2829, 0.0
    %2834 = vadd.xlane.f32.xlu0 %v2833
    %v2835 = vpop.xlane.xlu0 %2834
    %v2836 = vsel %vm181, %v2830, 0.0
    %2837 = vadd.xlane.f32.xlu0 %v2836
    %v2838 = vpop.xlane.xlu0 %2837
    %v2839 = vmul.f32 %v2835, %v188
    %v2840 = vmul.f32 %v2838, %v188
    %v2841 = vsub.f32 %v2829, %v2839
    %v2842 = vsub.f32 %v2830, %v2840
    %v2843 = vmul.f32 %v2841, %v2841
    %v2844 = vmul.f32 %v2842, %v2842
    %v2845 = vsel %vm181, %v2843, 0.0
    %2846 = vadd.xlane.f32.xlu0 %v2845
    %v2847 = vpop.xlane.xlu0 %2846
    %v2848 = vsel %vm181, %v2844, 0.0
    %2849 = vadd.xlane.f32.xlu0 %v2848
    %v2850 = vpop.xlane.xlu0 %2849
    %v2851 = vmul.f32 %v2847, %v188
    %v2852 = vmul.f32 %v2850, %v188
    %v2853 = vadd.f32 %v2851, 1e-05
    %v2854 = vadd.f32 %v2852, 1e-05
    %v2855 = vrsqrt.pop %v2853
    %v2856 = vrsqrt.pop %v2854
    %v2857 = vmul.f32 %v2841, %v2855
    %v2858 = vmul.f32 %v2842, %v2856
    %v2860 = vlaneseq
    %v2861 = vshrl.u32 %v2860, 7
    %v2862 = vsub.s32 0, %v2861
    %v2863 = vrot.slane %v2831, %v2862
    %v2865 = vmul.f32 %v2857, %v2863
    %v2866 = vmul.f32 %v2858, %v2863
    %v2868 = vlaneseq
    %v2869 = vshrl.u32 %v2868, 7
    %v2870 = vsub.s32 0, %v2869
    %v2871 = vrot.slane %v2832, %v2870
    %v2873 = vadd.f32 %v2865, %v2871
    %v2874 = vadd.f32 %v2866, %v2871
    %v2875 = vld [vmem:[%s12] sm:$0xff]
    %v2876 = vld [vmem:[%s12 + $0x8] sm:$0xff]
    %v2877 = vld [vmem:[%s12 + $0x10] sm:$0xff]
    %v2878 = vld [vmem:[%s12 + $0x18] sm:$0xff]
    %v2879 = vld [vmem:[%s13] sm:$0x1]
    %v2881 = vlaneseq
    %v2882 = vshrl.u32 %v2881, 7
    %v2883 = vsub.s32 0, %v2882
    %v2884 = vrot.slane %v2879, %v2883
    %v2887 = vsel %vm181, %v2873, 0
    %v2890 = vsel %vm181, %v2874, 0
    %2892 = vmatprep.subr.mxu0 0.0
    %2893 = vmatpush1.msra.mxu0 %v2875
    %2894 = vmatprep.subr.mxu0 0.0
    %2895 = vmatpush1.msra.mxu0 %v2876
    %2896 = vmatprep.subr.mxu0 0.0
    %2897 = vmatpush1.msra.mxu0 %v2877
    %2898 = vmatprep.subr.mxu0 0.0
    %2899 = vmatpush1.msra.mxu0 %v2878
    %2900 = vmatprep.subr.mxu0 0.0
    %2901 = vmatpush1.msra.mxu0 0.0
    %2902 = vmatprep.subr.mxu0 0.0
    %2903 = vmatpush1.msra.mxu0 0.0
    %2904 = vmatprep.subr.mxu0 0.0
    %2905 = vmatpush1.msra.mxu0 0.0
    %2906 = vmatprep.subr.mxu0 0.0
    %2907 = vmatpush1.msra.mxu0 0.0
    %2908 = vmatprep.subr.mxu0 0.0
    %2909 = vmatpush1.msra.mxu0 0.0
    %2910 = vmatprep.subr.mxu0 0.0
    %2911 = vmatpush1.msra.mxu0 0.0
    %2912 = vmatprep.subr.mxu0 0.0
    %2913 = vmatpush1.msra.mxu0 0.0
    %2914 = vmatprep.subr.mxu0 0.0
    %2915 = vmatpush1.msra.mxu0 0.0
    %2916 = vmatprep.subr.mxu0 0.0
    %2917 = vmatpush1.msra.mxu0 0.0
    %2918 = vmatprep.subr.mxu0 0.0
    %2919 = vmatpush1.msra.mxu0 0.0
    %2920 = vmatprep.subr.mxu0 0.0
    %2921 = vmatpush1.msra.mxu0 0.0
    %2922 = vmatprep.subr.mxu0 0.0
    %2923 = vmatpush1.msra.mxu0 0.0
    %2924 = vmatprep.subr.mxu0 0.0
    %2925 = vmatpush1.msra.mxu0 0.0
    %2926 = vmatprep.subr.mxu0 0.0
    %2927 = vmatpush1.msra.mxu0 0.0
    %2928 = vmatprep.subr.mxu0 0.0
    %2929 = vmatpush1.msra.mxu0 0.0
    %2930 = vmatprep.subr.mxu0 0.0
    %2931 = vmatpush1.msra.mxu0 0.0
    %2932 = vmatprep.subr.mxu0 0.0
    %2933 = vmatpush1.msra.mxu0 0.0
    %2934 = vmatprep.subr.mxu0 0.0
    %2935 = vmatpush1.msra.mxu0 0.0
    %2936 = vmatprep.subr.mxu0 0.0
    %2937 = vmatpush1.msra.mxu0 0.0
    %2938 = vmatprep.subr.mxu0 0.0
    %2939 = vmatpush1.msra.mxu0 0.0
    %2940 = vmatprep.subr.mxu0 0.0
    %2941 = vmatpush1.msra.mxu0 0.0
    %2942 = vmatprep.subr.mxu0 0.0
    %2943 = vmatpush1.msra.mxu0 0.0
    %2944 = vmatprep.subr.mxu0 0.0
    %2945 = vmatpush1.msra.mxu0 0.0
    %2946 = vmatprep.subr.mxu0 0.0
    %2947 = vmatpush1.msra.mxu0 0.0
    %2948 = vmatprep.subr.mxu0 0.0
    %2949 = vmatpush1.msra.mxu0 0.0
    %2950 = vmatprep.subr.mxu0 0.0
    %2951 = vmatpush1.msra.mxu0 0.0
    %2952 = vmatprep.subr.mxu0 0.0
    %2953 = vmatpush1.msra.mxu0 0.0
    %2954 = vmatprep.subr.mxu0 0.0
    %2955 = vmatpush1.msra.mxu0 0.0
    %2956 = vmatprep.mubr.f32.mxu0 0.0
    %2957 = vmatmul.mubr.f32.gmra.mrb[0].mxu0 %v2887
    %v2958 = vpop.f32.mrb[0].mxu0
    %v2959 = vadd.f32 %v2884, %v2958
    %v2960 = vpop.f32.mrb[0].mxu0
    %2961 = vmatprep.mubr.f32.mxu0 0.0
    %2962 = vmatmul.mubr.f32.gmra.mrb[0].mxu0 %v2890
    %v2963 = vpop.f32.mrb[0].mxu0
    %v2964 = vadd.f32 %v2884, %v2963
    %v2965 = vpop.f32.mrb[0].mxu0
    %2966 = vdwg.mxu0
    %v2967 = vmax.f32 %v2959, 0.0
    %v2968 = vmax.f32 %v2964, 0.0
    %v2969 = vld [vmem:[%s14] sm:$0xff]
    %v2970 = vld [vmem:[%s14 + $0x8] sm:$0xff]
    %v2971 = vld [vmem:[%s14 + $0x10] sm:$0xff]
    %v2972 = vld [vmem:[%s14 + $0x18] sm:$0xff]
    %v2973 = vld [vmem:[%s14 + $0x20] sm:$0xff]
    %v2974 = vld [vmem:[%s14 + $0x28] sm:$0xff]
    %v2975 = vld [vmem:[%s14 + $0x30] sm:$0xff]
    %v2976 = vld [vmem:[%s14 + $0x38] sm:$0xff]
    %v2977 = vld [vmem:[%s14 + $0x40] sm:$0xff]
    %v2978 = vld [vmem:[%s14 + $0x48] sm:$0xff]
    %v2979 = vld [vmem:[%s14 + $0x50] sm:$0xff]
    %v2980 = vld [vmem:[%s14 + $0x58] sm:$0xff]
    %v2981 = vld [vmem:[%s14 + $0x60] sm:$0xff]
    %v2982 = vld [vmem:[%s14 + $0x68] sm:$0xff]
    %v2983 = vld [vmem:[%s14 + $0x70] sm:$0xff]
    %v2984 = vld [vmem:[%s14 + $0x78] sm:$0xff]
    %2985 = vmatprep.subr.mxu0 0.0
    %2986 = vmatpush1.msra.mxu0 %v2969
    %2987 = vmatprep.subr.mxu0 0.0
    %2988 = vmatpush1.msra.mxu0 %v2970
    %2989 = vmatprep.subr.mxu0 0.0
    %2990 = vmatpush1.msra.mxu0 %v2971
    %2991 = vmatprep.subr.mxu0 0.0
    %2992 = vmatpush1.msra.mxu0 %v2972
    %2993 = vmatprep.subr.mxu0 0.0
    %2994 = vmatpush1.msra.mxu0 %v2973
    %2995 = vmatprep.subr.mxu0 0.0
    %2996 = vmatpush1.msra.mxu0 %v2974
    %2997 = vmatprep.subr.mxu0 0.0
    %2998 = vmatpush1.msra.mxu0 %v2975
    %2999 = vmatprep.subr.mxu0 0.0
    %3000 = vmatpush1.msra.mxu0 %v2976
    %3001 = vmatprep.subr.mxu0 0.0
    %3002 = vmatpush1.msra.mxu0 %v2977
    %3003 = vmatprep.subr.mxu0 0.0
    %3004 = vmatpush1.msra.mxu0 %v2978
    %3005 = vmatprep.subr.mxu0 0.0
    %3006 = vmatpush1.msra.mxu0 %v2979
    %3007 = vmatprep.subr.mxu0 0.0
    %3008 = vmatpush1.msra.mxu0 %v2980
    %3009 = vmatprep.subr.mxu0 0.0
    %3010 = vmatpush1.msra.mxu0 %v2981
    %3011 = vmatprep.subr.mxu0 0.0
    %3012 = vmatpush1.msra.mxu0 %v2982
    %3013 = vmatprep.subr.mxu0 0.0
    %3014 = vmatpush1.msra.mxu0 %v2983
    %3015 = vmatprep.subr.mxu0 0.0
    %3016 = vmatpush1.msra.mxu0 %v2984
    %3017 = vmatprep.subr.mxu0 0.0
    %3018 = vmatpush1.msra.mxu0 0.0
    %3019 = vmatprep.subr.mxu0 0.0
    %3020 = vmatpush1.msra.mxu0 0.0
    %3021 = vmatprep.subr.mxu0 0.0
    %3022 = vmatpush1.msra.mxu0 0.0
    %3023 = vmatprep.subr.mxu0 0.0
    %3024 = vmatpush1.msra.mxu0 0.0
    %3025 = vmatprep.subr.mxu0 0.0
    %3026 = vmatpush1.msra.mxu0 0.0
    %3027 = vmatprep.subr.mxu0 0.0
    %3028 = vmatpush1.msra.mxu0 0.0
    %3029 = vmatprep.subr.mxu0 0.0
    %3030 = vmatpush1.msra.mxu0 0.0
    %3031 = vmatprep.subr.mxu0 0.0
    %3032 = vmatpush1.msra.mxu0 0.0
    %3033 = vmatprep.subr.mxu0 0.0
    %3034 = vmatpush1.msra.mxu0 0.0
    %3035 = vmatprep.subr.mxu0 0.0
    %3036 = vmatpush1.msra.mxu0 0.0
    %3037 = vmatprep.subr.mxu0 0.0
    %3038 = vmatpush1.msra.mxu0 0.0
    %3039 = vmatprep.subr.mxu0 0.0
    %3040 = vmatpush1.msra.mxu0 0.0
    %3041 = vmatprep.subr.mxu0 0.0
    %3042 = vmatpush1.msra.mxu0 0.0
    %3043 = vmatprep.subr.mxu0 0.0
    %3044 = vmatpush1.msra.mxu0 0.0
    %3045 = vmatprep.subr.mxu0 0.0
    %3046 = vmatpush1.msra.mxu0 0.0
    %3047 = vmatprep.subr.mxu0 0.0
    %3048 = vmatpush1.msra.mxu0 0.0
    %3049 = vmatprep.mubr.f32.mxu0 0.0
    %3050 = vmatmul.mubr.f32.gmra.mrb[0].mxu0 %v2967
    %v3051 = vpop.f32.mrb[0].mxu0
    %v3052 = vadd.f32 0.0, %v3051
    %v3053 = vpop.f32.mrb[0].mxu0
    %3054 = vmatprep.mubr.f32.mxu0 0.0
    %3055 = vmatmul.mubr.f32.gmra.mrb[0].mxu0 %v2968
    %v3056 = vpop.f32.mrb[0].mxu0
    %v3057 = vadd.f32 0.0, %v3056
    %v3058 = vpop.f32.mrb[0].mxu0
    %3059 = vdwg.mxu0
    %v3060 = vadd.f32 %v2829, %v3052
    %v3061 = vadd.f32 %v2830, %v3057
    %v3062 = vld [vmem:[%s15] sm:$0x1]
    %v3064 = vlaneseq
    %v3065 = vshrl.u32 %v3064, 7
    %v3066 = vsub.s32 0, %v3065
    %v3067 = vrot.slane %v3062, %v3066
    %v3069 = vadd.f32 %v3060, %v3067
    %v3070 = vadd.f32 %v3061, %v3067
    %s3071 = scalar_lea.vmem %s3, 1
    %v3072 = vld [vmem:[%s3071] sm:$0x1]
    %s3073 = scalar_lea.vmem %s4, 1
    %v3074 = vld [vmem:[%s3073] sm:$0x1]
    %v3075 = vsel %vm181, %v3069, 0.0
    %3076 = vadd.xlane.f32.xlu0 %v3075
    %v3077 = vpop.xlane.xlu0 %3076
    %v3078 = vsel %vm181, %v3070, 0.0
    %3079 = vadd.xlane.f32.xlu0 %v3078
    %v3080 = vpop.xlane.xlu0 %3079
    %v3081 = vmul.f32 %v3077, %v188
    %v3082 = vmul.f32 %v3080, %v188
    %v3083 = vsub.f32 %v3069, %v3081
    %v3084 = vsub.f32 %v3070, %v3082
    %v3085 = vmul.f32 %v3083, %v3083
    %v3086 = vmul.f32 %v3084, %v3084
    %v3087 = vsel %vm181, %v3085, 0.0
    %3088 = vadd.xlane.f32.xlu0 %v3087
    %v3089 = vpop.xlane.xlu0 %3088
    %v3090 = vsel %vm181, %v3086, 0.0
    %3091 = vadd.xlane.f32.xlu0 %v3090
    %v3092 = vpop.xlane.xlu0 %3091
    %v3093 = vmul.f32 %v3089, %v188
    %v3094 = vmul.f32 %v3092, %v188
    %v3095 = vadd.f32 %v3093, 1e-05
    %v3096 = vadd.f32 %v3094, 1e-05
    %v3097 = vrsqrt.pop %v3095
    %v3098 = vrsqrt.pop %v3096
    %v3099 = vmul.f32 %v3083, %v3097
    %v3100 = vmul.f32 %v3084, %v3098
    %v3102 = vlaneseq
    %v3103 = vshrl.u32 %v3102, 7
    %v3104 = vsub.s32 0, %v3103
    %v3105 = vrot.slane %v3072, %v3104
    %v3107 = vmul.f32 %v3099, %v3105
    %v3108 = vmul.f32 %v3100, %v3105
    %v3110 = vlaneseq
    %v3111 = vshrl.u32 %v3110, 7
    %v3112 = vsub.s32 0, %v3111
    %v3113 = vrot.slane %v3074, %v3112
    %v3115 = vadd.f32 %v3107, %v3113
    %v3116 = vadd.f32 %v3108, %v3113
    %s3117 = scalar_lea.vmem %s5, 128
    %v3118 = vld [vmem:[%s3117] sm:$0xff]
    %v3119 = vld [vmem:[%s3117 + $0x8] sm:$0xff]
    %v3120 = vld [vmem:[%s3117 + $0x10] sm:$0xff]
    %v3121 = vld [vmem:[%s3117 + $0x18] sm:$0xff]
    %v3123 = vsel %vm181, %v3115, 0
    %v3126 = vsel %vm181, %v3116, 0
    %3128 = vmatprep.subr.mxu0 0.0
    %3129 = vmatpush1.msra.mxu0 %v3118
    %3130 = vmatprep.subr.mxu0 0.0
    %3131 = vmatpush1.msra.mxu0 %v3119
    %3132 = vmatprep.subr.mxu0 0.0
    %3133 = vmatpush1.msra.mxu0 %v3120
    %3134 = vmatprep.subr.mxu0 0.0
    %3135 = vmatpush1.msra.mxu0 %v3121
    %3136 = vmatprep.subr.mxu0 0.0
    %3137 = vmatpush1.msra.mxu0 0.0
    %3138 = vmatprep.subr.mxu0 0.0
    %3139 = vmatpush1.msra.mxu0 0.0
    %3140 = vmatprep.subr.mxu0 0.0
    %3141 = vmatpush1.msra.mxu0 0.0
    %3142 = vmatprep.subr.mxu0 0.0
    %3143 = vmatpush1.msra.mxu0 0.0
    %3144 = vmatprep.subr.mxu0 0.0
    %3145 = vmatpush1.msra.mxu0 0.0
    %3146 = vmatprep.subr.mxu0 0.0
    %3147 = vmatpush1.msra.mxu0 0.0
    %3148 = vmatprep.subr.mxu0 0.0
    %3149 = vmatpush1.msra.mxu0 0.0
    %3150 = vmatprep.subr.mxu0 0.0
    %3151 = vmatpush1.msra.mxu0 0.0
    %3152 = vmatprep.subr.mxu0 0.0
    %3153 = vmatpush1.msra.mxu0 0.0
    %3154 = vmatprep.subr.mxu0 0.0
    %3155 = vmatpush1.msra.mxu0 0.0
    %3156 = vmatprep.subr.mxu0 0.0
    %3157 = vmatpush1.msra.mxu0 0.0
    %3158 = vmatprep.subr.mxu0 0.0
    %3159 = vmatpush1.msra.mxu0 0.0
    %3160 = vmatprep.subr.mxu0 0.0
    %3161 = vmatpush1.msra.mxu0 0.0
    %3162 = vmatprep.subr.mxu0 0.0
    %3163 = vmatpush1.msra.mxu0 0.0
    %3164 = vmatprep.subr.mxu0 0.0
    %3165 = vmatpush1.msra.mxu0 0.0
    %3166 = vmatprep.subr.mxu0 0.0
    %3167 = vmatpush1.msra.mxu0 0.0
    %3168 = vmatprep.subr.mxu0 0.0
    %3169 = vmatpush1.msra.mxu0 0.0
    %3170 = vmatprep.subr.mxu0 0.0
    %3171 = vmatpush1.msra.mxu0 0.0
    %3172 = vmatprep.subr.mxu0 0.0
    %3173 = vmatpush1.msra.mxu0 0.0
    %3174 = vmatprep.subr.mxu0 0.0
    %3175 = vmatpush1.msra.mxu0 0.0
    %3176 = vmatprep.subr.mxu0 0.0
    %3177 = vmatpush1.msra.mxu0 0.0
    %3178 = vmatprep.subr.mxu0 0.0
    %3179 = vmatpush1.msra.mxu0 0.0
    %3180 = vmatprep.subr.mxu0 0.0
    %3181 = vmatpush1.msra.mxu0 0.0
    %3182 = vmatprep.subr.mxu0 0.0
    %3183 = vmatpush1.msra.mxu0 0.0
    %3184 = vmatprep.subr.mxu0 0.0
    %3185 = vmatpush1.msra.mxu0 0.0
    %3186 = vmatprep.subr.mxu0 0.0
    %3187 = vmatpush1.msra.mxu0 0.0
    %3188 = vmatprep.subr.mxu0 0.0
    %3189 = vmatpush1.msra.mxu0 0.0
    %3190 = vmatprep.subr.mxu0 0.0
    %3191 = vmatpush1.msra.mxu0 0.0
    %3192 = vmatprep.mubr.f32.mxu0 0.0
    %3193 = vmatmul.mubr.f32.gmra.mrb[0].mxu0 %v3123
    %v3194 = vpop.f32.mrb[0].mxu0
    %v3195 = vadd.f32 0.0, %v3194
    %v3196 = vpop.f32.mrb[0].mxu0
    %3197 = vmatprep.mubr.f32.mxu0 0.0
    %3198 = vmatmul.mubr.f32.gmra.mrb[0].mxu0 %v3126
    %v3199 = vpop.f32.mrb[0].mxu0
    %v3200 = vadd.f32 0.0, %v3199
    %v3201 = vpop.f32.mrb[0].mxu0
    %3202 = vdwg.mxu0
    %s3203 = scalar_lea.vmem %s6, 128
    %v3204 = vld [vmem:[%s3203] sm:$0xff]
    %v3205 = vld [vmem:[%s3203 + $0x8] sm:$0xff]
    %v3206 = vld [vmem:[%s3203 + $0x10] sm:$0xff]
    %v3207 = vld [vmem:[%s3203 + $0x18] sm:$0xff]
    %3208 = vmatprep.subr.mxu0 0.0
    %3209 = vmatpush1.msra.mxu0 %v3204
    %3210 = vmatprep.subr.mxu0 0.0
    %3211 = vmatpush1.msra.mxu0 %v3205
    %3212 = vmatprep.subr.mxu0 0.0
    %3213 = vmatpush1.msra.mxu0 %v3206
    %3214 = vmatprep.subr.mxu0 0.0
    %3215 = vmatpush1.msra.mxu0 %v3207
    %3216 = vmatprep.subr.mxu0 0.0
    %3217 = vmatpush1.msra.mxu0 0.0
    %3218 = vmatprep.subr.mxu0 0.0
    %3219 = vmatpush1.msra.mxu0 0.0
    %3220 = vmatprep.subr.mxu0 0.0
    %3221 = vmatpush1.msra.mxu0 0.0
    %3222 = vmatprep.subr.mxu0 0.0
    %3223 = vmatpush1.msra.mxu0 0.0
    %3224 = vmatprep.subr.mxu0 0.0
    %3225 = vmatpush1.msra.mxu0 0.0
    %3226 = vmatprep.subr.mxu0 0.0
    %3227 = vmatpush1.msra.mxu0 0.0
    %3228 = vmatprep.subr.mxu0 0.0
    %3229 = vmatpush1.msra.mxu0 0.0
    %3230 = vmatprep.subr.mxu0 0.0
    %3231 = vmatpush1.msra.mxu0 0.0
    %3232 = vmatprep.subr.mxu0 0.0
    %3233 = vmatpush1.msra.mxu0 0.0
    %3234 = vmatprep.subr.mxu0 0.0
    %3235 = vmatpush1.msra.mxu0 0.0
    %3236 = vmatprep.subr.mxu0 0.0
    %3237 = vmatpush1.msra.mxu0 0.0
    %3238 = vmatprep.subr.mxu0 0.0
    %3239 = vmatpush1.msra.mxu0 0.0
    %3240 = vmatprep.subr.mxu0 0.0
    %3241 = vmatpush1.msra.mxu0 0.0
    %3242 = vmatprep.subr.mxu0 0.0
    %3243 = vmatpush1.msra.mxu0 0.0
    %3244 = vmatprep.subr.mxu0 0.0
    %3245 = vmatpush1.msra.mxu0 0.0
    %3246 = vmatprep.subr.mxu0 0.0
    %3247 = vmatpush1.msra.mxu0 0.0
    %3248 = vmatprep.subr.mxu0 0.0
    %3249 = vmatpush1.msra.mxu0 0.0
    %3250 = vmatprep.subr.mxu0 0.0
    %3251 = vmatpush1.msra.mxu0 0.0
    %3252 = vmatprep.subr.mxu0 0.0
    %3253 = vmatpush1.msra.mxu0 0.0
    %3254 = vmatprep.subr.mxu0 0.0
    %3255 = vmatpush1.msra.mxu0 0.0
    %3256 = vmatprep.subr.mxu0 0.0
    %3257 = vmatpush1.msra.mxu0 0.0
    %3258 = vmatprep.subr.mxu0 0.0
    %3259 = vmatpush1.msra.mxu0 0.0
    %3260 = vmatprep.subr.mxu0 0.0
    %3261 = vmatpush1.msra.mxu0 0.0
    %3262 = vmatprep.subr.mxu0 0.0
    %3263 = vmatpush1.msra.mxu0 0.0
    %3264 = vmatprep.subr.mxu0 0.0
    %3265 = vmatpush1.msra.mxu0 0.0
    %3266 = vmatprep.subr.mxu0 0.0
    %3267 = vmatpush1.msra.mxu0 0.0
    %3268 = vmatprep.subr.mxu0 0.0
    %3269 = vmatpush1.msra.mxu0 0.0
    %3270 = vmatprep.subr.mxu0 0.0
    %3271 = vmatpush1.msra.mxu0 0.0
    %3272 = vmatprep.mubr.f32.mxu0 0.0
    %3273 = vmatmul.mubr.f32.gmra.mrb[0].mxu0 %v3123
    %v3274 = vpop.f32.mrb[0].mxu0
    %v3275 = vadd.f32 0.0, %v3274
    %v3276 = vpop.f32.mrb[0].mxu0
    %3277 = vmatprep.mubr.f32.mxu0 0.0
    %3278 = vmatmul.mubr.f32.gmra.mrb[0].mxu0 %v3126
    %v3279 = vpop.f32.mrb[0].mxu0
    %v3280 = vadd.f32 0.0, %v3279
    %v3281 = vpop.f32.mrb[0].mxu0
    %3282 = vdwg.mxu0
    %s3283 = scalar_lea.vmem %s7, 128
    %v3284 = vld [vmem:[%s3283] sm:$0xff]
    %v3285 = vld [vmem:[%s3283 + $0x8] sm:$0xff]
    %v3286 = vld [vmem:[%s3283 + $0x10] sm:$0xff]
    %v3287 = vld [vmem:[%s3283 + $0x18] sm:$0xff]
    %3288 = vmatprep.subr.mxu0 0.0
    %3289 = vmatpush1.msra.mxu0 %v3284
    %3290 = vmatprep.subr.mxu0 0.0
    %3291 = vmatpush1.msra.mxu0 %v3285
    %3292 = vmatprep.subr.mxu0 0.0
    %3293 = vmatpush1.msra.mxu0 %v3286
    %3294 = vmatprep.subr.mxu0 0.0
    %3295 = vmatpush1.msra.mxu0 %v3287
    %3296 = vmatprep.subr.mxu0 0.0
    %3297 = vmatpush1.msra.mxu0 0.0
    %3298 = vmatprep.subr.mxu0 0.0
    %3299 = vmatpush1.msra.mxu0 0.0
    %3300 = vmatprep.subr.mxu0 0.0
    %3301 = vmatpush1.msra.mxu0 0.0
    %3302 = vmatprep.subr.mxu0 0.0
    %3303 = vmatpush1.msra.mxu0 0.0
    %3304 = vmatprep.subr.mxu0 0.0
    %3305 = vmatpush1.msra.mxu0 0.0
    %3306 = vmatprep.subr.mxu0 0.0
    %3307 = vmatpush1.msra.mxu0 0.0
    %3308 = vmatprep.subr.mxu0 0.0
    %3309 = vmatpush1.msra.mxu0 0.0
    %3310 = vmatprep.subr.mxu0 0.0
    %3311 = vmatpush1.msra.mxu0 0.0
    %3312 = vmatprep.subr.mxu0 0.0
    %3313 = vmatpush1.msra.mxu0 0.0
    %3314 = vmatprep.subr.mxu0 0.0
    %3315 = vmatpush1.msra.mxu0 0.0
    %3316 = vmatprep.subr.mxu0 0.0
    %3317 = vmatpush1.msra.mxu0 0.0
    %3318 = vmatprep.subr.mxu0 0.0
    %3319 = vmatpush1.msra.mxu0 0.0
    %3320 = vmatprep.subr.mxu0 0.0
    %3321 = vmatpush1.msra.mxu0 0.0
    %3322 = vmatprep.subr.mxu0 0.0
    %3323 = vmatpush1.msra.mxu0 0.0
    %3324 = vmatprep.subr.mxu0 0.0
    %3325 = vmatpush1.msra.mxu0 0.0
    %3326 = vmatprep.subr.mxu0 0.0
    %3327 = vmatpush1.msra.mxu0 0.0
    %3328 = vmatprep.subr.mxu0 0.0
    %3329 = vmatpush1.msra.mxu0 0.0
    %3330 = vmatprep.subr.mxu0 0.0
    %3331 = vmatpush1.msra.mxu0 0.0
    %3332 = vmatprep.subr.mxu0 0.0
    %3333 = vmatpush1.msra.mxu0 0.0
    %3334 = vmatprep.subr.mxu0 0.0
    %3335 = vmatpush1.msra.mxu0 0.0
    %3336 = vmatprep.subr.mxu0 0.0
    %3337 = vmatpush1.msra.mxu0 0.0
    %3338 = vmatprep.subr.mxu0 0.0
    %3339 = vmatpush1.msra.mxu0 0.0
    %3340 = vmatprep.subr.mxu0 0.0
    %3341 = vmatpush1.msra.mxu0 0.0
    %3342 = vmatprep.subr.mxu0 0.0
    %3343 = vmatpush1.msra.mxu0 0.0
    %3344 = vmatprep.subr.mxu0 0.0
    %3345 = vmatpush1.msra.mxu0 0.0
    %3346 = vmatprep.subr.mxu0 0.0
    %3347 = vmatpush1.msra.mxu0 0.0
    %3348 = vmatprep.subr.mxu0 0.0
    %3349 = vmatpush1.msra.mxu0 0.0
    %3350 = vmatprep.subr.mxu0 0.0
    %3351 = vmatpush1.msra.mxu0 0.0
    %3352 = vmatprep.mubr.f32.mxu0 0.0
    %3353 = vmatmul.mubr.f32.gmra.mrb[0].mxu0 %v3123
    %v3354 = vpop.f32.mrb[0].mxu0
    %v3355 = vadd.f32 0.0, %v3354
    %v3356 = vpop.f32.mrb[0].mxu0
    %3357 = vmatprep.mubr.f32.mxu0 0.0
    %3358 = vmatmul.mubr.f32.gmra.mrb[0].mxu0 %v3126
    %v3359 = vpop.f32.mrb[0].mxu0
    %v3360 = vadd.f32 0.0, %v3359
    %v3361 = vpop.f32.mrb[0].mxu0
    %3362 = vdwg.mxu0
    %v3364 = vsel %vm468, %v3195, 0
    %v3367 = vsel %vm468, %v3275, 0
    %3369 = vmatprep.subr.mxu0 0.0
    %3370 = vmatpush1.xpose.msra.mxu0 %v3367
    %3371 = vmatprep.subr.mxu0 0.0
    %3372 = vmatpush1.xpose.msra.mxu0 0.0
    %3373 = vmatprep.subr.mxu0 0.0
    %3374 = vmatpush1.xpose.msra.mxu0 0.0
    %3375 = vmatprep.subr.mxu0 0.0
    %3376 = vmatpush1.xpose.msra.mxu0 0.0
    %3377 = vmatprep.subr.mxu0 0.0
    %3378 = vmatpush1.xpose.msra.mxu0 0.0
    %3379 = vmatprep.subr.mxu0 0.0
    %3380 = vmatpush1.xpose.msra.mxu0 0.0
    %3381 = vmatprep.subr.mxu0 0.0
    %3382 = vmatpush1.xpose.msra.mxu0 0.0
    %3383 = vmatprep.subr.mxu0 0.0
    %3384 = vmatpush1.xpose.msra.mxu0 0.0
    %3385 = vmatprep.subr.mxu0 0.0
    %3386 = vmatpush1.xpose.msra.mxu0 0.0
    %3387 = vmatprep.subr.mxu0 0.0
    %3388 = vmatpush1.xpose.msra.mxu0 0.0
    %3389 = vmatprep.subr.mxu0 0.0
    %3390 = vmatpush1.xpose.msra.mxu0 0.0
    %3391 = vmatprep.subr.mxu0 0.0
    %3392 = vmatpush1.xpose.msra.mxu0 0.0
    %3393 = vmatprep.subr.mxu0 0.0
    %3394 = vmatpush1.xpose.msra.mxu0 0.0
    %3395 = vmatprep.subr.mxu0 0.0
    %3396 = vmatpush1.xpose.msra.mxu0 0.0
    %3397 = vmatprep.subr.mxu0 0.0
    %3398 = vmatpush1.xpose.msra.mxu0 0.0
    %3399 = vmatprep.subr.mxu0 0.0
    %3400 = vmatpush1.xpose.msra.mxu0 0.0
    %3401 = vmatprep.subr.mxu0 0.0
    %3402 = vmatpush1.xpose.msra.mxu0 0.0
    %3403 = vmatprep.subr.mxu0 0.0
    %3404 = vmatpush1.xpose.msra.mxu0 0.0
    %3405 = vmatprep.subr.mxu0 0.0
    %3406 = vmatpush1.xpose.msra.mxu0 0.0
    %3407 = vmatprep.subr.mxu0 0.0
    %3408 = vmatpush1.xpose.msra.mxu0 0.0
    %3409 = vmatprep.subr.mxu0 0.0
    %3410 = vmatpush1.xpose.msra.mxu0 0.0
    %3411 = vmatprep.subr.mxu0 0.0
    %3412 = vmatpush1.xpose.msra.mxu0 0.0
    %3413 = vmatprep.subr.mxu0 0.0
    %3414 = vmatpush1.xpose.msra.mxu0 0.0
    %3415 = vmatprep.subr.mxu0 0.0
    %3416 = vmatpush1.xpose.msra.mxu0 0.0
    %3417 = vmatprep.subr.mxu0 0.0
    %3418 = vmatpush1.xpose.msra.mxu0 0.0
    %3419 = vmatprep.subr.mxu0 0.0
    %3420 = vmatpush1.xpose.msra.mxu0 0.0
    %3421 = vmatprep.subr.mxu0 0.0
    %3422 = vmatpush1.xpose.msra.mxu0 0.0
    %3423 = vmatprep.subr.mxu0 0.0
    %3424 = vmatpush1.xpose.msra.mxu0 0.0
    %3425 = vmatprep.subr.mxu0 0.0
    %3426 = vmatpush1.xpose.msra.mxu0 0.0
    %3427 = vmatprep.subr.mxu0 0.0
    %3428 = vmatpush1.xpose.msra.mxu0 0.0
    %3429 = vmatprep.subr.mxu0 0.0
    %3430 = vmatpush1.xpose.msra.mxu0 0.0
    %3431 = vmatprep.subr.mxu0 0.0
    %3432 = vmatpush1.xpose.msra.mxu0 0.0
    %3433 = vmatprep.mubr.f32.mxu0 0.0
    %3434 = vmatmul.mubr.f32.gmra.mrb[0].mxu0 %v3364
    %v3435 = vpop.f32.mrb[0].mxu0
    %v3436 = vadd.f32 0.0, %v3435
    %v3437 = vpop.f32.mrb[0].mxu0
    %3438 = vdwg.mxu0
    %v3440 = vsel %vm468, %v3200, 0
    %v3443 = vsel %vm468, %v3280, 0
    %3445 = vmatprep.subr.mxu0 0.0
    %3446 = vmatpush1.xpose.msra.mxu0 %v3443
    %3447 = vmatprep.subr.mxu0 0.0
    %3448 = vmatpush1.xpose.msra.mxu0 0.0
    %3449 = vmatprep.subr.mxu0 0.0
    %3450 = vmatpush1.xpose.msra.mxu0 0.0
    %3451 = vmatprep.subr.mxu0 0.0
    %3452 = vmatpush1.xpose.msra.mxu0 0.0
    %3453 = vmatprep.subr.mxu0 0.0
    %3454 = vmatpush1.xpose.msra.mxu0 0.0
    %3455 = vmatprep.subr.mxu0 0.0
    %3456 = vmatpush1.xpose.msra.mxu0 0.0
    %3457 = vmatprep.subr.mxu0 0.0
    %3458 = vmatpush1.xpose.msra.mxu0 0.0
    %3459 = vmatprep.subr.mxu0 0.0
    %3460 = vmatpush1.xpose.msra.mxu0 0.0
    %3461 = vmatprep.subr.mxu0 0.0
    %3462 = vmatpush1.xpose.msra.mxu0 0.0
    %3463 = vmatprep.subr.mxu0 0.0
    %3464 = vmatpush1.xpose.msra.mxu0 0.0
    %3465 = vmatprep.subr.mxu0 0.0
    %3466 = vmatpush1.xpose.msra.mxu0 0.0
    %3467 = vmatprep.subr.mxu0 0.0
    %3468 = vmatpush1.xpose.msra.mxu0 0.0
    %3469 = vmatprep.subr.mxu0 0.0
    %3470 = vmatpush1.xpose.msra.mxu0 0.0
    %3471 = vmatprep.subr.mxu0 0.0
    %3472 = vmatpush1.xpose.msra.mxu0 0.0
    %3473 = vmatprep.subr.mxu0 0.0
    %3474 = vmatpush1.xpose.msra.mxu0 0.0
    %3475 = vmatprep.subr.mxu0 0.0
    %3476 = vmatpush1.xpose.msra.mxu0 0.0
    %3477 = vmatprep.subr.mxu0 0.0
    %3478 = vmatpush1.xpose.msra.mxu0 0.0
    %3479 = vmatprep.subr.mxu0 0.0
    %3480 = vmatpush1.xpose.msra.mxu0 0.0
    %3481 = vmatprep.subr.mxu0 0.0
    %3482 = vmatpush1.xpose.msra.mxu0 0.0
    %3483 = vmatprep.subr.mxu0 0.0
    %3484 = vmatpush1.xpose.msra.mxu0 0.0
    %3485 = vmatprep.subr.mxu0 0.0
    %3486 = vmatpush1.xpose.msra.mxu0 0.0
    %3487 = vmatprep.subr.mxu0 0.0
    %3488 = vmatpush1.xpose.msra.mxu0 0.0
    %3489 = vmatprep.subr.mxu0 0.0
    %3490 = vmatpush1.xpose.msra.mxu0 0.0
    %3491 = vmatprep.subr.mxu0 0.0
    %3492 = vmatpush1.xpose.msra.mxu0 0.0
    %3493 = vmatprep.subr.mxu0 0.0
    %3494 = vmatpush1.xpose.msra.mxu0 0.0
    %3495 = vmatprep.subr.mxu0 0.0
    %3496 = vmatpush1.xpose.msra.mxu0 0.0
    %3497 = vmatprep.subr.mxu0 0.0
    %3498 = vmatpush1.xpose.msra.mxu0 0.0
    %3499 = vmatprep.subr.mxu0 0.0
    %3500 = vmatpush1.xpose.msra.mxu0 0.0
    %3501 = vmatprep.subr.mxu0 0.0
    %3502 = vmatpush1.xpose.msra.mxu0 0.0
    %3503 = vmatprep.subr.mxu0 0.0
    %3504 = vmatpush1.xpose.msra.mxu0 0.0
    %3505 = vmatprep.subr.mxu0 0.0
    %3506 = vmatpush1.xpose.msra.mxu0 0.0
    %3507 = vmatprep.subr.mxu0 0.0
    %3508 = vmatpush1.xpose.msra.mxu0 0.0
    %3509 = vmatprep.mubr.f32.mxu0 0.0
    %3510 = vmatmul.mubr.f32.gmra.mrb[0].mxu0 %v3440
    %v3511 = vpop.f32.mrb[0].mxu0
    %v3512 = vadd.f32 0.0, %v3511
    %v3513 = vpop.f32.mrb[0].mxu0
    %3514 = vdwg.mxu0
    %v3515 = vmul.f32 %v3436, 0.17677669
    %v3516 = vmul.f32 %v3512, 0.17677669
    %v3517 = vadd.f32 %v3515, %v178
    %v3518 = vadd.f32 %v3516, %v178
    %v3519 = vsel %vm468, %v3517, -inf
    %3520 = vmax.xlane.f32.xlu0 %v3519
    %v3521 = vpop.xlane.xlu0 %3520
    %v3522 = vsel %vm468, %v3518, -inf
    %3523 = vmax.xlane.f32.xlu0 %v3522
    %v3524 = vpop.xlane.xlu0 %3523
    %v3525 = vsub.f32 %v3517, %v3521
    %v3526 = vsub.f32 %v3518, %v3524
    %v3527 = vmul.f32 %v3525, 1.442695
    %v3528 = vpow.pop %v3527
    %v3529 = vmul.f32 %v3526, 1.442695
    %v3530 = vpow.pop %v3529
    %v3531 = vsel %vm468, %v3528, 0.0
    %3532 = vadd.xlane.f32.xlu0 %v3531
    %v3533 = vpop.xlane.xlu0 %3532
    %v3534 = vsel %vm468, %v3530, 0.0
    %3535 = vadd.xlane.f32.xlu0 %v3534
    %v3536 = vpop.xlane.xlu0 %3535
    %v3537 = vrcp.pop %v3533
    %v3538 = vmul.f32 %v3528, %v3537
    %v3539 = vrcp.pop %v3536
    %v3540 = vmul.f32 %v3530, %v3539
    %v3542 = vsel %vm468, %v3538, 0
    %3544 = vmatprep.subr.mxu0 0.0
    %3545 = vmatpush1.msra.mxu0 %v3355
    %3546 = vmatprep.subr.mxu0 0.0
    %3547 = vmatpush1.msra.mxu0 0.0
    %3548 = vmatprep.subr.mxu0 0.0
    %3549 = vmatpush1.msra.mxu0 0.0
    %3550 = vmatprep.subr.mxu0 0.0
    %3551 = vmatpush1.msra.mxu0 0.0
    %3552 = vmatprep.subr.mxu0 0.0
    %3553 = vmatpush1.msra.mxu0 0.0
    %3554 = vmatprep.subr.mxu0 0.0
    %3555 = vmatpush1.msra.mxu0 0.0
    %3556 = vmatprep.subr.mxu0 0.0
    %3557 = vmatpush1.msra.mxu0 0.0
    %3558 = vmatprep.subr.mxu0 0.0
    %3559 = vmatpush1.msra.mxu0 0.0
    %3560 = vmatprep.subr.mxu0 0.0
    %3561 = vmatpush1.msra.mxu0 0.0
    %3562 = vmatprep.subr.mxu0 0.0
    %3563 = vmatpush1.msra.mxu0 0.0
    %3564 = vmatprep.subr.mxu0 0.0
    %3565 = vmatpush1.msra.mxu0 0.0
    %3566 = vmatprep.subr.mxu0 0.0
    %3567 = vmatpush1.msra.mxu0 0.0
    %3568 = vmatprep.subr.mxu0 0.0
    %3569 = vmatpush1.msra.mxu0 0.0
    %3570 = vmatprep.subr.mxu0 0.0
    %3571 = vmatpush1.msra.mxu0 0.0
    %3572 = vmatprep.subr.mxu0 0.0
    %3573 = vmatpush1.msra.mxu0 0.0
    %3574 = vmatprep.subr.mxu0 0.0
    %3575 = vmatpush1.msra.mxu0 0.0
    %3576 = vmatprep.subr.mxu0 0.0
    %3577 = vmatpush1.msra.mxu0 0.0
    %3578 = vmatprep.subr.mxu0 0.0
    %3579 = vmatpush1.msra.mxu0 0.0
    %3580 = vmatprep.subr.mxu0 0.0
    %3581 = vmatpush1.msra.mxu0 0.0
    %3582 = vmatprep.subr.mxu0 0.0
    %3583 = vmatpush1.msra.mxu0 0.0
    %3584 = vmatprep.subr.mxu0 0.0
    %3585 = vmatpush1.msra.mxu0 0.0
    %3586 = vmatprep.subr.mxu0 0.0
    %3587 = vmatpush1.msra.mxu0 0.0
    %3588 = vmatprep.subr.mxu0 0.0
    %3589 = vmatpush1.msra.mxu0 0.0
    %3590 = vmatprep.subr.mxu0 0.0
    %3591 = vmatpush1.msra.mxu0 0.0
    %3592 = vmatprep.subr.mxu0 0.0
    %3593 = vmatpush1.msra.mxu0 0.0
    %3594 = vmatprep.subr.mxu0 0.0
    %3595 = vmatpush1.msra.mxu0 0.0
    %3596 = vmatprep.subr.mxu0 0.0
    %3597 = vmatpush1.msra.mxu0 0.0
    %3598 = vmatprep.subr.mxu0 0.0
    %3599 = vmatpush1.msra.mxu0 0.0
    %3600 = vmatprep.subr.mxu0 0.0
    %3601 = vmatpush1.msra.mxu0 0.0
    %3602 = vmatprep.subr.mxu0 0.0
    %3603 = vmatpush1.msra.mxu0 0.0
    %3604 = vmatprep.subr.mxu0 0.0
    %3605 = vmatpush1.msra.mxu0 0.0
    %3606 = vmatprep.subr.mxu0 0.0
    %3607 = vmatpush1.msra.mxu0 0.0
    %3608 = vmatprep.mubr.f32.mxu0 0.0
    %3609 = vmatmul.mubr.f32.gmra.mrb[0].mxu0 %v3542
    %v3610 = vpop.f32.mrb[0].mxu0
    %v3611 = vadd.f32 0.0, %v3610
    %v3612 = vpop.f32.mrb[0].mxu0
    %3613 = vdwg.mxu0
    %v3615 = vsel %vm468, %v3540, 0
    %3617 = vmatprep.subr.mxu0 0.0
    %3618 = vmatpush1.msra.mxu0 %v3360
    %3619 = vmatprep.subr.mxu0 0.0
    %3620 = vmatpush1.msra.mxu0 0.0
    %3621 = vmatprep.subr.mxu0 0.0
    %3622 = vmatpush1.msra.mxu0 0.0
    %3623 = vmatprep.subr.mxu0 0.0
    %3624 = vmatpush1.msra.mxu0 0.0
    %3625 = vmatprep.subr.mxu0 0.0
    %3626 = vmatpush1.msra.mxu0 0.0
    %3627 = vmatprep.subr.mxu0 0.0
    %3628 = vmatpush1.msra.mxu0 0.0
    %3629 = vmatprep.subr.mxu0 0.0
    %3630 = vmatpush1.msra.mxu0 0.0
    %3631 = vmatprep.subr.mxu0 0.0
    %3632 = vmatpush1.msra.mxu0 0.0
    %3633 = vmatprep.subr.mxu0 0.0
    %3634 = vmatpush1.msra.mxu0 0.0
    %3635 = vmatprep.subr.mxu0 0.0
    %3636 = vmatpush1.msra.mxu0 0.0
    %3637 = vmatprep.subr.mxu0 0.0
    %3638 = vmatpush1.msra.mxu0 0.0
    %3639 = vmatprep.subr.mxu0 0.0
    %3640 = vmatpush1.msra.mxu0 0.0
    %3641 = vmatprep.subr.mxu0 0.0
    %3642 = vmatpush1.msra.mxu0 0.0
    %3643 = vmatprep.subr.mxu0 0.0
    %3644 = vmatpush1.msra.mxu0 0.0
    %3645 = vmatprep.subr.mxu0 0.0
    %3646 = vmatpush1.msra.mxu0 0.0
    %3647 = vmatprep.subr.mxu0 0.0
    %3648 = vmatpush1.msra.mxu0 0.0
    %3649 = vmatprep.subr.mxu0 0.0
    %3650 = vmatpush1.msra.mxu0 0.0
    %3651 = vmatprep.subr.mxu0 0.0
    %3652 = vmatpush1.msra.mxu0 0.0
    %3653 = vmatprep.subr.mxu0 0.0
    %3654 = vmatpush1.msra.mxu0 0.0
    %3655 = vmatprep.subr.mxu0 0.0
    %3656 = vmatpush1.msra.mxu0 0.0
    %3657 = vmatprep.subr.mxu0 0.0
    %3658 = vmatpush1.msra.mxu0 0.0
    %3659 = vmatprep.subr.mxu0 0.0
    %3660 = vmatpush1.msra.mxu0 0.0
    %3661 = vmatprep.subr.mxu0 0.0
    %3662 = vmatpush1.msra.mxu0 0.0
    %3663 = vmatprep.subr.mxu0 0.0
    %3664 = vmatpush1.msra.mxu0 0.0
    %3665 = vmatprep.subr.mxu0 0.0
    %3666 = vmatpush1.msra.mxu0 0.0
    %3667 = vmatprep.subr.mxu0 0.0
    %3668 = vmatpush1.msra.mxu0 0.0
    %3669 = vmatprep.subr.mxu0 0.0
    %3670 = vmatpush1.msra.mxu0 0.0
    %3671 = vmatprep.subr.mxu0 0.0
    %3672 = vmatpush1.msra.mxu0 0.0
    %3673 = vmatprep.subr.mxu0 0.0
    %3674 = vmatpush1.msra.mxu0 0.0
    %3675 = vmatprep.subr.mxu0 0.0
    %3676 = vmatpush1.msra.mxu0 0.0
    %3677 = vmatprep.subr.mxu0 0.0
    %3678 = vmatpush1.msra.mxu0 0.0
    %3679 = vmatprep.subr.mxu0 0.0
    %3680 = vmatpush1.msra.mxu0 0.0
    %3681 = vmatprep.mubr.f32.mxu0 0.0
    %3682 = vmatmul.mubr.f32.gmra.mrb[0].mxu0 %v3615
    %v3683 = vpop.f32.mrb[0].mxu0
    %v3684 = vadd.f32 0.0, %v3683
    %v3685 = vpop.f32.mrb[0].mxu0
    %3686 = vdwg.mxu0
    %s3687 = scalar_lea.vmem %s8, 32
    %v3688 = vld [vmem:[%s3687] sm:$0xff]
    %s3689 = scalar_lea.vmem %s5, 160
    %v3690 = vld [vmem:[%s3689] sm:$0xff]
    %v3691 = vld [vmem:[%s3689 + $0x8] sm:$0xff]
    %v3692 = vld [vmem:[%s3689 + $0x10] sm:$0xff]
    %v3693 = vld [vmem:[%s3689 + $0x18] sm:$0xff]
    %3694 = vmatprep.subr.mxu0 0.0
    %3695 = vmatpush1.msra.mxu0 %v3690
    %3696 = vmatprep.subr.mxu0 0.0
    %3697 = vmatpush1.msra.mxu0 %v3691
    %3698 = vmatprep.subr.mxu0 0.0
    %3699 = vmatpush1.msra.mxu0 %v3692
    %3700 = vmatprep.subr.mxu0 0.0
    %3701 = vmatpush1.msra.mxu0 %v3693
    %3702 = vmatprep.subr.mxu0 0.0
    %3703 = vmatpush1.msra.mxu0 0.0
    %3704 = vmatprep.subr.mxu0 0.0
    %3705 = vmatpush1.msra.mxu0 0.0
    %3706 = vmatprep.subr.mxu0 0.0
    %3707 = vmatpush1.msra.mxu0 0.0
    %3708 = vmatprep.subr.mxu0 0.0
    %3709 = vmatpush1.msra.mxu0 0.0
    %3710 = vmatprep.subr.mxu0 0.0
    %3711 = vmatpush1.msra.mxu0 0.0
    %3712 = vmatprep.subr.mxu0 0.0
    %3713 = vmatpush1.msra.mxu0 0.0
    %3714 = vmatprep.subr.mxu0 0.0
    %3715 = vmatpush1.msra.mxu0 0.0
    %3716 = vmatprep.subr.mxu0 0.0
    %3717 = vmatpush1.msra.mxu0 0.0
    %3718 = vmatprep.subr.mxu0 0.0
    %3719 = vmatpush1.msra.mxu0 0.0
    %3720 = vmatprep.subr.mxu0 0.0
    %3721 = vmatpush1.msra.mxu0 0.0
    %3722 = vmatprep.subr.mxu0 0.0
    %3723 = vmatpush1.msra.mxu0 0.0
    %3724 = vmatprep.subr.mxu0 0.0
    %3725 = vmatpush1.msra.mxu0 0.0
    %3726 = vmatprep.subr.mxu0 0.0
    %3727 = vmatpush1.msra.mxu0 0.0
    %3728 = vmatprep.subr.mxu0 0.0
    %3729 = vmatpush1.msra.mxu0 0.0
    %3730 = vmatprep.subr.mxu0 0.0
    %3731 = vmatpush1.msra.mxu0 0.0
    %3732 = vmatprep.subr.mxu0 0.0
    %3733 = vmatpush1.msra.mxu0 0.0
    %3734 = vmatprep.subr.mxu0 0.0
    %3735 = vmatpush1.msra.mxu0 0.0
    %3736 = vmatprep.subr.mxu0 0.0
    %3737 = vmatpush1.msra.mxu0 0.0
    %3738 = vmatprep.subr.mxu0 0.0
    %3739 = vmatpush1.msra.mxu0 0.0
    %3740 = vmatprep.subr.mxu0 0.0
    %3741 = vmatpush1.msra.mxu0 0.0
    %3742 = vmatprep.subr.mxu0 0.0
    %3743 = vmatpush1.msra.mxu0 0.0
    %3744 = vmatprep.subr.mxu0 0.0
    %3745 = vmatpush1.msra.mxu0 0.0
    %3746 = vmatprep.subr.mxu0 0.0
    %3747 = vmatpush1.msra.mxu0 0.0
    %3748 = vmatprep.subr.mxu0 0.0
    %3749 = vmatpush1.msra.mxu0 0.0
    %3750 = vmatprep.subr.mxu0 0.0
    %3751 = vmatpush1.msra.mxu0 0.0
    %3752 = vmatprep.subr.mxu0 0.0
    %3753 = vmatpush1.msra.mxu0 0.0
    %3754 = vmatprep.subr.mxu0 0.0
    %3755 = vmatpush1.msra.mxu0 0.0
    %3756 = vmatprep.subr.mxu0 0.0
    %3757 = vmatpush1.msra.mxu0 0.0
    %3758 = vmatprep.mubr.f32.mxu0 0.0
    %3759 = vmatmul.mubr.f32.gmra.mrb[0].mxu0 %v3123
    %v3760 = vpop.f32.mrb[0].mxu0
    %v3761 = vadd.f32 0.0, %v3760
    %v3762 = vpop.f32.mrb[0].mxu0
    %3763 = vmatprep.mubr.f32.mxu0 0.0
    %3764 = vmatmul.mubr.f32.gmra.mrb[0].mxu0 %v3126
    %v3765 = vpop.f32.mrb[0].mxu0
    %v3766 = vadd.f32 0.0, %v3765
    %v3767 = vpop.f32.mrb[0].mxu0
    %3768 = vdwg.mxu0
    %s3769 = scalar_lea.vmem %s6, 160
    %v3770 = vld [vmem:[%s3769] sm:$0xff]
    %v3771 = vld [vmem:[%s3769 + $0x8] sm:$0xff]
    %v3772 = vld [vmem:[%s3769 + $0x10] sm:$0xff]
    %v3773 = vld [vmem:[%s3769 + $0x18] sm:$0xff]
    %3774 = vmatprep.subr.mxu0 0.0
    %3775 = vmatpush1.msra.mxu0 %v3770
    %3776 = vmatprep.subr.mxu0 0.0
    %3777 = vmatpush1.msra.mxu0 %v3771
    %3778 = vmatprep.subr.mxu0 0.0
    %3779 = vmatpush1.msra.mxu0 %v3772
    %3780 = vmatprep.subr.mxu0 0.0
    %3781 = vmatpush1.msra.mxu0 %v3773
    %3782 = vmatprep.subr.mxu0 0.0
    %3783 = vmatpush1.msra.mxu0 0.0
    %3784 = vmatprep.subr.mxu0 0.0
    %3785 = vmatpush1.msra.mxu0 0.0
    %3786 = vmatprep.subr.mxu0 0.0
    %3787 = vmatpush1.msra.mxu0 0.0
    %3788 = vmatprep.subr.mxu0 0.0
    %3789 = vmatpush1.msra.mxu0 0.0
    %3790 = vmatprep.subr.mxu0 0.0
    %3791 = vmatpush1.msra.mxu0 0.0
    %3792 = vmatprep.subr.mxu0 0.0
    %3793 = vmatpush1.msra.mxu0 0.0
    %3794 = vmatprep.subr.mxu0 0.0
    %3795 = vmatpush1.msra.mxu0 0.0
    %3796 = vmatprep.subr.mxu0 0.0
    %3797 = vmatpush1.msra.mxu0 0.0
    %3798 = vmatprep.subr.mxu0 0.0
    %3799 = vmatpush1.msra.mxu0 0.0
    %3800 = vmatprep.subr.mxu0 0.0
    %3801 = vmatpush1.msra.mxu0 0.0
    %3802 = vmatprep.subr.mxu0 0.0
    %3803 = vmatpush1.msra.mxu0 0.0
    %3804 = vmatprep.subr.mxu0 0.0
    %3805 = vmatpush1.msra.mxu0 0.0
    %3806 = vmatprep.subr.mxu0 0.0
    %3807 = vmatpush1.msra.mxu0 0.0
    %3808 = vmatprep.subr.mxu0 0.0
    %3809 = vmatpush1.msra.mxu0 0.0
    %3810 = vmatprep.subr.mxu0 0.0
    %3811 = vmatpush1.msra.mxu0 0.0
    %3812 = vmatprep.subr.mxu0 0.0
    %3813 = vmatpush1.msra.mxu0 0.0
    %3814 = vmatprep.subr.mxu0 0.0
    %3815 = vmatpush1.msra.mxu0 0.0
    %3816 = vmatprep.subr.mxu0 0.0
    %3817 = vmatpush1.msra.mxu0 0.0
    %3818 = vmatprep.subr.mxu0 0.0
    %3819 = vmatpush1.msra.mxu0 0.0
    %3820 = vmatprep.subr.mxu0 0.0
    %3821 = vmatpush1.msra.mxu0 0.0
    %3822 = vmatprep.subr.mxu0 0.0
    %3823 = vmatpush1.msra.mxu0 0.0
    %3824 = vmatprep.subr.mxu0 0.0
    %3825 = vmatpush1.msra.mxu0 0.0
    %3826 = vmatprep.subr.mxu0 0.0
    %3827 = vmatpush1.msra.mxu0 0.0
    %3828 = vmatprep.subr.mxu0 0.0
    %3829 = vmatpush1.msra.mxu0 0.0
    %3830 = vmatprep.subr.mxu0 0.0
    %3831 = vmatpush1.msra.mxu0 0.0
    %3832 = vmatprep.subr.mxu0 0.0
    %3833 = vmatpush1.msra.mxu0 0.0
    %3834 = vmatprep.subr.mxu0 0.0
    %3835 = vmatpush1.msra.mxu0 0.0
    %3836 = vmatprep.subr.mxu0 0.0
    %3837 = vmatpush1.msra.mxu0 0.0
    %3838 = vmatprep.mubr.f32.mxu0 0.0
    %3839 = vmatmul.mubr.f32.gmra.mrb[0].mxu0 %v3123
    %v3840 = vpop.f32.mrb[0].mxu0
    %v3841 = vadd.f32 0.0, %v3840
    %v3842 = vpop.f32.mrb[0].mxu0
    %3843 = vmatprep.mubr.f32.mxu0 0.0
    %3844 = vmatmul.mubr.f32.gmra.mrb[0].mxu0 %v3126
    %v3845 = vpop.f32.mrb[0].mxu0
    %v3846 = vadd.f32 0.0, %v3845
    %v3847 = vpop.f32.mrb[0].mxu0
    %3848 = vdwg.mxu0
    %s3849 = scalar_lea.vmem %s7, 160
    %v3850 = vld [vmem:[%s3849] sm:$0xff]
    %v3851 = vld [vmem:[%s3849 + $0x8] sm:$0xff]
    %v3852 = vld [vmem:[%s3849 + $0x10] sm:$0xff]
    %v3853 = vld [vmem:[%s3849 + $0x18] sm:$0xff]
    %3854 = vmatprep.subr.mxu0 0.0
    %3855 = vmatpush1.msra.mxu0 %v3850
    %3856 = vmatprep.subr.mxu0 0.0
    %3857 = vmatpush1.msra.mxu0 %v3851
    %3858 = vmatprep.subr.mxu0 0.0
    %3859 = vmatpush1.msra.mxu0 %v3852
    %3860 = vmatprep.subr.mxu0 0.0
    %3861 = vmatpush1.msra.mxu0 %v3853
    %3862 = vmatprep.subr.mxu0 0.0
    %3863 = vmatpush1.msra.mxu0 0.0
    %3864 = vmatprep.subr.mxu0 0.0
    %3865 = vmatpush1.msra.mxu0 0.0
    %3866 = vmatprep.subr.mxu0 0.0
    %3867 = vmatpush1.msra.mxu0 0.0
    %3868 = vmatprep.subr.mxu0 0.0
    %3869 = vmatpush1.msra.mxu0 0.0
    %3870 = vmatprep.subr.mxu0 0.0
    %3871 = vmatpush1.msra.mxu0 0.0
    %3872 = vmatprep.subr.mxu0 0.0
    %3873 = vmatpush1.msra.mxu0 0.0
    %3874 = vmatprep.subr.mxu0 0.0
    %3875 = vmatpush1.msra.mxu0 0.0
    %3876 = vmatprep.subr.mxu0 0.0
    %3877 = vmatpush1.msra.mxu0 0.0
    %3878 = vmatprep.subr.mxu0 0.0
    %3879 = vmatpush1.msra.mxu0 0.0
    %3880 = vmatprep.subr.mxu0 0.0
    %3881 = vmatpush1.msra.mxu0 0.0
    %3882 = vmatprep.subr.mxu0 0.0
    %3883 = vmatpush1.msra.mxu0 0.0
    %3884 = vmatprep.subr.mxu0 0.0
    %3885 = vmatpush1.msra.mxu0 0.0
    %3886 = vmatprep.subr.mxu0 0.0
    %3887 = vmatpush1.msra.mxu0 0.0
    %3888 = vmatprep.subr.mxu0 0.0
    %3889 = vmatpush1.msra.mxu0 0.0
    %3890 = vmatprep.subr.mxu0 0.0
    %3891 = vmatpush1.msra.mxu0 0.0
    %3892 = vmatprep.subr.mxu0 0.0
    %3893 = vmatpush1.msra.mxu0 0.0
    %3894 = vmatprep.subr.mxu0 0.0
    %3895 = vmatpush1.msra.mxu0 0.0
    %3896 = vmatprep.subr.mxu0 0.0
    %3897 = vmatpush1.msra.mxu0 0.0
    %3898 = vmatprep.subr.mxu0 0.0
    %3899 = vmatpush1.msra.mxu0 0.0
    %3900 = vmatprep.subr.mxu0 0.0
    %3901 = vmatpush1.msra.mxu0 0.0
    %3902 = vmatprep.subr.mxu0 0.0
    %3903 = vmatpush1.msra.mxu0 0.0
    %3904 = vmatprep.subr.mxu0 0.0
    %3905 = vmatpush1.msra.mxu0 0.0
    %3906 = vmatprep.subr.mxu0 0.0
    %3907 = vmatpush1.msra.mxu0 0.0
    %3908 = vmatprep.subr.mxu0 0.0
    %3909 = vmatpush1.msra.mxu0 0.0
    %3910 = vmatprep.subr.mxu0 0.0
    %3911 = vmatpush1.msra.mxu0 0.0
    %3912 = vmatprep.subr.mxu0 0.0
    %3913 = vmatpush1.msra.mxu0 0.0
    %3914 = vmatprep.subr.mxu0 0.0
    %3915 = vmatpush1.msra.mxu0 0.0
    %3916 = vmatprep.subr.mxu0 0.0
    %3917 = vmatpush1.msra.mxu0 0.0
    %3918 = vmatprep.mubr.f32.mxu0 0.0
    %3919 = vmatmul.mubr.f32.gmra.mrb[0].mxu0 %v3123
    %v3920 = vpop.f32.mrb[0].mxu0
    %v3921 = vadd.f32 0.0, %v3920
    %v3922 = vpop.f32.mrb[0].mxu0
    %3923 = vmatprep.mubr.f32.mxu0 0.0
    %3924 = vmatmul.mubr.f32.gmra.mrb[0].mxu0 %v3126
    %v3925 = vpop.f32.mrb[0].mxu0
    %v3926 = vadd.f32 0.0, %v3925
    %v3927 = vpop.f32.mrb[0].mxu0
    %3928 = vdwg.mxu0
    %v3930 = vsel %vm468, %v3761, 0
    %v3933 = vsel %vm468, %v3841, 0
    %3935 = vmatprep.subr.mxu0 0.0
    %3936 = vmatpush1.xpose.msra.mxu0 %v3933
    %3937 = vmatprep.subr.mxu0 0.0
    %3938 = vmatpush1.xpose.msra.mxu0 0.0
    %3939 = vmatprep.subr.mxu0 0.0
    %3940 = vmatpush1.xpose.msra.mxu0 0.0
    %3941 = vmatprep.subr.mxu0 0.0
    %3942 = vmatpush1.xpose.msra.mxu0 0.0
    %3943 = vmatprep.subr.mxu0 0.0
    %3944 = vmatpush1.xpose.msra.mxu0 0.0
    %3945 = vmatprep.subr.mxu0 0.0
    %3946 = vmatpush1.xpose.msra.mxu0 0.0
    %3947 = vmatprep.subr.mxu0 0.0
    %3948 = vmatpush1.xpose.msra.mxu0 0.0
    %3949 = vmatprep.subr.mxu0 0.0
    %3950 = vmatpush1.xpose.msra.mxu0 0.0
    %3951 = vmatprep.subr.mxu0 0.0
    %3952 = vmatpush1.xpose.msra.mxu0 0.0
    %3953 = vmatprep.subr.mxu0 0.0
    %3954 = vmatpush1.xpose.msra.mxu0 0.0
    %3955 = vmatprep.subr.mxu0 0.0
    %3956 = vmatpush1.xpose.msra.mxu0 0.0
    %3957 = vmatprep.subr.mxu0 0.0
    %3958 = vmatpush1.xpose.msra.mxu0 0.0
    %3959 = vmatprep.subr.mxu0 0.0
    %3960 = vmatpush1.xpose.msra.mxu0 0.0
    %3961 = vmatprep.subr.mxu0 0.0
    %3962 = vmatpush1.xpose.msra.mxu0 0.0
    %3963 = vmatprep.subr.mxu0 0.0
    %3964 = vmatpush1.xpose.msra.mxu0 0.0
    %3965 = vmatprep.subr.mxu0 0.0
    %3966 = vmatpush1.xpose.msra.mxu0 0.0
    %3967 = vmatprep.subr.mxu0 0.0
    %3968 = vmatpush1.xpose.msra.mxu0 0.0
    %3969 = vmatprep.subr.mxu0 0.0
    %3970 = vmatpush1.xpose.msra.mxu0 0.0
    %3971 = vmatprep.subr.mxu0 0.0
    %3972 = vmatpush1.xpose.msra.mxu0 0.0
    %3973 = vmatprep.subr.mxu0 0.0
    %3974 = vmatpush1.xpose.msra.mxu0 0.0
    %3975 = vmatprep.subr.mxu0 0.0
    %3976 = vmatpush1.xpose.msra.mxu0 0.0
    %3977 = vmatprep.subr.mxu0 0.0
    %3978 = vmatpush1.xpose.msra.mxu0 0.0
    %3979 = vmatprep.subr.mxu0 0.0
    %3980 = vmatpush1.xpose.msra.mxu0 0.0
    %3981 = vmatprep.subr.mxu0 0.0
    %3982 = vmatpush1.xpose.msra.mxu0 0.0
    %3983 = vmatprep.subr.mxu0 0.0
    %3984 = vmatpush1.xpose.msra.mxu0 0.0
    %3985 = vmatprep.subr.mxu0 0.0
    %3986 = vmatpush1.xpose.msra.mxu0 0.0
    %3987 = vmatprep.subr.mxu0 0.0
    %3988 = vmatpush1.xpose.msra.mxu0 0.0
    %3989 = vmatprep.subr.mxu0 0.0
    %3990 = vmatpush1.xpose.msra.mxu0 0.0
    %3991 = vmatprep.subr.mxu0 0.0
    %3992 = vmatpush1.xpose.msra.mxu0 0.0
    %3993 = vmatprep.subr.mxu0 0.0
    %3994 = vmatpush1.xpose.msra.mxu0 0.0
    %3995 = vmatprep.subr.mxu0 0.0
    %3996 = vmatpush1.xpose.msra.mxu0 0.0
    %3997 = vmatprep.subr.mxu0 0.0
    %3998 = vmatpush1.xpose.msra.mxu0 0.0
    %3999 = vmatprep.mubr.f32.mxu0 0.0
    %4000 = vmatmul.mubr.f32.gmra.mrb[0].mxu0 %v3930
    %v4001 = vpop.f32.mrb[0].mxu0
    %v4002 = vadd.f32 0.0, %v4001
    %v4003 = vpop.f32.mrb[0].mxu0
    %4004 = vdwg.mxu0
    %v4006 = vsel %vm468, %v3766, 0
    %v4009 = vsel %vm468, %v3846, 0
    %4011 = vmatprep.subr.mxu0 0.0
    %4012 = vmatpush1.xpose.msra.mxu0 %v4009
    %4013 = vmatprep.subr.mxu0 0.0
    %4014 = vmatpush1.xpose.msra.mxu0 0.0
    %4015 = vmatprep.subr.mxu0 0.0
    %4016 = vmatpush1.xpose.msra.mxu0 0.0
    %4017 = vmatprep.subr.mxu0 0.0
    %4018 = vmatpush1.xpose.msra.mxu0 0.0
    %4019 = vmatprep.subr.mxu0 0.0
    %4020 = vmatpush1.xpose.msra.mxu0 0.0
    %4021 = vmatprep.subr.mxu0 0.0
    %4022 = vmatpush1.xpose.msra.mxu0 0.0
    %4023 = vmatprep.subr.mxu0 0.0
    %4024 = vmatpush1.xpose.msra.mxu0 0.0
    %4025 = vmatprep.subr.mxu0 0.0
    %4026 = vmatpush1.xpose.msra.mxu0 0.0
    %4027 = vmatprep.subr.mxu0 0.0
    %4028 = vmatpush1.xpose.msra.mxu0 0.0
    %4029 = vmatprep.subr.mxu0 0.0
    %4030 = vmatpush1.xpose.msra.mxu0 0.0
    %4031 = vmatprep.subr.mxu0 0.0
    %4032 = vmatpush1.xpose.msra.mxu0 0.0
    %4033 = vmatprep.subr.mxu0 0.0
    %4034 = vmatpush1.xpose.msra.mxu0 0.0
    %4035 = vmatprep.subr.mxu0 0.0
    %4036 = vmatpush1.xpose.msra.mxu0 0.0
    %4037 = vmatprep.subr.mxu0 0.0
    %4038 = vmatpush1.xpose.msra.mxu0 0.0
    %4039 = vmatprep.subr.mxu0 0.0
    %4040 = vmatpush1.xpose.msra.mxu0 0.0
    %4041 = vmatprep.subr.mxu0 0.0
    %4042 = vmatpush1.xpose.msra.mxu0 0.0
    %4043 = vmatprep.subr.mxu0 0.0
    %4044 = vmatpush1.xpose.msra.mxu0 0.0
    %4045 = vmatprep.subr.mxu0 0.0
    %4046 = vmatpush1.xpose.msra.mxu0 0.0
    %4047 = vmatprep.subr.mxu0 0.0
    %4048 = vmatpush1.xpose.msra.mxu0 0.0
    %4049 = vmatprep.subr.mxu0 0.0
    %4050 = vmatpush1.xpose.msra.mxu0 0.0
    %4051 = vmatprep.subr.mxu0 0.0
    %4052 = vmatpush1.xpose.msra.mxu0 0.0
    %4053 = vmatprep.subr.mxu0 0.0
    %4054 = vmatpush1.xpose.msra.mxu0 0.0
    %4055 = vmatprep.subr.mxu0 0.0
    %4056 = vmatpush1.xpose.msra.mxu0 0.0
    %4057 = vmatprep.subr.mxu0 0.0
    %4058 = vmatpush1.xpose.msra.mxu0 0.0
    %4059 = vmatprep.subr.mxu0 0.0
    %4060 = vmatpush1.xpose.msra.mxu0 0.0
    %4061 = vmatprep.subr.mxu0 0.0
    %4062 = vmatpush1.xpose.msra.mxu0 0.0
    %4063 = vmatprep.subr.mxu0 0.0
    %4064 = vmatpush1.xpose.msra.mxu0 0.0
    %4065 = vmatprep.subr.mxu0 0.0
    %4066 = vmatpush1.xpose.msra.mxu0 0.0
    %4067 = vmatprep.subr.mxu0 0.0
    %4068 = vmatpush1.xpose.msra.mxu0 0.0
    %4069 = vmatprep.subr.mxu0 0.0
    %4070 = vmatpush1.xpose.msra.mxu0 0.0
    %4071 = vmatprep.subr.mxu0 0.0
    %4072 = vmatpush1.xpose.msra.mxu0 0.0
    %4073 = vmatprep.subr.mxu0 0.0
    %4074 = vmatpush1.xpose.msra.mxu0 0.0
    %4075 = vmatprep.mubr.f32.mxu0 0.0
    %4076 = vmatmul.mubr.f32.gmra.mrb[0].mxu0 %v4006
    %v4077 = vpop.f32.mrb[0].mxu0
    %v4078 = vadd.f32 0.0, %v4077
    %v4079 = vpop.f32.mrb[0].mxu0
    %4080 = vdwg.mxu0
    %v4081 = vmul.f32 %v4002, 0.17677669
    %v4082 = vmul.f32 %v4078, 0.17677669
    %v4083 = vadd.f32 %v4081, %v178
    %v4084 = vadd.f32 %v4082, %v178
    %v4085 = vsel %vm468, %v4083, -inf
    %4086 = vmax.xlane.f32.xlu0 %v4085
    %v4087 = vpop.xlane.xlu0 %4086
    %v4088 = vsel %vm468, %v4084, -inf
    %4089 = vmax.xlane.f32.xlu0 %v4088
    %v4090 = vpop.xlane.xlu0 %4089
    %v4091 = vsub.f32 %v4083, %v4087
    %v4092 = vsub.f32 %v4084, %v4090
    %v4093 = vmul.f32 %v4091, 1.442695
    %v4094 = vpow.pop %v4093
    %v4095 = vmul.f32 %v4092, 1.442695
    %v4096 = vpow.pop %v4095
    %v4097 = vsel %vm468, %v4094, 0.0
    %4098 = vadd.xlane.f32.xlu0 %v4097
    %v4099 = vpop.xlane.xlu0 %4098
    %v4100 = vsel %vm468, %v4096, 0.0
    %4101 = vadd.xlane.f32.xlu0 %v4100
    %v4102 = vpop.xlane.xlu0 %4101
    %v4103 = vrcp.pop %v4099
    %v4104 = vmul.f32 %v4094, %v4103
    %v4105 = vrcp.pop %v4102
    %v4106 = vmul.f32 %v4096, %v4105
    %v4108 = vsel %vm468, %v4104, 0
    %4110 = vmatprep.subr.mxu0 0.0
    %4111 = vmatpush1.msra.mxu0 %v3921
    %4112 = vmatprep.subr.mxu0 0.0
    %4113 = vmatpush1.msra.mxu0 0.0
    %4114 = vmatprep.subr.mxu0 0.0
    %4115 = vmatpush1.msra.mxu0 0.0
    %4116 = vmatprep.subr.mxu0 0.0
    %4117 = vmatpush1.msra.mxu0 0.0
    %4118 = vmatprep.subr.mxu0 0.0
    %4119 = vmatpush1.msra.mxu0 0.0
    %4120 = vmatprep.subr.mxu0 0.0
    %4121 = vmatpush1.msra.mxu0 0.0
    %4122 = vmatprep.subr.mxu0 0.0
    %4123 = vmatpush1.msra.mxu0 0.0
    %4124 = vmatprep.subr.mxu0 0.0
    %4125 = vmatpush1.msra.mxu0 0.0
    %4126 = vmatprep.subr.mxu0 0.0
    %4127 = vmatpush1.msra.mxu0 0.0
    %4128 = vmatprep.subr.mxu0 0.0
    %4129 = vmatpush1.msra.mxu0 0.0
    %4130 = vmatprep.subr.mxu0 0.0
    %4131 = vmatpush1.msra.mxu0 0.0
    %4132 = vmatprep.subr.mxu0 0.0
    %4133 = vmatpush1.msra.mxu0 0.0
    %4134 = vmatprep.subr.mxu0 0.0
    %4135 = vmatpush1.msra.mxu0 0.0
    %4136 = vmatprep.subr.mxu0 0.0
    %4137 = vmatpush1.msra.mxu0 0.0
    %4138 = vmatprep.subr.mxu0 0.0
    %4139 = vmatpush1.msra.mxu0 0.0
    %4140 = vmatprep.subr.mxu0 0.0
    %4141 = vmatpush1.msra.mxu0 0.0
    %4142 = vmatprep.subr.mxu0 0.0
    %4143 = vmatpush1.msra.mxu0 0.0
    %4144 = vmatprep.subr.mxu0 0.0
    %4145 = vmatpush1.msra.mxu0 0.0
    %4146 = vmatprep.subr.mxu0 0.0
    %4147 = vmatpush1.msra.mxu0 0.0
    %4148 = vmatprep.subr.mxu0 0.0
    %4149 = vmatpush1.msra.mxu0 0.0
    %4150 = vmatprep.subr.mxu0 0.0
    %4151 = vmatpush1.msra.mxu0 0.0
    %4152 = vmatprep.subr.mxu0 0.0
    %4153 = vmatpush1.msra.mxu0 0.0
    %4154 = vmatprep.subr.mxu0 0.0
    %4155 = vmatpush1.msra.mxu0 0.0
    %4156 = vmatprep.subr.mxu0 0.0
    %4157 = vmatpush1.msra.mxu0 0.0
    %4158 = vmatprep.subr.mxu0 0.0
    %4159 = vmatpush1.msra.mxu0 0.0
    %4160 = vmatprep.subr.mxu0 0.0
    %4161 = vmatpush1.msra.mxu0 0.0
    %4162 = vmatprep.subr.mxu0 0.0
    %4163 = vmatpush1.msra.mxu0 0.0
    %4164 = vmatprep.subr.mxu0 0.0
    %4165 = vmatpush1.msra.mxu0 0.0
    %4166 = vmatprep.subr.mxu0 0.0
    %4167 = vmatpush1.msra.mxu0 0.0
    %4168 = vmatprep.subr.mxu0 0.0
    %4169 = vmatpush1.msra.mxu0 0.0
    %4170 = vmatprep.subr.mxu0 0.0
    %4171 = vmatpush1.msra.mxu0 0.0
    %4172 = vmatprep.subr.mxu0 0.0
    %4173 = vmatpush1.msra.mxu0 0.0
    %4174 = vmatprep.mubr.f32.mxu0 0.0
    %4175 = vmatmul.mubr.f32.gmra.mrb[0].mxu0 %v4108
    %v4176 = vpop.f32.mrb[0].mxu0
    %v4177 = vadd.f32 0.0, %v4176
    %v4178 = vpop.f32.mrb[0].mxu0
    %4179 = vdwg.mxu0
    %v4181 = vsel %vm468, %v4106, 0
    %4183 = vmatprep.subr.mxu0 0.0
    %4184 = vmatpush1.msra.mxu0 %v3926
    %4185 = vmatprep.subr.mxu0 0.0
    %4186 = vmatpush1.msra.mxu0 0.0
    %4187 = vmatprep.subr.mxu0 0.0
    %4188 = vmatpush1.msra.mxu0 0.0
    %4189 = vmatprep.subr.mxu0 0.0
    %4190 = vmatpush1.msra.mxu0 0.0
    %4191 = vmatprep.subr.mxu0 0.0
    %4192 = vmatpush1.msra.mxu0 0.0
    %4193 = vmatprep.subr.mxu0 0.0
    %4194 = vmatpush1.msra.mxu0 0.0
    %4195 = vmatprep.subr.mxu0 0.0
    %4196 = vmatpush1.msra.mxu0 0.0
    %4197 = vmatprep.subr.mxu0 0.0
    %4198 = vmatpush1.msra.mxu0 0.0
    %4199 = vmatprep.subr.mxu0 0.0
    %4200 = vmatpush1.msra.mxu0 0.0
    %4201 = vmatprep.subr.mxu0 0.0
    %4202 = vmatpush1.msra.mxu0 0.0
    %4203 = vmatprep.subr.mxu0 0.0
    %4204 = vmatpush1.msra.mxu0 0.0
    %4205 = vmatprep.subr.mxu0 0.0
    %4206 = vmatpush1.msra.mxu0 0.0
    %4207 = vmatprep.subr.mxu0 0.0
    %4208 = vmatpush1.msra.mxu0 0.0
    %4209 = vmatprep.subr.mxu0 0.0
    %4210 = vmatpush1.msra.mxu0 0.0
    %4211 = vmatprep.subr.mxu0 0.0
    %4212 = vmatpush1.msra.mxu0 0.0
    %4213 = vmatprep.subr.mxu0 0.0
    %4214 = vmatpush1.msra.mxu0 0.0
    %4215 = vmatprep.subr.mxu0 0.0
    %4216 = vmatpush1.msra.mxu0 0.0
    %4217 = vmatprep.subr.mxu0 0.0
    %4218 = vmatpush1.msra.mxu0 0.0
    %4219 = vmatprep.subr.mxu0 0.0
    %4220 = vmatpush1.msra.mxu0 0.0
    %4221 = vmatprep.subr.mxu0 0.0
    %4222 = vmatpush1.msra.mxu0 0.0
    %4223 = vmatprep.subr.mxu0 0.0
    %4224 = vmatpush1.msra.mxu0 0.0
    %4225 = vmatprep.subr.mxu0 0.0
    %4226 = vmatpush1.msra.mxu0 0.0
    %4227 = vmatprep.subr.mxu0 0.0
    %4228 = vmatpush1.msra.mxu0 0.0
    %4229 = vmatprep.subr.mxu0 0.0
    %4230 = vmatpush1.msra.mxu0 0.0
    %4231 = vmatprep.subr.mxu0 0.0
    %4232 = vmatpush1.msra.mxu0 0.0
    %4233 = vmatprep.subr.mxu0 0.0
    %4234 = vmatpush1.msra.mxu0 0.0
    %4235 = vmatprep.subr.mxu0 0.0
    %4236 = vmatpush1.msra.mxu0 0.0
    %4237 = vmatprep.subr.mxu0 0.0
    %4238 = vmatpush1.msra.mxu0 0.0
    %4239 = vmatprep.subr.mxu0 0.0
    %4240 = vmatpush1.msra.mxu0 0.0
    %4241 = vmatprep.subr.mxu0 0.0
    %4242 = vmatpush1.msra.mxu0 0.0
    %4243 = vmatprep.subr.mxu0 0.0
    %4244 = vmatpush1.msra.mxu0 0.0
    %4245 = vmatprep.subr.mxu0 0.0
    %4246 = vmatpush1.msra.mxu0 0.0
    %4247 = vmatprep.mubr.f32.mxu0 0.0
    %4248 = vmatmul.mubr.f32.gmra.mrb[0].mxu0 %v4181
    %v4249 = vpop.f32.mrb[0].mxu0
    %v4250 = vadd.f32 0.0, %v4249
    %v4251 = vpop.f32.mrb[0].mxu0
    %4252 = vdwg.mxu0
    %s4253 = scalar_lea.vmem %s8, 40
    %v4254 = vld [vmem:[%s4253] sm:$0xff]
    %v4256 = vsel %vm468, %v4177, 0
    %v4259 = vsel %vm468, %v4250, 0
    %4261 = vmatprep.subr.mxu0 0.0
    %4262 = vmatpush1.msra.mxu0 %v4254
    %4263 = vmatprep.subr.mxu0 0.0
    %4264 = vmatpush1.msra.mxu0 0.0
    %4265 = vmatprep.subr.mxu0 0.0
    %4266 = vmatpush1.msra.mxu0 0.0
    %4267 = vmatprep.subr.mxu0 0.0
    %4268 = vmatpush1.msra.mxu0 0.0
    %4269 = vmatprep.subr.mxu0 0.0
    %4270 = vmatpush1.msra.mxu0 0.0
    %4271 = vmatprep.subr.mxu0 0.0
    %4272 = vmatpush1.msra.mxu0 0.0
    %4273 = vmatprep.subr.mxu0 0.0
    %4274 = vmatpush1.msra.mxu0 0.0
    %4275 = vmatprep.subr.mxu0 0.0
    %4276 = vmatpush1.msra.mxu0 0.0
    %4277 = vmatprep.subr.mxu0 0.0
    %4278 = vmatpush1.msra.mxu0 0.0
    %4279 = vmatprep.subr.mxu0 0.0
    %4280 = vmatpush1.msra.mxu0 0.0
    %4281 = vmatprep.subr.mxu0 0.0
    %4282 = vmatpush1.msra.mxu0 0.0
    %4283 = vmatprep.subr.mxu0 0.0
    %4284 = vmatpush1.msra.mxu0 0.0
    %4285 = vmatprep.subr.mxu0 0.0
    %4286 = vmatpush1.msra.mxu0 0.0
    %4287 = vmatprep.subr.mxu0 0.0
    %4288 = vmatpush1.msra.mxu0 0.0
    %4289 = vmatprep.subr.mxu0 0.0
    %4290 = vmatpush1.msra.mxu0 0.0
    %4291 = vmatprep.subr.mxu0 0.0
    %4292 = vmatpush1.msra.mxu0 0.0
    %4293 = vmatprep.subr.mxu0 0.0
    %4294 = vmatpush1.msra.mxu0 0.0
    %4295 = vmatprep.subr.mxu0 0.0
    %4296 = vmatpush1.msra.mxu0 0.0
    %4297 = vmatprep.subr.mxu0 0.0
    %4298 = vmatpush1.msra.mxu0 0.0
    %4299 = vmatprep.subr.mxu0 0.0
    %4300 = vmatpush1.msra.mxu0 0.0
    %4301 = vmatprep.subr.mxu0 0.0
    %4302 = vmatpush1.msra.mxu0 0.0
    %4303 = vmatprep.subr.mxu0 0.0
    %4304 = vmatpush1.msra.mxu0 0.0
    %4305 = vmatprep.subr.mxu0 0.0
    %4306 = vmatpush1.msra.mxu0 0.0
    %4307 = vmatprep.subr.mxu0 0.0
    %4308 = vmatpush1.msra.mxu0 0.0
    %4309 = vmatprep.subr.mxu0 0.0
    %4310 = vmatpush1.msra.mxu0 0.0
    %4311 = vmatprep.subr.mxu0 0.0
    %4312 = vmatpush1.msra.mxu0 0.0
    %4313 = vmatprep.subr.mxu0 0.0
    %4314 = vmatpush1.msra.mxu0 0.0
    %4315 = vmatprep.subr.mxu0 0.0
    %4316 = vmatpush1.msra.mxu0 0.0
    %4317 = vmatprep.subr.mxu0 0.0
    %4318 = vmatpush1.msra.mxu0 0.0
    %4319 = vmatprep.subr.mxu0 0.0
    %4320 = vmatpush1.msra.mxu0 0.0
    %4321 = vmatprep.subr.mxu0 0.0
    %4322 = vmatpush1.msra.mxu0 0.0
    %4323 = vmatprep.subr.mxu0 0.0
    %4324 = vmatpush1.msra.mxu0 0.0
    %4325 = vmatprep.mubr.f32.mxu0 0.0
    %4326 = vmatmul.mubr.f32.gmra.mrb[0].mxu0 %v4256
    %v4327 = vpop.f32.mrb[0].mxu0
    %v4328 = vadd.f32 0.0, %v4327
    %v4329 = vpop.f32.mrb[0].mxu0
    %4330 = vmatprep.mubr.f32.mxu0 0.0
    %4331 = vmatmul.mubr.f32.gmra.mrb[0].mxu0 %v4259
    %v4332 = vpop.f32.mrb[0].mxu0
    %v4333 = vadd.f32 0.0, %v4332
    %v4334 = vpop.f32.mrb[0].mxu0
    %4335 = vdwg.mxu0
    %v4337 = vsel %vm468, %v3611, 0
    %v4340 = vsel %vm468, %v3684, 0
    %4342 = vmatprep.subr.mxu0 0.0
    %4343 = vmatpush1.msra.mxu0 %v3688
    %4344 = vmatprep.subr.mxu0 0.0
    %4345 = vmatpush1.msra.mxu0 0.0
    %4346 = vmatprep.subr.mxu0 0.0
    %4347 = vmatpush1.msra.mxu0 0.0
    %4348 = vmatprep.subr.mxu0 0.0
    %4349 = vmatpush1.msra.mxu0 0.0
    %4350 = vmatprep.subr.mxu0 0.0
    %4351 = vmatpush1.msra.mxu0 0.0
    %4352 = vmatprep.subr.mxu0 0.0
    %4353 = vmatpush1.msra.mxu0 0.0
    %4354 = vmatprep.subr.mxu0 0.0
    %4355 = vmatpush1.msra.mxu0 0.0
    %4356 = vmatprep.subr.mxu0 0.0
    %4357 = vmatpush1.msra.mxu0 0.0
    %4358 = vmatprep.subr.mxu0 0.0
    %4359 = vmatpush1.msra.mxu0 0.0
    %4360 = vmatprep.subr.mxu0 0.0
    %4361 = vmatpush1.msra.mxu0 0.0
    %4362 = vmatprep.subr.mxu0 0.0
    %4363 = vmatpush1.msra.mxu0 0.0
    %4364 = vmatprep.subr.mxu0 0.0
    %4365 = vmatpush1.msra.mxu0 0.0
    %4366 = vmatprep.subr.mxu0 0.0
    %4367 = vmatpush1.msra.mxu0 0.0
    %4368 = vmatprep.subr.mxu0 0.0
    %4369 = vmatpush1.msra.mxu0 0.0
    %4370 = vmatprep.subr.mxu0 0.0
    %4371 = vmatpush1.msra.mxu0 0.0
    %4372 = vmatprep.subr.mxu0 0.0
    %4373 = vmatpush1.msra.mxu0 0.0
    %4374 = vmatprep.subr.mxu0 0.0
    %4375 = vmatpush1.msra.mxu0 0.0
    %4376 = vmatprep.subr.mxu0 0.0
    %4377 = vmatpush1.msra.mxu0 0.0
    %4378 = vmatprep.subr.mxu0 0.0
    %4379 = vmatpush1.msra.mxu0 0.0
    %4380 = vmatprep.subr.mxu0 0.0
    %4381 = vmatpush1.msra.mxu0 0.0
    %4382 = vmatprep.subr.mxu0 0.0
    %4383 = vmatpush1.msra.mxu0 0.0
    %4384 = vmatprep.subr.mxu0 0.0
    %4385 = vmatpush1.msra.mxu0 0.0
    %4386 = vmatprep.subr.mxu0 0.0
    %4387 = vmatpush1.msra.mxu0 0.0
    %4388 = vmatprep.subr.mxu0 0.0
    %4389 = vmatpush1.msra.mxu0 0.0
    %4390 = vmatprep.subr.mxu0 0.0
    %4391 = vmatpush1.msra.mxu0 0.0
    %4392 = vmatprep.subr.mxu0 0.0
    %4393 = vmatpush1.msra.mxu0 0.0
    %4394 = vmatprep.subr.mxu0 0.0
    %4395 = vmatpush1.msra.mxu0 0.0
    %4396 = vmatprep.subr.mxu0 0.0
    %4397 = vmatpush1.msra.mxu0 0.0
    %4398 = vmatprep.subr.mxu0 0.0
    %4399 = vmatpush1.msra.mxu0 0.0
    %4400 = vmatprep.subr.mxu0 0.0
    %4401 = vmatpush1.msra.mxu0 0.0
    %4402 = vmatprep.subr.mxu0 0.0
    %4403 = vmatpush1.msra.mxu0 0.0
    %4404 = vmatprep.subr.mxu0 0.0
    %4405 = vmatpush1.msra.mxu0 0.0
    %4406 = vmatprep.mubr.f32.mxu0 0.0
    %4407 = vmatmul.mubr.f32.gmra.mrb[0].mxu0 %v4337
    %v4408 = vpop.f32.mrb[0].mxu0
    %v4409 = vadd.f32 %v4328, %v4408
    %v4410 = vpop.f32.mrb[0].mxu0
    %4411 = vmatprep.mubr.f32.mxu0 0.0
    %4412 = vmatmul.mubr.f32.gmra.mrb[0].mxu0 %v4340
    %v4413 = vpop.f32.mrb[0].mxu0
    %v4414 = vadd.f32 %v4333, %v4413
    %v4415 = vpop.f32.mrb[0].mxu0
    %4416 = vdwg.mxu0
    %s4417 = scalar_lea.vmem %s5, 192
    %v4418 = vld [vmem:[%s4417] sm:$0xff]
    %v4419 = vld [vmem:[%s4417 + $0x8] sm:$0xff]
    %v4420 = vld [vmem:[%s4417 + $0x10] sm:$0xff]
    %v4421 = vld [vmem:[%s4417 + $0x18] sm:$0xff]
    %4422 = vmatprep.subr.mxu0 0.0
    %4423 = vmatpush1.msra.mxu0 %v4418
    %4424 = vmatprep.subr.mxu0 0.0
    %4425 = vmatpush1.msra.mxu0 %v4419
    %4426 = vmatprep.subr.mxu0 0.0
    %4427 = vmatpush1.msra.mxu0 %v4420
    %4428 = vmatprep.subr.mxu0 0.0
    %4429 = vmatpush1.msra.mxu0 %v4421
    %4430 = vmatprep.subr.mxu0 0.0
    %4431 = vmatpush1.msra.mxu0 0.0
    %4432 = vmatprep.subr.mxu0 0.0
    %4433 = vmatpush1.msra.mxu0 0.0
    %4434 = vmatprep.subr.mxu0 0.0
    %4435 = vmatpush1.msra.mxu0 0.0
    %4436 = vmatprep.subr.mxu0 0.0
    %4437 = vmatpush1.msra.mxu0 0.0
    %4438 = vmatprep.subr.mxu0 0.0
    %4439 = vmatpush1.msra.mxu0 0.0
    %4440 = vmatprep.subr.mxu0 0.0
    %4441 = vmatpush1.msra.mxu0 0.0
    %4442 = vmatprep.subr.mxu0 0.0
    %4443 = vmatpush1.msra.mxu0 0.0
    %4444 = vmatprep.subr.mxu0 0.0
    %4445 = vmatpush1.msra.mxu0 0.0
    %4446 = vmatprep.subr.mxu0 0.0
    %4447 = vmatpush1.msra.mxu0 0.0
    %4448 = vmatprep.subr.mxu0 0.0
    %4449 = vmatpush1.msra.mxu0 0.0
    %4450 = vmatprep.subr.mxu0 0.0
    %4451 = vmatpush1.msra.mxu0 0.0
    %4452 = vmatprep.subr.mxu0 0.0
    %4453 = vmatpush1.msra.mxu0 0.0
    %4454 = vmatprep.subr.mxu0 0.0
    %4455 = vmatpush1.msra.mxu0 0.0
    %4456 = vmatprep.subr.mxu0 0.0
    %4457 = vmatpush1.msra.mxu0 0.0
    %4458 = vmatprep.subr.mxu0 0.0
    %4459 = vmatpush1.msra.mxu0 0.0
    %4460 = vmatprep.subr.mxu0 0.0
    %4461 = vmatpush1.msra.mxu0 0.0
    %4462 = vmatprep.subr.mxu0 0.0
    %4463 = vmatpush1.msra.mxu0 0.0
    %4464 = vmatprep.subr.mxu0 0.0
    %4465 = vmatpush1.msra.mxu0 0.0
    %4466 = vmatprep.subr.mxu0 0.0
    %4467 = vmatpush1.msra.mxu0 0.0
    %4468 = vmatprep.subr.mxu0 0.0
    %4469 = vmatpush1.msra.mxu0 0.0
    %4470 = vmatprep.subr.mxu0 0.0
    %4471 = vmatpush1.msra.mxu0 0.0
    %4472 = vmatprep.subr.mxu0 0.0
    %4473 = vmatpush1.msra.mxu0 0.0
    %4474 = vmatprep.subr.mxu0 0.0
    %4475 = vmatpush1.msra.mxu0 0.0
    %4476 = vmatprep.subr.mxu0 0.0
    %4477 = vmatpush1.msra.mxu0 0.0
    %4478 = vmatprep.subr.mxu0 0.0
    %4479 = vmatpush1.msra.mxu0 0.0
    %4480 = vmatprep.subr.mxu0 0.0
    %4481 = vmatpush1.msra.mxu0 0.0
    %4482 = vmatprep.subr.mxu0 0.0
    %4483 = vmatpush1.msra.mxu0 0.0
    %4484 = vmatprep.subr.mxu0 0.0
    %4485 = vmatpush1.msra.mxu0 0.0
    %4486 = vmatprep.mubr.f32.mxu0 0.0
    %4487 = vmatmul.mubr.f32.gmra.mrb[0].mxu0 %v3123
    %v4488 = vpop.f32.mrb[0].mxu0
    %v4489 = vadd.f32 0.0, %v4488
    %v4490 = vpop.f32.mrb[0].mxu0
    %4491 = vmatprep.mubr.f32.mxu0 0.0
    %4492 = vmatmul.mubr.f32.gmra.mrb[0].mxu0 %v3126
    %v4493 = vpop.f32.mrb[0].mxu0
    %v4494 = vadd.f32 0.0, %v4493
    %v4495 = vpop.f32.mrb[0].mxu0
    %4496 = vdwg.mxu0
    %s4497 = scalar_lea.vmem %s6, 192
    %v4498 = vld [vmem:[%s4497] sm:$0xff]
    %v4499 = vld [vmem:[%s4497 + $0x8] sm:$0xff]
    %v4500 = vld [vmem:[%s4497 + $0x10] sm:$0xff]
    %v4501 = vld [vmem:[%s4497 + $0x18] sm:$0xff]
    %4502 = vmatprep.subr.mxu0 0.0
    %4503 = vmatpush1.msra.mxu0 %v4498
    %4504 = vmatprep.subr.mxu0 0.0
    %4505 = vmatpush1.msra.mxu0 %v4499
    %4506 = vmatprep.subr.mxu0 0.0
    %4507 = vmatpush1.msra.mxu0 %v4500
    %4508 = vmatprep.subr.mxu0 0.0
    %4509 = vmatpush1.msra.mxu0 %v4501
    %4510 = vmatprep.subr.mxu0 0.0
    %4511 = vmatpush1.msra.mxu0 0.0
    %4512 = vmatprep.subr.mxu0 0.0
    %4513 = vmatpush1.msra.mxu0 0.0
    %4514 = vmatprep.subr.mxu0 0.0
    %4515 = vmatpush1.msra.mxu0 0.0
    %4516 = vmatprep.subr.mxu0 0.0
    %4517 = vmatpush1.msra.mxu0 0.0
    %4518 = vmatprep.subr.mxu0 0.0
    %4519 = vmatpush1.msra.mxu0 0.0
    %4520 = vmatprep.subr.mxu0 0.0
    %4521 = vmatpush1.msra.mxu0 0.0
    %4522 = vmatprep.subr.mxu0 0.0
    %4523 = vmatpush1.msra.mxu0 0.0
    %4524 = vmatprep.subr.mxu0 0.0
    %4525 = vmatpush1.msra.mxu0 0.0
    %4526 = vmatprep.subr.mxu0 0.0
    %4527 = vmatpush1.msra.mxu0 0.0
    %4528 = vmatprep.subr.mxu0 0.0
    %4529 = vmatpush1.msra.mxu0 0.0
    %4530 = vmatprep.subr.mxu0 0.0
    %4531 = vmatpush1.msra.mxu0 0.0
    %4532 = vmatprep.subr.mxu0 0.0
    %4533 = vmatpush1.msra.mxu0 0.0
    %4534 = vmatprep.subr.mxu0 0.0
    %4535 = vmatpush1.msra.mxu0 0.0
    %4536 = vmatprep.subr.mxu0 0.0
    %4537 = vmatpush1.msra.mxu0 0.0
    %4538 = vmatprep.subr.mxu0 0.0
    %4539 = vmatpush1.msra.mxu0 0.0
    %4540 = vmatprep.subr.mxu0 0.0
    %4541 = vmatpush1.msra.mxu0 0.0
    %4542 = vmatprep.subr.mxu0 0.0
    %4543 = vmatpush1.msra.mxu0 0.0
    %4544 = vmatprep.subr.mxu0 0.0
    %4545 = vmatpush1.msra.mxu0 0.0
    %4546 = vmatprep.subr.mxu0 0.0
    %4547 = vmatpush1.msra.mxu0 0.0
    %4548 = vmatprep.subr.mxu0 0.0
    %4549 = vmatpush1.msra.mxu0 0.0
    %4550 = vmatprep.subr.mxu0 0.0
    %4551 = vmatpush1.msra.mxu0 0.0
    %4552 = vmatprep.subr.mxu0 0.0
    %4553 = vmatpush1.msra.mxu0 0.0
    %4554 = vmatprep.subr.mxu0 0.0
    %4555 = vmatpush1.msra.mxu0 0.0
    %4556 = vmatprep.subr.mxu0 0.0
    %4557 = vmatpush1.msra.mxu0 0.0
    %4558 = vmatprep.subr.mxu0 0.0
    %4559 = vmatpush1.msra.mxu0 0.0
    %4560 = vmatprep.subr.mxu0 0.0
    %4561 = vmatpush1.msra.mxu0 0.0
    %4562 = vmatprep.subr.mxu0 0.0
    %4563 = vmatpush1.msra.mxu0 0.0
    %4564 = vmatprep.subr.mxu0 0.0
    %4565 = vmatpush1.msra.mxu0 0.0
    %4566 = vmatprep.mubr.f32.mxu0 0.0
    %4567 = vmatmul.mubr.f32.gmra.mrb[0].mxu0 %v3123
    %v4568 = vpop.f32.mrb[0].mxu0
    %v4569 = vadd.f32 0.0, %v4568
    %v4570 = vpop.f32.mrb[0].mxu0
    %4571 = vmatprep.mubr.f32.mxu0 0.0
    %4572 = vmatmul.mubr.f32.gmra.mrb[0].mxu0 %v3126
    %v4573 = vpop.f32.mrb[0].mxu0
    %v4574 = vadd.f32 0.0, %v4573
    %v4575 = vpop.f32.mrb[0].mxu0
    %4576 = vdwg.mxu0
    %s4577 = scalar_lea.vmem %s7, 192
    %v4578 = vld [vmem:[%s4577] sm:$0xff]
    %v4579 = vld [vmem:[%s4577 + $0x8] sm:$0xff]
    %v4580 = vld [vmem:[%s4577 + $0x10] sm:$0xff]
    %v4581 = vld [vmem:[%s4577 + $0x18] sm:$0xff]
    %4582 = vmatprep.subr.mxu0 0.0
    %4583 = vmatpush1.msra.mxu0 %v4578
    %4584 = vmatprep.subr.mxu0 0.0
    %4585 = vmatpush1.msra.mxu0 %v4579
    %4586 = vmatprep.subr.mxu0 0.0
    %4587 = vmatpush1.msra.mxu0 %v4580
    %4588 = vmatprep.subr.mxu0 0.0
    %4589 = vmatpush1.msra.mxu0 %v4581
    %4590 = vmatprep.subr.mxu0 0.0
    %4591 = vmatpush1.msra.mxu0 0.0
    %4592 = vmatprep.subr.mxu0 0.0
    %4593 = vmatpush1.msra.mxu0 0.0
    %4594 = vmatprep.subr.mxu0 0.0
    %4595 = vmatpush1.msra.mxu0 0.0
    %4596 = vmatprep.subr.mxu0 0.0
    %4597 = vmatpush1.msra.mxu0 0.0
    %4598 = vmatprep.subr.mxu0 0.0
    %4599 = vmatpush1.msra.mxu0 0.0
    %4600 = vmatprep.subr.mxu0 0.0
    %4601 = vmatpush1.msra.mxu0 0.0
    %4602 = vmatprep.subr.mxu0 0.0
    %4603 = vmatpush1.msra.mxu0 0.0
    %4604 = vmatprep.subr.mxu0 0.0
    %4605 = vmatpush1.msra.mxu0 0.0
    %4606 = vmatprep.subr.mxu0 0.0
    %4607 = vmatpush1.msra.mxu0 0.0
    %4608 = vmatprep.subr.mxu0 0.0
    %4609 = vmatpush1.msra.mxu0 0.0
    %4610 = vmatprep.subr.mxu0 0.0
    %4611 = vmatpush1.msra.mxu0 0.0
    %4612 = vmatprep.subr.mxu0 0.0
    %4613 = vmatpush1.msra.mxu0 0.0
    %4614 = vmatprep.subr.mxu0 0.0
    %4615 = vmatpush1.msra.mxu0 0.0
    %4616 = vmatprep.subr.mxu0 0.0
    %4617 = vmatpush1.msra.mxu0 0.0
    %4618 = vmatprep.subr.mxu0 0.0
    %4619 = vmatpush1.msra.mxu0 0.0
    %4620 = vmatprep.subr.mxu0 0.0
    %4621 = vmatpush1.msra.mxu0 0.0
    %4622 = vmatprep.subr.mxu0 0.0
    %4623 = vmatpush1.msra.mxu0 0.0
    %4624 = vmatprep.subr.mxu0 0.0
    %4625 = vmatpush1.msra.mxu0 0.0
    %4626 = vmatprep.subr.mxu0 0.0
    %4627 = vmatpush1.msra.mxu0 0.0
    %4628 = vmatprep.subr.mxu0 0.0
    %4629 = vmatpush1.msra.mxu0 0.0
    %4630 = vmatprep.subr.mxu0 0.0
    %4631 = vmatpush1.msra.mxu0 0.0
    %4632 = vmatprep.subr.mxu0 0.0
    %4633 = vmatpush1.msra.mxu0 0.0
    %4634 = vmatprep.subr.mxu0 0.0
    %4635 = vmatpush1.msra.mxu0 0.0
    %4636 = vmatprep.subr.mxu0 0.0
    %4637 = vmatpush1.msra.mxu0 0.0
    %4638 = vmatprep.subr.mxu0 0.0
    %4639 = vmatpush1.msra.mxu0 0.0
    %4640 = vmatprep.subr.mxu0 0.0
    %4641 = vmatpush1.msra.mxu0 0.0
    %4642 = vmatprep.subr.mxu0 0.0
    %4643 = vmatpush1.msra.mxu0 0.0
    %4644 = vmatprep.subr.mxu0 0.0
    %4645 = vmatpush1.msra.mxu0 0.0
    %4646 = vmatprep.mubr.f32.mxu0 0.0
    %4647 = vmatmul.mubr.f32.gmra.mrb[0].mxu0 %v3123
    %v4648 = vpop.f32.mrb[0].mxu0
    %v4649 = vadd.f32 0.0, %v4648
    %v4650 = vpop.f32.mrb[0].mxu0
    %4651 = vmatprep.mubr.f32.mxu0 0.0
    %4652 = vmatmul.mubr.f32.gmra.mrb[0].mxu0 %v3126
    %v4653 = vpop.f32.mrb[0].mxu0
    %v4654 = vadd.f32 0.0, %v4653
    %v4655 = vpop.f32.mrb[0].mxu0
    %4656 = vdwg.mxu0
    %v4658 = vsel %vm468, %v4489, 0
    %v4661 = vsel %vm468, %v4569, 0
    %4663 = vmatprep.subr.mxu0 0.0
    %4664 = vmatpush1.xpose.msra.mxu0 %v4661
    %4665 = vmatprep.subr.mxu0 0.0
    %4666 = vmatpush1.xpose.msra.mxu0 0.0
    %4667 = vmatprep.subr.mxu0 0.0
    %4668 = vmatpush1.xpose.msra.mxu0 0.0
    %4669 = vmatprep.subr.mxu0 0.0
    %4670 = vmatpush1.xpose.msra.mxu0 0.0
    %4671 = vmatprep.subr.mxu0 0.0
    %4672 = vmatpush1.xpose.msra.mxu0 0.0
    %4673 = vmatprep.subr.mxu0 0.0
    %4674 = vmatpush1.xpose.msra.mxu0 0.0
    %4675 = vmatprep.subr.mxu0 0.0
    %4676 = vmatpush1.xpose.msra.mxu0 0.0
    %4677 = vmatprep.subr.mxu0 0.0
    %4678 = vmatpush1.xpose.msra.mxu0 0.0
    %4679 = vmatprep.subr.mxu0 0.0
    %4680 = vmatpush1.xpose.msra.mxu0 0.0
    %4681 = vmatprep.subr.mxu0 0.0
    %4682 = vmatpush1.xpose.msra.mxu0 0.0
    %4683 = vmatprep.subr.mxu0 0.0
    %4684 = vmatpush1.xpose.msra.mxu0 0.0
    %4685 = vmatprep.subr.mxu0 0.0
    %4686 = vmatpush1.xpose.msra.mxu0 0.0
    %4687 = vmatprep.subr.mxu0 0.0
    %4688 = vmatpush1.xpose.msra.mxu0 0.0
    %4689 = vmatprep.subr.mxu0 0.0
    %4690 = vmatpush1.xpose.msra.mxu0 0.0
    %4691 = vmatprep.subr.mxu0 0.0
    %4692 = vmatpush1.xpose.msra.mxu0 0.0
    %4693 = vmatprep.subr.mxu0 0.0
    %4694 = vmatpush1.xpose.msra.mxu0 0.0
    %4695 = vmatprep.subr.mxu0 0.0
    %4696 = vmatpush1.xpose.msra.mxu0 0.0
    %4697 = vmatprep.subr.mxu0 0.0
    %4698 = vmatpush1.xpose.msra.mxu0 0.0
    %4699 = vmatprep.subr.mxu0 0.0
    %4700 = vmatpush1.xpose.msra.mxu0 0.0
    %4701 = vmatprep.subr.mxu0 0.0
    %4702 = vmatpush1.xpose.msra.mxu0 0.0
    %4703 = vmatprep.subr.mxu0 0.0
    %4704 = vmatpush1.xpose.msra.mxu0 0.0
    %4705 = vmatprep.subr.mxu0 0.0
    %4706 = vmatpush1.xpose.msra.mxu0 0.0
    %4707 = vmatprep.subr.mxu0 0.0
    %4708 = vmatpush1.xpose.msra.mxu0 0.0
    %4709 = vmatprep.subr.mxu0 0.0
    %4710 = vmatpush1.xpose.msra.mxu0 0.0
    %4711 = vmatprep.subr.mxu0 0.0
    %4712 = vmatpush1.xpose.msra.mxu0 0.0
    %4713 = vmatprep.subr.mxu0 0.0
    %4714 = vmatpush1.xpose.msra.mxu0 0.0
    %4715 = vmatprep.subr.mxu0 0.0
    %4716 = vmatpush1.xpose.msra.mxu0 0.0
    %4717 = vmatprep.subr.mxu0 0.0
    %4718 = vmatpush1.xpose.msra.mxu0 0.0
    %4719 = vmatprep.subr.mxu0 0.0
    %4720 = vmatpush1.xpose.msra.mxu0 0.0
    %4721 = vmatprep.subr.mxu0 0.0
    %4722 = vmatpush1.xpose.msra.mxu0 0.0
    %4723 = vmatprep.subr.mxu0 0.0
    %4724 = vmatpush1.xpose.msra.mxu0 0.0
    %4725 = vmatprep.subr.mxu0 0.0
    %4726 = vmatpush1.xpose.msra.mxu0 0.0
    %4727 = vmatprep.mubr.f32.mxu0 0.0
    %4728 = vmatmul.mubr.f32.gmra.mrb[0].mxu0 %v4658
    %v4729 = vpop.f32.mrb[0].mxu0
    %v4730 = vadd.f32 0.0, %v4729
    %v4731 = vpop.f32.mrb[0].mxu0
    %4732 = vdwg.mxu0
    %v4734 = vsel %vm468, %v4494, 0
    %v4737 = vsel %vm468, %v4574, 0
    %4739 = vmatprep.subr.mxu0 0.0
    %4740 = vmatpush1.xpose.msra.mxu0 %v4737
    %4741 = vmatprep.subr.mxu0 0.0
    %4742 = vmatpush1.xpose.msra.mxu0 0.0
    %4743 = vmatprep.subr.mxu0 0.0
    %4744 = vmatpush1.xpose.msra.mxu0 0.0
    %4745 = vmatprep.subr.mxu0 0.0
    %4746 = vmatpush1.xpose.msra.mxu0 0.0
    %4747 = vmatprep.subr.mxu0 0.0
    %4748 = vmatpush1.xpose.msra.mxu0 0.0
    %4749 = vmatprep.subr.mxu0 0.0
    %4750 = vmatpush1.xpose.msra.mxu0 0.0
    %4751 = vmatprep.subr.mxu0 0.0
    %4752 = vmatpush1.xpose.msra.mxu0 0.0
    %4753 = vmatprep.subr.mxu0 0.0
    %4754 = vmatpush1.xpose.msra.mxu0 0.0
    %4755 = vmatprep.subr.mxu0 0.0
    %4756 = vmatpush1.xpose.msra.mxu0 0.0
    %4757 = vmatprep.subr.mxu0 0.0
    %4758 = vmatpush1.xpose.msra.mxu0 0.0
    %4759 = vmatprep.subr.mxu0 0.0
    %4760 = vmatpush1.xpose.msra.mxu0 0.0
    %4761 = vmatprep.subr.mxu0 0.0
    %4762 = vmatpush1.xpose.msra.mxu0 0.0
    %4763 = vmatprep.subr.mxu0 0.0
    %4764 = vmatpush1.xpose.msra.mxu0 0.0
    %4765 = vmatprep.subr.mxu0 0.0
    %4766 = vmatpush1.xpose.msra.mxu0 0.0
    %4767 = vmatprep.subr.mxu0 0.0
    %4768 = vmatpush1.xpose.msra.mxu0 0.0
    %4769 = vmatprep.subr.mxu0 0.0
    %4770 = vmatpush1.xpose.msra.mxu0 0.0
    %4771 = vmatprep.subr.mxu0 0.0
    %4772 = vmatpush1.xpose.msra.mxu0 0.0
    %4773 = vmatprep.subr.mxu0 0.0
    %4774 = vmatpush1.xpose.msra.mxu0 0.0
    %4775 = vmatprep.subr.mxu0 0.0
    %4776 = vmatpush1.xpose.msra.mxu0 0.0
    %4777 = vmatprep.subr.mxu0 0.0
    %4778 = vmatpush1.xpose.msra.mxu0 0.0
    %4779 = vmatprep.subr.mxu0 0.0
    %4780 = vmatpush1.xpose.msra.mxu0 0.0
    %4781 = vmatprep.subr.mxu0 0.0
    %4782 = vmatpush1.xpose.msra.mxu0 0.0
    %4783 = vmatprep.subr.mxu0 0.0
    %4784 = vmatpush1.xpose.msra.mxu0 0.0
    %4785 = vmatprep.subr.mxu0 0.0
    %4786 = vmatpush1.xpose.msra.mxu0 0.0
    %4787 = vmatprep.subr.mxu0 0.0
    %4788 = vmatpush1.xpose.msra.mxu0 0.0
    %4789 = vmatprep.subr.mxu0 0.0
    %4790 = vmatpush1.xpose.msra.mxu0 0.0
    %4791 = vmatprep.subr.mxu0 0.0
    %4792 = vmatpush1.xpose.msra.mxu0 0.0
    %4793 = vmatprep.subr.mxu0 0.0
    %4794 = vmatpush1.xpose.msra.mxu0 0.0
    %4795 = vmatprep.subr.mxu0 0.0
    %4796 = vmatpush1.xpose.msra.mxu0 0.0
    %4797 = vmatprep.subr.mxu0 0.0
    %4798 = vmatpush1.xpose.msra.mxu0 0.0
    %4799 = vmatprep.subr.mxu0 0.0
    %4800 = vmatpush1.xpose.msra.mxu0 0.0
    %4801 = vmatprep.subr.mxu0 0.0
    %4802 = vmatpush1.xpose.msra.mxu0 0.0
    %4803 = vmatprep.mubr.f32.mxu0 0.0
    %4804 = vmatmul.mubr.f32.gmra.mrb[0].mxu0 %v4734
    %v4805 = vpop.f32.mrb[0].mxu0
    %v4806 = vadd.f32 0.0, %v4805
    %v4807 = vpop.f32.mrb[0].mxu0
    %4808 = vdwg.mxu0
    %v4809 = vmul.f32 %v4730, 0.17677669
    %v4810 = vmul.f32 %v4806, 0.17677669
    %v4811 = vadd.f32 %v4809, %v178
    %v4812 = vadd.f32 %v4810, %v178
    %v4813 = vsel %vm468, %v4811, -inf
    %4814 = vmax.xlane.f32.xlu0 %v4813
    %v4815 = vpop.xlane.xlu0 %4814
    %v4816 = vsel %vm468, %v4812, -inf
    %4817 = vmax.xlane.f32.xlu0 %v4816
    %v4818 = vpop.xlane.xlu0 %4817
    %v4819 = vsub.f32 %v4811, %v4815
    %v4820 = vsub.f32 %v4812, %v4818
    %v4821 = vmul.f32 %v4819, 1.442695
    %v4822 = vpow.pop %v4821
    %v4823 = vmul.f32 %v4820, 1.442695
    %v4824 = vpow.pop %v4823
    %v4825 = vsel %vm468, %v4822, 0.0
    %4826 = vadd.xlane.f32.xlu0 %v4825
    %v4827 = vpop.xlane.xlu0 %4826
    %v4828 = vsel %vm468, %v4824, 0.0
    %4829 = vadd.xlane.f32.xlu0 %v4828
    %v4830 = vpop.xlane.xlu0 %4829
    %v4831 = vrcp.pop %v4827
    %v4832 = vmul.f32 %v4822, %v4831
    %v4833 = vrcp.pop %v4830
    %v4834 = vmul.f32 %v4824, %v4833
    %v4836 = vsel %vm468, %v4832, 0
    %4838 = vmatprep.subr.mxu0 0.0
    %4839 = vmatpush1.msra.mxu0 %v4649
    %4840 = vmatprep.subr.mxu0 0.0
    %4841 = vmatpush1.msra.mxu0 0.0
    %4842 = vmatprep.subr.mxu0 0.0
    %4843 = vmatpush1.msra.mxu0 0.0
    %4844 = vmatprep.subr.mxu0 0.0
    %4845 = vmatpush1.msra.mxu0 0.0
    %4846 = vmatprep.subr.mxu0 0.0
    %4847 = vmatpush1.msra.mxu0 0.0
    %4848 = vmatprep.subr.mxu0 0.0
    %4849 = vmatpush1.msra.mxu0 0.0
    %4850 = vmatprep.subr.mxu0 0.0
    %4851 = vmatpush1.msra.mxu0 0.0
    %4852 = vmatprep.subr.mxu0 0.0
    %4853 = vmatpush1.msra.mxu0 0.0
    %4854 = vmatprep.subr.mxu0 0.0
    %4855 = vmatpush1.msra.mxu0 0.0
    %4856 = vmatprep.subr.mxu0 0.0
    %4857 = vmatpush1.msra.mxu0 0.0
    %4858 = vmatprep.subr.mxu0 0.0
    %4859 = vmatpush1.msra.mxu0 0.0
    %4860 = vmatprep.subr.mxu0 0.0
    %4861 = vmatpush1.msra.mxu0 0.0
    %4862 = vmatprep.subr.mxu0 0.0
    %4863 = vmatpush1.msra.mxu0 0.0
    %4864 = vmatprep.subr.mxu0 0.0
    %4865 = vmatpush1.msra.mxu0 0.0
    %4866 = vmatprep.subr.mxu0 0.0
    %4867 = vmatpush1.msra.mxu0 0.0
    %4868 = vmatprep.subr.mxu0 0.0
    %4869 = vmatpush1.msra.mxu0 0.0
    %4870 = vmatprep.subr.mxu0 0.0
    %4871 = vmatpush1.msra.mxu0 0.0
    %4872 = vmatprep.subr.mxu0 0.0
    %4873 = vmatpush1.msra.mxu0 0.0
    %4874 = vmatprep.subr.mxu0 0.0
    %4875 = vmatpush1.msra.mxu0 0.0
    %4876 = vmatprep.subr.mxu0 0.0
    %4877 = vmatpush1.msra.mxu0 0.0
    %4878 = vmatprep.subr.mxu0 0.0
    %4879 = vmatpush1.msra.mxu0 0.0
    %4880 = vmatprep.subr.mxu0 0.0
    %4881 = vmatpush1.msra.mxu0 0.0
    %4882 = vmatprep.subr.mxu0 0.0
    %4883 = vmatpush1.msra.mxu0 0.0
    %4884 = vmatprep.subr.mxu0 0.0
    %4885 = vmatpush1.msra.mxu0 0.0
    %4886 = vmatprep.subr.mxu0 0.0
    %4887 = vmatpush1.msra.mxu0 0.0
    %4888 = vmatprep.subr.mxu0 0.0
    %4889 = vmatpush1.msra.mxu0 0.0
    %4890 = vmatprep.subr.mxu0 0.0
    %4891 = vmatpush1.msra.mxu0 0.0
    %4892 = vmatprep.subr.mxu0 0.0
    %4893 = vmatpush1.msra.mxu0 0.0
    %4894 = vmatprep.subr.mxu0 0.0
    %4895 = vmatpush1.msra.mxu0 0.0
    %4896 = vmatprep.subr.mxu0 0.0
    %4897 = vmatpush1.msra.mxu0 0.0
    %4898 = vmatprep.subr.mxu0 0.0
    %4899 = vmatpush1.msra.mxu0 0.0
    %4900 = vmatprep.subr.mxu0 0.0
    %4901 = vmatpush1.msra.mxu0 0.0
    %4902 = vmatprep.mubr.f32.mxu0 0.0
    %4903 = vmatmul.mubr.f32.gmra.mrb[0].mxu0 %v4836
    %v4904 = vpop.f32.mrb[0].mxu0
    %v4905 = vadd.f32 0.0, %v4904
    %v4906 = vpop.f32.mrb[0].mxu0
    %4907 = vdwg.mxu0
    %v4909 = vsel %vm468, %v4834, 0
    %4911 = vmatprep.subr.mxu0 0.0
    %4912 = vmatpush1.msra.mxu0 %v4654
    %4913 = vmatprep.subr.mxu0 0.0
    %4914 = vmatpush1.msra.mxu0 0.0
    %4915 = vmatprep.subr.mxu0 0.0
    %4916 = vmatpush1.msra.mxu0 0.0
    %4917 = vmatprep.subr.mxu0 0.0
    %4918 = vmatpush1.msra.mxu0 0.0
    %4919 = vmatprep.subr.mxu0 0.0
    %4920 = vmatpush1.msra.mxu0 0.0
    %4921 = vmatprep.subr.mxu0 0.0
    %4922 = vmatpush1.msra.mxu0 0.0
    %4923 = vmatprep.subr.mxu0 0.0
    %4924 = vmatpush1.msra.mxu0 0.0
    %4925 = vmatprep.subr.mxu0 0.0
    %4926 = vmatpush1.msra.mxu0 0.0
    %4927 = vmatprep.subr.mxu0 0.0
    %4928 = vmatpush1.msra.mxu0 0.0
    %4929 = vmatprep.subr.mxu0 0.0
    %4930 = vmatpush1.msra.mxu0 0.0
    %4931 = vmatprep.subr.mxu0 0.0
    %4932 = vmatpush1.msra.mxu0 0.0
    %4933 = vmatprep.subr.mxu0 0.0
    %4934 = vmatpush1.msra.mxu0 0.0
    %4935 = vmatprep.subr.mxu0 0.0
    %4936 = vmatpush1.msra.mxu0 0.0
    %4937 = vmatprep.subr.mxu0 0.0
    %4938 = vmatpush1.msra.mxu0 0.0
    %4939 = vmatprep.subr.mxu0 0.0
    %4940 = vmatpush1.msra.mxu0 0.0
    %4941 = vmatprep.subr.mxu0 0.0
    %4942 = vmatpush1.msra.mxu0 0.0
    %4943 = vmatprep.subr.mxu0 0.0
    %4944 = vmatpush1.msra.mxu0 0.0
    %4945 = vmatprep.subr.mxu0 0.0
    %4946 = vmatpush1.msra.mxu0 0.0
    %4947 = vmatprep.subr.mxu0 0.0
    %4948 = vmatpush1.msra.mxu0 0.0
    %4949 = vmatprep.subr.mxu0 0.0
    %4950 = vmatpush1.msra.mxu0 0.0
    %4951 = vmatprep.subr.mxu0 0.0
    %4952 = vmatpush1.msra.mxu0 0.0
    %4953 = vmatprep.subr.mxu0 0.0
    %4954 = vmatpush1.msra.mxu0 0.0
    %4955 = vmatprep.subr.mxu0 0.0
    %4956 = vmatpush1.msra.mxu0 0.0
    %4957 = vmatprep.subr.mxu0 0.0
    %4958 = vmatpush1.msra.mxu0 0.0
    %4959 = vmatprep.subr.mxu0 0.0
    %4960 = vmatpush1.msra.mxu0 0.0
    %4961 = vmatprep.subr.mxu0 0.0
    %4962 = vmatpush1.msra.mxu0 0.0
    %4963 = vmatprep.subr.mxu0 0.0
    %4964 = vmatpush1.msra.mxu0 0.0
    %4965 = vmatprep.subr.mxu0 0.0
    %4966 = vmatpush1.msra.mxu0 0.0
    %4967 = vmatprep.subr.mxu0 0.0
    %4968 = vmatpush1.msra.mxu0 0.0
    %4969 = vmatprep.subr.mxu0 0.0
    %4970 = vmatpush1.msra.mxu0 0.0
    %4971 = vmatprep.subr.mxu0 0.0
    %4972 = vmatpush1.msra.mxu0 0.0
    %4973 = vmatprep.subr.mxu0 0.0
    %4974 = vmatpush1.msra.mxu0 0.0
    %4975 = vmatprep.mubr.f32.mxu0 0.0
    %4976 = vmatmul.mubr.f32.gmra.mrb[0].mxu0 %v4909
    %v4977 = vpop.f32.mrb[0].mxu0
    %v4978 = vadd.f32 0.0, %v4977
    %v4979 = vpop.f32.mrb[0].mxu0
    %4980 = vdwg.mxu0
    %s4981 = scalar_lea.vmem %s8, 48
    %v4982 = vld [vmem:[%s4981] sm:$0xff]
    %v4984 = vsel %vm468, %v4905, 0
    %v4987 = vsel %vm468, %v4978, 0
    %4989 = vmatprep.subr.mxu0 0.0
    %4990 = vmatpush1.msra.mxu0 %v4982
    %4991 = vmatprep.subr.mxu0 0.0
    %4992 = vmatpush1.msra.mxu0 0.0
    %4993 = vmatprep.subr.mxu0 0.0
    %4994 = vmatpush1.msra.mxu0 0.0
    %4995 = vmatprep.subr.mxu0 0.0
    %4996 = vmatpush1.msra.mxu0 0.0
    %4997 = vmatprep.subr.mxu0 0.0
    %4998 = vmatpush1.msra.mxu0 0.0
    %4999 = vmatprep.subr.mxu0 0.0
    %5000 = vmatpush1.msra.mxu0 0.0
    %5001 = vmatprep.subr.mxu0 0.0
    %5002 = vmatpush1.msra.mxu0 0.0
    %5003 = vmatprep.subr.mxu0 0.0
    %5004 = vmatpush1.msra.mxu0 0.0
    %5005 = vmatprep.subr.mxu0 0.0
    %5006 = vmatpush1.msra.mxu0 0.0
    %5007 = vmatprep.subr.mxu0 0.0
    %5008 = vmatpush1.msra.mxu0 0.0
    %5009 = vmatprep.subr.mxu0 0.0
    %5010 = vmatpush1.msra.mxu0 0.0
    %5011 = vmatprep.subr.mxu0 0.0
    %5012 = vmatpush1.msra.mxu0 0.0
    %5013 = vmatprep.subr.mxu0 0.0
    %5014 = vmatpush1.msra.mxu0 0.0
    %5015 = vmatprep.subr.mxu0 0.0
    %5016 = vmatpush1.msra.mxu0 0.0
    %5017 = vmatprep.subr.mxu0 0.0
    %5018 = vmatpush1.msra.mxu0 0.0
    %5019 = vmatprep.subr.mxu0 0.0
    %5020 = vmatpush1.msra.mxu0 0.0
    %5021 = vmatprep.subr.mxu0 0.0
    %5022 = vmatpush1.msra.mxu0 0.0
    %5023 = vmatprep.subr.mxu0 0.0
    %5024 = vmatpush1.msra.mxu0 0.0
    %5025 = vmatprep.subr.mxu0 0.0
    %5026 = vmatpush1.msra.mxu0 0.0
    %5027 = vmatprep.subr.mxu0 0.0
    %5028 = vmatpush1.msra.mxu0 0.0
    %5029 = vmatprep.subr.mxu0 0.0
    %5030 = vmatpush1.msra.mxu0 0.0
    %5031 = vmatprep.subr.mxu0 0.0
    %5032 = vmatpush1.msra.mxu0 0.0
    %5033 = vmatprep.subr.mxu0 0.0
    %5034 = vmatpush1.msra.mxu0 0.0
    %5035 = vmatprep.subr.mxu0 0.0
    %5036 = vmatpush1.msra.mxu0 0.0
    %5037 = vmatprep.subr.mxu0 0.0
    %5038 = vmatpush1.msra.mxu0 0.0
    %5039 = vmatprep.subr.mxu0 0.0
    %5040 = vmatpush1.msra.mxu0 0.0
    %5041 = vmatprep.subr.mxu0 0.0
    %5042 = vmatpush1.msra.mxu0 0.0
    %5043 = vmatprep.subr.mxu0 0.0
    %5044 = vmatpush1.msra.mxu0 0.0
    %5045 = vmatprep.subr.mxu0 0.0
    %5046 = vmatpush1.msra.mxu0 0.0
    %5047 = vmatprep.subr.mxu0 0.0
    %5048 = vmatpush1.msra.mxu0 0.0
    %5049 = vmatprep.subr.mxu0 0.0
    %5050 = vmatpush1.msra.mxu0 0.0
    %5051 = vmatprep.subr.mxu0 0.0
    %5052 = vmatpush1.msra.mxu0 0.0
    %5053 = vmatprep.mubr.f32.mxu0 0.0
    %5054 = vmatmul.mubr.f32.gmra.mrb[0].mxu0 %v4984
    %v5055 = vpop.f32.mrb[0].mxu0
    %v5056 = vadd.f32 0.0, %v5055
    %v5057 = vpop.f32.mrb[0].mxu0
    %5058 = vmatprep.mubr.f32.mxu0 0.0
    %5059 = vmatmul.mubr.f32.gmra.mrb[0].mxu0 %v4987
    %v5060 = vpop.f32.mrb[0].mxu0
    %v5061 = vadd.f32 0.0, %v5060
    %v5062 = vpop.f32.mrb[0].mxu0
    %5063 = vdwg.mxu0
    %v5064 = vadd.f32 %v4409, %v5056
    %v5065 = vadd.f32 %v4414, %v5061
    %s5066 = scalar_lea.vmem %s5, 224
    %v5067 = vld [vmem:[%s5066] sm:$0xff]
    %v5068 = vld [vmem:[%s5066 + $0x8] sm:$0xff]
    %v5069 = vld [vmem:[%s5066 + $0x10] sm:$0xff]
    %v5070 = vld [vmem:[%s5066 + $0x18] sm:$0xff]
    %5071 = vmatprep.subr.mxu0 0.0
    %5072 = vmatpush1.msra.mxu0 %v5067
    %5073 = vmatprep.subr.mxu0 0.0
    %5074 = vmatpush1.msra.mxu0 %v5068
    %5075 = vmatprep.subr.mxu0 0.0
    %5076 = vmatpush1.msra.mxu0 %v5069
    %5077 = vmatprep.subr.mxu0 0.0
    %5078 = vmatpush1.msra.mxu0 %v5070
    %5079 = vmatprep.subr.mxu0 0.0
    %5080 = vmatpush1.msra.mxu0 0.0
    %5081 = vmatprep.subr.mxu0 0.0
    %5082 = vmatpush1.msra.mxu0 0.0
    %5083 = vmatprep.subr.mxu0 0.0
    %5084 = vmatpush1.msra.mxu0 0.0
    %5085 = vmatprep.subr.mxu0 0.0
    %5086 = vmatpush1.msra.mxu0 0.0
    %5087 = vmatprep.subr.mxu0 0.0
    %5088 = vmatpush1.msra.mxu0 0.0
    %5089 = vmatprep.subr.mxu0 0.0
    %5090 = vmatpush1.msra.mxu0 0.0
    %5091 = vmatprep.subr.mxu0 0.0
    %5092 = vmatpush1.msra.mxu0 0.0
    %5093 = vmatprep.subr.mxu0 0.0
    %5094 = vmatpush1.msra.mxu0 0.0
    %5095 = vmatprep.subr.mxu0 0.0
    %5096 = vmatpush1.msra.mxu0 0.0
    %5097 = vmatprep.subr.mxu0 0.0
    %5098 = vmatpush1.msra.mxu0 0.0
    %5099 = vmatprep.subr.mxu0 0.0
    %5100 = vmatpush1.msra.mxu0 0.0
    %5101 = vmatprep.subr.mxu0 0.0
    %5102 = vmatpush1.msra.mxu0 0.0
    %5103 = vmatprep.subr.mxu0 0.0
    %5104 = vmatpush1.msra.mxu0 0.0
    %5105 = vmatprep.subr.mxu0 0.0
    %5106 = vmatpush1.msra.mxu0 0.0
    %5107 = vmatprep.subr.mxu0 0.0
    %5108 = vmatpush1.msra.mxu0 0.0
    %5109 = vmatprep.subr.mxu0 0.0
    %5110 = vmatpush1.msra.mxu0 0.0
    %5111 = vmatprep.subr.mxu0 0.0
    %5112 = vmatpush1.msra.mxu0 0.0
    %5113 = vmatprep.subr.mxu0 0.0
    %5114 = vmatpush1.msra.mxu0 0.0
    %5115 = vmatprep.subr.mxu0 0.0
    %5116 = vmatpush1.msra.mxu0 0.0
    %5117 = vmatprep.subr.mxu0 0.0
    %5118 = vmatpush1.msra.mxu0 0.0
    %5119 = vmatprep.subr.mxu0 0.0
    %5120 = vmatpush1.msra.mxu0 0.0
    %5121 = vmatprep.subr.mxu0 0.0
    %5122 = vmatpush1.msra.mxu0 0.0
    %5123 = vmatprep.subr.mxu0 0.0
    %5124 = vmatpush1.msra.mxu0 0.0
    %5125 = vmatprep.subr.mxu0 0.0
    %5126 = vmatpush1.msra.mxu0 0.0
    %5127 = vmatprep.subr.mxu0 0.0
    %5128 = vmatpush1.msra.mxu0 0.0
    %5129 = vmatprep.subr.mxu0 0.0
    %5130 = vmatpush1.msra.mxu0 0.0
    %5131 = vmatprep.subr.mxu0 0.0
    %5132 = vmatpush1.msra.mxu0 0.0
    %5133 = vmatprep.subr.mxu0 0.0
    %5134 = vmatpush1.msra.mxu0 0.0
    %5135 = vmatprep.mubr.f32.mxu0 0.0
    %5136 = vmatmul.mubr.f32.gmra.mrb[0].mxu0 %v3123
    %v5137 = vpop.f32.mrb[0].mxu0
    %v5138 = vadd.f32 0.0, %v5137
    %v5139 = vpop.f32.mrb[0].mxu0
    %5140 = vmatprep.mubr.f32.mxu0 0.0
    %5141 = vmatmul.mubr.f32.gmra.mrb[0].mxu0 %v3126
    %v5142 = vpop.f32.mrb[0].mxu0
    %v5143 = vadd.f32 0.0, %v5142
    %v5144 = vpop.f32.mrb[0].mxu0
    %5145 = vdwg.mxu0
    %s5146 = scalar_lea.vmem %s6, 224
    %v5147 = vld [vmem:[%s5146] sm:$0xff]
    %v5148 = vld [vmem:[%s5146 + $0x8] sm:$0xff]
    %v5149 = vld [vmem:[%s5146 + $0x10] sm:$0xff]
    %v5150 = vld [vmem:[%s5146 + $0x18] sm:$0xff]
    %5151 = vmatprep.subr.mxu0 0.0
    %5152 = vmatpush1.msra.mxu0 %v5147
    %5153 = vmatprep.subr.mxu0 0.0
    %5154 = vmatpush1.msra.mxu0 %v5148
    %5155 = vmatprep.subr.mxu0 0.0
    %5156 = vmatpush1.msra.mxu0 %v5149
    %5157 = vmatprep.subr.mxu0 0.0
    %5158 = vmatpush1.msra.mxu0 %v5150
    %5159 = vmatprep.subr.mxu0 0.0
    %5160 = vmatpush1.msra.mxu0 0.0
    %5161 = vmatprep.subr.mxu0 0.0
    %5162 = vmatpush1.msra.mxu0 0.0
    %5163 = vmatprep.subr.mxu0 0.0
    %5164 = vmatpush1.msra.mxu0 0.0
    %5165 = vmatprep.subr.mxu0 0.0
    %5166 = vmatpush1.msra.mxu0 0.0
    %5167 = vmatprep.subr.mxu0 0.0
    %5168 = vmatpush1.msra.mxu0 0.0
    %5169 = vmatprep.subr.mxu0 0.0
    %5170 = vmatpush1.msra.mxu0 0.0
    %5171 = vmatprep.subr.mxu0 0.0
    %5172 = vmatpush1.msra.mxu0 0.0
    %5173 = vmatprep.subr.mxu0 0.0
    %5174 = vmatpush1.msra.mxu0 0.0
    %5175 = vmatprep.subr.mxu0 0.0
    %5176 = vmatpush1.msra.mxu0 0.0
    %5177 = vmatprep.subr.mxu0 0.0
    %5178 = vmatpush1.msra.mxu0 0.0
    %5179 = vmatprep.subr.mxu0 0.0
    %5180 = vmatpush1.msra.mxu0 0.0
    %5181 = vmatprep.subr.mxu0 0.0
    %5182 = vmatpush1.msra.mxu0 0.0
    %5183 = vmatprep.subr.mxu0 0.0
    %5184 = vmatpush1.msra.mxu0 0.0
    %5185 = vmatprep.subr.mxu0 0.0
    %5186 = vmatpush1.msra.mxu0 0.0
    %5187 = vmatprep.subr.mxu0 0.0
    %5188 = vmatpush1.msra.mxu0 0.0
    %5189 = vmatprep.subr.mxu0 0.0
    %5190 = vmatpush1.msra.mxu0 0.0
    %5191 = vmatprep.subr.mxu0 0.0
    %5192 = vmatpush1.msra.mxu0 0.0
    %5193 = vmatprep.subr.mxu0 0.0
    %5194 = vmatpush1.msra.mxu0 0.0
    %5195 = vmatprep.subr.mxu0 0.0
    %5196 = vmatpush1.msra.mxu0 0.0
    %5197 = vmatprep.subr.mxu0 0.0
    %5198 = vmatpush1.msra.mxu0 0.0
    %5199 = vmatprep.subr.mxu0 0.0
    %5200 = vmatpush1.msra.mxu0 0.0
    %5201 = vmatprep.subr.mxu0 0.0
    %5202 = vmatpush1.msra.mxu0 0.0
    %5203 = vmatprep.subr.mxu0 0.0
    %5204 = vmatpush1.msra.mxu0 0.0
    %5205 = vmatprep.subr.mxu0 0.0
    %5206 = vmatpush1.msra.mxu0 0.0
    %5207 = vmatprep.subr.mxu0 0.0
    %5208 = vmatpush1.msra.mxu0 0.0
    %5209 = vmatprep.subr.mxu0 0.0
    %5210 = vmatpush1.msra.mxu0 0.0
    %5211 = vmatprep.subr.mxu0 0.0
    %5212 = vmatpush1.msra.mxu0 0.0
    %5213 = vmatprep.subr.mxu0 0.0
    %5214 = vmatpush1.msra.mxu0 0.0
    %5215 = vmatprep.mubr.f32.mxu0 0.0
    %5216 = vmatmul.mubr.f32.gmra.mrb[0].mxu0 %v3123
    %v5217 = vpop.f32.mrb[0].mxu0
    %v5218 = vadd.f32 0.0, %v5217
    %v5219 = vpop.f32.mrb[0].mxu0
    %5220 = vmatprep.mubr.f32.mxu0 0.0
    %5221 = vmatmul.mubr.f32.gmra.mrb[0].mxu0 %v3126
    %v5222 = vpop.f32.mrb[0].mxu0
    %v5223 = vadd.f32 0.0, %v5222
    %v5224 = vpop.f32.mrb[0].mxu0
    %5225 = vdwg.mxu0
    %s5226 = scalar_lea.vmem %s7, 224
    %v5227 = vld [vmem:[%s5226] sm:$0xff]
    %v5228 = vld [vmem:[%s5226 + $0x8] sm:$0xff]
    %v5229 = vld [vmem:[%s5226 + $0x10] sm:$0xff]
    %v5230 = vld [vmem:[%s5226 + $0x18] sm:$0xff]
    %5231 = vmatprep.subr.mxu0 0.0
    %5232 = vmatpush1.msra.mxu0 %v5227
    %5233 = vmatprep.subr.mxu0 0.0
    %5234 = vmatpush1.msra.mxu0 %v5228
    %5235 = vmatprep.subr.mxu0 0.0
    %5236 = vmatpush1.msra.mxu0 %v5229
    %5237 = vmatprep.subr.mxu0 0.0
    %5238 = vmatpush1.msra.mxu0 %v5230
    %5239 = vmatprep.subr.mxu0 0.0
    %5240 = vmatpush1.msra.mxu0 0.0
    %5241 = vmatprep.subr.mxu0 0.0
    %5242 = vmatpush1.msra.mxu0 0.0
    %5243 = vmatprep.subr.mxu0 0.0
    %5244 = vmatpush1.msra.mxu0 0.0
    %5245 = vmatprep.subr.mxu0 0.0
    %5246 = vmatpush1.msra.mxu0 0.0
    %5247 = vmatprep.subr.mxu0 0.0
    %5248 = vmatpush1.msra.mxu0 0.0
    %5249 = vmatprep.subr.mxu0 0.0
    %5250 = vmatpush1.msra.mxu0 0.0
    %5251 = vmatprep.subr.mxu0 0.0
    %5252 = vmatpush1.msra.mxu0 0.0
    %5253 = vmatprep.subr.mxu0 0.0
    %5254 = vmatpush1.msra.mxu0 0.0
    %5255 = vmatprep.subr.mxu0 0.0
    %5256 = vmatpush1.msra.mxu0 0.0
    %5257 = vmatprep.subr.mxu0 0.0
    %5258 = vmatpush1.msra.mxu0 0.0
    %5259 = vmatprep.subr.mxu0 0.0
    %5260 = vmatpush1.msra.mxu0 0.0
    %5261 = vmatprep.subr.mxu0 0.0
    %5262 = vmatpush1.msra.mxu0 0.0
    %5263 = vmatprep.subr.mxu0 0.0
    %5264 = vmatpush1.msra.mxu0 0.0
    %5265 = vmatprep.subr.mxu0 0.0
    %5266 = vmatpush1.msra.mxu0 0.0
    %5267 = vmatprep.subr.mxu0 0.0
    %5268 = vmatpush1.msra.mxu0 0.0
    %5269 = vmatprep.subr.mxu0 0.0
    %5270 = vmatpush1.msra.mxu0 0.0
    %5271 = vmatprep.subr.mxu0 0.0
    %5272 = vmatpush1.msra.mxu0 0.0
    %5273 = vmatprep.subr.mxu0 0.0
    %5274 = vmatpush1.msra.mxu0 0.0
    %5275 = vmatprep.subr.mxu0 0.0
    %5276 = vmatpush1.msra.mxu0 0.0
    %5277 = vmatprep.subr.mxu0 0.0
    %5278 = vmatpush1.msra.mxu0 0.0
    %5279 = vmatprep.subr.mxu0 0.0
    %5280 = vmatpush1.msra.mxu0 0.0
    %5281 = vmatprep.subr.mxu0 0.0
    %5282 = vmatpush1.msra.mxu0 0.0
    %5283 = vmatprep.subr.mxu0 0.0
    %5284 = vmatpush1.msra.mxu0 0.0
    %5285 = vmatprep.subr.mxu0 0.0
    %5286 = vmatpush1.msra.mxu0 0.0
    %5287 = vmatprep.subr.mxu0 0.0
    %5288 = vmatpush1.msra.mxu0 0.0
    %5289 = vmatprep.subr.mxu0 0.0
    %5290 = vmatpush1.msra.mxu0 0.0
    %5291 = vmatprep.subr.mxu0 0.0
    %5292 = vmatpush1.msra.mxu0 0.0
    %5293 = vmatprep.subr.mxu0 0.0
    %5294 = vmatpush1.msra.mxu0 0.0
    %5295 = vmatprep.mubr.f32.mxu0 0.0
    %5296 = vmatmul.mubr.f32.gmra.mrb[0].mxu0 %v3123
    %v5297 = vpop.f32.mrb[0].mxu0
    %v5298 = vadd.f32 0.0, %v5297
    %v5299 = vpop.f32.mrb[0].mxu0
    %5300 = vmatprep.mubr.f32.mxu0 0.0
    %5301 = vmatmul.mubr.f32.gmra.mrb[0].mxu0 %v3126
    %v5302 = vpop.f32.mrb[0].mxu0
    %v5303 = vadd.f32 0.0, %v5302
    %v5304 = vpop.f32.mrb[0].mxu0
    %5305 = vdwg.mxu0
    %v5307 = vsel %vm468, %v5138, 0
    %v5310 = vsel %vm468, %v5218, 0
    %5312 = vmatprep.subr.mxu0 0.0
    %5313 = vmatpush1.xpose.msra.mxu0 %v5310
    %5314 = vmatprep.subr.mxu0 0.0
    %5315 = vmatpush1.xpose.msra.mxu0 0.0
    %5316 = vmatprep.subr.mxu0 0.0
    %5317 = vmatpush1.xpose.msra.mxu0 0.0
    %5318 = vmatprep.subr.mxu0 0.0
    %5319 = vmatpush1.xpose.msra.mxu0 0.0
    %5320 = vmatprep.subr.mxu0 0.0
    %5321 = vmatpush1.xpose.msra.mxu0 0.0
    %5322 = vmatprep.subr.mxu0 0.0
    %5323 = vmatpush1.xpose.msra.mxu0 0.0
    %5324 = vmatprep.subr.mxu0 0.0
    %5325 = vmatpush1.xpose.msra.mxu0 0.0
    %5326 = vmatprep.subr.mxu0 0.0
    %5327 = vmatpush1.xpose.msra.mxu0 0.0
    %5328 = vmatprep.subr.mxu0 0.0
    %5329 = vmatpush1.xpose.msra.mxu0 0.0
    %5330 = vmatprep.subr.mxu0 0.0
    %5331 = vmatpush1.xpose.msra.mxu0 0.0
    %5332 = vmatprep.subr.mxu0 0.0
    %5333 = vmatpush1.xpose.msra.mxu0 0.0
    %5334 = vmatprep.subr.mxu0 0.0
    %5335 = vmatpush1.xpose.msra.mxu0 0.0
    %5336 = vmatprep.subr.mxu0 0.0
    %5337 = vmatpush1.xpose.msra.mxu0 0.0
    %5338 = vmatprep.subr.mxu0 0.0
    %5339 = vmatpush1.xpose.msra.mxu0 0.0
    %5340 = vmatprep.subr.mxu0 0.0
    %5341 = vmatpush1.xpose.msra.mxu0 0.0
    %5342 = vmatprep.subr.mxu0 0.0
    %5343 = vmatpush1.xpose.msra.mxu0 0.0
    %5344 = vmatprep.subr.mxu0 0.0
    %5345 = vmatpush1.xpose.msra.mxu0 0.0
    %5346 = vmatprep.subr.mxu0 0.0
    %5347 = vmatpush1.xpose.msra.mxu0 0.0
    %5348 = vmatprep.subr.mxu0 0.0
    %5349 = vmatpush1.xpose.msra.mxu0 0.0
    %5350 = vmatprep.subr.mxu0 0.0
    %5351 = vmatpush1.xpose.msra.mxu0 0.0
    %5352 = vmatprep.subr.mxu0 0.0
    %5353 = vmatpush1.xpose.msra.mxu0 0.0
    %5354 = vmatprep.subr.mxu0 0.0
    %5355 = vmatpush1.xpose.msra.mxu0 0.0
    %5356 = vmatprep.subr.mxu0 0.0
    %5357 = vmatpush1.xpose.msra.mxu0 0.0
    %5358 = vmatprep.subr.mxu0 0.0
    %5359 = vmatpush1.xpose.msra.mxu0 0.0
    %5360 = vmatprep.subr.mxu0 0.0
    %5361 = vmatpush1.xpose.msra.mxu0 0.0
    %5362 = vmatprep.subr.mxu0 0.0
    %5363 = vmatpush1.xpose.msra.mxu0 0.0
    %5364 = vmatprep.subr.mxu0 0.0
    %5365 = vmatpush1.xpose.msra.mxu0 0.0
    %5366 = vmatprep.subr.mxu0 0.0
    %5367 = vmatpush1.xpose.msra.mxu0 0.0
    %5368 = vmatprep.subr.mxu0 0.0
    %5369 = vmatpush1.xpose.msra.mxu0 0.0
    %5370 = vmatprep.subr.mxu0 0.0
    %5371 = vmatpush1.xpose.msra.mxu0 0.0
    %5372 = vmatprep.subr.mxu0 0.0
    %5373 = vmatpush1.xpose.msra.mxu0 0.0
    %5374 = vmatprep.subr.mxu0 0.0
    %5375 = vmatpush1.xpose.msra.mxu0 0.0
    %5376 = vmatprep.mubr.f32.mxu0 0.0
    %5377 = vmatmul.mubr.f32.gmra.mrb[0].mxu0 %v5307
    %v5378 = vpop.f32.mrb[0].mxu0
    %v5379 = vadd.f32 0.0, %v5378
    %v5380 = vpop.f32.mrb[0].mxu0
    %5381 = vdwg.mxu0
    %v5383 = vsel %vm468, %v5143, 0
    %v5386 = vsel %vm468, %v5223, 0
    %5388 = vmatprep.subr.mxu0 0.0
    %5389 = vmatpush1.xpose.msra.mxu0 %v5386
    %5390 = vmatprep.subr.mxu0 0.0
    %5391 = vmatpush1.xpose.msra.mxu0 0.0
    %5392 = vmatprep.subr.mxu0 0.0
    %5393 = vmatpush1.xpose.msra.mxu0 0.0
    %5394 = vmatprep.subr.mxu0 0.0
    %5395 = vmatpush1.xpose.msra.mxu0 0.0
    %5396 = vmatprep.subr.mxu0 0.0
    %5397 = vmatpush1.xpose.msra.mxu0 0.0
    %5398 = vmatprep.subr.mxu0 0.0
    %5399 = vmatpush1.xpose.msra.mxu0 0.0
    %5400 = vmatprep.subr.mxu0 0.0
    %5401 = vmatpush1.xpose.msra.mxu0 0.0
    %5402 = vmatprep.subr.mxu0 0.0
    %5403 = vmatpush1.xpose.msra.mxu0 0.0
    %5404 = vmatprep.subr.mxu0 0.0
    %5405 = vmatpush1.xpose.msra.mxu0 0.0
    %5406 = vmatprep.subr.mxu0 0.0
    %5407 = vmatpush1.xpose.msra.mxu0 0.0
    %5408 = vmatprep.subr.mxu0 0.0
    %5409 = vmatpush1.xpose.msra.mxu0 0.0
    %5410 = vmatprep.subr.mxu0 0.0
    %5411 = vmatpush1.xpose.msra.mxu0 0.0
    %5412 = vmatprep.subr.mxu0 0.0
    %5413 = vmatpush1.xpose.msra.mxu0 0.0
    %5414 = vmatprep.subr.mxu0 0.0
    %5415 = vmatpush1.xpose.msra.mxu0 0.0
    %5416 = vmatprep.subr.mxu0 0.0
    %5417 = vmatpush1.xpose.msra.mxu0 0.0
    %5418 = vmatprep.subr.mxu0 0.0
    %5419 = vmatpush1.xpose.msra.mxu0 0.0
    %5420 = vmatprep.subr.mxu0 0.0
    %5421 = vmatpush1.xpose.msra.mxu0 0.0
    %5422 = vmatprep.subr.mxu0 0.0
    %5423 = vmatpush1.xpose.msra.mxu0 0.0
    %5424 = vmatprep.subr.mxu0 0.0
    %5425 = vmatpush1.xpose.msra.mxu0 0.0
    %5426 = vmatprep.subr.mxu0 0.0
    %5427 = vmatpush1.xpose.msra.mxu0 0.0
    %5428 = vmatprep.subr.mxu0 0.0
    %5429 = vmatpush1.xpose.msra.mxu0 0.0
    %5430 = vmatprep.subr.mxu0 0.0
    %5431 = vmatpush1.xpose.msra.mxu0 0.0
    %5432 = vmatprep.subr.mxu0 0.0
    %5433 = vmatpush1.xpose.msra.mxu0 0.0
    %5434 = vmatprep.subr.mxu0 0.0
    %5435 = vmatpush1.xpose.msra.mxu0 0.0
    %5436 = vmatprep.subr.mxu0 0.0
    %5437 = vmatpush1.xpose.msra.mxu0 0.0
    %5438 = vmatprep.subr.mxu0 0.0
    %5439 = vmatpush1.xpose.msra.mxu0 0.0
    %5440 = vmatprep.subr.mxu0 0.0
    %5441 = vmatpush1.xpose.msra.mxu0 0.0
    %5442 = vmatprep.subr.mxu0 0.0
    %5443 = vmatpush1.xpose.msra.mxu0 0.0
    %5444 = vmatprep.subr.mxu0 0.0
    %5445 = vmatpush1.xpose.msra.mxu0 0.0
    %5446 = vmatprep.subr.mxu0 0.0
    %5447 = vmatpush1.xpose.msra.mxu0 0.0
    %5448 = vmatprep.subr.mxu0 0.0
    %5449 = vmatpush1.xpose.msra.mxu0 0.0
    %5450 = vmatprep.subr.mxu0 0.0
    %5451 = vmatpush1.xpose.msra.mxu0 0.0
    %5452 = vmatprep.mubr.f32.mxu0 0.0
    %5453 = vmatmul.mubr.f32.gmra.mrb[0].mxu0 %v5383
    %v5454 = vpop.f32.mrb[0].mxu0
    %v5455 = vadd.f32 0.0, %v5454
    %v5456 = vpop.f32.mrb[0].mxu0
    %5457 = vdwg.mxu0
    %v5458 = vmul.f32 %v5379, 0.17677669
    %v5459 = vmul.f32 %v5455, 0.17677669
    %v5460 = vadd.f32 %v5458, %v178
    %v5461 = vadd.f32 %v5459, %v178
    %v5462 = vsel %vm468, %v5460, -inf
    %5463 = vmax.xlane.f32.xlu0 %v5462
    %v5464 = vpop.xlane.xlu0 %5463
    %v5465 = vsel %vm468, %v5461, -inf
    %5466 = vmax.xlane.f32.xlu0 %v5465
    %v5467 = vpop.xlane.xlu0 %5466
    %v5468 = vsub.f32 %v5460, %v5464
    %v5469 = vsub.f32 %v5461, %v5467
    %v5470 = vmul.f32 %v5468, 1.442695
    %v5471 = vpow.pop %v5470
    %v5472 = vmul.f32 %v5469, 1.442695
    %v5473 = vpow.pop %v5472
    %v5474 = vsel %vm468, %v5471, 0.0
    %5475 = vadd.xlane.f32.xlu0 %v5474
    %v5476 = vpop.xlane.xlu0 %5475
    %v5477 = vsel %vm468, %v5473, 0.0
    %5478 = vadd.xlane.f32.xlu0 %v5477
    %v5479 = vpop.xlane.xlu0 %5478
    %v5480 = vrcp.pop %v5476
    %v5481 = vmul.f32 %v5471, %v5480
    %v5482 = vrcp.pop %v5479
    %v5483 = vmul.f32 %v5473, %v5482
    %v5485 = vsel %vm468, %v5481, 0
    %5487 = vmatprep.subr.mxu0 0.0
    %5488 = vmatpush1.msra.mxu0 %v5298
    %5489 = vmatprep.subr.mxu0 0.0
    %5490 = vmatpush1.msra.mxu0 0.0
    %5491 = vmatprep.subr.mxu0 0.0
    %5492 = vmatpush1.msra.mxu0 0.0
    %5493 = vmatprep.subr.mxu0 0.0
    %5494 = vmatpush1.msra.mxu0 0.0
    %5495 = vmatprep.subr.mxu0 0.0
    %5496 = vmatpush1.msra.mxu0 0.0
    %5497 = vmatprep.subr.mxu0 0.0
    %5498 = vmatpush1.msra.mxu0 0.0
    %5499 = vmatprep.subr.mxu0 0.0
    %5500 = vmatpush1.msra.mxu0 0.0
    %5501 = vmatprep.subr.mxu0 0.0
    %5502 = vmatpush1.msra.mxu0 0.0
    %5503 = vmatprep.subr.mxu0 0.0
    %5504 = vmatpush1.msra.mxu0 0.0
    %5505 = vmatprep.subr.mxu0 0.0
    %5506 = vmatpush1.msra.mxu0 0.0
    %5507 = vmatprep.subr.mxu0 0.0
    %5508 = vmatpush1.msra.mxu0 0.0
    %5509 = vmatprep.subr.mxu0 0.0
    %5510 = vmatpush1.msra.mxu0 0.0
    %5511 = vmatprep.subr.mxu0 0.0
    %5512 = vmatpush1.msra.mxu0 0.0
    %5513 = vmatprep.subr.mxu0 0.0
    %5514 = vmatpush1.msra.mxu0 0.0
    %5515 = vmatprep.subr.mxu0 0.0
    %5516 = vmatpush1.msra.mxu0 0.0
    %5517 = vmatprep.subr.mxu0 0.0
    %5518 = vmatpush1.msra.mxu0 0.0
    %5519 = vmatprep.subr.mxu0 0.0
    %5520 = vmatpush1.msra.mxu0 0.0
    %5521 = vmatprep.subr.mxu0 0.0
    %5522 = vmatpush1.msra.mxu0 0.0
    %5523 = vmatprep.subr.mxu0 0.0
    %5524 = vmatpush1.msra.mxu0 0.0
    %5525 = vmatprep.subr.mxu0 0.0
    %5526 = vmatpush1.msra.mxu0 0.0
    %5527 = vmatprep.subr.mxu0 0.0
    %5528 = vmatpush1.msra.mxu0 0.0
    %5529 = vmatprep.subr.mxu0 0.0
    %5530 = vmatpush1.msra.mxu0 0.0
    %5531 = vmatprep.subr.mxu0 0.0
    %5532 = vmatpush1.msra.mxu0 0.0
    %5533 = vmatprep.subr.mxu0 0.0
    %5534 = vmatpush1.msra.mxu0 0.0
    %5535 = vmatprep.subr.mxu0 0.0
    %5536 = vmatpush1.msra.mxu0 0.0
    %5537 = vmatprep.subr.mxu0 0.0
    %5538 = vmatpush1.msra.mxu0 0.0
    %5539 = vmatprep.subr.mxu0 0.0
    %5540 = vmatpush1.msra.mxu0 0.0
    %5541 = vmatprep.subr.mxu0 0.0
    %5542 = vmatpush1.msra.mxu0 0.0
    %5543 = vmatprep.subr.mxu0 0.0
    %5544 = vmatpush1.msra.mxu0 0.0
    %5545 = vmatprep.subr.mxu0 0.0
    %5546 = vmatpush1.msra.mxu0 0.0
    %5547 = vmatprep.subr.mxu0 0.0
    %5548 = vmatpush1.msra.mxu0 0.0
    %5549 = vmatprep.subr.mxu0 0.0
    %5550 = vmatpush1.msra.mxu0 0.0
    %5551 = vmatprep.mubr.f32.mxu0 0.0
    %5552 = vmatmul.mubr.f32.gmra.mrb[0].mxu0 %v5485
    %v5553 = vpop.f32.mrb[0].mxu0
    %v5554 = vadd.f32 0.0, %v5553
    %v5555 = vpop.f32.mrb[0].mxu0
    %5556 = vdwg.mxu0
    %v5558 = vsel %vm468, %v5483, 0
    %5560 = vmatprep.subr.mxu0 0.0
    %5561 = vmatpush1.msra.mxu0 %v5303
    %5562 = vmatprep.subr.mxu0 0.0
    %5563 = vmatpush1.msra.mxu0 0.0
    %5564 = vmatprep.subr.mxu0 0.0
    %5565 = vmatpush1.msra.mxu0 0.0
    %5566 = vmatprep.subr.mxu0 0.0
    %5567 = vmatpush1.msra.mxu0 0.0
    %5568 = vmatprep.subr.mxu0 0.0
    %5569 = vmatpush1.msra.mxu0 0.0
    %5570 = vmatprep.subr.mxu0 0.0
    %5571 = vmatpush1.msra.mxu0 0.0
    %5572 = vmatprep.subr.mxu0 0.0
    %5573 = vmatpush1.msra.mxu0 0.0
    %5574 = vmatprep.subr.mxu0 0.0
    %5575 = vmatpush1.msra.mxu0 0.0
    %5576 = vmatprep.subr.mxu0 0.0
    %5577 = vmatpush1.msra.mxu0 0.0
    %5578 = vmatprep.subr.mxu0 0.0
    %5579 = vmatpush1.msra.mxu0 0.0
    %5580 = vmatprep.subr.mxu0 0.0
    %5581 = vmatpush1.msra.mxu0 0.0
    %5582 = vmatprep.subr.mxu0 0.0
    %5583 = vmatpush1.msra.mxu0 0.0
    %5584 = vmatprep.subr.mxu0 0.0
    %5585 = vmatpush1.msra.mxu0 0.0
    %5586 = vmatprep.subr.mxu0 0.0
    %5587 = vmatpush1.msra.mxu0 0.0
    %5588 = vmatprep.subr.mxu0 0.0
    %5589 = vmatpush1.msra.mxu0 0.0
    %5590 = vmatprep.subr.mxu0 0.0
    %5591 = vmatpush1.msra.mxu0 0.0
    %5592 = vmatprep.subr.mxu0 0.0
    %5593 = vmatpush1.msra.mxu0 0.0
    %5594 = vmatprep.subr.mxu0 0.0
    %5595 = vmatpush1.msra.mxu0 0.0
    %5596 = vmatprep.subr.mxu0 0.0
    %5597 = vmatpush1.msra.mxu0 0.0
    %5598 = vmatprep.subr.mxu0 0.0
    %5599 = vmatpush1.msra.mxu0 0.0
    %5600 = vmatprep.subr.mxu0 0.0
    %5601 = vmatpush1.msra.mxu0 0.0
    %5602 = vmatprep.subr.mxu0 0.0
    %5603 = vmatpush1.msra.mxu0 0.0
    %5604 = vmatprep.subr.mxu0 0.0
    %5605 = vmatpush1.msra.mxu0 0.0
    %5606 = vmatprep.subr.mxu0 0.0
    %5607 = vmatpush1.msra.mxu0 0.0
    %5608 = vmatprep.subr.mxu0 0.0
    %5609 = vmatpush1.msra.mxu0 0.0
    %5610 = vmatprep.subr.mxu0 0.0
    %5611 = vmatpush1.msra.mxu0 0.0
    %5612 = vmatprep.subr.mxu0 0.0
    %5613 = vmatpush1.msra.mxu0 0.0
    %5614 = vmatprep.subr.mxu0 0.0
    %5615 = vmatpush1.msra.mxu0 0.0
    %5616 = vmatprep.subr.mxu0 0.0
    %5617 = vmatpush1.msra.mxu0 0.0
    %5618 = vmatprep.subr.mxu0 0.0
    %5619 = vmatpush1.msra.mxu0 0.0
    %5620 = vmatprep.subr.mxu0 0.0
    %5621 = vmatpush1.msra.mxu0 0.0
    %5622 = vmatprep.subr.mxu0 0.0
    %5623 = vmatpush1.msra.mxu0 0.0
    %5624 = vmatprep.mubr.f32.mxu0 0.0
    %5625 = vmatmul.mubr.f32.gmra.mrb[0].mxu0 %v5558
    %v5626 = vpop.f32.mrb[0].mxu0
    %v5627 = vadd.f32 0.0, %v5626
    %v5628 = vpop.f32.mrb[0].mxu0
    %5629 = vdwg.mxu0
    %s5630 = scalar_lea.vmem %s8, 56
    %v5631 = vld [vmem:[%s5630] sm:$0xff]
    %v5633 = vsel %vm468, %v5554, 0
    %v5636 = vsel %vm468, %v5627, 0
    %5638 = vmatprep.subr.mxu0 0.0
    %5639 = vmatpush1.msra.mxu0 %v5631
    %5640 = vmatprep.subr.mxu0 0.0
    %5641 = vmatpush1.msra.mxu0 0.0
    %5642 = vmatprep.subr.mxu0 0.0
    %5643 = vmatpush1.msra.mxu0 0.0
    %5644 = vmatprep.subr.mxu0 0.0
    %5645 = vmatpush1.msra.mxu0 0.0
    %5646 = vmatprep.subr.mxu0 0.0
    %5647 = vmatpush1.msra.mxu0 0.0
    %5648 = vmatprep.subr.mxu0 0.0
    %5649 = vmatpush1.msra.mxu0 0.0
    %5650 = vmatprep.subr.mxu0 0.0
    %5651 = vmatpush1.msra.mxu0 0.0
    %5652 = vmatprep.subr.mxu0 0.0
    %5653 = vmatpush1.msra.mxu0 0.0
    %5654 = vmatprep.subr.mxu0 0.0
    %5655 = vmatpush1.msra.mxu0 0.0
    %5656 = vmatprep.subr.mxu0 0.0
    %5657 = vmatpush1.msra.mxu0 0.0
    %5658 = vmatprep.subr.mxu0 0.0
    %5659 = vmatpush1.msra.mxu0 0.0
    %5660 = vmatprep.subr.mxu0 0.0
    %5661 = vmatpush1.msra.mxu0 0.0
    %5662 = vmatprep.subr.mxu0 0.0
    %5663 = vmatpush1.msra.mxu0 0.0
    %5664 = vmatprep.subr.mxu0 0.0
    %5665 = vmatpush1.msra.mxu0 0.0
    %5666 = vmatprep.subr.mxu0 0.0
    %5667 = vmatpush1.msra.mxu0 0.0
    %5668 = vmatprep.subr.mxu0 0.0
    %5669 = vmatpush1.msra.mxu0 0.0
    %5670 = vmatprep.subr.mxu0 0.0
    %5671 = vmatpush1.msra.mxu0 0.0
    %5672 = vmatprep.subr.mxu0 0.0
    %5673 = vmatpush1.msra.mxu0 0.0
    %5674 = vmatprep.subr.mxu0 0.0
    %5675 = vmatpush1.msra.mxu0 0.0
    %5676 = vmatprep.subr.mxu0 0.0
    %5677 = vmatpush1.msra.mxu0 0.0
    %5678 = vmatprep.subr.mxu0 0.0
    %5679 = vmatpush1.msra.mxu0 0.0
    %5680 = vmatprep.subr.mxu0 0.0
    %5681 = vmatpush1.msra.mxu0 0.0
    %5682 = vmatprep.subr.mxu0 0.0
    %5683 = vmatpush1.msra.mxu0 0.0
    %5684 = vmatprep.subr.mxu0 0.0
    %5685 = vmatpush1.msra.mxu0 0.0
    %5686 = vmatprep.subr.mxu0 0.0
    %5687 = vmatpush1.msra.mxu0 0.0
    %5688 = vmatprep.subr.mxu0 0.0
    %5689 = vmatpush1.msra.mxu0 0.0
    %5690 = vmatprep.subr.mxu0 0.0
    %5691 = vmatpush1.msra.mxu0 0.0
    %5692 = vmatprep.subr.mxu0 0.0
    %5693 = vmatpush1.msra.mxu0 0.0
    %5694 = vmatprep.subr.mxu0 0.0
    %5695 = vmatpush1.msra.mxu0 0.0
    %5696 = vmatprep.subr.mxu0 0.0
    %5697 = vmatpush1.msra.mxu0 0.0
    %5698 = vmatprep.subr.mxu0 0.0
    %5699 = vmatpush1.msra.mxu0 0.0
    %5700 = vmatprep.subr.mxu0 0.0
    %5701 = vmatpush1.msra.mxu0 0.0
    %5702 = vmatprep.mubr.f32.mxu0 0.0
    %5703 = vmatmul.mubr.f32.gmra.mrb[0].mxu0 %v5633
    %v5704 = vpop.f32.mrb[0].mxu0
    %v5705 = vadd.f32 0.0, %v5704
    %v5706 = vpop.f32.mrb[0].mxu0
    %5707 = vmatprep.mubr.f32.mxu0 0.0
    %5708 = vmatmul.mubr.f32.gmra.mrb[0].mxu0 %v5636
    %v5709 = vpop.f32.mrb[0].mxu0
    %v5710 = vadd.f32 0.0, %v5709
    %v5711 = vpop.f32.mrb[0].mxu0
    %5712 = vdwg.mxu0
    %v5713 = vadd.f32 %v5064, %v5705
    %v5714 = vadd.f32 %v5065, %v5710
    %v5715 = vadd.f32 %v3069, %v5713
    %v5716 = vadd.f32 %v3070, %v5714
    %s5717 = scalar_lea.vmem %s9, 1
    %v5718 = vld [vmem:[%s5717] sm:$0x1]
    %v5720 = vlaneseq
    %v5721 = vshrl.u32 %v5720, 7
    %v5722 = vsub.s32 0, %v5721
    %v5723 = vrot.slane %v5718, %v5722
    %v5725 = vadd.f32 %v5715, %v5723
    %v5726 = vadd.f32 %v5716, %v5723
    %s5727 = scalar_lea.vmem %s10, 1
    %v5728 = vld [vmem:[%s5727] sm:$0x1]
    %s5729 = scalar_lea.vmem %s11, 1
    %v5730 = vld [vmem:[%s5729] sm:$0x1]
    %v5731 = vsel %vm181, %v5725, 0.0
    %5732 = vadd.xlane.f32.xlu0 %v5731
    %v5733 = vpop.xlane.xlu0 %5732
    %v5734 = vsel %vm181, %v5726, 0.0
    %5735 = vadd.xlane.f32.xlu0 %v5734
    %v5736 = vpop.xlane.xlu0 %5735
    %v5737 = vmul.f32 %v5733, %v188
    %v5738 = vmul.f32 %v5736, %v188
    %v5739 = vsub.f32 %v5725, %v5737
    %v5740 = vsub.f32 %v5726, %v5738
    %v5741 = vmul.f32 %v5739, %v5739
    %v5742 = vmul.f32 %v5740, %v5740
    %v5743 = vsel %vm181, %v5741, 0.0
    %5744 = vadd.xlane.f32.xlu0 %v5743
    %v5745 = vpop.xlane.xlu0 %5744
    %v5746 = vsel %vm181, %v5742, 0.0
    %5747 = vadd.xlane.f32.xlu0 %v5746
    %v5748 = vpop.xlane.xlu0 %5747
    %v5749 = vmul.f32 %v5745, %v188
    %v5750 = vmul.f32 %v5748, %v188
    %v5751 = vadd.f32 %v5749, 1e-05
    %v5752 = vadd.f32 %v5750, 1e-05
    %v5753 = vrsqrt.pop %v5751
    %v5754 = vrsqrt.pop %v5752
    %v5755 = vmul.f32 %v5739, %v5753
    %v5756 = vmul.f32 %v5740, %v5754
    %v5758 = vlaneseq
    %v5759 = vshrl.u32 %v5758, 7
    %v5760 = vsub.s32 0, %v5759
    %v5761 = vrot.slane %v5728, %v5760
    %v5763 = vmul.f32 %v5755, %v5761
    %v5764 = vmul.f32 %v5756, %v5761
    %v5766 = vlaneseq
    %v5767 = vshrl.u32 %v5766, 7
    %v5768 = vsub.s32 0, %v5767
    %v5769 = vrot.slane %v5730, %v5768
    %v5771 = vadd.f32 %v5763, %v5769
    %v5772 = vadd.f32 %v5764, %v5769
    %s5773 = scalar_lea.vmem %s12, 32
    %v5774 = vld [vmem:[%s5773] sm:$0xff]
    %v5775 = vld [vmem:[%s5773 + $0x8] sm:$0xff]
    %v5776 = vld [vmem:[%s5773 + $0x10] sm:$0xff]
    %v5777 = vld [vmem:[%s5773 + $0x18] sm:$0xff]
    %s5778 = scalar_lea.vmem %s13, 1
    %v5779 = vld [vmem:[%s5778] sm:$0x1]
    %v5781 = vlaneseq
    %v5782 = vshrl.u32 %v5781, 7
    %v5783 = vsub.s32 0, %v5782
    %v5784 = vrot.slane %v5779, %v5783
    %v5787 = vsel %vm181, %v5771, 0
    %v5790 = vsel %vm181, %v5772, 0
    %5792 = vmatprep.subr.mxu0 0.0
    %5793 = vmatpush1.msra.mxu0 %v5774
    %5794 = vmatprep.subr.mxu0 0.0
    %5795 = vmatpush1.msra.mxu0 %v5775
    %5796 = vmatprep.subr.mxu0 0.0
    %5797 = vmatpush1.msra.mxu0 %v5776
    %5798 = vmatprep.subr.mxu0 0.0
    %5799 = vmatpush1.msra.mxu0 %v5777
    %5800 = vmatprep.subr.mxu0 0.0
    %5801 = vmatpush1.msra.mxu0 0.0
    %5802 = vmatprep.subr.mxu0 0.0
    %5803 = vmatpush1.msra.mxu0 0.0
    %5804 = vmatprep.subr.mxu0 0.0
    %5805 = vmatpush1.msra.mxu0 0.0
    %5806 = vmatprep.subr.mxu0 0.0
    %5807 = vmatpush1.msra.mxu0 0.0
    %5808 = vmatprep.subr.mxu0 0.0
    %5809 = vmatpush1.msra.mxu0 0.0
    %5810 = vmatprep.subr.mxu0 0.0
    %5811 = vmatpush1.msra.mxu0 0.0
    %5812 = vmatprep.subr.mxu0 0.0
    %5813 = vmatpush1.msra.mxu0 0.0
    %5814 = vmatprep.subr.mxu0 0.0
    %5815 = vmatpush1.msra.mxu0 0.0
    %5816 = vmatprep.subr.mxu0 0.0
    %5817 = vmatpush1.msra.mxu0 0.0
    %5818 = vmatprep.subr.mxu0 0.0
    %5819 = vmatpush1.msra.mxu0 0.0
    %5820 = vmatprep.subr.mxu0 0.0
    %5821 = vmatpush1.msra.mxu0 0.0
    %5822 = vmatprep.subr.mxu0 0.0
    %5823 = vmatpush1.msra.mxu0 0.0
    %5824 = vmatprep.subr.mxu0 0.0
    %5825 = vmatpush1.msra.mxu0 0.0
    %5826 = vmatprep.subr.mxu0 0.0
    %5827 = vmatpush1.msra.mxu0 0.0
    %5828 = vmatprep.subr.mxu0 0.0
    %5829 = vmatpush1.msra.mxu0 0.0
    %5830 = vmatprep.subr.mxu0 0.0
    %5831 = vmatpush1.msra.mxu0 0.0
    %5832 = vmatprep.subr.mxu0 0.0
    %5833 = vmatpush1.msra.mxu0 0.0
    %5834 = vmatprep.subr.mxu0 0.0
    %5835 = vmatpush1.msra.mxu0 0.0
    %5836 = vmatprep.subr.mxu0 0.0
    %5837 = vmatpush1.msra.mxu0 0.0
    %5838 = vmatprep.subr.mxu0 0.0
    %5839 = vmatpush1.msra.mxu0 0.0
    %5840 = vmatprep.subr.mxu0 0.0
    %5841 = vmatpush1.msra.mxu0 0.0
    %5842 = vmatprep.subr.mxu0 0.0
    %5843 = vmatpush1.msra.mxu0 0.0
    %5844 = vmatprep.subr.mxu0 0.0
    %5845 = vmatpush1.msra.mxu0 0.0
    %5846 = vmatprep.subr.mxu0 0.0
    %5847 = vmatpush1.msra.mxu0 0.0
    %5848 = vmatprep.subr.mxu0 0.0
    %5849 = vmatpush1.msra.mxu0 0.0
    %5850 = vmatprep.subr.mxu0 0.0
    %5851 = vmatpush1.msra.mxu0 0.0
    %5852 = vmatprep.subr.mxu0 0.0
    %5853 = vmatpush1.msra.mxu0 0.0
    %5854 = vmatprep.subr.mxu0 0.0
    %5855 = vmatpush1.msra.mxu0 0.0
    %5856 = vmatprep.mubr.f32.mxu0 0.0
    %5857 = vmatmul.mubr.f32.gmra.mrb[0].mxu0 %v5787
    %v5858 = vpop.f32.mrb[0].mxu0
    %v5859 = vadd.f32 %v5784, %v5858
    %v5860 = vpop.f32.mrb[0].mxu0
    %5861 = vmatprep.mubr.f32.mxu0 0.0
    %5862 = vmatmul.mubr.f32.gmra.mrb[0].mxu0 %v5790
    %v5863 = vpop.f32.mrb[0].mxu0
    %v5864 = vadd.f32 %v5784, %v5863
    %v5865 = vpop.f32.mrb[0].mxu0
    %5866 = vdwg.mxu0
    %v5867 = vmax.f32 %v5859, 0.0
    %v5868 = vmax.f32 %v5864, 0.0
    %s5869 = scalar_lea.vmem %s14, 128
    %v5870 = vld [vmem:[%s5869] sm:$0xff]
    %v5871 = vld [vmem:[%s5869 + $0x8] sm:$0xff]
    %v5872 = vld [vmem:[%s5869 + $0x10] sm:$0xff]
    %v5873 = vld [vmem:[%s5869 + $0x18] sm:$0xff]
    %v5874 = vld [vmem:[%s5869 + $0x20] sm:$0xff]
    %v5875 = vld [vmem:[%s5869 + $0x28] sm:$0xff]
    %v5876 = vld [vmem:[%s5869 + $0x30] sm:$0xff]
    %v5877 = vld [vmem:[%s5869 + $0x38] sm:$0xff]
    %v5878 = vld [vmem:[%s5869 + $0x40] sm:$0xff]
    %v5879 = vld [vmem:[%s5869 + $0x48] sm:$0xff]
    %v5880 = vld [vmem:[%s5869 + $0x50] sm:$0xff]
    %v5881 = vld [vmem:[%s5869 + $0x58] sm:$0xff]
    %v5882 = vld [vmem:[%s5869 + $0x60] sm:$0xff]
    %v5883 = vld [vmem:[%s5869 + $0x68] sm:$0xff]
    %v5884 = vld [vmem:[%s5869 + $0x70] sm:$0xff]
    %v5885 = vld [vmem:[%s5869 + $0x78] sm:$0xff]
    %5886 = vmatprep.subr.mxu0 0.0
    %5887 = vmatpush1.msra.mxu0 %v5870
    %5888 = vmatprep.subr.mxu0 0.0
    %5889 = vmatpush1.msra.mxu0 %v5871
    %5890 = vmatprep.subr.mxu0 0.0
    %5891 = vmatpush1.msra.mxu0 %v5872
    %5892 = vmatprep.subr.mxu0 0.0
    %5893 = vmatpush1.msra.mxu0 %v5873
    %5894 = vmatprep.subr.mxu0 0.0
    %5895 = vmatpush1.msra.mxu0 %v5874
    %5896 = vmatprep.subr.mxu0 0.0
    %5897 = vmatpush1.msra.mxu0 %v5875
    %5898 = vmatprep.subr.mxu0 0.0
    %5899 = vmatpush1.msra.mxu0 %v5876
    %5900 = vmatprep.subr.mxu0 0.0
    %5901 = vmatpush1.msra.mxu0 %v5877
    %5902 = vmatprep.subr.mxu0 0.0
    %5903 = vmatpush1.msra.mxu0 %v5878
    %5904 = vmatprep.subr.mxu0 0.0
    %5905 = vmatpush1.msra.mxu0 %v5879
    %5906 = vmatprep.subr.mxu0 0.0
    %5907 = vmatpush1.msra.mxu0 %v5880
    %5908 = vmatprep.subr.mxu0 0.0
    %5909 = vmatpush1.msra.mxu0 %v5881
    %5910 = vmatprep.subr.mxu0 0.0
    %5911 = vmatpush1.msra.mxu0 %v5882
    %5912 = vmatprep.subr.mxu0 0.0
    %5913 = vmatpush1.msra.mxu0 %v5883
    %5914 = vmatprep.subr.mxu0 0.0
    %5915 = vmatpush1.msra.mxu0 %v5884
    %5916 = vmatprep.subr.mxu0 0.0
    %5917 = vmatpush1.msra.mxu0 %v5885
    %5918 = vmatprep.subr.mxu0 0.0
    %5919 = vmatpush1.msra.mxu0 0.0
    %5920 = vmatprep.subr.mxu0 0.0
    %5921 = vmatpush1.msra.mxu0 0.0
    %5922 = vmatprep.subr.mxu0 0.0
    %5923 = vmatpush1.msra.mxu0 0.0
    %5924 = vmatprep.subr.mxu0 0.0
    %5925 = vmatpush1.msra.mxu0 0.0
    %5926 = vmatprep.subr.mxu0 0.0
    %5927 = vmatpush1.msra.mxu0 0.0
    %5928 = vmatprep.subr.mxu0 0.0
    %5929 = vmatpush1.msra.mxu0 0.0
    %5930 = vmatprep.subr.mxu0 0.0
    %5931 = vmatpush1.msra.mxu0 0.0
    %5932 = vmatprep.subr.mxu0 0.0
    %5933 = vmatpush1.msra.mxu0 0.0
    %5934 = vmatprep.subr.mxu0 0.0
    %5935 = vmatpush1.msra.mxu0 0.0
    %5936 = vmatprep.subr.mxu0 0.0
    %5937 = vmatpush1.msra.mxu0 0.0
    %5938 = vmatprep.subr.mxu0 0.0
    %5939 = vmatpush1.msra.mxu0 0.0
    %5940 = vmatprep.subr.mxu0 0.0
    %5941 = vmatpush1.msra.mxu0 0.0
    %5942 = vmatprep.subr.mxu0 0.0
    %5943 = vmatpush1.msra.mxu0 0.0
    %5944 = vmatprep.subr.mxu0 0.0
    %5945 = vmatpush1.msra.mxu0 0.0
    %5946 = vmatprep.subr.mxu0 0.0
    %5947 = vmatpush1.msra.mxu0 0.0
    %5948 = vmatprep.subr.mxu0 0.0
    %5949 = vmatpush1.msra.mxu0 0.0
    %5950 = vmatprep.mubr.f32.mxu0 0.0
    %5951 = vmatmul.mubr.f32.gmra.mrb[0].mxu0 %v5867
    %v5952 = vpop.f32.mrb[0].mxu0
    %v5953 = vadd.f32 0.0, %v5952
    %v5954 = vpop.f32.mrb[0].mxu0
    %5955 = vmatprep.mubr.f32.mxu0 0.0
    %5956 = vmatmul.mubr.f32.gmra.mrb[0].mxu0 %v5868
    %v5957 = vpop.f32.mrb[0].mxu0
    %v5958 = vadd.f32 0.0, %v5957
    %v5959 = vpop.f32.mrb[0].mxu0
    %5960 = vdwg.mxu0
    %v5961 = vadd.f32 %v5725, %v5953
    %v5962 = vadd.f32 %v5726, %v5958
    %s5963 = scalar_lea.vmem %s15, 1
    %v5964 = vld [vmem:[%s5963] sm:$0x1]
    %v5966 = vlaneseq
    %v5967 = vshrl.u32 %v5966, 7
    %v5968 = vsub.s32 0, %v5967
    %v5969 = vrot.slane %v5964, %v5968
    %v5971 = vadd.f32 %v5961, %v5969
    %v5972 = vadd.f32 %v5962, %v5969
    %v5973 = vld [vmem:[%s16] sm:$0x1]
    %v5974 = vld [vmem:[%s17] sm:$0x1]
    %v5975 = vsel %vm181, %v5971, 0.0
    %5976 = vadd.xlane.f32.xlu0 %v5975
    %v5977 = vpop.xlane.xlu0 %5976
    %v5978 = vsel %vm181, %v5972, 0.0
    %5979 = vadd.xlane.f32.xlu0 %v5978
    %v5980 = vpop.xlane.xlu0 %5979
    %v5981 = vmul.f32 %v5977, %v188
    %v5982 = vmul.f32 %v5980, %v188
    %v5983 = vsub.f32 %v5971, %v5981
    %v5984 = vsub.f32 %v5972, %v5982
    %v5985 = vmul.f32 %v5983, %v5983
    %v5986 = vmul.f32 %v5984, %v5984
    %v5987 = vsel %vm181, %v5985, 0.0
    %5988 = vadd.xlane.f32.xlu0 %v5987
    %v5989 = vpop.xlane.xlu0 %5988
    %v5990 = vsel %vm181, %v5986, 0.0
    %5991 = vadd.xlane.f32.xlu0 %v5990
    %v5992 = vpop.xlane.xlu0 %5991
    %v5993 = vmul.f32 %v5989, %v188
    %v5994 = vmul.f32 %v5992, %v188
    %v5995 = vadd.f32 %v5993, 1e-05
    %v5996 = vadd.f32 %v5994, 1e-05
    %v5997 = vrsqrt.pop %v5995
    %v5998 = vrsqrt.pop %v5996
    %v5999 = vmul.f32 %v5983, %v5997
    %v6000 = vmul.f32 %v5984, %v5998
    %v6002 = vlaneseq
    %v6003 = vshrl.u32 %v6002, 7
    %v6004 = vsub.s32 0, %v6003
    %v6005 = vrot.slane %v5973, %v6004
    %v6007 = vmul.f32 %v5999, %v6005
    %v6008 = vmul.f32 %v6000, %v6005
    %v6010 = vlaneseq
    %v6011 = vshrl.u32 %v6010, 7
    %v6012 = vsub.s32 0, %v6011
    %v6013 = vrot.slane %v5974, %v6012
    %v6015 = vadd.f32 %v6007, %v6013
    %v6016 = vadd.f32 %v6008, %v6013
    %v6017 = vld [vmem:[%s18] sm:$0xff]
    %v6018 = vld [vmem:[%s18 + $0x8] sm:$0xff]
    %v6019 = vld [vmem:[%s18 + $0x10] sm:$0xff]
    %v6020 = vld [vmem:[%s18 + $0x18] sm:$0xff]
    %v6021 = vld [vmem:[%s19] sm:$0x1]
    %v6023 = vlaneseq
    %v6024 = vshrl.u32 %v6023, 7
    %v6025 = vsub.s32 0, %v6024
    %v6026 = vrot.slane %v6021, %v6025
    %v6029 = vsel %vm181, %v6015, 0
    %v6032 = vsel %vm181, %v6016, 0
    %6034 = vmatprep.subr.mxu0 0.0
    %6035 = vmatpush1.msra.mxu0 %v6017
    %6036 = vmatprep.subr.mxu0 0.0
    %6037 = vmatpush1.msra.mxu0 %v6018
    %6038 = vmatprep.subr.mxu0 0.0
    %6039 = vmatpush1.msra.mxu0 %v6019
    %6040 = vmatprep.subr.mxu0 0.0
    %6041 = vmatpush1.msra.mxu0 %v6020
    %6042 = vmatprep.subr.mxu0 0.0
    %6043 = vmatpush1.msra.mxu0 0.0
    %6044 = vmatprep.subr.mxu0 0.0
    %6045 = vmatpush1.msra.mxu0 0.0
    %6046 = vmatprep.subr.mxu0 0.0
    %6047 = vmatpush1.msra.mxu0 0.0
    %6048 = vmatprep.subr.mxu0 0.0
    %6049 = vmatpush1.msra.mxu0 0.0
    %6050 = vmatprep.subr.mxu0 0.0
    %6051 = vmatpush1.msra.mxu0 0.0
    %6052 = vmatprep.subr.mxu0 0.0
    %6053 = vmatpush1.msra.mxu0 0.0
    %6054 = vmatprep.subr.mxu0 0.0
    %6055 = vmatpush1.msra.mxu0 0.0
    %6056 = vmatprep.subr.mxu0 0.0
    %6057 = vmatpush1.msra.mxu0 0.0
    %6058 = vmatprep.subr.mxu0 0.0
    %6059 = vmatpush1.msra.mxu0 0.0
    %6060 = vmatprep.subr.mxu0 0.0
    %6061 = vmatpush1.msra.mxu0 0.0
    %6062 = vmatprep.subr.mxu0 0.0
    %6063 = vmatpush1.msra.mxu0 0.0
    %6064 = vmatprep.subr.mxu0 0.0
    %6065 = vmatpush1.msra.mxu0 0.0
    %6066 = vmatprep.subr.mxu0 0.0
    %6067 = vmatpush1.msra.mxu0 0.0
    %6068 = vmatprep.subr.mxu0 0.0
    %6069 = vmatpush1.msra.mxu0 0.0
    %6070 = vmatprep.subr.mxu0 0.0
    %6071 = vmatpush1.msra.mxu0 0.0
    %6072 = vmatprep.subr.mxu0 0.0
    %6073 = vmatpush1.msra.mxu0 0.0
    %6074 = vmatprep.subr.mxu0 0.0
    %6075 = vmatpush1.msra.mxu0 0.0
    %6076 = vmatprep.subr.mxu0 0.0
    %6077 = vmatpush1.msra.mxu0 0.0
    %6078 = vmatprep.subr.mxu0 0.0
    %6079 = vmatpush1.msra.mxu0 0.0
    %6080 = vmatprep.subr.mxu0 0.0
    %6081 = vmatpush1.msra.mxu0 0.0
    %6082 = vmatprep.subr.mxu0 0.0
    %6083 = vmatpush1.msra.mxu0 0.0
    %6084 = vmatprep.subr.mxu0 0.0
    %6085 = vmatpush1.msra.mxu0 0.0
    %6086 = vmatprep.subr.mxu0 0.0
    %6087 = vmatpush1.msra.mxu0 0.0
    %6088 = vmatprep.subr.mxu0 0.0
    %6089 = vmatpush1.msra.mxu0 0.0
    %6090 = vmatprep.subr.mxu0 0.0
    %6091 = vmatpush1.msra.mxu0 0.0
    %6092 = vmatprep.subr.mxu0 0.0
    %6093 = vmatpush1.msra.mxu0 0.0
    %6094 = vmatprep.subr.mxu0 0.0
    %6095 = vmatpush1.msra.mxu0 0.0
    %6096 = vmatprep.subr.mxu0 0.0
    %6097 = vmatpush1.msra.mxu0 0.0
    %6098 = vmatprep.mubr.f32.mxu0 0.0
    %6099 = vmatmul.mubr.f32.gmra.mrb[0].mxu0 %v6029
    %v6100 = vpop.f32.mrb[0].mxu0
    %v6101 = vadd.f32 %v6026, %v6100
    %v6102 = vpop.f32.mrb[0].mxu0
    %6103 = vmatprep.mubr.f32.mxu0 0.0
    %6104 = vmatmul.mubr.f32.gmra.mrb[0].mxu0 %v6032
    %v6105 = vpop.f32.mrb[0].mxu0
    %v6106 = vadd.f32 %v6026, %v6105
    %v6107 = vpop.f32.mrb[0].mxu0
    %6108 = vdwg.mxu0
    %6109 = vst [vmem:[#allocation2] sm:$0xff] %v6101
    %6110 = vst [vmem:[#allocation2 + $0x8] sm:$0xff] %v6106
    // Predicated region
    $region82: #{model_forward.1} parent=1 // pred_check
      _
    $region83: #{model_forward.1} parent=1 // pred_check_branch
      %6112 = sbr.rel (0) target = $region85
    $region84: #{model_forward.1} parent=1 // pred_region
      %s6114 = ssub.s32 256, 256
      %6115 = vsyncadd [#allocation3], %s6114
      %s6116 = sshll.u32 [#allocation2], 4
      %s6117 = int_to_ptr.vmem [resolvable:$true] %s6116
      %6122 = dma.vmem_to_hbm [thread:$0]  %s6117, 256, %s20, [#allocation3], 128, 128, 8
    $region85: #{model_forward.1} parent=1 // pred_fallthru
      _
    // Predicated region
    $region86: #{model_forward.1} parent=1 // pred_check
      _
    $region87: #{model_forward.1} parent=1 // pred_check_branch
      %6124 = sbr.rel (0) target = $region89
    $region88: #{model_forward.1} parent=1 // pred_region
      %6125 = dma.done [#allocation3], 256
    $region89: #{model_forward.1} parent=1 // pred_fallthru
      _
    %6126 = vsyncpa [#allocation3], 1

</llo_original>
